<compile_context>
chip_gen: v7x
topology: tpu7x:2x2x1
jax: 0.10.0
libtpu: 0.0.40
codegen_flags: <defaults>
</compile_context>

<pallas_src>
import jax
import jax.numpy as jnp
from jax.experimental import pallas as pl
from jax.experimental.pallas import tpu as pltpu


def _round_up(x, m):
    return (x + m - 1) // m * m


def _make_kernel(n_rows, w_pad):
    """Fused conv(9 shifted dots) + bias + ReLU + GAP + fc kernel."""

    def kernel(x_ref, wtap_ref, bconv_ref, pool_ref, wfc_ref, bfc_ref,
               out_ref, acc_ref):
        # x_ref:    (BT*img_rows, Cin) f32   padded, spatially flattened images
        # wtap_ref: (9, Cin, Cpad)     bf16  per-tap conv weights (Cout padded)
        # bconv_ref:(1, Cpad)          f32
        # pool_ref: (BT, n_rows)       f32   masked GAP matrix (1/(H*W) on valid rows)
        # wfc_ref:  (Cpad, Lpad)       f32
        # bfc_ref:  (1, Lpad)          f32
        # out_ref:  (BT, Lpad)         f32
        # acc_ref:  (n_rows, Cpad)     f32   conv accumulator (VMEM scratch)
        first = True
        for dy in range(3):
            for dx in range(3):
                t = dy * 3 + dx
                off = dy * w_pad + dx
                # Shifted row-slice = im2col tap, cast to bf16 for the MXU.
                tap = x_ref[pl.ds(off, n_rows), :].astype(jnp.bfloat16)
                contrib = jnp.dot(tap, wtap_ref[t],
                                  preferred_element_type=jnp.float32)
                if first:
                    acc_ref[...] = contrib
                    first = False
                else:
                    acc_ref[...] += contrib

        # bias + ReLU (f32, lane-dense 128-wide)
        conv = jnp.maximum(acc_ref[...] + bconv_ref[...], 0.0)

        # Global average pool as an MXU matmul with a masked block-diagonal
        # pooling matrix (junk rows get weight 0, valid rows 1/(H*W)).
        pooled = jnp.dot(pool_ref[...], conv,
                         preferred_element_type=jnp.float32)      # (BT, Cpad)

        # Final fc for the whole batch tile in one MXU pass.
        out_ref[...] = (jnp.dot(pooled, wfc_ref[...],
                                preferred_element_type=jnp.float32)
                        + bfc_ref[...])

    return kernel


def atma18_vision_forward(x_nchw, conv_w, conv_b, fc_w, fc_b, *,
                          batch_tile=None):
    """Forward pass.

    x_nchw : (B, Cin, H, W) float32       (PyTorch NCHW convention)
    conv_w : (Cout, Cin, 3, 3) float32    (PyTorch conv weight layout)
    conv_b : (Cout,) float32
    fc_w   : (L, Cout) float32            (PyTorch Linear weight layout)
    fc_b   : (L,) float32
    returns: (B, L) float32
    """
    B, Cin, H, W = x_nchw.shape
    Cout = conv_w.shape[0]
    L = fc_w.shape[0]
    P = H * W
    LANE = 128
    Cpad = _round_up(Cout, LANE)
    Lpad = _round_up(L, LANE)
    Hp, Wp = H + 2, W + 2
    pad_img = Hp * Wp
    # Per-image flattened row count: enough slack so every shifted tap slice
    # (length H*Wp, max offset 2*Wp+2) stays inside the image's own rows.
    img_rows = _round_up(pad_img + 2, 8)

    bt = B if batch_tile is None else batch_tile
    assert B % bt == 0, "batch_tile must divide batch"
    # Rows of conv output (incl. interleaved junk rows) per grid step.
    n_rows = (bt - 1) * img_rows + H * Wp

    # ---- input: NCHW -> padded NHWC -> flattened rows (B*img_rows, Cin) ----
    x_nhwc = jnp.transpose(x_nchw, (0, 2, 3, 1))                 # (B,H,W,Cin)
    xp = jnp.pad(x_nhwc, ((0, 0), (1, 1), (1, 1), (0, 0)))       # (B,Hp,Wp,Cin)
    xf = xp.reshape(B, pad_img, Cin)
    xf = jnp.pad(xf, ((0, 0), (0, img_rows - pad_img), (0, 0)))
    x2d = xf.reshape(B * img_rows, Cin).astype(jnp.float32)

    # ---- conv weight: (Cout,Cin,3,3) -> per-tap (9, Cin, Cpad) bf16 --------
    w_taps = jnp.transpose(conv_w, (2, 3, 1, 0)).reshape(9, Cin, Cout)
    w_taps = jnp.pad(w_taps,
                     ((0, 0), (0, 0), (0, Cpad - Cout))).astype(jnp.bfloat16)
    b_conv = jnp.pad(conv_b, (0, Cpad - Cout)).reshape(1, Cpad).astype(jnp.float32)

    # ---- masked GAP matrix: (bt, n_rows) -----------------------------------
    q = jnp.arange(n_rows)[None, :]
    s = q - (jnp.arange(bt) * img_rows)[:, None]
    yy = s // Wp
    xx = s % Wp
    valid = (s >= 0) & (yy < H) & (xx < W)
    pool = jnp.where(valid, 1.0 / P, 0.0).astype(jnp.float32)

    # ---- fc weights: (L, Cout) -> (Cpad, Lpad) f32 -------------------------
    w_fc = jnp.pad(fc_w.T, ((0, Cpad - Cout), (0, Lpad - L))).astype(jnp.float32)
    b_fc = jnp.pad(fc_b, (0, Lpad - L)).reshape(1, Lpad).astype(jnp.float32)

    kernel = _make_kernel(n_rows, Wp)

    out = pl.pallas_call(
        kernel,
        out_shape=jax.ShapeDtypeStruct((B, Lpad), jnp.float32),
        grid_spec=pltpu.PrefetchScalarGridSpec(
            num_scalar_prefetch=0,
            grid=(B // bt,),
            in_specs=[
                pl.BlockSpec((bt * img_rows, Cin), lambda i: (i, 0)),  # image rows
                pl.BlockSpec((9, Cin, Cpad), lambda i: (0, 0, 0)),     # conv taps
                pl.BlockSpec((1, Cpad), lambda i: (0, 0)),             # conv bias
                pl.BlockSpec((bt, n_rows), lambda i: (0, 0)),          # GAP matrix
                pl.BlockSpec((Cpad, Lpad), lambda i: (0, 0)),          # fc weight
                pl.BlockSpec((1, Lpad), lambda i: (0, 0)),             # fc bias
            ],
            out_specs=pl.BlockSpec((bt, Lpad), lambda i: (i, 0)),      # lane-dense
            scratch_shapes=[pltpu.VMEM((n_rows, Cpad), jnp.float32)],
        ),
        compiler_params=pltpu.CompilerParams(
            dimension_semantics=("parallel",)),
    )(x2d, w_taps, b_conv, pool, w_fc, b_fc)

    return out[:, :L]


# ---------------------------------------------------------------------------
# Pure-JAX reference (same math, incl. the bf16 rounding of conv inputs)
# ---------------------------------------------------------------------------
def _reference(x_nchw, conv_w, conv_b, fc_w, fc_b):
    B, Cin, H, W = x_nchw.shape
    Cout = conv_w.shape[0]
    xr = x_nchw.astype(jnp.bfloat16).astype(jnp.float32)
    wr = conv_w.astype(jnp.bfloat16).astype(jnp.float32)
    x_nhwc = jnp.transpose(xr, (0, 2, 3, 1))
    xp = jnp.pad(x_nhwc, ((0, 0), (1, 1), (1, 1), (0, 0)))
    pats = [xp[:, dy:dy + H, dx:dx + W, :] for dy in range(3) for dx in range(3)]
    patches = jnp.stack(pats, axis=3).reshape(B, H * W, 9 * Cin)
    wmat = jnp.transpose(wr, (2, 3, 1, 0)).reshape(9 * Cin, Cout)
    conv = jnp.einsum("bpk,kc->bpc", patches, wmat,
                      precision=jax.lax.Precision.HIGHEST) + conv_b
    conv = jnp.maximum(conv, 0.0)
    feat = conv.mean(axis=1)                                     # GAP
    return jnp.dot(feat, fc_w.T, precision=jax.lax.Precision.HIGHEST) + fc_b


if __name__ == "__main__":
    # batch=2, in_chans=9 (as in the module), spatial=16, features=32, labels=18.
    B, Cin, H, W = 2, 9, 16, 16
    Cout, L = 32, 18

    key = jax.random.PRNGKey(0)
    k_x, k_cw, k_cb, k_fw, k_fb = jax.random.split(key, 5)

    x = jax.random.normal(k_x, (B, Cin, H, W), dtype=jnp.float32)
    conv_w = 0.1 * jax.random.normal(k_cw, (Cout, Cin, 3, 3), dtype=jnp.float32)
    conv_b = 0.1 * jax.random.normal(k_cb, (Cout,), dtype=jnp.float32)
    fc_w = 0.1 * jax.random.normal(k_fw, (L, Cout), dtype=jnp.float32)
    fc_b = 0.1 * jax.random.normal(k_fb, (L,), dtype=jnp.float32)

    out = atma18_vision_forward(x, conv_w, conv_b, fc_w, fc_b)
    out = jax.block_until_ready(out)

    ref = jax.block_until_ready(_reference(x, conv_w, conv_b, fc_w, fc_b))
    assert out.shape == (B, L), out.shape
    max_err = jnp.max(jnp.abs(out - ref))
    assert jnp.allclose(out, ref, atol=5e-3, rtol=5e-3), f"max abs err {max_err}"

    print("KERNEL_OK")
</pallas_src>

<mosaic_0001>
module attributes {stable_mosaic.version = 11 : i64} {
  func.func @kernel(%arg0: i32, %arg1: memref<656x9xf32, #tpu.memory_space<vmem>>, %arg2: memref<9x9x128xbf16, #tpu.memory_space<vmem>>, %arg3: memref<1x128xf32, #tpu.memory_space<vmem>>, %arg4: memref<2x616xf32, #tpu.memory_space<vmem>>, %arg5: memref<128x128xf32, #tpu.memory_space<vmem>>, %arg6: memref<1x128xf32, #tpu.memory_space<vmem>>, %arg7: memref<2x128xf32, #tpu.memory_space<vmem>>, %arg8: memref<616x128xf32, #tpu.memory_space<vmem>>) attributes {dimension_semantics = [#tpu.dimension_semantics<parallel>], iteration_bounds = array<i64: 1>, scalar_prefetch = 0 : i64, scratch_operands = 1 : i64, tpu.core_type = #tpu.core_type<tc>, window_params = [{transform_indices = @transform_0, window_bounds = array<i64: 656, 9>}, {pipeline_mode = #tpu.pipeline_mode<synchronous>, transform_indices = @transform_1, window_bounds = array<i64: 9, 9, 128>}, {pipeline_mode = #tpu.pipeline_mode<synchronous>, transform_indices = @transform_2, window_bounds = array<i64: 1, 128>}, {pipeline_mode = #tpu.pipeline_mode<synchronous>, transform_indices = @transform_3, window_bounds = array<i64: 2, 616>}, {pipeline_mode = #tpu.pipeline_mode<synchronous>, transform_indices = @transform_4, window_bounds = array<i64: 128, 128>}, {pipeline_mode = #tpu.pipeline_mode<synchronous>, transform_indices = @transform_5, window_bounds = array<i64: 1, 128>}, {transform_indices = @transform_6, window_bounds = array<i64: 2, 128>}]} {
    %c0 = arith.constant 0 : index
    %c0_0 = arith.constant 0 : index
    %0 = vector.load %arg1[%c0, %c0_0] : memref<656x9xf32, #tpu.memory_space<vmem>>, vector<616x9xf32>
    %1 = arith.truncf %0 : vector<616x9xf32> to vector<616x9xbf16>
    %c0_1 = arith.constant 0 : index
    %c0_2 = arith.constant 0 : index
    %c0_3 = arith.constant 0 : index
    %2 = vector.load %arg2[%c0_1, %c0_2, %c0_3] : memref<9x9x128xbf16, #tpu.memory_space<vmem>>, vector<1x9x128xbf16>
    %3 = vector.shape_cast %2 : vector<1x9x128xbf16> to vector<9x128xbf16>
    %cst = arith.constant dense<0.000000e+00> : vector<616x128xf32>
    %4 = tpu.matmul %1, %3, %cst {dimension_numbers = #tpu.dot_dimension_numbers<[1], [0], [0], [1], [0, 0, 1, 1], [], []>} : vector<616x9xbf16>, vector<9x128xbf16>, vector<616x128xf32> -> vector<616x128xf32>
    %c0_4 = arith.constant 0 : index
    %c0_5 = arith.constant 0 : index
    %5 = vector.load %arg8[%c0_4, %c0_5] : memref<616x128xf32, #tpu.memory_space<vmem>>, vector<616x128xf32>
    tpu.vector_store %arg8[%c0_4, %c0_5], %4 {strides = array<i32>} : memref<616x128xf32, #tpu.memory_space<vmem>>, vector<616x128xf32>,
    %c1 = arith.constant 1 : index
    %c0_6 = arith.constant 0 : index
    %6 = vector.load %arg1[%c1, %c0_6] : memref<656x9xf32, #tpu.memory_space<vmem>>, vector<616x9xf32>
    %7 = arith.truncf %6 : vector<616x9xf32> to vector<616x9xbf16>
    %c1_7 = arith.constant 1 : index
    %c0_8 = arith.constant 0 : index
    %c0_9 = arith.constant 0 : index
    %8 = vector.load %arg2[%c1_7, %c0_8, %c0_9] : memref<9x9x128xbf16, #tpu.memory_space<vmem>>, vector<1x9x128xbf16>
    %9 = vector.shape_cast %8 : vector<1x9x128xbf16> to vector<9x128xbf16>
    %cst_10 = arith.constant dense<0.000000e+00> : vector<616x128xf32>
    %10 = tpu.matmul %7, %9, %cst_10 {dimension_numbers = #tpu.dot_dimension_numbers<[1], [0], [0], [1], [0, 0, 1, 1], [], []>} : vector<616x9xbf16>, vector<9x128xbf16>, vector<616x128xf32> -> vector<616x128xf32>
    %c0_11 = arith.constant 0 : index
    %c0_12 = arith.constant 0 : index
    %11 = vector.load %arg8[%c0_11, %c0_12] : memref<616x128xf32, #tpu.memory_space<vmem>>, vector<616x128xf32>
    %12 = arith.addf %11, %10 : vector<616x128xf32>
    %c0_13 = arith.constant 0 : index
    %c0_14 = arith.constant 0 : index
    %13 = vector.load %arg8[%c0_13, %c0_14] : memref<616x128xf32, #tpu.memory_space<vmem>>, vector<616x128xf32>
    tpu.vector_store %arg8[%c0_13, %c0_14], %12 {strides = array<i32>} : memref<616x128xf32, #tpu.memory_space<vmem>>, vector<616x128xf32>,
    %c2 = arith.constant 2 : index
    %c0_15 = arith.constant 0 : index
    %14 = vector.load %arg1[%c2, %c0_15] : memref<656x9xf32, #tpu.memory_space<vmem>>, vector<616x9xf32>
    %15 = arith.truncf %14 : vector<616x9xf32> to vector<616x9xbf16>
    %c2_16 = arith.constant 2 : index
    %c0_17 = arith.constant 0 : index
    %c0_18 = arith.constant 0 : index
    %16 = vector.load %arg2[%c2_16, %c0_17, %c0_18] : memref<9x9x128xbf16, #tpu.memory_space<vmem>>, vector<1x9x128xbf16>
    %17 = vector.shape_cast %16 : vector<1x9x128xbf16> to vector<9x128xbf16>
    %cst_19 = arith.constant dense<0.000000e+00> : vector<616x128xf32>
    %18 = tpu.matmul %15, %17, %cst_19 {dimension_numbers = #tpu.dot_dimension_numbers<[1], [0], [0], [1], [0, 0, 1, 1], [], []>} : vector<616x9xbf16>, vector<9x128xbf16>, vector<616x128xf32> -> vector<616x128xf32>
    %c0_20 = arith.constant 0 : index
    %c0_21 = arith.constant 0 : index
    %19 = vector.load %arg8[%c0_20, %c0_21] : memref<616x128xf32, #tpu.memory_space<vmem>>, vector<616x128xf32>
    %20 = arith.addf %19, %18 : vector<616x128xf32>
    %c0_22 = arith.constant 0 : index
    %c0_23 = arith.constant 0 : index
    %21 = vector.load %arg8[%c0_22, %c0_23] : memref<616x128xf32, #tpu.memory_space<vmem>>, vector<616x128xf32>
    tpu.vector_store %arg8[%c0_22, %c0_23], %20 {strides = array<i32>} : memref<616x128xf32, #tpu.memory_space<vmem>>, vector<616x128xf32>,
    %c18 = arith.constant 18 : index
    %c0_24 = arith.constant 0 : index
    %22 = vector.load %arg1[%c18, %c0_24] : memref<656x9xf32, #tpu.memory_space<vmem>>, vector<616x9xf32>
    %23 = arith.truncf %22 : vector<616x9xf32> to vector<616x9xbf16>
    %c3 = arith.constant 3 : index
    %c0_25 = arith.constant 0 : index
    %c0_26 = arith.constant 0 : index
    %24 = vector.load %arg2[%c3, %c0_25, %c0_26] : memref<9x9x128xbf16, #tpu.memory_space<vmem>>, vector<1x9x128xbf16>
    %25 = vector.shape_cast %24 : vector<1x9x128xbf16> to vector<9x128xbf16>
    %cst_27 = arith.constant dense<0.000000e+00> : vector<616x128xf32>
    %26 = tpu.matmul %23, %25, %cst_27 {dimension_numbers = #tpu.dot_dimension_numbers<[1], [0], [0], [1], [0, 0, 1, 1], [], []>} : vector<616x9xbf16>, vector<9x128xbf16>, vector<616x128xf32> -> vector<616x128xf32>
    %c0_28 = arith.constant 0 : index
    %c0_29 = arith.constant 0 : index
    %27 = vector.load %arg8[%c0_28, %c0_29] : memref<616x128xf32, #tpu.memory_space<vmem>>, vector<616x128xf32>
    %28 = arith.addf %27, %26 : vector<616x128xf32>
    %c0_30 = arith.constant 0 : index
    %c0_31 = arith.constant 0 : index
    %29 = vector.load %arg8[%c0_30, %c0_31] : memref<616x128xf32, #tpu.memory_space<vmem>>, vector<616x128xf32>
    tpu.vector_store %arg8[%c0_30, %c0_31], %28 {strides = array<i32>} : memref<616x128xf32, #tpu.memory_space<vmem>>, vector<616x128xf32>,
    %c19 = arith.constant 19 : index
    %c0_32 = arith.constant 0 : index
    %30 = vector.load %arg1[%c19, %c0_32] : memref<656x9xf32, #tpu.memory_space<vmem>>, vector<616x9xf32>
    %31 = arith.truncf %30 : vector<616x9xf32> to vector<616x9xbf16>
    %c4 = arith.constant 4 : index
    %c0_33 = arith.constant 0 : index
    %c0_34 = arith.constant 0 : index
    %32 = vector.load %arg2[%c4, %c0_33, %c0_34] : memref<9x9x128xbf16, #tpu.memory_space<vmem>>, vector<1x9x128xbf16>
    %33 = vector.shape_cast %32 : vector<1x9x128xbf16> to vector<9x128xbf16>
    %cst_35 = arith.constant dense<0.000000e+00> : vector<616x128xf32>
    %34 = tpu.matmul %31, %33, %cst_35 {dimension_numbers = #tpu.dot_dimension_numbers<[1], [0], [0], [1], [0, 0, 1, 1], [], []>} : vector<616x9xbf16>, vector<9x128xbf16>, vector<616x128xf32> -> vector<616x128xf32>
    %c0_36 = arith.constant 0 : index
    %c0_37 = arith.constant 0 : index
    %35 = vector.load %arg8[%c0_36, %c0_37] : memref<616x128xf32, #tpu.memory_space<vmem>>, vector<616x128xf32>
    %36 = arith.addf %35, %34 : vector<616x128xf32>
    %c0_38 = arith.constant 0 : index
    %c0_39 = arith.constant 0 : index
    %37 = vector.load %arg8[%c0_38, %c0_39] : memref<616x128xf32, #tpu.memory_space<vmem>>, vector<616x128xf32>
    tpu.vector_store %arg8[%c0_38, %c0_39], %36 {strides = array<i32>} : memref<616x128xf32, #tpu.memory_space<vmem>>, vector<616x128xf32>,
    %c20 = arith.constant 20 : index
    %c0_40 = arith.constant 0 : index
    %38 = vector.load %arg1[%c20, %c0_40] : memref<656x9xf32, #tpu.memory_space<vmem>>, vector<616x9xf32>
    %39 = arith.truncf %38 : vector<616x9xf32> to vector<616x9xbf16>
    %c5 = arith.constant 5 : index
    %c0_41 = arith.constant 0 : index
    %c0_42 = arith.constant 0 : index
    %40 = vector.load %arg2[%c5, %c0_41, %c0_42] : memref<9x9x128xbf16, #tpu.memory_space<vmem>>, vector<1x9x128xbf16>
    %41 = vector.shape_cast %40 : vector<1x9x128xbf16> to vector<9x128xbf16>
    %cst_43 = arith.constant dense<0.000000e+00> : vector<616x128xf32>
    %42 = tpu.matmul %39, %41, %cst_43 {dimension_numbers = #tpu.dot_dimension_numbers<[1], [0], [0], [1], [0, 0, 1, 1], [], []>} : vector<616x9xbf16>, vector<9x128xbf16>, vector<616x128xf32> -> vector<616x128xf32>
    %c0_44 = arith.constant 0 : index
    %c0_45 = arith.constant 0 : index
    %43 = vector.load %arg8[%c0_44, %c0_45] : memref<616x128xf32, #tpu.memory_space<vmem>>, vector<616x128xf32>
    %44 = arith.addf %43, %42 : vector<616x128xf32>
    %c0_46 = arith.constant 0 : index
    %c0_47 = arith.constant 0 : index
    %45 = vector.load %arg8[%c0_46, %c0_47] : memref<616x128xf32, #tpu.memory_space<vmem>>, vector<616x128xf32>
    tpu.vector_store %arg8[%c0_46, %c0_47], %44 {strides = array<i32>} : memref<616x128xf32, #tpu.memory_space<vmem>>, vector<616x128xf32>,
    %c36 = arith.constant 36 : index
    %c0_48 = arith.constant 0 : index
    %46 = vector.load %arg1[%c36, %c0_48] : memref<656x9xf32, #tpu.memory_space<vmem>>, vector<616x9xf32>
    %47 = arith.truncf %46 : vector<616x9xf32> to vector<616x9xbf16>
    %c6 = arith.constant 6 : index
    %c0_49 = arith.constant 0 : index
    %c0_50 = arith.constant 0 : index
    %48 = vector.load %arg2[%c6, %c0_49, %c0_50] : memref<9x9x128xbf16, #tpu.memory_space<vmem>>, vector<1x9x128xbf16>
    %49 = vector.shape_cast %48 : vector<1x9x128xbf16> to vector<9x128xbf16>
    %cst_51 = arith.constant dense<0.000000e+00> : vector<616x128xf32>
    %50 = tpu.matmul %47, %49, %cst_51 {dimension_numbers = #tpu.dot_dimension_numbers<[1], [0], [0], [1], [0, 0, 1, 1], [], []>} : vector<616x9xbf16>, vector<9x128xbf16>, vector<616x128xf32> -> vector<616x128xf32>
    %c0_52 = arith.constant 0 : index
    %c0_53 = arith.constant 0 : index
    %51 = vector.load %arg8[%c0_52, %c0_53] : memref<616x128xf32, #tpu.memory_space<vmem>>, vector<616x128xf32>
    %52 = arith.addf %51, %50 : vector<616x128xf32>
    %c0_54 = arith.constant 0 : index
    %c0_55 = arith.constant 0 : index
    %53 = vector.load %arg8[%c0_54, %c0_55] : memref<616x128xf32, #tpu.memory_space<vmem>>, vector<616x128xf32>
    tpu.vector_store %arg8[%c0_54, %c0_55], %52 {strides = array<i32>} : memref<616x128xf32, #tpu.memory_space<vmem>>, vector<616x128xf32>,
    %c37 = arith.constant 37 : index
    %c0_56 = arith.constant 0 : index
    %54 = vector.load %arg1[%c37, %c0_56] : memref<656x9xf32, #tpu.memory_space<vmem>>, vector<616x9xf32>
    %55 = arith.truncf %54 : vector<616x9xf32> to vector<616x9xbf16>
    %c7 = arith.constant 7 : index
    %c0_57 = arith.constant 0 : index
    %c0_58 = arith.constant 0 : index
    %56 = vector.load %arg2[%c7, %c0_57, %c0_58] : memref<9x9x128xbf16, #tpu.memory_space<vmem>>, vector<1x9x128xbf16>
    %57 = vector.shape_cast %56 : vector<1x9x128xbf16> to vector<9x128xbf16>
    %cst_59 = arith.constant dense<0.000000e+00> : vector<616x128xf32>
    %58 = tpu.matmul %55, %57, %cst_59 {dimension_numbers = #tpu.dot_dimension_numbers<[1], [0], [0], [1], [0, 0, 1, 1], [], []>} : vector<616x9xbf16>, vector<9x128xbf16>, vector<616x128xf32> -> vector<616x128xf32>
    %c0_60 = arith.constant 0 : index
    %c0_61 = arith.constant 0 : index
    %59 = vector.load %arg8[%c0_60, %c0_61] : memref<616x128xf32, #tpu.memory_space<vmem>>, vector<616x128xf32>
    %60 = arith.addf %59, %58 : vector<616x128xf32>
    %c0_62 = arith.constant 0 : index
    %c0_63 = arith.constant 0 : index
    %61 = vector.load %arg8[%c0_62, %c0_63] : memref<616x128xf32, #tpu.memory_space<vmem>>, vector<616x128xf32>
    tpu.vector_store %arg8[%c0_62, %c0_63], %60 {strides = array<i32>} : memref<616x128xf32, #tpu.memory_space<vmem>>, vector<616x128xf32>,
    %c38 = arith.constant 38 : index
    %c0_64 = arith.constant 0 : index
    %62 = vector.load %arg1[%c38, %c0_64] : memref<656x9xf32, #tpu.memory_space<vmem>>, vector<616x9xf32>
    %63 = arith.truncf %62 : vector<616x9xf32> to vector<616x9xbf16>
    %c8 = arith.constant 8 : index
    %c0_65 = arith.constant 0 : index
    %c0_66 = arith.constant 0 : index
    %64 = vector.load %arg2[%c8, %c0_65, %c0_66] : memref<9x9x128xbf16, #tpu.memory_space<vmem>>, vector<1x9x128xbf16>
    %65 = vector.shape_cast %64 : vector<1x9x128xbf16> to vector<9x128xbf16>
    %cst_67 = arith.constant dense<0.000000e+00> : vector<616x128xf32>
    %66 = tpu.matmul %63, %65, %cst_67 {dimension_numbers = #tpu.dot_dimension_numbers<[1], [0], [0], [1], [0, 0, 1, 1], [], []>} : vector<616x9xbf16>, vector<9x128xbf16>, vector<616x128xf32> -> vector<616x128xf32>
    %c0_68 = arith.constant 0 : index
    %c0_69 = arith.constant 0 : index
    %67 = vector.load %arg8[%c0_68, %c0_69] : memref<616x128xf32, #tpu.memory_space<vmem>>, vector<616x128xf32>
    %68 = arith.addf %67, %66 : vector<616x128xf32>
    %c0_70 = arith.constant 0 : index
    %c0_71 = arith.constant 0 : index
    %69 = vector.load %arg8[%c0_70, %c0_71] : memref<616x128xf32, #tpu.memory_space<vmem>>, vector<616x128xf32>
    tpu.vector_store %arg8[%c0_70, %c0_71], %68 {strides = array<i32>} : memref<616x128xf32, #tpu.memory_space<vmem>>, vector<616x128xf32>,
    %c0_72 = arith.constant 0 : index
    %c0_73 = arith.constant 0 : index
    %70 = vector.load %arg8[%c0_72, %c0_73] : memref<616x128xf32, #tpu.memory_space<vmem>>, vector<616x128xf32>
    %c0_74 = arith.constant 0 : index
    %c0_75 = arith.constant 0 : index
    %71 = vector.load %arg3[%c0_74, %c0_75] : memref<1x128xf32, #tpu.memory_space<vmem>>, vector<1x128xf32>
    %72 = vector.broadcast %71 : vector<1x128xf32> to vector<616x128xf32>
    %73 = arith.addf %70, %72 : vector<616x128xf32>
    %cst_76 = arith.constant 0.000000e+00 : f32
    %74 = vector.broadcast %cst_76 : f32 to vector<616x128xf32>
    %75 = arith.maximumf %73, %74 : vector<616x128xf32>
    %c0_77 = arith.constant 0 : index
    %c0_78 = arith.constant 0 : index
    %76 = vector.load %arg4[%c0_77, %c0_78] : memref<2x616xf32, #tpu.memory_space<vmem>>, vector<2x616xf32>
    %cst_79 = arith.constant dense<0.000000e+00> : vector<2x128xf32>
    %77 = tpu.matmul %76, %75, %cst_79 {dimension_numbers = #tpu.dot_dimension_numbers<[1], [0], [0], [1], [0, 0, 1, 1], [], []>} : vector<2x616xf32>, vector<616x128xf32>, vector<2x128xf32> -> vector<2x128xf32>
    %c0_80 = arith.constant 0 : index
    %c0_81 = arith.constant 0 : index
    %78 = vector.load %arg5[%c0_80, %c0_81] : memref<128x128xf32, #tpu.memory_space<vmem>>, vector<128x128xf32>
    %cst_82 = arith.constant dense<0.000000e+00> : vector<2x128xf32>
    %79 = tpu.matmul %77, %78, %cst_82 {dimension_numbers = #tpu.dot_dimension_numbers<[1], [0], [0], [1], [0, 0, 1, 1], [], []>} : vector<2x128xf32>, vector<128x128xf32>, vector<2x128xf32> -> vector<2x128xf32>
    %c0_83 = arith.constant 0 : index
    %c0_84 = arith.constant 0 : index
    %80 = vector.load %arg6[%c0_83, %c0_84] : memref<1x128xf32, #tpu.memory_space<vmem>>, vector<1x128xf32>
    %81 = vector.broadcast %80 : vector<1x128xf32> to vector<2x128xf32>
    %82 = arith.addf %79, %81 : vector<2x128xf32>
    %c0_85 = arith.constant 0 : index
    %c0_86 = arith.constant 0 : index
    %83 = vector.load %arg7[%c0_85, %c0_86] : memref<2x128xf32, #tpu.memory_space<vmem>>, vector<2x128xf32>
    tpu.vector_store %arg7[%c0_85, %c0_86], %82 {strides = array<i32>} : memref<2x128xf32, #tpu.memory_space<vmem>>, vector<2x128xf32>,
    return
  }
  func.func @transform_0(%arg0: i32) -> (i32, i32) {
    %c0_i32 = arith.constant 0 : i32
    %c0_i32_0 = arith.constant 0 : i32
    return %arg0, %c0_i32 : i32, i32
  }
  func.func @transform_1(%arg0: i32) -> (i32, i32, i32) {
    %c0_i32 = arith.constant 0 : i32
    %c0_i32_0 = arith.constant 0 : i32
    %c0_i32_1 = arith.constant 0 : i32
    %c0_i32_2 = arith.constant 0 : i32
    return %c0_i32, %c0_i32_0, %c0_i32_1 : i32, i32, i32
  }
  func.func @transform_2(%arg0: i32) -> (i32, i32) {
    %c0_i32 = arith.constant 0 : i32
    %c0_i32_0 = arith.constant 0 : i32
    %c0_i32_1 = arith.constant 0 : i32
    return %c0_i32, %c0_i32_0 : i32, i32
  }
  func.func @transform_3(%arg0: i32) -> (i32, i32) {
    %c0_i32 = arith.constant 0 : i32
    %c0_i32_0 = arith.constant 0 : i32
    %c0_i32_1 = arith.constant 0 : i32
    return %c0_i32, %c0_i32_0 : i32, i32
  }
  func.func @transform_4(%arg0: i32) -> (i32, i32) {
    %c0_i32 = arith.constant 0 : i32
    %c0_i32_0 = arith.constant 0 : i32
    %c0_i32_1 = arith.constant 0 : i32
    return %c0_i32, %c0_i32_0 : i32, i32
  }
  func.func @transform_5(%arg0: i32) -> (i32, i32) {
    %c0_i32 = arith.constant 0 : i32
    %c0_i32_0 = arith.constant 0 : i32
    %c0_i32_1 = arith.constant 0 : i32
    return %c0_i32, %c0_i32_0 : i32, i32
  }
  func.func @transform_6(%arg0: i32) -> (i32, i32) {
    %c0_i32 = arith.constant 0 : i32
    %c0_i32_0 = arith.constant 0 : i32
    return %arg0, %c0_i32 : i32, i32
  }
}

</mosaic_0001>

<llo_original>
// kernel: tpu_custom_call.1
$region0: #{tpu_custom_call.1}
  #allocation0 [shape = 'u32[]', space=smem, size = 0x4, offset = 0x4, fixed_abs, tag = 'smem constant byte address 0x4 - core index']
  #allocation1 [shape = 'u32[144,128]{1,0:T(1,128)}', space=vmem, size = 0x12000, scoped, tag = 'internal scratch']
  #allocation2 [shape = 'f32[616,128]{1,0:T(8,128)}', space=vmem, size = 0x4d000, scoped, tag = 'scratch operand']
  %s0 = inlined_call_operand.vmem [shape: f32[656,9], index: 0, kind: input, shape index: {}]
  %s1 = inlined_call_operand.vmem [shape: bf16[9,9,128], index: 1, kind: input, shape index: {}]
  %s2 = inlined_call_operand.vmem [shape: f32[1,128], index: 2, kind: input, shape index: {}]
  %s3 = inlined_call_operand.vmem [shape: f32[2,616], index: 3, kind: input, shape index: {}]
  %s4 = inlined_call_operand.vmem [shape: f32[128,128], index: 4, kind: input, shape index: {}]
  %s5 = inlined_call_operand.vmem [shape: f32[1,128], index: 5, kind: input, shape index: {}]
  %s6 = inlined_call_operand.hbm [shape: f32[2,128], index: 6, kind: output, shape index: {}]
  %s7 = sld [smem:[#allocation0]]
  $region34: #{tpu_custom_call.1} parent=0
    _
  %s9 = ssub.s32 1, %s7
  %s10 = scalar_select 0, %s9, %s7
  $region1: #{tpu_custom_call.1} parent=0
    #allocation3 [shape = 'u8[1024]{0}', space=vmem, size = 0x400, scoped, tag = 'output window, operand 0, single buffered']
    #allocation4 [shape = 's32[1]{0}', space=sflag, size = 0x4, scoped, tag = 'scoped memory for tpu_custom_call.1']
    %11 = vsyncpa [#allocation4], 0
    // Predicated region
    $region2: #{tpu_custom_call.1} parent=1 // pred_check
      _
    $region3: #{tpu_custom_call.1} parent=1 // pred_check_branch
      %13 = sbr.rel (0) target = $region5
    $region4: #{tpu_custom_call.1} parent=1 // pred_region
      _
    $region5: #{tpu_custom_call.1} parent=1 // pred_fallthru
      _
    // Predicated region
    $region6: #{tpu_custom_call.1} parent=1 // pred_check
      _
    $region7: #{tpu_custom_call.1} parent=1 // pred_check_branch
      %15 = sbr.rel (0) target = $region9
    $region8: #{tpu_custom_call.1} parent=1 // pred_region
      _
    $region9: #{tpu_custom_call.1} parent=1 // pred_fallthru
      _
    // Predicated region
    $region10: #{tpu_custom_call.1} parent=1 // pred_check
      _
    $region11: #{tpu_custom_call.1} parent=1 // pred_check_branch
      %17 = sbr.rel (0) target = $region13
    $region12: #{tpu_custom_call.1} parent=1 // pred_region
      _
    $region13: #{tpu_custom_call.1} parent=1 // pred_fallthru
      _
    // Predicated region
    $region14: #{tpu_custom_call.1} parent=1 // pred_check
      _
    $region15: #{tpu_custom_call.1} parent=1 // pred_check_branch
      %19 = sbr.rel (0) target = $region17
    $region16: #{tpu_custom_call.1} parent=1 // pred_region
      _
    $region17: #{tpu_custom_call.1} parent=1 // pred_fallthru
      _
    // Predicated region
    $region18: #{tpu_custom_call.1} parent=1 // pred_check
      _
    $region19: #{tpu_custom_call.1} parent=1 // pred_check_branch
      %21 = sbr.rel (0) target = $region21
    $region20: #{tpu_custom_call.1} parent=1 // pred_region
      _
    $region21: #{tpu_custom_call.1} parent=1 // pred_fallthru
      _
    // Predicated region
    $region22: #{tpu_custom_call.1} parent=1 // pred_check
      _
    $region23: #{tpu_custom_call.1} parent=1 // pred_check_branch
      %23 = sbr.rel (0) target = $region25
    $region24: #{tpu_custom_call.1} parent=1 // pred_region
      _
    $region25: #{tpu_custom_call.1} parent=1 // pred_fallthru
      _
    %v25 = vld [vmem:[%s0] sm:$0xff]
    %v26 = vld [vmem:[%s0 + $0x8] sm:$0xff]
    %v27 = vld [vmem:[%s0 + $0x10] sm:$0xff]
    %v28 = vld [vmem:[%s0 + $0x18] sm:$0xff]
    %v29 = vld [vmem:[%s0 + $0x20] sm:$0xff]
    %v30 = vld [vmem:[%s0 + $0x28] sm:$0xff]
    %v31 = vld [vmem:[%s0 + $0x30] sm:$0xff]
    %v32 = vld [vmem:[%s0 + $0x38] sm:$0xff]
    %v33 = vld [vmem:[%s0 + $0x40] sm:$0xff]
    %v34 = vld [vmem:[%s0 + $0x48] sm:$0xff]
    %v35 = vld [vmem:[%s0 + $0x50] sm:$0xff]
    %v36 = vld [vmem:[%s0 + $0x58] sm:$0xff]
    %v37 = vld [vmem:[%s0 + $0x60] sm:$0xff]
    %v38 = vld [vmem:[%s0 + $0x68] sm:$0xff]
    %v39 = vld [vmem:[%s0 + $0x70] sm:$0xff]
    %v40 = vld [vmem:[%s0 + $0x78] sm:$0xff]
    %v41 = vld [vmem:[%s0 + $0x80] sm:$0xff]
    %v42 = vld [vmem:[%s0 + $0x88] sm:$0xff]
    %v43 = vld [vmem:[%s0 + $0x90] sm:$0xff]
    %v44 = vld [vmem:[%s0 + $0x98] sm:$0xff]
    %v45 = vld [vmem:[%s0 + $0xa0] sm:$0xff]
    %v46 = vld [vmem:[%s0 + $0xa8] sm:$0xff]
    %v47 = vld [vmem:[%s0 + $0xb0] sm:$0xff]
    %v48 = vld [vmem:[%s0 + $0xb8] sm:$0xff]
    %v49 = vld [vmem:[%s0 + $0xc0] sm:$0xff]
    %v50 = vld [vmem:[%s0 + $0xc8] sm:$0xff]
    %v51 = vld [vmem:[%s0 + $0xd0] sm:$0xff]
    %v52 = vld [vmem:[%s0 + $0xd8] sm:$0xff]
    %v53 = vld [vmem:[%s0 + $0xe0] sm:$0xff]
    %v54 = vld [vmem:[%s0 + $0xe8] sm:$0xff]
    %v55 = vld [vmem:[%s0 + $0xf0] sm:$0xff]
    %v56 = vld [vmem:[%s0 + $0xf8] sm:$0xff]
    %v57 = vld [vmem:[%s0 + $0x100] sm:$0xff]
    %v58 = vld [vmem:[%s0 + $0x108] sm:$0xff]
    %v59 = vld [vmem:[%s0 + $0x110] sm:$0xff]
    %v60 = vld [vmem:[%s0 + $0x118] sm:$0xff]
    %v61 = vld [vmem:[%s0 + $0x120] sm:$0xff]
    %v62 = vld [vmem:[%s0 + $0x128] sm:$0xff]
    %v63 = vld [vmem:[%s0 + $0x130] sm:$0xff]
    %v64 = vld [vmem:[%s0 + $0x138] sm:$0xff]
    %v65 = vld [vmem:[%s0 + $0x140] sm:$0xff]
    %v66 = vld [vmem:[%s0 + $0x148] sm:$0xff]
    %v67 = vld [vmem:[%s0 + $0x150] sm:$0xff]
    %v68 = vld [vmem:[%s0 + $0x158] sm:$0xff]
    %v69 = vld [vmem:[%s0 + $0x160] sm:$0xff]
    %v70 = vld [vmem:[%s0 + $0x168] sm:$0xff]
    %v71 = vld [vmem:[%s0 + $0x170] sm:$0xff]
    %v72 = vld [vmem:[%s0 + $0x178] sm:$0xff]
    %v73 = vld [vmem:[%s0 + $0x180] sm:$0xff]
    %v74 = vld [vmem:[%s0 + $0x188] sm:$0xff]
    %v75 = vld [vmem:[%s0 + $0x190] sm:$0xff]
    %v76 = vld [vmem:[%s0 + $0x198] sm:$0xff]
    %v77 = vld [vmem:[%s0 + $0x1a0] sm:$0xff]
    %v78 = vld [vmem:[%s0 + $0x1a8] sm:$0xff]
    %v79 = vld [vmem:[%s0 + $0x1b0] sm:$0xff]
    %v80 = vld [vmem:[%s0 + $0x1b8] sm:$0xff]
    %v81 = vld [vmem:[%s0 + $0x1c0] sm:$0xff]
    %v82 = vld [vmem:[%s0 + $0x1c8] sm:$0xff]
    %v83 = vld [vmem:[%s0 + $0x1d0] sm:$0xff]
    %v84 = vld [vmem:[%s0 + $0x1d8] sm:$0xff]
    %v85 = vld [vmem:[%s0 + $0x1e0] sm:$0xff]
    %v86 = vld [vmem:[%s0 + $0x1e8] sm:$0xff]
    %v87 = vld [vmem:[%s0 + $0x1f0] sm:$0xff]
    %v88 = vld [vmem:[%s0 + $0x1f8] sm:$0xff]
    %v89 = vld [vmem:[%s0 + $0x200] sm:$0xff]
    %v90 = vld [vmem:[%s0 + $0x208] sm:$0xff]
    %v91 = vld [vmem:[%s0 + $0x210] sm:$0xff]
    %v92 = vld [vmem:[%s0 + $0x218] sm:$0xff]
    %v93 = vld [vmem:[%s0 + $0x220] sm:$0xff]
    %v94 = vld [vmem:[%s0 + $0x228] sm:$0xff]
    %v95 = vld [vmem:[%s0 + $0x230] sm:$0xff]
    %v96 = vld [vmem:[%s0 + $0x238] sm:$0xff]
    %v97 = vld [vmem:[%s0 + $0x240] sm:$0xff]
    %v98 = vld [vmem:[%s0 + $0x248] sm:$0xff]
    %v99 = vld [vmem:[%s0 + $0x250] sm:$0xff]
    %v100 = vld [vmem:[%s0 + $0x258] sm:$0xff]
    %v101 = vld [vmem:[%s0 + $0x260] sm:$0xff]
    %v102 = vpack.c.bf16 %v26, %v25
    %v103 = vpack.c.bf16 %v28, %v27
    %v104 = vpack.c.bf16 %v30, %v29
    %v105 = vpack.c.bf16 %v32, %v31
    %v106 = vpack.c.bf16 %v34, %v33
    %v107 = vpack.c.bf16 %v36, %v35
    %v108 = vpack.c.bf16 %v38, %v37
    %v109 = vpack.c.bf16 %v40, %v39
    %v110 = vpack.c.bf16 %v42, %v41
    %v111 = vpack.c.bf16 %v44, %v43
    %v112 = vpack.c.bf16 %v46, %v45
    %v113 = vpack.c.bf16 %v48, %v47
    %v114 = vpack.c.bf16 %v50, %v49
    %v115 = vpack.c.bf16 %v52, %v51
    %v116 = vpack.c.bf16 %v54, %v53
    %v117 = vpack.c.bf16 %v56, %v55
    %v118 = vpack.c.bf16 %v58, %v57
    %v119 = vpack.c.bf16 %v60, %v59
    %v120 = vpack.c.bf16 %v62, %v61
    %v121 = vpack.c.bf16 %v64, %v63
    %v122 = vpack.c.bf16 %v66, %v65
    %v123 = vpack.c.bf16 %v68, %v67
    %v124 = vpack.c.bf16 %v70, %v69
    %v125 = vpack.c.bf16 %v72, %v71
    %v126 = vpack.c.bf16 %v74, %v73
    %v127 = vpack.c.bf16 %v76, %v75
    %v128 = vpack.c.bf16 %v78, %v77
    %v129 = vpack.c.bf16 %v80, %v79
    %v130 = vpack.c.bf16 %v82, %v81
    %v131 = vpack.c.bf16 %v84, %v83
    %v132 = vpack.c.bf16 %v86, %v85
    %v133 = vpack.c.bf16 %v88, %v87
    %v134 = vpack.c.bf16 %v90, %v89
    %v135 = vpack.c.bf16 %v92, %v91
    %v136 = vpack.c.bf16 %v94, %v93
    %v137 = vpack.c.bf16 %v96, %v95
    %v138 = vpack.c.bf16 %v98, %v97
    %v139 = vpack.c.bf16 %v100, %v99
    %v140 = vpack.c.bf16 %v101, %v101
    %v141 = vld [vmem:[%s1] sm:$0xf]
    %v142 = vld [vmem:[%s1 + $0x4] sm:$0x1]
    %v145 = vunpack.c.l.b16 %v141
    %v146 = vunpack.c.l.b16 %v142
    %v147 = vpack.c.b16 %v146, %v145
    %vm148 = vcmask 72704
    %v150 = vsel %vm148, %v102, 0
    %v153 = vsel %vm148, %v103, 0
    %v156 = vsel %vm148, %v104, 0
    %v159 = vsel %vm148, %v105, 0
    %v162 = vsel %vm148, %v106, 0
    %v165 = vsel %vm148, %v107, 0
    %v168 = vsel %vm148, %v108, 0
    %v171 = vsel %vm148, %v109, 0
    %v174 = vsel %vm148, %v110, 0
    %v177 = vsel %vm148, %v111, 0
    %v180 = vsel %vm148, %v112, 0
    %v183 = vsel %vm148, %v113, 0
    %v186 = vsel %vm148, %v114, 0
    %v189 = vsel %vm148, %v115, 0
    %v192 = vsel %vm148, %v116, 0
    %v195 = vsel %vm148, %v117, 0
    %v198 = vsel %vm148, %v118, 0
    %v201 = vsel %vm148, %v119, 0
    %v204 = vsel %vm148, %v120, 0
    %v207 = vsel %vm148, %v121, 0
    %v210 = vsel %vm148, %v122, 0
    %v213 = vsel %vm148, %v123, 0
    %v216 = vsel %vm148, %v124, 0
    %v219 = vsel %vm148, %v125, 0
    %v222 = vsel %vm148, %v126, 0
    %v225 = vsel %vm148, %v127, 0
    %v228 = vsel %vm148, %v128, 0
    %v231 = vsel %vm148, %v129, 0
    %v234 = vsel %vm148, %v130, 0
    %v237 = vsel %vm148, %v131, 0
    %v240 = vsel %vm148, %v132, 0
    %v243 = vsel %vm148, %v133, 0
    %v246 = vsel %vm148, %v134, 0
    %v249 = vsel %vm148, %v135, 0
    %v252 = vsel %vm148, %v136, 0
    %v255 = vsel %vm148, %v137, 0
    %v258 = vsel %vm148, %v138, 0
    %v261 = vsel %vm148, %v139, 0
    %v264 = vsel %vm148, %v140, 0
    %vm266 = vcmask 1043456
    %vm267 = vcmask 1044480
    %v268 = vsel %vm266, 4294967295, 65535
    %v269 = vsel %vm267, %v268, 0
    %v271 = vand.u32 %v147, %v269
    %273 = vmatprep.subr.bf16.mxu0 0
    %274 = vmatpush1.bf16.msra.mxu0 %v271
    %275 = vmatprep.subr.bf16.mxu0 0
    %276 = vmatpush1.bf16.msra.mxu0 0
    %277 = vmatprep.subr.bf16.mxu0 0
    %278 = vmatpush1.bf16.msra.mxu0 0
    %279 = vmatprep.subr.bf16.mxu0 0
    %280 = vmatpush1.bf16.msra.mxu0 0
    %281 = vmatprep.subr.bf16.mxu0 0
    %282 = vmatpush1.bf16.msra.mxu0 0
    %283 = vmatprep.subr.bf16.mxu0 0
    %284 = vmatpush1.bf16.msra.mxu0 0
    %285 = vmatprep.subr.bf16.mxu0 0
    %286 = vmatpush1.bf16.msra.mxu0 0
    %287 = vmatprep.subr.bf16.mxu0 0
    %288 = vmatpush1.bf16.msra.mxu0 0
    %289 = vmatprep.subr.bf16.mxu0 0
    %290 = vmatpush1.bf16.msra.mxu0 0
    %291 = vmatprep.subr.bf16.mxu0 0
    %292 = vmatpush1.bf16.msra.mxu0 0
    %293 = vmatprep.subr.bf16.mxu0 0
    %294 = vmatpush1.bf16.msra.mxu0 0
    %295 = vmatprep.subr.bf16.mxu0 0
    %296 = vmatpush1.bf16.msra.mxu0 0
    %297 = vmatprep.subr.bf16.mxu0 0
    %298 = vmatpush1.bf16.msra.mxu0 0
    %299 = vmatprep.subr.bf16.mxu0 0
    %300 = vmatpush1.bf16.msra.mxu0 0
    %301 = vmatprep.subr.bf16.mxu0 0
    %302 = vmatpush1.bf16.msra.mxu0 0
    %303 = vmatprep.subr.bf16.mxu0 0
    %304 = vmatpush1.bf16.msra.mxu0 0
    %305 = vmatprep.mubr.bf16.mxu0 0
    %306 = vmatmul.mubr.bf16.gmra.mrb[0].mxu0 %v150
    %v307 = vpop.f32.mrb[0].mxu0
    %v308 = vadd.f32 0.0, %v307
    %v309 = vpop.f32.mrb[0].mxu0
    %v310 = vpop.f32.mrb[0].mxu0
    %v311 = vadd.f32 0.0, %v310
    %v312 = vpop.f32.mrb[0].mxu0
    %313 = vmatprep.mubr.bf16.mxu0 0
    %314 = vmatmul.mubr.bf16.gmra.mrb[0].mxu0 %v153
    %v315 = vpop.f32.mrb[0].mxu0
    %v316 = vadd.f32 0.0, %v315
    %v317 = vpop.f32.mrb[0].mxu0
    %v318 = vpop.f32.mrb[0].mxu0
    %v319 = vadd.f32 0.0, %v318
    %v320 = vpop.f32.mrb[0].mxu0
    %321 = vmatprep.mubr.bf16.mxu0 0
    %322 = vmatmul.mubr.bf16.gmra.mrb[0].mxu0 %v156
    %v323 = vpop.f32.mrb[0].mxu0
    %v324 = vadd.f32 0.0, %v323
    %v325 = vpop.f32.mrb[0].mxu0
    %v326 = vpop.f32.mrb[0].mxu0
    %v327 = vadd.f32 0.0, %v326
    %v328 = vpop.f32.mrb[0].mxu0
    %329 = vmatprep.mubr.bf16.mxu0 0
    %330 = vmatmul.mubr.bf16.gmra.mrb[0].mxu0 %v159
    %v331 = vpop.f32.mrb[0].mxu0
    %v332 = vadd.f32 0.0, %v331
    %v333 = vpop.f32.mrb[0].mxu0
    %v334 = vpop.f32.mrb[0].mxu0
    %v335 = vadd.f32 0.0, %v334
    %v336 = vpop.f32.mrb[0].mxu0
    %337 = vmatprep.mubr.bf16.mxu0 0
    %338 = vmatmul.mubr.bf16.gmra.mrb[0].mxu0 %v162
    %v339 = vpop.f32.mrb[0].mxu0
    %v340 = vadd.f32 0.0, %v339
    %v341 = vpop.f32.mrb[0].mxu0
    %v342 = vpop.f32.mrb[0].mxu0
    %v343 = vadd.f32 0.0, %v342
    %v344 = vpop.f32.mrb[0].mxu0
    %345 = vmatprep.mubr.bf16.mxu0 0
    %346 = vmatmul.mubr.bf16.gmra.mrb[0].mxu0 %v165
    %v347 = vpop.f32.mrb[0].mxu0
    %v348 = vadd.f32 0.0, %v347
    %v349 = vpop.f32.mrb[0].mxu0
    %v350 = vpop.f32.mrb[0].mxu0
    %v351 = vadd.f32 0.0, %v350
    %v352 = vpop.f32.mrb[0].mxu0
    %353 = vmatprep.mubr.bf16.mxu0 0
    %354 = vmatmul.mubr.bf16.gmra.mrb[0].mxu0 %v168
    %v355 = vpop.f32.mrb[0].mxu0
    %v356 = vadd.f32 0.0, %v355
    %v357 = vpop.f32.mrb[0].mxu0
    %v358 = vpop.f32.mrb[0].mxu0
    %v359 = vadd.f32 0.0, %v358
    %v360 = vpop.f32.mrb[0].mxu0
    %361 = vmatprep.mubr.bf16.mxu0 0
    %362 = vmatmul.mubr.bf16.gmra.mrb[0].mxu0 %v171
    %v363 = vpop.f32.mrb[0].mxu0
    %v364 = vadd.f32 0.0, %v363
    %v365 = vpop.f32.mrb[0].mxu0
    %v366 = vpop.f32.mrb[0].mxu0
    %v367 = vadd.f32 0.0, %v366
    %v368 = vpop.f32.mrb[0].mxu0
    %369 = vmatprep.mubr.bf16.mxu0 0
    %370 = vmatmul.mubr.bf16.gmra.mrb[0].mxu0 %v174
    %v371 = vpop.f32.mrb[0].mxu0
    %v372 = vadd.f32 0.0, %v371
    %v373 = vpop.f32.mrb[0].mxu0
    %v374 = vpop.f32.mrb[0].mxu0
    %v375 = vadd.f32 0.0, %v374
    %v376 = vpop.f32.mrb[0].mxu0
    %377 = vmatprep.mubr.bf16.mxu0 0
    %378 = vmatmul.mubr.bf16.gmra.mrb[0].mxu0 %v177
    %v379 = vpop.f32.mrb[0].mxu0
    %v380 = vadd.f32 0.0, %v379
    %v381 = vpop.f32.mrb[0].mxu0
    %v382 = vpop.f32.mrb[0].mxu0
    %v383 = vadd.f32 0.0, %v382
    %v384 = vpop.f32.mrb[0].mxu0
    %385 = vmatprep.mubr.bf16.mxu0 0
    %386 = vmatmul.mubr.bf16.gmra.mrb[0].mxu0 %v180
    %v387 = vpop.f32.mrb[0].mxu0
    %v388 = vadd.f32 0.0, %v387
    %v389 = vpop.f32.mrb[0].mxu0
    %v390 = vpop.f32.mrb[0].mxu0
    %v391 = vadd.f32 0.0, %v390
    %v392 = vpop.f32.mrb[0].mxu0
    %393 = vmatprep.mubr.bf16.mxu0 0
    %394 = vmatmul.mubr.bf16.gmra.mrb[0].mxu0 %v183
    %v395 = vpop.f32.mrb[0].mxu0
    %v396 = vadd.f32 0.0, %v395
    %v397 = vpop.f32.mrb[0].mxu0
    %v398 = vpop.f32.mrb[0].mxu0
    %v399 = vadd.f32 0.0, %v398
    %v400 = vpop.f32.mrb[0].mxu0
    %401 = vmatprep.mubr.bf16.mxu0 0
    %402 = vmatmul.mubr.bf16.gmra.mrb[0].mxu0 %v186
    %v403 = vpop.f32.mrb[0].mxu0
    %v404 = vadd.f32 0.0, %v403
    %v405 = vpop.f32.mrb[0].mxu0
    %v406 = vpop.f32.mrb[0].mxu0
    %v407 = vadd.f32 0.0, %v406
    %v408 = vpop.f32.mrb[0].mxu0
    %409 = vmatprep.mubr.bf16.mxu0 0
    %410 = vmatmul.mubr.bf16.gmra.mrb[0].mxu0 %v189
    %v411 = vpop.f32.mrb[0].mxu0
    %v412 = vadd.f32 0.0, %v411
    %v413 = vpop.f32.mrb[0].mxu0
    %v414 = vpop.f32.mrb[0].mxu0
    %v415 = vadd.f32 0.0, %v414
    %v416 = vpop.f32.mrb[0].mxu0
    %417 = vmatprep.mubr.bf16.mxu0 0
    %418 = vmatmul.mubr.bf16.gmra.mrb[0].mxu0 %v192
    %v419 = vpop.f32.mrb[0].mxu0
    %v420 = vadd.f32 0.0, %v419
    %v421 = vpop.f32.mrb[0].mxu0
    %v422 = vpop.f32.mrb[0].mxu0
    %v423 = vadd.f32 0.0, %v422
    %v424 = vpop.f32.mrb[0].mxu0
    %425 = vmatprep.mubr.bf16.mxu0 0
    %426 = vmatmul.mubr.bf16.gmra.mrb[0].mxu0 %v195
    %v427 = vpop.f32.mrb[0].mxu0
    %v428 = vadd.f32 0.0, %v427
    %v429 = vpop.f32.mrb[0].mxu0
    %v430 = vpop.f32.mrb[0].mxu0
    %v431 = vadd.f32 0.0, %v430
    %v432 = vpop.f32.mrb[0].mxu0
    %433 = vmatprep.mubr.bf16.mxu0 0
    %434 = vmatmul.mubr.bf16.gmra.mrb[0].mxu0 %v198
    %v435 = vpop.f32.mrb[0].mxu0
    %v436 = vadd.f32 0.0, %v435
    %v437 = vpop.f32.mrb[0].mxu0
    %v438 = vpop.f32.mrb[0].mxu0
    %v439 = vadd.f32 0.0, %v438
    %v440 = vpop.f32.mrb[0].mxu0
    %441 = vmatprep.mubr.bf16.mxu0 0
    %442 = vmatmul.mubr.bf16.gmra.mrb[0].mxu0 %v201
    %v443 = vpop.f32.mrb[0].mxu0
    %v444 = vadd.f32 0.0, %v443
    %v445 = vpop.f32.mrb[0].mxu0
    %v446 = vpop.f32.mrb[0].mxu0
    %v447 = vadd.f32 0.0, %v446
    %v448 = vpop.f32.mrb[0].mxu0
    %449 = vmatprep.mubr.bf16.mxu0 0
    %450 = vmatmul.mubr.bf16.gmra.mrb[0].mxu0 %v204
    %v451 = vpop.f32.mrb[0].mxu0
    %v452 = vadd.f32 0.0, %v451
    %v453 = vpop.f32.mrb[0].mxu0
    %v454 = vpop.f32.mrb[0].mxu0
    %v455 = vadd.f32 0.0, %v454
    %v456 = vpop.f32.mrb[0].mxu0
    %457 = vmatprep.mubr.bf16.mxu0 0
    %458 = vmatmul.mubr.bf16.gmra.mrb[0].mxu0 %v207
    %v459 = vpop.f32.mrb[0].mxu0
    %v460 = vadd.f32 0.0, %v459
    %v461 = vpop.f32.mrb[0].mxu0
    %v462 = vpop.f32.mrb[0].mxu0
    %v463 = vadd.f32 0.0, %v462
    %v464 = vpop.f32.mrb[0].mxu0
    %465 = vmatprep.mubr.bf16.mxu0 0
    %466 = vmatmul.mubr.bf16.gmra.mrb[0].mxu0 %v210
    %v467 = vpop.f32.mrb[0].mxu0
    %v468 = vadd.f32 0.0, %v467
    %v469 = vpop.f32.mrb[0].mxu0
    %v470 = vpop.f32.mrb[0].mxu0
    %v471 = vadd.f32 0.0, %v470
    %v472 = vpop.f32.mrb[0].mxu0
    %473 = vmatprep.mubr.bf16.mxu0 0
    %474 = vmatmul.mubr.bf16.gmra.mrb[0].mxu0 %v213
    %v475 = vpop.f32.mrb[0].mxu0
    %v476 = vadd.f32 0.0, %v475
    %v477 = vpop.f32.mrb[0].mxu0
    %v478 = vpop.f32.mrb[0].mxu0
    %v479 = vadd.f32 0.0, %v478
    %v480 = vpop.f32.mrb[0].mxu0
    %481 = vmatprep.mubr.bf16.mxu0 0
    %482 = vmatmul.mubr.bf16.gmra.mrb[0].mxu0 %v216
    %v483 = vpop.f32.mrb[0].mxu0
    %v484 = vadd.f32 0.0, %v483
    %v485 = vpop.f32.mrb[0].mxu0
    %v486 = vpop.f32.mrb[0].mxu0
    %v487 = vadd.f32 0.0, %v486
    %v488 = vpop.f32.mrb[0].mxu0
    %489 = vmatprep.mubr.bf16.mxu0 0
    %490 = vmatmul.mubr.bf16.gmra.mrb[0].mxu0 %v219
    %v491 = vpop.f32.mrb[0].mxu0
    %v492 = vadd.f32 0.0, %v491
    %v493 = vpop.f32.mrb[0].mxu0
    %v494 = vpop.f32.mrb[0].mxu0
    %v495 = vadd.f32 0.0, %v494
    %v496 = vpop.f32.mrb[0].mxu0
    %497 = vmatprep.mubr.bf16.mxu0 0
    %498 = vmatmul.mubr.bf16.gmra.mrb[0].mxu0 %v222
    %v499 = vpop.f32.mrb[0].mxu0
    %v500 = vadd.f32 0.0, %v499
    %v501 = vpop.f32.mrb[0].mxu0
    %v502 = vpop.f32.mrb[0].mxu0
    %v503 = vadd.f32 0.0, %v502
    %v504 = vpop.f32.mrb[0].mxu0
    %505 = vmatprep.mubr.bf16.mxu0 0
    %506 = vmatmul.mubr.bf16.gmra.mrb[0].mxu0 %v225
    %v507 = vpop.f32.mrb[0].mxu0
    %v508 = vadd.f32 0.0, %v507
    %v509 = vpop.f32.mrb[0].mxu0
    %v510 = vpop.f32.mrb[0].mxu0
    %v511 = vadd.f32 0.0, %v510
    %v512 = vpop.f32.mrb[0].mxu0
    %513 = vmatprep.mubr.bf16.mxu0 0
    %514 = vmatmul.mubr.bf16.gmra.mrb[0].mxu0 %v228
    %v515 = vpop.f32.mrb[0].mxu0
    %v516 = vadd.f32 0.0, %v515
    %v517 = vpop.f32.mrb[0].mxu0
    %v518 = vpop.f32.mrb[0].mxu0
    %v519 = vadd.f32 0.0, %v518
    %v520 = vpop.f32.mrb[0].mxu0
    %521 = vmatprep.mubr.bf16.mxu0 0
    %522 = vmatmul.mubr.bf16.gmra.mrb[0].mxu0 %v231
    %v523 = vpop.f32.mrb[0].mxu0
    %v524 = vadd.f32 0.0, %v523
    %v525 = vpop.f32.mrb[0].mxu0
    %v526 = vpop.f32.mrb[0].mxu0
    %v527 = vadd.f32 0.0, %v526
    %v528 = vpop.f32.mrb[0].mxu0
    %529 = vmatprep.mubr.bf16.mxu0 0
    %530 = vmatmul.mubr.bf16.gmra.mrb[0].mxu0 %v234
    %v531 = vpop.f32.mrb[0].mxu0
    %v532 = vadd.f32 0.0, %v531
    %v533 = vpop.f32.mrb[0].mxu0
    %v534 = vpop.f32.mrb[0].mxu0
    %v535 = vadd.f32 0.0, %v534
    %v536 = vpop.f32.mrb[0].mxu0
    %537 = vmatprep.mubr.bf16.mxu0 0
    %538 = vmatmul.mubr.bf16.gmra.mrb[0].mxu0 %v237
    %v539 = vpop.f32.mrb[0].mxu0
    %v540 = vadd.f32 0.0, %v539
    %v541 = vpop.f32.mrb[0].mxu0
    %v542 = vpop.f32.mrb[0].mxu0
    %v543 = vadd.f32 0.0, %v542
    %v544 = vpop.f32.mrb[0].mxu0
    %545 = vmatprep.mubr.bf16.mxu0 0
    %546 = vmatmul.mubr.bf16.gmra.mrb[0].mxu0 %v240
    %v547 = vpop.f32.mrb[0].mxu0
    %v548 = vadd.f32 0.0, %v547
    %v549 = vpop.f32.mrb[0].mxu0
    %v550 = vpop.f32.mrb[0].mxu0
    %v551 = vadd.f32 0.0, %v550
    %v552 = vpop.f32.mrb[0].mxu0
    %553 = vmatprep.mubr.bf16.mxu0 0
    %554 = vmatmul.mubr.bf16.gmra.mrb[0].mxu0 %v243
    %v555 = vpop.f32.mrb[0].mxu0
    %v556 = vadd.f32 0.0, %v555
    %v557 = vpop.f32.mrb[0].mxu0
    %v558 = vpop.f32.mrb[0].mxu0
    %v559 = vadd.f32 0.0, %v558
    %v560 = vpop.f32.mrb[0].mxu0
    %561 = vmatprep.mubr.bf16.mxu0 0
    %562 = vmatmul.mubr.bf16.gmra.mrb[0].mxu0 %v246
    %v563 = vpop.f32.mrb[0].mxu0
    %v564 = vadd.f32 0.0, %v563
    %v565 = vpop.f32.mrb[0].mxu0
    %v566 = vpop.f32.mrb[0].mxu0
    %v567 = vadd.f32 0.0, %v566
    %v568 = vpop.f32.mrb[0].mxu0
    %569 = vmatprep.mubr.bf16.mxu0 0
    %570 = vmatmul.mubr.bf16.gmra.mrb[0].mxu0 %v249
    %v571 = vpop.f32.mrb[0].mxu0
    %v572 = vadd.f32 0.0, %v571
    %v573 = vpop.f32.mrb[0].mxu0
    %v574 = vpop.f32.mrb[0].mxu0
    %v575 = vadd.f32 0.0, %v574
    %v576 = vpop.f32.mrb[0].mxu0
    %577 = vmatprep.mubr.bf16.mxu0 0
    %578 = vmatmul.mubr.bf16.gmra.mrb[0].mxu0 %v252
    %v579 = vpop.f32.mrb[0].mxu0
    %v580 = vadd.f32 0.0, %v579
    %v581 = vpop.f32.mrb[0].mxu0
    %v582 = vpop.f32.mrb[0].mxu0
    %v583 = vadd.f32 0.0, %v582
    %v584 = vpop.f32.mrb[0].mxu0
    %585 = vmatprep.mubr.bf16.mxu0 0
    %586 = vmatmul.mubr.bf16.gmra.mrb[0].mxu0 %v255
    %v587 = vpop.f32.mrb[0].mxu0
    %v588 = vadd.f32 0.0, %v587
    %v589 = vpop.f32.mrb[0].mxu0
    %v590 = vpop.f32.mrb[0].mxu0
    %v591 = vadd.f32 0.0, %v590
    %v592 = vpop.f32.mrb[0].mxu0
    %593 = vmatprep.mubr.bf16.mxu0 0
    %594 = vmatmul.mubr.bf16.gmra.mrb[0].mxu0 %v258
    %v595 = vpop.f32.mrb[0].mxu0
    %v596 = vadd.f32 0.0, %v595
    %v597 = vpop.f32.mrb[0].mxu0
    %v598 = vpop.f32.mrb[0].mxu0
    %v599 = vadd.f32 0.0, %v598
    %v600 = vpop.f32.mrb[0].mxu0
    %601 = vmatprep.mubr.bf16.mxu0 0
    %602 = vmatmul.mubr.bf16.gmra.mrb[0].mxu0 %v261
    %v603 = vpop.f32.mrb[0].mxu0
    %v604 = vadd.f32 0.0, %v603
    %v605 = vpop.f32.mrb[0].mxu0
    %v606 = vpop.f32.mrb[0].mxu0
    %v607 = vadd.f32 0.0, %v606
    %v608 = vpop.f32.mrb[0].mxu0
    %609 = vmatprep.mubr.bf16.mxu0 0
    %610 = vmatmul.mubr.bf16.gmra.mrb[0].mxu0 %v264
    %v611 = vpop.f32.mrb[0].mxu0
    %v612 = vadd.f32 0.0, %v611
    %v613 = vpop.f32.mrb[0].mxu0
    %v614 = vpop.f32.mrb[0].mxu0
    %v615 = vpop.f32.mrb[0].mxu0
    %616 = vdwg.mxu0
    %617 = vst [vmem:[#allocation2] sm:$0xff] %v308
    %618 = vst [vmem:[#allocation2 + $0x8] sm:$0xff] %v311
    %619 = vst [vmem:[#allocation2 + $0x10] sm:$0xff] %v316
    %620 = vst [vmem:[#allocation2 + $0x18] sm:$0xff] %v319
    %621 = vst [vmem:[#allocation2 + $0x20] sm:$0xff] %v324
    %622 = vst [vmem:[#allocation2 + $0x28] sm:$0xff] %v327
    %623 = vst [vmem:[#allocation2 + $0x30] sm:$0xff] %v332
    %624 = vst [vmem:[#allocation2 + $0x38] sm:$0xff] %v335
    %625 = vst [vmem:[#allocation2 + $0x40] sm:$0xff] %v340
    %626 = vst [vmem:[#allocation2 + $0x48] sm:$0xff] %v343
    %627 = vst [vmem:[#allocation2 + $0x50] sm:$0xff] %v348
    %628 = vst [vmem:[#allocation2 + $0x58] sm:$0xff] %v351
    %629 = vst [vmem:[#allocation2 + $0x60] sm:$0xff] %v356
    %630 = vst [vmem:[#allocation2 + $0x68] sm:$0xff] %v359
    %631 = vst [vmem:[#allocation2 + $0x70] sm:$0xff] %v364
    %632 = vst [vmem:[#allocation2 + $0x78] sm:$0xff] %v367
    %633 = vst [vmem:[#allocation2 + $0x80] sm:$0xff] %v372
    %634 = vst [vmem:[#allocation2 + $0x88] sm:$0xff] %v375
    %635 = vst [vmem:[#allocation2 + $0x90] sm:$0xff] %v380
    %636 = vst [vmem:[#allocation2 + $0x98] sm:$0xff] %v383
    %637 = vst [vmem:[#allocation2 + $0xa0] sm:$0xff] %v388
    %638 = vst [vmem:[#allocation2 + $0xa8] sm:$0xff] %v391
    %639 = vst [vmem:[#allocation2 + $0xb0] sm:$0xff] %v396
    %640 = vst [vmem:[#allocation2 + $0xb8] sm:$0xff] %v399
    %641 = vst [vmem:[#allocation2 + $0xc0] sm:$0xff] %v404
    %642 = vst [vmem:[#allocation2 + $0xc8] sm:$0xff] %v407
    %643 = vst [vmem:[#allocation2 + $0xd0] sm:$0xff] %v412
    %644 = vst [vmem:[#allocation2 + $0xd8] sm:$0xff] %v415
    %645 = vst [vmem:[#allocation2 + $0xe0] sm:$0xff] %v420
    %646 = vst [vmem:[#allocation2 + $0xe8] sm:$0xff] %v423
    %647 = vst [vmem:[#allocation2 + $0xf0] sm:$0xff] %v428
    %648 = vst [vmem:[#allocation2 + $0xf8] sm:$0xff] %v431
    %649 = vst [vmem:[#allocation2 + $0x100] sm:$0xff] %v436
    %650 = vst [vmem:[#allocation2 + $0x108] sm:$0xff] %v439
    %651 = vst [vmem:[#allocation2 + $0x110] sm:$0xff] %v444
    %652 = vst [vmem:[#allocation2 + $0x118] sm:$0xff] %v447
    %653 = vst [vmem:[#allocation2 + $0x120] sm:$0xff] %v452
    %654 = vst [vmem:[#allocation2 + $0x128] sm:$0xff] %v455
    %655 = vst [vmem:[#allocation2 + $0x130] sm:$0xff] %v460
    %656 = vst [vmem:[#allocation2 + $0x138] sm:$0xff] %v463
    %657 = vst [vmem:[#allocation2 + $0x140] sm:$0xff] %v468
    %658 = vst [vmem:[#allocation2 + $0x148] sm:$0xff] %v471
    %659 = vst [vmem:[#allocation2 + $0x150] sm:$0xff] %v476
    %660 = vst [vmem:[#allocation2 + $0x158] sm:$0xff] %v479
    %661 = vst [vmem:[#allocation2 + $0x160] sm:$0xff] %v484
    %662 = vst [vmem:[#allocation2 + $0x168] sm:$0xff] %v487
    %663 = vst [vmem:[#allocation2 + $0x170] sm:$0xff] %v492
    %664 = vst [vmem:[#allocation2 + $0x178] sm:$0xff] %v495
    %665 = vst [vmem:[#allocation2 + $0x180] sm:$0xff] %v500
    %666 = vst [vmem:[#allocation2 + $0x188] sm:$0xff] %v503
    %667 = vst [vmem:[#allocation2 + $0x190] sm:$0xff] %v508
    %668 = vst [vmem:[#allocation2 + $0x198] sm:$0xff] %v511
    %669 = vst [vmem:[#allocation2 + $0x1a0] sm:$0xff] %v516
    %670 = vst [vmem:[#allocation2 + $0x1a8] sm:$0xff] %v519
    %671 = vst [vmem:[#allocation2 + $0x1b0] sm:$0xff] %v524
    %672 = vst [vmem:[#allocation2 + $0x1b8] sm:$0xff] %v527
    %673 = vst [vmem:[#allocation2 + $0x1c0] sm:$0xff] %v532
    %674 = vst [vmem:[#allocation2 + $0x1c8] sm:$0xff] %v535
    %675 = vst [vmem:[#allocation2 + $0x1d0] sm:$0xff] %v540
    %676 = vst [vmem:[#allocation2 + $0x1d8] sm:$0xff] %v543
    %677 = vst [vmem:[#allocation2 + $0x1e0] sm:$0xff] %v548
    %678 = vst [vmem:[#allocation2 + $0x1e8] sm:$0xff] %v551
    %679 = vst [vmem:[#allocation2 + $0x1f0] sm:$0xff] %v556
    %680 = vst [vmem:[#allocation2 + $0x1f8] sm:$0xff] %v559
    %681 = vst [vmem:[#allocation2 + $0x200] sm:$0xff] %v564
    %682 = vst [vmem:[#allocation2 + $0x208] sm:$0xff] %v567
    %683 = vst [vmem:[#allocation2 + $0x210] sm:$0xff] %v572
    %684 = vst [vmem:[#allocation2 + $0x218] sm:$0xff] %v575
    %685 = vst [vmem:[#allocation2 + $0x220] sm:$0xff] %v580
    %686 = vst [vmem:[#allocation2 + $0x228] sm:$0xff] %v583
    %687 = vst [vmem:[#allocation2 + $0x230] sm:$0xff] %v588
    %688 = vst [vmem:[#allocation2 + $0x238] sm:$0xff] %v591
    %689 = vst [vmem:[#allocation2 + $0x240] sm:$0xff] %v596
    %690 = vst [vmem:[#allocation2 + $0x248] sm:$0xff] %v599
    %691 = vst [vmem:[#allocation2 + $0x250] sm:$0xff] %v604
    %692 = vst [vmem:[#allocation2 + $0x258] sm:$0xff] %v607
    %693 = vst [vmem:[#allocation2 + $0x260] sm:$0xff] %v612
    %v694 = vld [vmem:[%s0 + $0x1] sm:$0xff]
    %v695 = vld [vmem:[%s0 + $0x9] sm:$0xff]
    %v696 = vld [vmem:[%s0 + $0x11] sm:$0xff]
    %v697 = vld [vmem:[%s0 + $0x19] sm:$0xff]
    %v698 = vld [vmem:[%s0 + $0x21] sm:$0xff]
    %v699 = vld [vmem:[%s0 + $0x29] sm:$0xff]
    %v700 = vld [vmem:[%s0 + $0x31] sm:$0xff]
    %v701 = vld [vmem:[%s0 + $0x39] sm:$0xff]
    %v702 = vld [vmem:[%s0 + $0x41] sm:$0xff]
    %v703 = vld [vmem:[%s0 + $0x49] sm:$0xff]
    %v704 = vld [vmem:[%s0 + $0x51] sm:$0xff]
    %v705 = vld [vmem:[%s0 + $0x59] sm:$0xff]
    %v706 = vld [vmem:[%s0 + $0x61] sm:$0xff]
    %v707 = vld [vmem:[%s0 + $0x69] sm:$0xff]
    %v708 = vld [vmem:[%s0 + $0x71] sm:$0xff]
    %v709 = vld [vmem:[%s0 + $0x79] sm:$0xff]
    %v710 = vld [vmem:[%s0 + $0x81] sm:$0xff]
    %v711 = vld [vmem:[%s0 + $0x89] sm:$0xff]
    %v712 = vld [vmem:[%s0 + $0x91] sm:$0xff]
    %v713 = vld [vmem:[%s0 + $0x99] sm:$0xff]
    %v714 = vld [vmem:[%s0 + $0xa1] sm:$0xff]
    %v715 = vld [vmem:[%s0 + $0xa9] sm:$0xff]
    %v716 = vld [vmem:[%s0 + $0xb1] sm:$0xff]
    %v717 = vld [vmem:[%s0 + $0xb9] sm:$0xff]
    %v718 = vld [vmem:[%s0 + $0xc1] sm:$0xff]
    %v719 = vld [vmem:[%s0 + $0xc9] sm:$0xff]
    %v720 = vld [vmem:[%s0 + $0xd1] sm:$0xff]
    %v721 = vld [vmem:[%s0 + $0xd9] sm:$0xff]
    %v722 = vld [vmem:[%s0 + $0xe1] sm:$0xff]
    %v723 = vld [vmem:[%s0 + $0xe9] sm:$0xff]
    %v724 = vld [vmem:[%s0 + $0xf1] sm:$0xff]
    %v725 = vld [vmem:[%s0 + $0xf9] sm:$0xff]
    %v726 = vld [vmem:[%s0 + $0x101] sm:$0xff]
    %v727 = vld [vmem:[%s0 + $0x109] sm:$0xff]
    %v728 = vld [vmem:[%s0 + $0x111] sm:$0xff]
    %v729 = vld [vmem:[%s0 + $0x119] sm:$0xff]
    %v730 = vld [vmem:[%s0 + $0x121] sm:$0xff]
    %v731 = vld [vmem:[%s0 + $0x129] sm:$0xff]
    %v732 = vld [vmem:[%s0 + $0x131] sm:$0xff]
    %v733 = vld [vmem:[%s0 + $0x139] sm:$0xff]
    %v734 = vld [vmem:[%s0 + $0x141] sm:$0xff]
    %v735 = vld [vmem:[%s0 + $0x149] sm:$0xff]
    %v736 = vld [vmem:[%s0 + $0x151] sm:$0xff]
    %v737 = vld [vmem:[%s0 + $0x159] sm:$0xff]
    %v738 = vld [vmem:[%s0 + $0x161] sm:$0xff]
    %v739 = vld [vmem:[%s0 + $0x169] sm:$0xff]
    %v740 = vld [vmem:[%s0 + $0x171] sm:$0xff]
    %v741 = vld [vmem:[%s0 + $0x179] sm:$0xff]
    %v742 = vld [vmem:[%s0 + $0x181] sm:$0xff]
    %v743 = vld [vmem:[%s0 + $0x189] sm:$0xff]
    %v744 = vld [vmem:[%s0 + $0x191] sm:$0xff]
    %v745 = vld [vmem:[%s0 + $0x199] sm:$0xff]
    %v746 = vld [vmem:[%s0 + $0x1a1] sm:$0xff]
    %v747 = vld [vmem:[%s0 + $0x1a9] sm:$0xff]
    %v748 = vld [vmem:[%s0 + $0x1b1] sm:$0xff]
    %v749 = vld [vmem:[%s0 + $0x1b9] sm:$0xff]
    %v750 = vld [vmem:[%s0 + $0x1c1] sm:$0xff]
    %v751 = vld [vmem:[%s0 + $0x1c9] sm:$0xff]
    %v752 = vld [vmem:[%s0 + $0x1d1] sm:$0xff]
    %v753 = vld [vmem:[%s0 + $0x1d9] sm:$0xff]
    %v754 = vld [vmem:[%s0 + $0x1e1] sm:$0xff]
    %v755 = vld [vmem:[%s0 + $0x1e9] sm:$0xff]
    %v756 = vld [vmem:[%s0 + $0x1f1] sm:$0xff]
    %v757 = vld [vmem:[%s0 + $0x1f9] sm:$0xff]
    %v758 = vld [vmem:[%s0 + $0x201] sm:$0xff]
    %v759 = vld [vmem:[%s0 + $0x209] sm:$0xff]
    %v760 = vld [vmem:[%s0 + $0x211] sm:$0xff]
    %v761 = vld [vmem:[%s0 + $0x219] sm:$0xff]
    %v762 = vld [vmem:[%s0 + $0x221] sm:$0xff]
    %v763 = vld [vmem:[%s0 + $0x229] sm:$0xff]
    %v764 = vld [vmem:[%s0 + $0x231] sm:$0xff]
    %v765 = vld [vmem:[%s0 + $0x239] sm:$0xff]
    %v766 = vld [vmem:[%s0 + $0x241] sm:$0xff]
    %v767 = vld [vmem:[%s0 + $0x249] sm:$0xff]
    %v768 = vld [vmem:[%s0 + $0x251] sm:$0xff]
    %v769 = vld [vmem:[%s0 + $0x259] sm:$0xff]
    %v770 = vld [vmem:[%s0 + $0x261] sm:$0xff]
    %v771 = vpack.c.bf16 %v695, %v694
    %v772 = vpack.c.bf16 %v697, %v696
    %v773 = vpack.c.bf16 %v699, %v698
    %v774 = vpack.c.bf16 %v701, %v700
    %v775 = vpack.c.bf16 %v703, %v702
    %v776 = vpack.c.bf16 %v705, %v704
    %v777 = vpack.c.bf16 %v707, %v706
    %v778 = vpack.c.bf16 %v709, %v708
    %v779 = vpack.c.bf16 %v711, %v710
    %v780 = vpack.c.bf16 %v713, %v712
    %v781 = vpack.c.bf16 %v715, %v714
    %v782 = vpack.c.bf16 %v717, %v716
    %v783 = vpack.c.bf16 %v719, %v718
    %v784 = vpack.c.bf16 %v721, %v720
    %v785 = vpack.c.bf16 %v723, %v722
    %v786 = vpack.c.bf16 %v725, %v724
    %v787 = vpack.c.bf16 %v727, %v726
    %v788 = vpack.c.bf16 %v729, %v728
    %v789 = vpack.c.bf16 %v731, %v730
    %v790 = vpack.c.bf16 %v733, %v732
    %v791 = vpack.c.bf16 %v735, %v734
    %v792 = vpack.c.bf16 %v737, %v736
    %v793 = vpack.c.bf16 %v739, %v738
    %v794 = vpack.c.bf16 %v741, %v740
    %v795 = vpack.c.bf16 %v743, %v742
    %v796 = vpack.c.bf16 %v745, %v744
    %v797 = vpack.c.bf16 %v747, %v746
    %v798 = vpack.c.bf16 %v749, %v748
    %v799 = vpack.c.bf16 %v751, %v750
    %v800 = vpack.c.bf16 %v753, %v752
    %v801 = vpack.c.bf16 %v755, %v754
    %v802 = vpack.c.bf16 %v757, %v756
    %v803 = vpack.c.bf16 %v759, %v758
    %v804 = vpack.c.bf16 %v761, %v760
    %v805 = vpack.c.bf16 %v763, %v762
    %v806 = vpack.c.bf16 %v765, %v764
    %v807 = vpack.c.bf16 %v767, %v766
    %v808 = vpack.c.bf16 %v769, %v768
    %v809 = vpack.c.bf16 %v770, %v770
    %s810 = scalar_lea.vmem %s1, 8
    %v811 = vld [vmem:[%s810] sm:$0xf]
    %v812 = vld [vmem:[%s810 + $0x4] sm:$0x1]
    %v815 = vunpack.c.l.b16 %v811
    %v816 = vunpack.c.l.b16 %v812
    %v817 = vpack.c.b16 %v816, %v815
    %v819 = vsel %vm148, %v771, 0
    %v822 = vsel %vm148, %v772, 0
    %v825 = vsel %vm148, %v773, 0
    %v828 = vsel %vm148, %v774, 0
    %v831 = vsel %vm148, %v775, 0
    %v834 = vsel %vm148, %v776, 0
    %v837 = vsel %vm148, %v777, 0
    %v840 = vsel %vm148, %v778, 0
    %v843 = vsel %vm148, %v779, 0
    %v846 = vsel %vm148, %v780, 0
    %v849 = vsel %vm148, %v781, 0
    %v852 = vsel %vm148, %v782, 0
    %v855 = vsel %vm148, %v783, 0
    %v858 = vsel %vm148, %v784, 0
    %v861 = vsel %vm148, %v785, 0
    %v864 = vsel %vm148, %v786, 0
    %v867 = vsel %vm148, %v787, 0
    %v870 = vsel %vm148, %v788, 0
    %v873 = vsel %vm148, %v789, 0
    %v876 = vsel %vm148, %v790, 0
    %v879 = vsel %vm148, %v791, 0
    %v882 = vsel %vm148, %v792, 0
    %v885 = vsel %vm148, %v793, 0
    %v888 = vsel %vm148, %v794, 0
    %v891 = vsel %vm148, %v795, 0
    %v894 = vsel %vm148, %v796, 0
    %v897 = vsel %vm148, %v797, 0
    %v900 = vsel %vm148, %v798, 0
    %v903 = vsel %vm148, %v799, 0
    %v906 = vsel %vm148, %v800, 0
    %v909 = vsel %vm148, %v801, 0
    %v912 = vsel %vm148, %v802, 0
    %v915 = vsel %vm148, %v803, 0
    %v918 = vsel %vm148, %v804, 0
    %v921 = vsel %vm148, %v805, 0
    %v924 = vsel %vm148, %v806, 0
    %v927 = vsel %vm148, %v807, 0
    %v930 = vsel %vm148, %v808, 0
    %v933 = vsel %vm148, %v809, 0
    %v936 = vand.u32 %v817, %v269
    %938 = vmatprep.subr.bf16.mxu0 0
    %939 = vmatpush1.bf16.msra.mxu0 %v936
    %940 = vmatprep.subr.bf16.mxu0 0
    %941 = vmatpush1.bf16.msra.mxu0 0
    %942 = vmatprep.subr.bf16.mxu0 0
    %943 = vmatpush1.bf16.msra.mxu0 0
    %944 = vmatprep.subr.bf16.mxu0 0
    %945 = vmatpush1.bf16.msra.mxu0 0
    %946 = vmatprep.subr.bf16.mxu0 0
    %947 = vmatpush1.bf16.msra.mxu0 0
    %948 = vmatprep.subr.bf16.mxu0 0
    %949 = vmatpush1.bf16.msra.mxu0 0
    %950 = vmatprep.subr.bf16.mxu0 0
    %951 = vmatpush1.bf16.msra.mxu0 0
    %952 = vmatprep.subr.bf16.mxu0 0
    %953 = vmatpush1.bf16.msra.mxu0 0
    %954 = vmatprep.subr.bf16.mxu0 0
    %955 = vmatpush1.bf16.msra.mxu0 0
    %956 = vmatprep.subr.bf16.mxu0 0
    %957 = vmatpush1.bf16.msra.mxu0 0
    %958 = vmatprep.subr.bf16.mxu0 0
    %959 = vmatpush1.bf16.msra.mxu0 0
    %960 = vmatprep.subr.bf16.mxu0 0
    %961 = vmatpush1.bf16.msra.mxu0 0
    %962 = vmatprep.subr.bf16.mxu0 0
    %963 = vmatpush1.bf16.msra.mxu0 0
    %964 = vmatprep.subr.bf16.mxu0 0
    %965 = vmatpush1.bf16.msra.mxu0 0
    %966 = vmatprep.subr.bf16.mxu0 0
    %967 = vmatpush1.bf16.msra.mxu0 0
    %968 = vmatprep.subr.bf16.mxu0 0
    %969 = vmatpush1.bf16.msra.mxu0 0
    %970 = vmatprep.mubr.bf16.mxu0 0
    %971 = vmatmul.mubr.bf16.gmra.mrb[0].mxu0 %v819
    %v972 = vpop.f32.mrb[0].mxu0
    %v973 = vadd.f32 0.0, %v972
    %v974 = vpop.f32.mrb[0].mxu0
    %v975 = vpop.f32.mrb[0].mxu0
    %v976 = vadd.f32 0.0, %v975
    %v977 = vpop.f32.mrb[0].mxu0
    %978 = vmatprep.mubr.bf16.mxu0 0
    %979 = vmatmul.mubr.bf16.gmra.mrb[0].mxu0 %v822
    %v980 = vpop.f32.mrb[0].mxu0
    %v981 = vadd.f32 0.0, %v980
    %v982 = vpop.f32.mrb[0].mxu0
    %v983 = vpop.f32.mrb[0].mxu0
    %v984 = vadd.f32 0.0, %v983
    %v985 = vpop.f32.mrb[0].mxu0
    %986 = vmatprep.mubr.bf16.mxu0 0
    %987 = vmatmul.mubr.bf16.gmra.mrb[0].mxu0 %v825
    %v988 = vpop.f32.mrb[0].mxu0
    %v989 = vadd.f32 0.0, %v988
    %v990 = vpop.f32.mrb[0].mxu0
    %v991 = vpop.f32.mrb[0].mxu0
    %v992 = vadd.f32 0.0, %v991
    %v993 = vpop.f32.mrb[0].mxu0
    %994 = vmatprep.mubr.bf16.mxu0 0
    %995 = vmatmul.mubr.bf16.gmra.mrb[0].mxu0 %v828
    %v996 = vpop.f32.mrb[0].mxu0
    %v997 = vadd.f32 0.0, %v996
    %v998 = vpop.f32.mrb[0].mxu0
    %v999 = vpop.f32.mrb[0].mxu0
    %v1000 = vadd.f32 0.0, %v999
    %v1001 = vpop.f32.mrb[0].mxu0
    %1002 = vmatprep.mubr.bf16.mxu0 0
    %1003 = vmatmul.mubr.bf16.gmra.mrb[0].mxu0 %v831
    %v1004 = vpop.f32.mrb[0].mxu0
    %v1005 = vadd.f32 0.0, %v1004
    %v1006 = vpop.f32.mrb[0].mxu0
    %v1007 = vpop.f32.mrb[0].mxu0
    %v1008 = vadd.f32 0.0, %v1007
    %v1009 = vpop.f32.mrb[0].mxu0
    %1010 = vmatprep.mubr.bf16.mxu0 0
    %1011 = vmatmul.mubr.bf16.gmra.mrb[0].mxu0 %v834
    %v1012 = vpop.f32.mrb[0].mxu0
    %v1013 = vadd.f32 0.0, %v1012
    %v1014 = vpop.f32.mrb[0].mxu0
    %v1015 = vpop.f32.mrb[0].mxu0
    %v1016 = vadd.f32 0.0, %v1015
    %v1017 = vpop.f32.mrb[0].mxu0
    %1018 = vmatprep.mubr.bf16.mxu0 0
    %1019 = vmatmul.mubr.bf16.gmra.mrb[0].mxu0 %v837
    %v1020 = vpop.f32.mrb[0].mxu0
    %v1021 = vadd.f32 0.0, %v1020
    %v1022 = vpop.f32.mrb[0].mxu0
    %v1023 = vpop.f32.mrb[0].mxu0
    %v1024 = vadd.f32 0.0, %v1023
    %v1025 = vpop.f32.mrb[0].mxu0
    %1026 = vmatprep.mubr.bf16.mxu0 0
    %1027 = vmatmul.mubr.bf16.gmra.mrb[0].mxu0 %v840
    %v1028 = vpop.f32.mrb[0].mxu0
    %v1029 = vadd.f32 0.0, %v1028
    %v1030 = vpop.f32.mrb[0].mxu0
    %v1031 = vpop.f32.mrb[0].mxu0
    %v1032 = vadd.f32 0.0, %v1031
    %v1033 = vpop.f32.mrb[0].mxu0
    %1034 = vmatprep.mubr.bf16.mxu0 0
    %1035 = vmatmul.mubr.bf16.gmra.mrb[0].mxu0 %v843
    %v1036 = vpop.f32.mrb[0].mxu0
    %v1037 = vadd.f32 0.0, %v1036
    %v1038 = vpop.f32.mrb[0].mxu0
    %v1039 = vpop.f32.mrb[0].mxu0
    %v1040 = vadd.f32 0.0, %v1039
    %v1041 = vpop.f32.mrb[0].mxu0
    %1042 = vmatprep.mubr.bf16.mxu0 0
    %1043 = vmatmul.mubr.bf16.gmra.mrb[0].mxu0 %v846
    %v1044 = vpop.f32.mrb[0].mxu0
    %v1045 = vadd.f32 0.0, %v1044
    %v1046 = vpop.f32.mrb[0].mxu0
    %v1047 = vpop.f32.mrb[0].mxu0
    %v1048 = vadd.f32 0.0, %v1047
    %v1049 = vpop.f32.mrb[0].mxu0
    %1050 = vmatprep.mubr.bf16.mxu0 0
    %1051 = vmatmul.mubr.bf16.gmra.mrb[0].mxu0 %v849
    %v1052 = vpop.f32.mrb[0].mxu0
    %v1053 = vadd.f32 0.0, %v1052
    %v1054 = vpop.f32.mrb[0].mxu0
    %v1055 = vpop.f32.mrb[0].mxu0
    %v1056 = vadd.f32 0.0, %v1055
    %v1057 = vpop.f32.mrb[0].mxu0
    %1058 = vmatprep.mubr.bf16.mxu0 0
    %1059 = vmatmul.mubr.bf16.gmra.mrb[0].mxu0 %v852
    %v1060 = vpop.f32.mrb[0].mxu0
    %v1061 = vadd.f32 0.0, %v1060
    %v1062 = vpop.f32.mrb[0].mxu0
    %v1063 = vpop.f32.mrb[0].mxu0
    %v1064 = vadd.f32 0.0, %v1063
    %v1065 = vpop.f32.mrb[0].mxu0
    %1066 = vmatprep.mubr.bf16.mxu0 0
    %1067 = vmatmul.mubr.bf16.gmra.mrb[0].mxu0 %v855
    %v1068 = vpop.f32.mrb[0].mxu0
    %v1069 = vadd.f32 0.0, %v1068
    %v1070 = vpop.f32.mrb[0].mxu0
    %v1071 = vpop.f32.mrb[0].mxu0
    %v1072 = vadd.f32 0.0, %v1071
    %v1073 = vpop.f32.mrb[0].mxu0
    %1074 = vmatprep.mubr.bf16.mxu0 0
    %1075 = vmatmul.mubr.bf16.gmra.mrb[0].mxu0 %v858
    %v1076 = vpop.f32.mrb[0].mxu0
    %v1077 = vadd.f32 0.0, %v1076
    %v1078 = vpop.f32.mrb[0].mxu0
    %v1079 = vpop.f32.mrb[0].mxu0
    %v1080 = vadd.f32 0.0, %v1079
    %v1081 = vpop.f32.mrb[0].mxu0
    %1082 = vmatprep.mubr.bf16.mxu0 0
    %1083 = vmatmul.mubr.bf16.gmra.mrb[0].mxu0 %v861
    %v1084 = vpop.f32.mrb[0].mxu0
    %v1085 = vadd.f32 0.0, %v1084
    %v1086 = vpop.f32.mrb[0].mxu0
    %v1087 = vpop.f32.mrb[0].mxu0
    %v1088 = vadd.f32 0.0, %v1087
    %v1089 = vpop.f32.mrb[0].mxu0
    %1090 = vmatprep.mubr.bf16.mxu0 0
    %1091 = vmatmul.mubr.bf16.gmra.mrb[0].mxu0 %v864
    %v1092 = vpop.f32.mrb[0].mxu0
    %v1093 = vadd.f32 0.0, %v1092
    %v1094 = vpop.f32.mrb[0].mxu0
    %v1095 = vpop.f32.mrb[0].mxu0
    %v1096 = vadd.f32 0.0, %v1095
    %v1097 = vpop.f32.mrb[0].mxu0
    %1098 = vmatprep.mubr.bf16.mxu0 0
    %1099 = vmatmul.mubr.bf16.gmra.mrb[0].mxu0 %v867
    %v1100 = vpop.f32.mrb[0].mxu0
    %v1101 = vadd.f32 0.0, %v1100
    %v1102 = vpop.f32.mrb[0].mxu0
    %v1103 = vpop.f32.mrb[0].mxu0
    %v1104 = vadd.f32 0.0, %v1103
    %v1105 = vpop.f32.mrb[0].mxu0
    %1106 = vmatprep.mubr.bf16.mxu0 0
    %1107 = vmatmul.mubr.bf16.gmra.mrb[0].mxu0 %v870
    %v1108 = vpop.f32.mrb[0].mxu0
    %v1109 = vadd.f32 0.0, %v1108
    %v1110 = vpop.f32.mrb[0].mxu0
    %v1111 = vpop.f32.mrb[0].mxu0
    %v1112 = vadd.f32 0.0, %v1111
    %v1113 = vpop.f32.mrb[0].mxu0
    %1114 = vmatprep.mubr.bf16.mxu0 0
    %1115 = vmatmul.mubr.bf16.gmra.mrb[0].mxu0 %v873
    %v1116 = vpop.f32.mrb[0].mxu0
    %v1117 = vadd.f32 0.0, %v1116
    %v1118 = vpop.f32.mrb[0].mxu0
    %v1119 = vpop.f32.mrb[0].mxu0
    %v1120 = vadd.f32 0.0, %v1119
    %v1121 = vpop.f32.mrb[0].mxu0
    %1122 = vmatprep.mubr.bf16.mxu0 0
    %1123 = vmatmul.mubr.bf16.gmra.mrb[0].mxu0 %v876
    %v1124 = vpop.f32.mrb[0].mxu0
    %v1125 = vadd.f32 0.0, %v1124
    %v1126 = vpop.f32.mrb[0].mxu0
    %v1127 = vpop.f32.mrb[0].mxu0
    %v1128 = vadd.f32 0.0, %v1127
    %v1129 = vpop.f32.mrb[0].mxu0
    %1130 = vmatprep.mubr.bf16.mxu0 0
    %1131 = vmatmul.mubr.bf16.gmra.mrb[0].mxu0 %v879
    %v1132 = vpop.f32.mrb[0].mxu0
    %v1133 = vadd.f32 0.0, %v1132
    %v1134 = vpop.f32.mrb[0].mxu0
    %v1135 = vpop.f32.mrb[0].mxu0
    %v1136 = vadd.f32 0.0, %v1135
    %v1137 = vpop.f32.mrb[0].mxu0
    %1138 = vmatprep.mubr.bf16.mxu0 0
    %1139 = vmatmul.mubr.bf16.gmra.mrb[0].mxu0 %v882
    %v1140 = vpop.f32.mrb[0].mxu0
    %v1141 = vadd.f32 0.0, %v1140
    %v1142 = vpop.f32.mrb[0].mxu0
    %v1143 = vpop.f32.mrb[0].mxu0
    %v1144 = vadd.f32 0.0, %v1143
    %v1145 = vpop.f32.mrb[0].mxu0
    %1146 = vmatprep.mubr.bf16.mxu0 0
    %1147 = vmatmul.mubr.bf16.gmra.mrb[0].mxu0 %v885
    %v1148 = vpop.f32.mrb[0].mxu0
    %v1149 = vadd.f32 0.0, %v1148
    %v1150 = vpop.f32.mrb[0].mxu0
    %v1151 = vpop.f32.mrb[0].mxu0
    %v1152 = vadd.f32 0.0, %v1151
    %v1153 = vpop.f32.mrb[0].mxu0
    %1154 = vmatprep.mubr.bf16.mxu0 0
    %1155 = vmatmul.mubr.bf16.gmra.mrb[0].mxu0 %v888
    %v1156 = vpop.f32.mrb[0].mxu0
    %v1157 = vadd.f32 0.0, %v1156
    %v1158 = vpop.f32.mrb[0].mxu0
    %v1159 = vpop.f32.mrb[0].mxu0
    %v1160 = vadd.f32 0.0, %v1159
    %v1161 = vpop.f32.mrb[0].mxu0
    %1162 = vmatprep.mubr.bf16.mxu0 0
    %1163 = vmatmul.mubr.bf16.gmra.mrb[0].mxu0 %v891
    %v1164 = vpop.f32.mrb[0].mxu0
    %v1165 = vadd.f32 0.0, %v1164
    %v1166 = vpop.f32.mrb[0].mxu0
    %v1167 = vpop.f32.mrb[0].mxu0
    %v1168 = vadd.f32 0.0, %v1167
    %v1169 = vpop.f32.mrb[0].mxu0
    %1170 = vmatprep.mubr.bf16.mxu0 0
    %1171 = vmatmul.mubr.bf16.gmra.mrb[0].mxu0 %v894
    %v1172 = vpop.f32.mrb[0].mxu0
    %v1173 = vadd.f32 0.0, %v1172
    %v1174 = vpop.f32.mrb[0].mxu0
    %v1175 = vpop.f32.mrb[0].mxu0
    %v1176 = vadd.f32 0.0, %v1175
    %v1177 = vpop.f32.mrb[0].mxu0
    %1178 = vmatprep.mubr.bf16.mxu0 0
    %1179 = vmatmul.mubr.bf16.gmra.mrb[0].mxu0 %v897
    %v1180 = vpop.f32.mrb[0].mxu0
    %v1181 = vadd.f32 0.0, %v1180
    %v1182 = vpop.f32.mrb[0].mxu0
    %v1183 = vpop.f32.mrb[0].mxu0
    %v1184 = vadd.f32 0.0, %v1183
    %v1185 = vpop.f32.mrb[0].mxu0
    %1186 = vmatprep.mubr.bf16.mxu0 0
    %1187 = vmatmul.mubr.bf16.gmra.mrb[0].mxu0 %v900
    %v1188 = vpop.f32.mrb[0].mxu0
    %v1189 = vadd.f32 0.0, %v1188
    %v1190 = vpop.f32.mrb[0].mxu0
    %v1191 = vpop.f32.mrb[0].mxu0
    %v1192 = vadd.f32 0.0, %v1191
    %v1193 = vpop.f32.mrb[0].mxu0
    %1194 = vmatprep.mubr.bf16.mxu0 0
    %1195 = vmatmul.mubr.bf16.gmra.mrb[0].mxu0 %v903
    %v1196 = vpop.f32.mrb[0].mxu0
    %v1197 = vadd.f32 0.0, %v1196
    %v1198 = vpop.f32.mrb[0].mxu0
    %v1199 = vpop.f32.mrb[0].mxu0
    %v1200 = vadd.f32 0.0, %v1199
    %v1201 = vpop.f32.mrb[0].mxu0
    %1202 = vmatprep.mubr.bf16.mxu0 0
    %1203 = vmatmul.mubr.bf16.gmra.mrb[0].mxu0 %v906
    %v1204 = vpop.f32.mrb[0].mxu0
    %v1205 = vadd.f32 0.0, %v1204
    %v1206 = vpop.f32.mrb[0].mxu0
    %v1207 = vpop.f32.mrb[0].mxu0
    %v1208 = vadd.f32 0.0, %v1207
    %v1209 = vpop.f32.mrb[0].mxu0
    %1210 = vmatprep.mubr.bf16.mxu0 0
    %1211 = vmatmul.mubr.bf16.gmra.mrb[0].mxu0 %v909
    %v1212 = vpop.f32.mrb[0].mxu0
    %v1213 = vadd.f32 0.0, %v1212
    %v1214 = vpop.f32.mrb[0].mxu0
    %v1215 = vpop.f32.mrb[0].mxu0
    %v1216 = vadd.f32 0.0, %v1215
    %v1217 = vpop.f32.mrb[0].mxu0
    %1218 = vmatprep.mubr.bf16.mxu0 0
    %1219 = vmatmul.mubr.bf16.gmra.mrb[0].mxu0 %v912
    %v1220 = vpop.f32.mrb[0].mxu0
    %v1221 = vadd.f32 0.0, %v1220
    %v1222 = vpop.f32.mrb[0].mxu0
    %v1223 = vpop.f32.mrb[0].mxu0
    %v1224 = vadd.f32 0.0, %v1223
    %v1225 = vpop.f32.mrb[0].mxu0
    %1226 = vmatprep.mubr.bf16.mxu0 0
    %1227 = vmatmul.mubr.bf16.gmra.mrb[0].mxu0 %v915
    %v1228 = vpop.f32.mrb[0].mxu0
    %v1229 = vadd.f32 0.0, %v1228
    %v1230 = vpop.f32.mrb[0].mxu0
    %v1231 = vpop.f32.mrb[0].mxu0
    %v1232 = vadd.f32 0.0, %v1231
    %v1233 = vpop.f32.mrb[0].mxu0
    %1234 = vmatprep.mubr.bf16.mxu0 0
    %1235 = vmatmul.mubr.bf16.gmra.mrb[0].mxu0 %v918
    %v1236 = vpop.f32.mrb[0].mxu0
    %v1237 = vadd.f32 0.0, %v1236
    %v1238 = vpop.f32.mrb[0].mxu0
    %v1239 = vpop.f32.mrb[0].mxu0
    %v1240 = vadd.f32 0.0, %v1239
    %v1241 = vpop.f32.mrb[0].mxu0
    %1242 = vmatprep.mubr.bf16.mxu0 0
    %1243 = vmatmul.mubr.bf16.gmra.mrb[0].mxu0 %v921
    %v1244 = vpop.f32.mrb[0].mxu0
    %v1245 = vadd.f32 0.0, %v1244
    %v1246 = vpop.f32.mrb[0].mxu0
    %v1247 = vpop.f32.mrb[0].mxu0
    %v1248 = vadd.f32 0.0, %v1247
    %v1249 = vpop.f32.mrb[0].mxu0
    %1250 = vmatprep.mubr.bf16.mxu0 0
    %1251 = vmatmul.mubr.bf16.gmra.mrb[0].mxu0 %v924
    %v1252 = vpop.f32.mrb[0].mxu0
    %v1253 = vadd.f32 0.0, %v1252
    %v1254 = vpop.f32.mrb[0].mxu0
    %v1255 = vpop.f32.mrb[0].mxu0
    %v1256 = vadd.f32 0.0, %v1255
    %v1257 = vpop.f32.mrb[0].mxu0
    %1258 = vmatprep.mubr.bf16.mxu0 0
    %1259 = vmatmul.mubr.bf16.gmra.mrb[0].mxu0 %v927
    %v1260 = vpop.f32.mrb[0].mxu0
    %v1261 = vadd.f32 0.0, %v1260
    %v1262 = vpop.f32.mrb[0].mxu0
    %v1263 = vpop.f32.mrb[0].mxu0
    %v1264 = vadd.f32 0.0, %v1263
    %v1265 = vpop.f32.mrb[0].mxu0
    %1266 = vmatprep.mubr.bf16.mxu0 0
    %1267 = vmatmul.mubr.bf16.gmra.mrb[0].mxu0 %v930
    %v1268 = vpop.f32.mrb[0].mxu0
    %v1269 = vadd.f32 0.0, %v1268
    %v1270 = vpop.f32.mrb[0].mxu0
    %v1271 = vpop.f32.mrb[0].mxu0
    %v1272 = vadd.f32 0.0, %v1271
    %v1273 = vpop.f32.mrb[0].mxu0
    %1274 = vmatprep.mubr.bf16.mxu0 0
    %1275 = vmatmul.mubr.bf16.gmra.mrb[0].mxu0 %v933
    %v1276 = vpop.f32.mrb[0].mxu0
    %v1277 = vadd.f32 0.0, %v1276
    %v1278 = vpop.f32.mrb[0].mxu0
    %v1279 = vpop.f32.mrb[0].mxu0
    %v1280 = vpop.f32.mrb[0].mxu0
    %1281 = vdwg.mxu0
    %v1282 = vld [vmem:[#allocation2] sm:$0xff]
    %v1283 = vld [vmem:[#allocation2 + $0x8] sm:$0xff]
    %v1284 = vld [vmem:[#allocation2 + $0x10] sm:$0xff]
    %v1285 = vld [vmem:[#allocation2 + $0x18] sm:$0xff]
    %v1286 = vld [vmem:[#allocation2 + $0x20] sm:$0xff]
    %v1287 = vld [vmem:[#allocation2 + $0x28] sm:$0xff]
    %v1288 = vld [vmem:[#allocation2 + $0x30] sm:$0xff]
    %v1289 = vld [vmem:[#allocation2 + $0x38] sm:$0xff]
    %v1290 = vld [vmem:[#allocation2 + $0x40] sm:$0xff]
    %v1291 = vld [vmem:[#allocation2 + $0x48] sm:$0xff]
    %v1292 = vld [vmem:[#allocation2 + $0x50] sm:$0xff]
    %v1293 = vld [vmem:[#allocation2 + $0x58] sm:$0xff]
    %v1294 = vld [vmem:[#allocation2 + $0x60] sm:$0xff]
    %v1295 = vld [vmem:[#allocation2 + $0x68] sm:$0xff]
    %v1296 = vld [vmem:[#allocation2 + $0x70] sm:$0xff]
    %v1297 = vld [vmem:[#allocation2 + $0x78] sm:$0xff]
    %v1298 = vld [vmem:[#allocation2 + $0x80] sm:$0xff]
    %v1299 = vld [vmem:[#allocation2 + $0x88] sm:$0xff]
    %v1300 = vld [vmem:[#allocation2 + $0x90] sm:$0xff]
    %v1301 = vld [vmem:[#allocation2 + $0x98] sm:$0xff]
    %v1302 = vld [vmem:[#allocation2 + $0xa0] sm:$0xff]
    %v1303 = vld [vmem:[#allocation2 + $0xa8] sm:$0xff]
    %v1304 = vld [vmem:[#allocation2 + $0xb0] sm:$0xff]
    %v1305 = vld [vmem:[#allocation2 + $0xb8] sm:$0xff]
    %v1306 = vld [vmem:[#allocation2 + $0xc0] sm:$0xff]
    %v1307 = vld [vmem:[#allocation2 + $0xc8] sm:$0xff]
    %v1308 = vld [vmem:[#allocation2 + $0xd0] sm:$0xff]
    %v1309 = vld [vmem:[#allocation2 + $0xd8] sm:$0xff]
    %v1310 = vld [vmem:[#allocation2 + $0xe0] sm:$0xff]
    %v1311 = vld [vmem:[#allocation2 + $0xe8] sm:$0xff]
    %v1312 = vld [vmem:[#allocation2 + $0xf0] sm:$0xff]
    %v1313 = vld [vmem:[#allocation2 + $0xf8] sm:$0xff]
    %v1314 = vld [vmem:[#allocation2 + $0x100] sm:$0xff]
    %v1315 = vld [vmem:[#allocation2 + $0x108] sm:$0xff]
    %v1316 = vld [vmem:[#allocation2 + $0x110] sm:$0xff]
    %v1317 = vld [vmem:[#allocation2 + $0x118] sm:$0xff]
    %v1318 = vld [vmem:[#allocation2 + $0x120] sm:$0xff]
    %v1319 = vld [vmem:[#allocation2 + $0x128] sm:$0xff]
    %v1320 = vld [vmem:[#allocation2 + $0x130] sm:$0xff]
    %v1321 = vld [vmem:[#allocation2 + $0x138] sm:$0xff]
    %v1322 = vld [vmem:[#allocation2 + $0x140] sm:$0xff]
    %v1323 = vld [vmem:[#allocation2 + $0x148] sm:$0xff]
    %v1324 = vld [vmem:[#allocation2 + $0x150] sm:$0xff]
    %v1325 = vld [vmem:[#allocation2 + $0x158] sm:$0xff]
    %v1326 = vld [vmem:[#allocation2 + $0x160] sm:$0xff]
    %v1327 = vld [vmem:[#allocation2 + $0x168] sm:$0xff]
    %v1328 = vld [vmem:[#allocation2 + $0x170] sm:$0xff]
    %v1329 = vld [vmem:[#allocation2 + $0x178] sm:$0xff]
    %v1330 = vld [vmem:[#allocation2 + $0x180] sm:$0xff]
    %v1331 = vld [vmem:[#allocation2 + $0x188] sm:$0xff]
    %v1332 = vld [vmem:[#allocation2 + $0x190] sm:$0xff]
    %v1333 = vld [vmem:[#allocation2 + $0x198] sm:$0xff]
    %v1334 = vld [vmem:[#allocation2 + $0x1a0] sm:$0xff]
    %v1335 = vld [vmem:[#allocation2 + $0x1a8] sm:$0xff]
    %v1336 = vld [vmem:[#allocation2 + $0x1b0] sm:$0xff]
    %v1337 = vld [vmem:[#allocation2 + $0x1b8] sm:$0xff]
    %v1338 = vld [vmem:[#allocation2 + $0x1c0] sm:$0xff]
    %v1339 = vld [vmem:[#allocation2 + $0x1c8] sm:$0xff]
    %v1340 = vld [vmem:[#allocation2 + $0x1d0] sm:$0xff]
    %v1341 = vld [vmem:[#allocation2 + $0x1d8] sm:$0xff]
    %v1342 = vld [vmem:[#allocation2 + $0x1e0] sm:$0xff]
    %v1343 = vld [vmem:[#allocation2 + $0x1e8] sm:$0xff]
    %v1344 = vld [vmem:[#allocation2 + $0x1f0] sm:$0xff]
    %v1345 = vld [vmem:[#allocation2 + $0x1f8] sm:$0xff]
    %v1346 = vld [vmem:[#allocation2 + $0x200] sm:$0xff]
    %v1347 = vld [vmem:[#allocation2 + $0x208] sm:$0xff]
    %v1348 = vld [vmem:[#allocation2 + $0x210] sm:$0xff]
    %v1349 = vld [vmem:[#allocation2 + $0x218] sm:$0xff]
    %v1350 = vld [vmem:[#allocation2 + $0x220] sm:$0xff]
    %v1351 = vld [vmem:[#allocation2 + $0x228] sm:$0xff]
    %v1352 = vld [vmem:[#allocation2 + $0x230] sm:$0xff]
    %v1353 = vld [vmem:[#allocation2 + $0x238] sm:$0xff]
    %v1354 = vld [vmem:[#allocation2 + $0x240] sm:$0xff]
    %v1355 = vld [vmem:[#allocation2 + $0x248] sm:$0xff]
    %v1356 = vld [vmem:[#allocation2 + $0x250] sm:$0xff]
    %v1357 = vld [vmem:[#allocation2 + $0x258] sm:$0xff]
    %v1358 = vld [vmem:[#allocation2 + $0x260] sm:$0xff]
    %v1359 = vadd.f32 %v1282, %v973
    %v1360 = vadd.f32 %v1283, %v976
    %v1361 = vadd.f32 %v1284, %v981
    %v1362 = vadd.f32 %v1285, %v984
    %v1363 = vadd.f32 %v1286, %v989
    %v1364 = vadd.f32 %v1287, %v992
    %v1365 = vadd.f32 %v1288, %v997
    %v1366 = vadd.f32 %v1289, %v1000
    %v1367 = vadd.f32 %v1290, %v1005
    %v1368 = vadd.f32 %v1291, %v1008
    %v1369 = vadd.f32 %v1292, %v1013
    %v1370 = vadd.f32 %v1293, %v1016
    %v1371 = vadd.f32 %v1294, %v1021
    %v1372 = vadd.f32 %v1295, %v1024
    %v1373 = vadd.f32 %v1296, %v1029
    %v1374 = vadd.f32 %v1297, %v1032
    %v1375 = vadd.f32 %v1298, %v1037
    %v1376 = vadd.f32 %v1299, %v1040
    %v1377 = vadd.f32 %v1300, %v1045
    %v1378 = vadd.f32 %v1301, %v1048
    %v1379 = vadd.f32 %v1302, %v1053
    %v1380 = vadd.f32 %v1303, %v1056
    %v1381 = vadd.f32 %v1304, %v1061
    %v1382 = vadd.f32 %v1305, %v1064
    %v1383 = vadd.f32 %v1306, %v1069
    %v1384 = vadd.f32 %v1307, %v1072
    %v1385 = vadd.f32 %v1308, %v1077
    %v1386 = vadd.f32 %v1309, %v1080
    %v1387 = vadd.f32 %v1310, %v1085
    %v1388 = vadd.f32 %v1311, %v1088
    %v1389 = vadd.f32 %v1312, %v1093
    %v1390 = vadd.f32 %v1313, %v1096
    %v1391 = vadd.f32 %v1314, %v1101
    %v1392 = vadd.f32 %v1315, %v1104
    %v1393 = vadd.f32 %v1316, %v1109
    %v1394 = vadd.f32 %v1317, %v1112
    %v1395 = vadd.f32 %v1318, %v1117
    %v1396 = vadd.f32 %v1319, %v1120
    %v1397 = vadd.f32 %v1320, %v1125
    %v1398 = vadd.f32 %v1321, %v1128
    %v1399 = vadd.f32 %v1322, %v1133
    %v1400 = vadd.f32 %v1323, %v1136
    %v1401 = vadd.f32 %v1324, %v1141
    %v1402 = vadd.f32 %v1325, %v1144
    %v1403 = vadd.f32 %v1326, %v1149
    %v1404 = vadd.f32 %v1327, %v1152
    %v1405 = vadd.f32 %v1328, %v1157
    %v1406 = vadd.f32 %v1329, %v1160
    %v1407 = vadd.f32 %v1330, %v1165
    %v1408 = vadd.f32 %v1331, %v1168
    %v1409 = vadd.f32 %v1332, %v1173
    %v1410 = vadd.f32 %v1333, %v1176
    %v1411 = vadd.f32 %v1334, %v1181
    %v1412 = vadd.f32 %v1335, %v1184
    %v1413 = vadd.f32 %v1336, %v1189
    %v1414 = vadd.f32 %v1337, %v1192
    %v1415 = vadd.f32 %v1338, %v1197
    %v1416 = vadd.f32 %v1339, %v1200
    %v1417 = vadd.f32 %v1340, %v1205
    %v1418 = vadd.f32 %v1341, %v1208
    %v1419 = vadd.f32 %v1342, %v1213
    %v1420 = vadd.f32 %v1343, %v1216
    %v1421 = vadd.f32 %v1344, %v1221
    %v1422 = vadd.f32 %v1345, %v1224
    %v1423 = vadd.f32 %v1346, %v1229
    %v1424 = vadd.f32 %v1347, %v1232
    %v1425 = vadd.f32 %v1348, %v1237
    %v1426 = vadd.f32 %v1349, %v1240
    %v1427 = vadd.f32 %v1350, %v1245
    %v1428 = vadd.f32 %v1351, %v1248
    %v1429 = vadd.f32 %v1352, %v1253
    %v1430 = vadd.f32 %v1353, %v1256
    %v1431 = vadd.f32 %v1354, %v1261
    %v1432 = vadd.f32 %v1355, %v1264
    %v1433 = vadd.f32 %v1356, %v1269
    %v1434 = vadd.f32 %v1357, %v1272
    %v1435 = vadd.f32 %v1358, %v1277
    %1436 = vst [vmem:[#allocation2] sm:$0xff] %v1359
    %1437 = vst [vmem:[#allocation2 + $0x8] sm:$0xff] %v1360
    %1438 = vst [vmem:[#allocation2 + $0x10] sm:$0xff] %v1361
    %1439 = vst [vmem:[#allocation2 + $0x18] sm:$0xff] %v1362
    %1440 = vst [vmem:[#allocation2 + $0x20] sm:$0xff] %v1363
    %1441 = vst [vmem:[#allocation2 + $0x28] sm:$0xff] %v1364
    %1442 = vst [vmem:[#allocation2 + $0x30] sm:$0xff] %v1365
    %1443 = vst [vmem:[#allocation2 + $0x38] sm:$0xff] %v1366
    %1444 = vst [vmem:[#allocation2 + $0x40] sm:$0xff] %v1367
    %1445 = vst [vmem:[#allocation2 + $0x48] sm:$0xff] %v1368
    %1446 = vst [vmem:[#allocation2 + $0x50] sm:$0xff] %v1369
    %1447 = vst [vmem:[#allocation2 + $0x58] sm:$0xff] %v1370
    %1448 = vst [vmem:[#allocation2 + $0x60] sm:$0xff] %v1371
    %1449 = vst [vmem:[#allocation2 + $0x68] sm:$0xff] %v1372
    %1450 = vst [vmem:[#allocation2 + $0x70] sm:$0xff] %v1373
    %1451 = vst [vmem:[#allocation2 + $0x78] sm:$0xff] %v1374
    %1452 = vst [vmem:[#allocation2 + $0x80] sm:$0xff] %v1375
    %1453 = vst [vmem:[#allocation2 + $0x88] sm:$0xff] %v1376
    %1454 = vst [vmem:[#allocation2 + $0x90] sm:$0xff] %v1377
    %1455 = vst [vmem:[#allocation2 + $0x98] sm:$0xff] %v1378
    %1456 = vst [vmem:[#allocation2 + $0xa0] sm:$0xff] %v1379
    %1457 = vst [vmem:[#allocation2 + $0xa8] sm:$0xff] %v1380
    %1458 = vst [vmem:[#allocation2 + $0xb0] sm:$0xff] %v1381
    %1459 = vst [vmem:[#allocation2 + $0xb8] sm:$0xff] %v1382
    %1460 = vst [vmem:[#allocation2 + $0xc0] sm:$0xff] %v1383
    %1461 = vst [vmem:[#allocation2 + $0xc8] sm:$0xff] %v1384
    %1462 = vst [vmem:[#allocation2 + $0xd0] sm:$0xff] %v1385
    %1463 = vst [vmem:[#allocation2 + $0xd8] sm:$0xff] %v1386
    %1464 = vst [vmem:[#allocation2 + $0xe0] sm:$0xff] %v1387
    %1465 = vst [vmem:[#allocation2 + $0xe8] sm:$0xff] %v1388
    %1466 = vst [vmem:[#allocation2 + $0xf0] sm:$0xff] %v1389
    %1467 = vst [vmem:[#allocation2 + $0xf8] sm:$0xff] %v1390
    %1468 = vst [vmem:[#allocation2 + $0x100] sm:$0xff] %v1391
    %1469 = vst [vmem:[#allocation2 + $0x108] sm:$0xff] %v1392
    %1470 = vst [vmem:[#allocation2 + $0x110] sm:$0xff] %v1393
    %1471 = vst [vmem:[#allocation2 + $0x118] sm:$0xff] %v1394
    %1472 = vst [vmem:[#allocation2 + $0x120] sm:$0xff] %v1395
    %1473 = vst [vmem:[#allocation2 + $0x128] sm:$0xff] %v1396
    %1474 = vst [vmem:[#allocation2 + $0x130] sm:$0xff] %v1397
    %1475 = vst [vmem:[#allocation2 + $0x138] sm:$0xff] %v1398
    %1476 = vst [vmem:[#allocation2 + $0x140] sm:$0xff] %v1399
    %1477 = vst [vmem:[#allocation2 + $0x148] sm:$0xff] %v1400
    %1478 = vst [vmem:[#allocation2 + $0x150] sm:$0xff] %v1401
    %1479 = vst [vmem:[#allocation2 + $0x158] sm:$0xff] %v1402
    %1480 = vst [vmem:[#allocation2 + $0x160] sm:$0xff] %v1403
    %1481 = vst [vmem:[#allocation2 + $0x168] sm:$0xff] %v1404
    %1482 = vst [vmem:[#allocation2 + $0x170] sm:$0xff] %v1405
    %1483 = vst [vmem:[#allocation2 + $0x178] sm:$0xff] %v1406
    %1484 = vst [vmem:[#allocation2 + $0x180] sm:$0xff] %v1407
    %1485 = vst [vmem:[#allocation2 + $0x188] sm:$0xff] %v1408
    %1486 = vst [vmem:[#allocation2 + $0x190] sm:$0xff] %v1409
    %1487 = vst [vmem:[#allocation2 + $0x198] sm:$0xff] %v1410
    %1488 = vst [vmem:[#allocation2 + $0x1a0] sm:$0xff] %v1411
    %1489 = vst [vmem:[#allocation2 + $0x1a8] sm:$0xff] %v1412
    %1490 = vst [vmem:[#allocation2 + $0x1b0] sm:$0xff] %v1413
    %1491 = vst [vmem:[#allocation2 + $0x1b8] sm:$0xff] %v1414
    %1492 = vst [vmem:[#allocation2 + $0x1c0] sm:$0xff] %v1415
    %1493 = vst [vmem:[#allocation2 + $0x1c8] sm:$0xff] %v1416
    %1494 = vst [vmem:[#allocation2 + $0x1d0] sm:$0xff] %v1417
    %1495 = vst [vmem:[#allocation2 + $0x1d8] sm:$0xff] %v1418
    %1496 = vst [vmem:[#allocation2 + $0x1e0] sm:$0xff] %v1419
    %1497 = vst [vmem:[#allocation2 + $0x1e8] sm:$0xff] %v1420
    %1498 = vst [vmem:[#allocation2 + $0x1f0] sm:$0xff] %v1421
    %1499 = vst [vmem:[#allocation2 + $0x1f8] sm:$0xff] %v1422
    %1500 = vst [vmem:[#allocation2 + $0x200] sm:$0xff] %v1423
    %1501 = vst [vmem:[#allocation2 + $0x208] sm:$0xff] %v1424
    %1502 = vst [vmem:[#allocation2 + $0x210] sm:$0xff] %v1425
    %1503 = vst [vmem:[#allocation2 + $0x218] sm:$0xff] %v1426
    %1504 = vst [vmem:[#allocation2 + $0x220] sm:$0xff] %v1427
    %1505 = vst [vmem:[#allocation2 + $0x228] sm:$0xff] %v1428
    %1506 = vst [vmem:[#allocation2 + $0x230] sm:$0xff] %v1429
    %1507 = vst [vmem:[#allocation2 + $0x238] sm:$0xff] %v1430
    %1508 = vst [vmem:[#allocation2 + $0x240] sm:$0xff] %v1431
    %1509 = vst [vmem:[#allocation2 + $0x248] sm:$0xff] %v1432
    %1510 = vst [vmem:[#allocation2 + $0x250] sm:$0xff] %v1433
    %1511 = vst [vmem:[#allocation2 + $0x258] sm:$0xff] %v1434
    %1512 = vst [vmem:[#allocation2 + $0x260] sm:$0xff] %v1435
    %v1513 = vld [vmem:[%s0 + $0x2] sm:$0xff]
    %v1514 = vld [vmem:[%s0 + $0xa] sm:$0xff]
    %v1515 = vld [vmem:[%s0 + $0x12] sm:$0xff]
    %v1516 = vld [vmem:[%s0 + $0x1a] sm:$0xff]
    %v1517 = vld [vmem:[%s0 + $0x22] sm:$0xff]
    %v1518 = vld [vmem:[%s0 + $0x2a] sm:$0xff]
    %v1519 = vld [vmem:[%s0 + $0x32] sm:$0xff]
    %v1520 = vld [vmem:[%s0 + $0x3a] sm:$0xff]
    %v1521 = vld [vmem:[%s0 + $0x42] sm:$0xff]
    %v1522 = vld [vmem:[%s0 + $0x4a] sm:$0xff]
    %v1523 = vld [vmem:[%s0 + $0x52] sm:$0xff]
    %v1524 = vld [vmem:[%s0 + $0x5a] sm:$0xff]
    %v1525 = vld [vmem:[%s0 + $0x62] sm:$0xff]
    %v1526 = vld [vmem:[%s0 + $0x6a] sm:$0xff]
    %v1527 = vld [vmem:[%s0 + $0x72] sm:$0xff]
    %v1528 = vld [vmem:[%s0 + $0x7a] sm:$0xff]
    %v1529 = vld [vmem:[%s0 + $0x82] sm:$0xff]
    %v1530 = vld [vmem:[%s0 + $0x8a] sm:$0xff]
    %v1531 = vld [vmem:[%s0 + $0x92] sm:$0xff]
    %v1532 = vld [vmem:[%s0 + $0x9a] sm:$0xff]
    %v1533 = vld [vmem:[%s0 + $0xa2] sm:$0xff]
    %v1534 = vld [vmem:[%s0 + $0xaa] sm:$0xff]
    %v1535 = vld [vmem:[%s0 + $0xb2] sm:$0xff]
    %v1536 = vld [vmem:[%s0 + $0xba] sm:$0xff]
    %v1537 = vld [vmem:[%s0 + $0xc2] sm:$0xff]
    %v1538 = vld [vmem:[%s0 + $0xca] sm:$0xff]
    %v1539 = vld [vmem:[%s0 + $0xd2] sm:$0xff]
    %v1540 = vld [vmem:[%s0 + $0xda] sm:$0xff]
    %v1541 = vld [vmem:[%s0 + $0xe2] sm:$0xff]
    %v1542 = vld [vmem:[%s0 + $0xea] sm:$0xff]
    %v1543 = vld [vmem:[%s0 + $0xf2] sm:$0xff]
    %v1544 = vld [vmem:[%s0 + $0xfa] sm:$0xff]
    %v1545 = vld [vmem:[%s0 + $0x102] sm:$0xff]
    %v1546 = vld [vmem:[%s0 + $0x10a] sm:$0xff]
    %v1547 = vld [vmem:[%s0 + $0x112] sm:$0xff]
    %v1548 = vld [vmem:[%s0 + $0x11a] sm:$0xff]
    %v1549 = vld [vmem:[%s0 + $0x122] sm:$0xff]
    %v1550 = vld [vmem:[%s0 + $0x12a] sm:$0xff]
    %v1551 = vld [vmem:[%s0 + $0x132] sm:$0xff]
    %v1552 = vld [vmem:[%s0 + $0x13a] sm:$0xff]
    %v1553 = vld [vmem:[%s0 + $0x142] sm:$0xff]
    %v1554 = vld [vmem:[%s0 + $0x14a] sm:$0xff]
    %v1555 = vld [vmem:[%s0 + $0x152] sm:$0xff]
    %v1556 = vld [vmem:[%s0 + $0x15a] sm:$0xff]
    %v1557 = vld [vmem:[%s0 + $0x162] sm:$0xff]
    %v1558 = vld [vmem:[%s0 + $0x16a] sm:$0xff]
    %v1559 = vld [vmem:[%s0 + $0x172] sm:$0xff]
    %v1560 = vld [vmem:[%s0 + $0x17a] sm:$0xff]
    %v1561 = vld [vmem:[%s0 + $0x182] sm:$0xff]
    %v1562 = vld [vmem:[%s0 + $0x18a] sm:$0xff]
    %v1563 = vld [vmem:[%s0 + $0x192] sm:$0xff]
    %v1564 = vld [vmem:[%s0 + $0x19a] sm:$0xff]
    %v1565 = vld [vmem:[%s0 + $0x1a2] sm:$0xff]
    %v1566 = vld [vmem:[%s0 + $0x1aa] sm:$0xff]
    %v1567 = vld [vmem:[%s0 + $0x1b2] sm:$0xff]
    %v1568 = vld [vmem:[%s0 + $0x1ba] sm:$0xff]
    %v1569 = vld [vmem:[%s0 + $0x1c2] sm:$0xff]
    %v1570 = vld [vmem:[%s0 + $0x1ca] sm:$0xff]
    %v1571 = vld [vmem:[%s0 + $0x1d2] sm:$0xff]
    %v1572 = vld [vmem:[%s0 + $0x1da] sm:$0xff]
    %v1573 = vld [vmem:[%s0 + $0x1e2] sm:$0xff]
    %v1574 = vld [vmem:[%s0 + $0x1ea] sm:$0xff]
    %v1575 = vld [vmem:[%s0 + $0x1f2] sm:$0xff]
    %v1576 = vld [vmem:[%s0 + $0x1fa] sm:$0xff]
    %v1577 = vld [vmem:[%s0 + $0x202] sm:$0xff]
    %v1578 = vld [vmem:[%s0 + $0x20a] sm:$0xff]
    %v1579 = vld [vmem:[%s0 + $0x212] sm:$0xff]
    %v1580 = vld [vmem:[%s0 + $0x21a] sm:$0xff]
    %v1581 = vld [vmem:[%s0 + $0x222] sm:$0xff]
    %v1582 = vld [vmem:[%s0 + $0x22a] sm:$0xff]
    %v1583 = vld [vmem:[%s0 + $0x232] sm:$0xff]
    %v1584 = vld [vmem:[%s0 + $0x23a] sm:$0xff]
    %v1585 = vld [vmem:[%s0 + $0x242] sm:$0xff]
    %v1586 = vld [vmem:[%s0 + $0x24a] sm:$0xff]
    %v1587 = vld [vmem:[%s0 + $0x252] sm:$0xff]
    %v1588 = vld [vmem:[%s0 + $0x25a] sm:$0xff]
    %v1589 = vld [vmem:[%s0 + $0x262] sm:$0xff]
    %v1590 = vpack.c.bf16 %v1514, %v1513
    %v1591 = vpack.c.bf16 %v1516, %v1515
    %v1592 = vpack.c.bf16 %v1518, %v1517
    %v1593 = vpack.c.bf16 %v1520, %v1519
    %v1594 = vpack.c.bf16 %v1522, %v1521
    %v1595 = vpack.c.bf16 %v1524, %v1523
    %v1596 = vpack.c.bf16 %v1526, %v1525
    %v1597 = vpack.c.bf16 %v1528, %v1527
    %v1598 = vpack.c.bf16 %v1530, %v1529
    %v1599 = vpack.c.bf16 %v1532, %v1531
    %v1600 = vpack.c.bf16 %v1534, %v1533
    %v1601 = vpack.c.bf16 %v1536, %v1535
    %v1602 = vpack.c.bf16 %v1538, %v1537
    %v1603 = vpack.c.bf16 %v1540, %v1539
    %v1604 = vpack.c.bf16 %v1542, %v1541
    %v1605 = vpack.c.bf16 %v1544, %v1543
    %v1606 = vpack.c.bf16 %v1546, %v1545
    %v1607 = vpack.c.bf16 %v1548, %v1547
    %v1608 = vpack.c.bf16 %v1550, %v1549
    %v1609 = vpack.c.bf16 %v1552, %v1551
    %v1610 = vpack.c.bf16 %v1554, %v1553
    %v1611 = vpack.c.bf16 %v1556, %v1555
    %v1612 = vpack.c.bf16 %v1558, %v1557
    %v1613 = vpack.c.bf16 %v1560, %v1559
    %v1614 = vpack.c.bf16 %v1562, %v1561
    %v1615 = vpack.c.bf16 %v1564, %v1563
    %v1616 = vpack.c.bf16 %v1566, %v1565
    %v1617 = vpack.c.bf16 %v1568, %v1567
    %v1618 = vpack.c.bf16 %v1570, %v1569
    %v1619 = vpack.c.bf16 %v1572, %v1571
    %v1620 = vpack.c.bf16 %v1574, %v1573
    %v1621 = vpack.c.bf16 %v1576, %v1575
    %v1622 = vpack.c.bf16 %v1578, %v1577
    %v1623 = vpack.c.bf16 %v1580, %v1579
    %v1624 = vpack.c.bf16 %v1582, %v1581
    %v1625 = vpack.c.bf16 %v1584, %v1583
    %v1626 = vpack.c.bf16 %v1586, %v1585
    %v1627 = vpack.c.bf16 %v1588, %v1587
    %v1628 = vpack.c.bf16 %v1589, %v1589
    %s1629 = scalar_lea.vmem %s1, 16
    %v1630 = vld [vmem:[%s1629] sm:$0xf]
    %v1631 = vld [vmem:[%s1629 + $0x4] sm:$0x1]
    %v1634 = vunpack.c.l.b16 %v1630
    %v1635 = vunpack.c.l.b16 %v1631
    %v1636 = vpack.c.b16 %v1635, %v1634
    %v1638 = vsel %vm148, %v1590, 0
    %v1641 = vsel %vm148, %v1591, 0
    %v1644 = vsel %vm148, %v1592, 0
    %v1647 = vsel %vm148, %v1593, 0
    %v1650 = vsel %vm148, %v1594, 0
    %v1653 = vsel %vm148, %v1595, 0
    %v1656 = vsel %vm148, %v1596, 0
    %v1659 = vsel %vm148, %v1597, 0
    %v1662 = vsel %vm148, %v1598, 0
    %v1665 = vsel %vm148, %v1599, 0
    %v1668 = vsel %vm148, %v1600, 0
    %v1671 = vsel %vm148, %v1601, 0
    %v1674 = vsel %vm148, %v1602, 0
    %v1677 = vsel %vm148, %v1603, 0
    %v1680 = vsel %vm148, %v1604, 0
    %v1683 = vsel %vm148, %v1605, 0
    %v1686 = vsel %vm148, %v1606, 0
    %v1689 = vsel %vm148, %v1607, 0
    %v1692 = vsel %vm148, %v1608, 0
    %v1695 = vsel %vm148, %v1609, 0
    %v1698 = vsel %vm148, %v1610, 0
    %v1701 = vsel %vm148, %v1611, 0
    %v1704 = vsel %vm148, %v1612, 0
    %v1707 = vsel %vm148, %v1613, 0
    %v1710 = vsel %vm148, %v1614, 0
    %v1713 = vsel %vm148, %v1615, 0
    %v1716 = vsel %vm148, %v1616, 0
    %v1719 = vsel %vm148, %v1617, 0
    %v1722 = vsel %vm148, %v1618, 0
    %v1725 = vsel %vm148, %v1619, 0
    %v1728 = vsel %vm148, %v1620, 0
    %v1731 = vsel %vm148, %v1621, 0
    %v1734 = vsel %vm148, %v1622, 0
    %v1737 = vsel %vm148, %v1623, 0
    %v1740 = vsel %vm148, %v1624, 0
    %v1743 = vsel %vm148, %v1625, 0
    %v1746 = vsel %vm148, %v1626, 0
    %v1749 = vsel %vm148, %v1627, 0
    %v1752 = vsel %vm148, %v1628, 0
    %v1755 = vand.u32 %v1636, %v269
    %1757 = vmatprep.subr.bf16.mxu0 0
    %1758 = vmatpush1.bf16.msra.mxu0 %v1755
    %1759 = vmatprep.subr.bf16.mxu0 0
    %1760 = vmatpush1.bf16.msra.mxu0 0
    %1761 = vmatprep.subr.bf16.mxu0 0
    %1762 = vmatpush1.bf16.msra.mxu0 0
    %1763 = vmatprep.subr.bf16.mxu0 0
    %1764 = vmatpush1.bf16.msra.mxu0 0
    %1765 = vmatprep.subr.bf16.mxu0 0
    %1766 = vmatpush1.bf16.msra.mxu0 0
    %1767 = vmatprep.subr.bf16.mxu0 0
    %1768 = vmatpush1.bf16.msra.mxu0 0
    %1769 = vmatprep.subr.bf16.mxu0 0
    %1770 = vmatpush1.bf16.msra.mxu0 0
    %1771 = vmatprep.subr.bf16.mxu0 0
    %1772 = vmatpush1.bf16.msra.mxu0 0
    %1773 = vmatprep.subr.bf16.mxu0 0
    %1774 = vmatpush1.bf16.msra.mxu0 0
    %1775 = vmatprep.subr.bf16.mxu0 0
    %1776 = vmatpush1.bf16.msra.mxu0 0
    %1777 = vmatprep.subr.bf16.mxu0 0
    %1778 = vmatpush1.bf16.msra.mxu0 0
    %1779 = vmatprep.subr.bf16.mxu0 0
    %1780 = vmatpush1.bf16.msra.mxu0 0
    %1781 = vmatprep.subr.bf16.mxu0 0
    %1782 = vmatpush1.bf16.msra.mxu0 0
    %1783 = vmatprep.subr.bf16.mxu0 0
    %1784 = vmatpush1.bf16.msra.mxu0 0
    %1785 = vmatprep.subr.bf16.mxu0 0
    %1786 = vmatpush1.bf16.msra.mxu0 0
    %1787 = vmatprep.subr.bf16.mxu0 0
    %1788 = vmatpush1.bf16.msra.mxu0 0
    %1789 = vmatprep.mubr.bf16.mxu0 0
    %1790 = vmatmul.mubr.bf16.gmra.mrb[0].mxu0 %v1638
    %v1791 = vpop.f32.mrb[0].mxu0
    %v1792 = vadd.f32 0.0, %v1791
    %v1793 = vpop.f32.mrb[0].mxu0
    %v1794 = vpop.f32.mrb[0].mxu0
    %v1795 = vadd.f32 0.0, %v1794
    %v1796 = vpop.f32.mrb[0].mxu0
    %1797 = vmatprep.mubr.bf16.mxu0 0
    %1798 = vmatmul.mubr.bf16.gmra.mrb[0].mxu0 %v1641
    %v1799 = vpop.f32.mrb[0].mxu0
    %v1800 = vadd.f32 0.0, %v1799
    %v1801 = vpop.f32.mrb[0].mxu0
    %v1802 = vpop.f32.mrb[0].mxu0
    %v1803 = vadd.f32 0.0, %v1802
    %v1804 = vpop.f32.mrb[0].mxu0
    %1805 = vmatprep.mubr.bf16.mxu0 0
    %1806 = vmatmul.mubr.bf16.gmra.mrb[0].mxu0 %v1644
    %v1807 = vpop.f32.mrb[0].mxu0
    %v1808 = vadd.f32 0.0, %v1807
    %v1809 = vpop.f32.mrb[0].mxu0
    %v1810 = vpop.f32.mrb[0].mxu0
    %v1811 = vadd.f32 0.0, %v1810
    %v1812 = vpop.f32.mrb[0].mxu0
    %1813 = vmatprep.mubr.bf16.mxu0 0
    %1814 = vmatmul.mubr.bf16.gmra.mrb[0].mxu0 %v1647
    %v1815 = vpop.f32.mrb[0].mxu0
    %v1816 = vadd.f32 0.0, %v1815
    %v1817 = vpop.f32.mrb[0].mxu0
    %v1818 = vpop.f32.mrb[0].mxu0
    %v1819 = vadd.f32 0.0, %v1818
    %v1820 = vpop.f32.mrb[0].mxu0
    %1821 = vmatprep.mubr.bf16.mxu0 0
    %1822 = vmatmul.mubr.bf16.gmra.mrb[0].mxu0 %v1650
    %v1823 = vpop.f32.mrb[0].mxu0
    %v1824 = vadd.f32 0.0, %v1823
    %v1825 = vpop.f32.mrb[0].mxu0
    %v1826 = vpop.f32.mrb[0].mxu0
    %v1827 = vadd.f32 0.0, %v1826
    %v1828 = vpop.f32.mrb[0].mxu0
    %1829 = vmatprep.mubr.bf16.mxu0 0
    %1830 = vmatmul.mubr.bf16.gmra.mrb[0].mxu0 %v1653
    %v1831 = vpop.f32.mrb[0].mxu0
    %v1832 = vadd.f32 0.0, %v1831
    %v1833 = vpop.f32.mrb[0].mxu0
    %v1834 = vpop.f32.mrb[0].mxu0
    %v1835 = vadd.f32 0.0, %v1834
    %v1836 = vpop.f32.mrb[0].mxu0
    %1837 = vmatprep.mubr.bf16.mxu0 0
    %1838 = vmatmul.mubr.bf16.gmra.mrb[0].mxu0 %v1656
    %v1839 = vpop.f32.mrb[0].mxu0
    %v1840 = vadd.f32 0.0, %v1839
    %v1841 = vpop.f32.mrb[0].mxu0
    %v1842 = vpop.f32.mrb[0].mxu0
    %v1843 = vadd.f32 0.0, %v1842
    %v1844 = vpop.f32.mrb[0].mxu0
    %1845 = vmatprep.mubr.bf16.mxu0 0
    %1846 = vmatmul.mubr.bf16.gmra.mrb[0].mxu0 %v1659
    %v1847 = vpop.f32.mrb[0].mxu0
    %v1848 = vadd.f32 0.0, %v1847
    %v1849 = vpop.f32.mrb[0].mxu0
    %v1850 = vpop.f32.mrb[0].mxu0
    %v1851 = vadd.f32 0.0, %v1850
    %v1852 = vpop.f32.mrb[0].mxu0
    %1853 = vmatprep.mubr.bf16.mxu0 0
    %1854 = vmatmul.mubr.bf16.gmra.mrb[0].mxu0 %v1662
    %v1855 = vpop.f32.mrb[0].mxu0
    %v1856 = vadd.f32 0.0, %v1855
    %v1857 = vpop.f32.mrb[0].mxu0
    %v1858 = vpop.f32.mrb[0].mxu0
    %v1859 = vadd.f32 0.0, %v1858
    %v1860 = vpop.f32.mrb[0].mxu0
    %1861 = vmatprep.mubr.bf16.mxu0 0
    %1862 = vmatmul.mubr.bf16.gmra.mrb[0].mxu0 %v1665
    %v1863 = vpop.f32.mrb[0].mxu0
    %v1864 = vadd.f32 0.0, %v1863
    %v1865 = vpop.f32.mrb[0].mxu0
    %v1866 = vpop.f32.mrb[0].mxu0
    %v1867 = vadd.f32 0.0, %v1866
    %v1868 = vpop.f32.mrb[0].mxu0
    %1869 = vmatprep.mubr.bf16.mxu0 0
    %1870 = vmatmul.mubr.bf16.gmra.mrb[0].mxu0 %v1668
    %v1871 = vpop.f32.mrb[0].mxu0
    %v1872 = vadd.f32 0.0, %v1871
    %v1873 = vpop.f32.mrb[0].mxu0
    %v1874 = vpop.f32.mrb[0].mxu0
    %v1875 = vadd.f32 0.0, %v1874
    %v1876 = vpop.f32.mrb[0].mxu0
    %1877 = vmatprep.mubr.bf16.mxu0 0
    %1878 = vmatmul.mubr.bf16.gmra.mrb[0].mxu0 %v1671
    %v1879 = vpop.f32.mrb[0].mxu0
    %v1880 = vadd.f32 0.0, %v1879
    %v1881 = vpop.f32.mrb[0].mxu0
    %v1882 = vpop.f32.mrb[0].mxu0
    %v1883 = vadd.f32 0.0, %v1882
    %v1884 = vpop.f32.mrb[0].mxu0
    %1885 = vmatprep.mubr.bf16.mxu0 0
    %1886 = vmatmul.mubr.bf16.gmra.mrb[0].mxu0 %v1674
    %v1887 = vpop.f32.mrb[0].mxu0
    %v1888 = vadd.f32 0.0, %v1887
    %v1889 = vpop.f32.mrb[0].mxu0
    %v1890 = vpop.f32.mrb[0].mxu0
    %v1891 = vadd.f32 0.0, %v1890
    %v1892 = vpop.f32.mrb[0].mxu0
    %1893 = vmatprep.mubr.bf16.mxu0 0
    %1894 = vmatmul.mubr.bf16.gmra.mrb[0].mxu0 %v1677
    %v1895 = vpop.f32.mrb[0].mxu0
    %v1896 = vadd.f32 0.0, %v1895
    %v1897 = vpop.f32.mrb[0].mxu0
    %v1898 = vpop.f32.mrb[0].mxu0
    %v1899 = vadd.f32 0.0, %v1898
    %v1900 = vpop.f32.mrb[0].mxu0
    %1901 = vmatprep.mubr.bf16.mxu0 0
    %1902 = vmatmul.mubr.bf16.gmra.mrb[0].mxu0 %v1680
    %v1903 = vpop.f32.mrb[0].mxu0
    %v1904 = vadd.f32 0.0, %v1903
    %v1905 = vpop.f32.mrb[0].mxu0
    %v1906 = vpop.f32.mrb[0].mxu0
    %v1907 = vadd.f32 0.0, %v1906
    %v1908 = vpop.f32.mrb[0].mxu0
    %1909 = vmatprep.mubr.bf16.mxu0 0
    %1910 = vmatmul.mubr.bf16.gmra.mrb[0].mxu0 %v1683
    %v1911 = vpop.f32.mrb[0].mxu0
    %v1912 = vadd.f32 0.0, %v1911
    %v1913 = vpop.f32.mrb[0].mxu0
    %v1914 = vpop.f32.mrb[0].mxu0
    %v1915 = vadd.f32 0.0, %v1914
    %v1916 = vpop.f32.mrb[0].mxu0
    %1917 = vmatprep.mubr.bf16.mxu0 0
    %1918 = vmatmul.mubr.bf16.gmra.mrb[0].mxu0 %v1686
    %v1919 = vpop.f32.mrb[0].mxu0
    %v1920 = vadd.f32 0.0, %v1919
    %v1921 = vpop.f32.mrb[0].mxu0
    %v1922 = vpop.f32.mrb[0].mxu0
    %v1923 = vadd.f32 0.0, %v1922
    %v1924 = vpop.f32.mrb[0].mxu0
    %1925 = vmatprep.mubr.bf16.mxu0 0
    %1926 = vmatmul.mubr.bf16.gmra.mrb[0].mxu0 %v1689
    %v1927 = vpop.f32.mrb[0].mxu0
    %v1928 = vadd.f32 0.0, %v1927
    %v1929 = vpop.f32.mrb[0].mxu0
    %v1930 = vpop.f32.mrb[0].mxu0
    %v1931 = vadd.f32 0.0, %v1930
    %v1932 = vpop.f32.mrb[0].mxu0
    %1933 = vmatprep.mubr.bf16.mxu0 0
    %1934 = vmatmul.mubr.bf16.gmra.mrb[0].mxu0 %v1692
    %v1935 = vpop.f32.mrb[0].mxu0
    %v1936 = vadd.f32 0.0, %v1935
    %v1937 = vpop.f32.mrb[0].mxu0
    %v1938 = vpop.f32.mrb[0].mxu0
    %v1939 = vadd.f32 0.0, %v1938
    %v1940 = vpop.f32.mrb[0].mxu0
    %1941 = vmatprep.mubr.bf16.mxu0 0
    %1942 = vmatmul.mubr.bf16.gmra.mrb[0].mxu0 %v1695
    %v1943 = vpop.f32.mrb[0].mxu0
    %v1944 = vadd.f32 0.0, %v1943
    %v1945 = vpop.f32.mrb[0].mxu0
    %v1946 = vpop.f32.mrb[0].mxu0
    %v1947 = vadd.f32 0.0, %v1946
    %v1948 = vpop.f32.mrb[0].mxu0
    %1949 = vmatprep.mubr.bf16.mxu0 0
    %1950 = vmatmul.mubr.bf16.gmra.mrb[0].mxu0 %v1698
    %v1951 = vpop.f32.mrb[0].mxu0
    %v1952 = vadd.f32 0.0, %v1951
    %v1953 = vpop.f32.mrb[0].mxu0
    %v1954 = vpop.f32.mrb[0].mxu0
    %v1955 = vadd.f32 0.0, %v1954
    %v1956 = vpop.f32.mrb[0].mxu0
    %1957 = vmatprep.mubr.bf16.mxu0 0
    %1958 = vmatmul.mubr.bf16.gmra.mrb[0].mxu0 %v1701
    %v1959 = vpop.f32.mrb[0].mxu0
    %v1960 = vadd.f32 0.0, %v1959
    %v1961 = vpop.f32.mrb[0].mxu0
    %v1962 = vpop.f32.mrb[0].mxu0
    %v1963 = vadd.f32 0.0, %v1962
    %v1964 = vpop.f32.mrb[0].mxu0
    %1965 = vmatprep.mubr.bf16.mxu0 0
    %1966 = vmatmul.mubr.bf16.gmra.mrb[0].mxu0 %v1704
    %v1967 = vpop.f32.mrb[0].mxu0
    %v1968 = vadd.f32 0.0, %v1967
    %v1969 = vpop.f32.mrb[0].mxu0
    %v1970 = vpop.f32.mrb[0].mxu0
    %v1971 = vadd.f32 0.0, %v1970
    %v1972 = vpop.f32.mrb[0].mxu0
    %1973 = vmatprep.mubr.bf16.mxu0 0
    %1974 = vmatmul.mubr.bf16.gmra.mrb[0].mxu0 %v1707
    %v1975 = vpop.f32.mrb[0].mxu0
    %v1976 = vadd.f32 0.0, %v1975
    %v1977 = vpop.f32.mrb[0].mxu0
    %v1978 = vpop.f32.mrb[0].mxu0
    %v1979 = vadd.f32 0.0, %v1978
    %v1980 = vpop.f32.mrb[0].mxu0
    %1981 = vmatprep.mubr.bf16.mxu0 0
    %1982 = vmatmul.mubr.bf16.gmra.mrb[0].mxu0 %v1710
    %v1983 = vpop.f32.mrb[0].mxu0
    %v1984 = vadd.f32 0.0, %v1983
    %v1985 = vpop.f32.mrb[0].mxu0
    %v1986 = vpop.f32.mrb[0].mxu0
    %v1987 = vadd.f32 0.0, %v1986
    %v1988 = vpop.f32.mrb[0].mxu0
    %1989 = vmatprep.mubr.bf16.mxu0 0
    %1990 = vmatmul.mubr.bf16.gmra.mrb[0].mxu0 %v1713
    %v1991 = vpop.f32.mrb[0].mxu0
    %v1992 = vadd.f32 0.0, %v1991
    %v1993 = vpop.f32.mrb[0].mxu0
    %v1994 = vpop.f32.mrb[0].mxu0
    %v1995 = vadd.f32 0.0, %v1994
    %v1996 = vpop.f32.mrb[0].mxu0
    %1997 = vmatprep.mubr.bf16.mxu0 0
    %1998 = vmatmul.mubr.bf16.gmra.mrb[0].mxu0 %v1716
    %v1999 = vpop.f32.mrb[0].mxu0
    %v2000 = vadd.f32 0.0, %v1999
    %v2001 = vpop.f32.mrb[0].mxu0
    %v2002 = vpop.f32.mrb[0].mxu0
    %v2003 = vadd.f32 0.0, %v2002
    %v2004 = vpop.f32.mrb[0].mxu0
    %2005 = vmatprep.mubr.bf16.mxu0 0
    %2006 = vmatmul.mubr.bf16.gmra.mrb[0].mxu0 %v1719
    %v2007 = vpop.f32.mrb[0].mxu0
    %v2008 = vadd.f32 0.0, %v2007
    %v2009 = vpop.f32.mrb[0].mxu0
    %v2010 = vpop.f32.mrb[0].mxu0
    %v2011 = vadd.f32 0.0, %v2010
    %v2012 = vpop.f32.mrb[0].mxu0
    %2013 = vmatprep.mubr.bf16.mxu0 0
    %2014 = vmatmul.mubr.bf16.gmra.mrb[0].mxu0 %v1722
    %v2015 = vpop.f32.mrb[0].mxu0
    %v2016 = vadd.f32 0.0, %v2015
    %v2017 = vpop.f32.mrb[0].mxu0
    %v2018 = vpop.f32.mrb[0].mxu0
    %v2019 = vadd.f32 0.0, %v2018
    %v2020 = vpop.f32.mrb[0].mxu0
    %2021 = vmatprep.mubr.bf16.mxu0 0
    %2022 = vmatmul.mubr.bf16.gmra.mrb[0].mxu0 %v1725
    %v2023 = vpop.f32.mrb[0].mxu0
    %v2024 = vadd.f32 0.0, %v2023
    %v2025 = vpop.f32.mrb[0].mxu0
    %v2026 = vpop.f32.mrb[0].mxu0
    %v2027 = vadd.f32 0.0, %v2026
    %v2028 = vpop.f32.mrb[0].mxu0
    %2029 = vmatprep.mubr.bf16.mxu0 0
    %2030 = vmatmul.mubr.bf16.gmra.mrb[0].mxu0 %v1728
    %v2031 = vpop.f32.mrb[0].mxu0
    %v2032 = vadd.f32 0.0, %v2031
    %v2033 = vpop.f32.mrb[0].mxu0
    %v2034 = vpop.f32.mrb[0].mxu0
    %v2035 = vadd.f32 0.0, %v2034
    %v2036 = vpop.f32.mrb[0].mxu0
    %2037 = vmatprep.mubr.bf16.mxu0 0
    %2038 = vmatmul.mubr.bf16.gmra.mrb[0].mxu0 %v1731
    %v2039 = vpop.f32.mrb[0].mxu0
    %v2040 = vadd.f32 0.0, %v2039
    %v2041 = vpop.f32.mrb[0].mxu0
    %v2042 = vpop.f32.mrb[0].mxu0
    %v2043 = vadd.f32 0.0, %v2042
    %v2044 = vpop.f32.mrb[0].mxu0
    %2045 = vmatprep.mubr.bf16.mxu0 0
    %2046 = vmatmul.mubr.bf16.gmra.mrb[0].mxu0 %v1734
    %v2047 = vpop.f32.mrb[0].mxu0
    %v2048 = vadd.f32 0.0, %v2047
    %v2049 = vpop.f32.mrb[0].mxu0
    %v2050 = vpop.f32.mrb[0].mxu0
    %v2051 = vadd.f32 0.0, %v2050
    %v2052 = vpop.f32.mrb[0].mxu0
    %2053 = vmatprep.mubr.bf16.mxu0 0
    %2054 = vmatmul.mubr.bf16.gmra.mrb[0].mxu0 %v1737
    %v2055 = vpop.f32.mrb[0].mxu0
    %v2056 = vadd.f32 0.0, %v2055
    %v2057 = vpop.f32.mrb[0].mxu0
    %v2058 = vpop.f32.mrb[0].mxu0
    %v2059 = vadd.f32 0.0, %v2058
    %v2060 = vpop.f32.mrb[0].mxu0
    %2061 = vmatprep.mubr.bf16.mxu0 0
    %2062 = vmatmul.mubr.bf16.gmra.mrb[0].mxu0 %v1740
    %v2063 = vpop.f32.mrb[0].mxu0
    %v2064 = vadd.f32 0.0, %v2063
    %v2065 = vpop.f32.mrb[0].mxu0
    %v2066 = vpop.f32.mrb[0].mxu0
    %v2067 = vadd.f32 0.0, %v2066
    %v2068 = vpop.f32.mrb[0].mxu0
    %2069 = vmatprep.mubr.bf16.mxu0 0
    %2070 = vmatmul.mubr.bf16.gmra.mrb[0].mxu0 %v1743
    %v2071 = vpop.f32.mrb[0].mxu0
    %v2072 = vadd.f32 0.0, %v2071
    %v2073 = vpop.f32.mrb[0].mxu0
    %v2074 = vpop.f32.mrb[0].mxu0
    %v2075 = vadd.f32 0.0, %v2074
    %v2076 = vpop.f32.mrb[0].mxu0
    %2077 = vmatprep.mubr.bf16.mxu0 0
    %2078 = vmatmul.mubr.bf16.gmra.mrb[0].mxu0 %v1746
    %v2079 = vpop.f32.mrb[0].mxu0
    %v2080 = vadd.f32 0.0, %v2079
    %v2081 = vpop.f32.mrb[0].mxu0
    %v2082 = vpop.f32.mrb[0].mxu0
    %v2083 = vadd.f32 0.0, %v2082
    %v2084 = vpop.f32.mrb[0].mxu0
    %2085 = vmatprep.mubr.bf16.mxu0 0
    %2086 = vmatmul.mubr.bf16.gmra.mrb[0].mxu0 %v1749
    %v2087 = vpop.f32.mrb[0].mxu0
    %v2088 = vadd.f32 0.0, %v2087
    %v2089 = vpop.f32.mrb[0].mxu0
    %v2090 = vpop.f32.mrb[0].mxu0
    %v2091 = vadd.f32 0.0, %v2090
    %v2092 = vpop.f32.mrb[0].mxu0
    %2093 = vmatprep.mubr.bf16.mxu0 0
    %2094 = vmatmul.mubr.bf16.gmra.mrb[0].mxu0 %v1752
    %v2095 = vpop.f32.mrb[0].mxu0
    %v2096 = vadd.f32 0.0, %v2095
    %v2097 = vpop.f32.mrb[0].mxu0
    %v2098 = vpop.f32.mrb[0].mxu0
    %v2099 = vpop.f32.mrb[0].mxu0
    %2100 = vdwg.mxu0
    %v2101 = vld [vmem:[#allocation2] sm:$0xff]
    %v2102 = vld [vmem:[#allocation2 + $0x8] sm:$0xff]
    %v2103 = vld [vmem:[#allocation2 + $0x10] sm:$0xff]
    %v2104 = vld [vmem:[#allocation2 + $0x18] sm:$0xff]
    %v2105 = vld [vmem:[#allocation2 + $0x20] sm:$0xff]
    %v2106 = vld [vmem:[#allocation2 + $0x28] sm:$0xff]
    %v2107 = vld [vmem:[#allocation2 + $0x30] sm:$0xff]
    %v2108 = vld [vmem:[#allocation2 + $0x38] sm:$0xff]
    %v2109 = vld [vmem:[#allocation2 + $0x40] sm:$0xff]
    %v2110 = vld [vmem:[#allocation2 + $0x48] sm:$0xff]
    %v2111 = vld [vmem:[#allocation2 + $0x50] sm:$0xff]
    %v2112 = vld [vmem:[#allocation2 + $0x58] sm:$0xff]
    %v2113 = vld [vmem:[#allocation2 + $0x60] sm:$0xff]
    %v2114 = vld [vmem:[#allocation2 + $0x68] sm:$0xff]
    %v2115 = vld [vmem:[#allocation2 + $0x70] sm:$0xff]
    %v2116 = vld [vmem:[#allocation2 + $0x78] sm:$0xff]
    %v2117 = vld [vmem:[#allocation2 + $0x80] sm:$0xff]
    %v2118 = vld [vmem:[#allocation2 + $0x88] sm:$0xff]
    %v2119 = vld [vmem:[#allocation2 + $0x90] sm:$0xff]
    %v2120 = vld [vmem:[#allocation2 + $0x98] sm:$0xff]
    %v2121 = vld [vmem:[#allocation2 + $0xa0] sm:$0xff]
    %v2122 = vld [vmem:[#allocation2 + $0xa8] sm:$0xff]
    %v2123 = vld [vmem:[#allocation2 + $0xb0] sm:$0xff]
    %v2124 = vld [vmem:[#allocation2 + $0xb8] sm:$0xff]
    %v2125 = vld [vmem:[#allocation2 + $0xc0] sm:$0xff]
    %v2126 = vld [vmem:[#allocation2 + $0xc8] sm:$0xff]
    %v2127 = vld [vmem:[#allocation2 + $0xd0] sm:$0xff]
    %v2128 = vld [vmem:[#allocation2 + $0xd8] sm:$0xff]
    %v2129 = vld [vmem:[#allocation2 + $0xe0] sm:$0xff]
    %v2130 = vld [vmem:[#allocation2 + $0xe8] sm:$0xff]
    %v2131 = vld [vmem:[#allocation2 + $0xf0] sm:$0xff]
    %v2132 = vld [vmem:[#allocation2 + $0xf8] sm:$0xff]
    %v2133 = vld [vmem:[#allocation2 + $0x100] sm:$0xff]
    %v2134 = vld [vmem:[#allocation2 + $0x108] sm:$0xff]
    %v2135 = vld [vmem:[#allocation2 + $0x110] sm:$0xff]
    %v2136 = vld [vmem:[#allocation2 + $0x118] sm:$0xff]
    %v2137 = vld [vmem:[#allocation2 + $0x120] sm:$0xff]
    %v2138 = vld [vmem:[#allocation2 + $0x128] sm:$0xff]
    %v2139 = vld [vmem:[#allocation2 + $0x130] sm:$0xff]
    %v2140 = vld [vmem:[#allocation2 + $0x138] sm:$0xff]
    %v2141 = vld [vmem:[#allocation2 + $0x140] sm:$0xff]
    %v2142 = vld [vmem:[#allocation2 + $0x148] sm:$0xff]
    %v2143 = vld [vmem:[#allocation2 + $0x150] sm:$0xff]
    %v2144 = vld [vmem:[#allocation2 + $0x158] sm:$0xff]
    %v2145 = vld [vmem:[#allocation2 + $0x160] sm:$0xff]
    %v2146 = vld [vmem:[#allocation2 + $0x168] sm:$0xff]
    %v2147 = vld [vmem:[#allocation2 + $0x170] sm:$0xff]
    %v2148 = vld [vmem:[#allocation2 + $0x178] sm:$0xff]
    %v2149 = vld [vmem:[#allocation2 + $0x180] sm:$0xff]
    %v2150 = vld [vmem:[#allocation2 + $0x188] sm:$0xff]
    %v2151 = vld [vmem:[#allocation2 + $0x190] sm:$0xff]
    %v2152 = vld [vmem:[#allocation2 + $0x198] sm:$0xff]
    %v2153 = vld [vmem:[#allocation2 + $0x1a0] sm:$0xff]
    %v2154 = vld [vmem:[#allocation2 + $0x1a8] sm:$0xff]
    %v2155 = vld [vmem:[#allocation2 + $0x1b0] sm:$0xff]
    %v2156 = vld [vmem:[#allocation2 + $0x1b8] sm:$0xff]
    %v2157 = vld [vmem:[#allocation2 + $0x1c0] sm:$0xff]
    %v2158 = vld [vmem:[#allocation2 + $0x1c8] sm:$0xff]
    %v2159 = vld [vmem:[#allocation2 + $0x1d0] sm:$0xff]
    %v2160 = vld [vmem:[#allocation2 + $0x1d8] sm:$0xff]
    %v2161 = vld [vmem:[#allocation2 + $0x1e0] sm:$0xff]
    %v2162 = vld [vmem:[#allocation2 + $0x1e8] sm:$0xff]
    %v2163 = vld [vmem:[#allocation2 + $0x1f0] sm:$0xff]
    %v2164 = vld [vmem:[#allocation2 + $0x1f8] sm:$0xff]
    %v2165 = vld [vmem:[#allocation2 + $0x200] sm:$0xff]
    %v2166 = vld [vmem:[#allocation2 + $0x208] sm:$0xff]
    %v2167 = vld [vmem:[#allocation2 + $0x210] sm:$0xff]
    %v2168 = vld [vmem:[#allocation2 + $0x218] sm:$0xff]
    %v2169 = vld [vmem:[#allocation2 + $0x220] sm:$0xff]
    %v2170 = vld [vmem:[#allocation2 + $0x228] sm:$0xff]
    %v2171 = vld [vmem:[#allocation2 + $0x230] sm:$0xff]
    %v2172 = vld [vmem:[#allocation2 + $0x238] sm:$0xff]
    %v2173 = vld [vmem:[#allocation2 + $0x240] sm:$0xff]
    %v2174 = vld [vmem:[#allocation2 + $0x248] sm:$0xff]
    %v2175 = vld [vmem:[#allocation2 + $0x250] sm:$0xff]
    %v2176 = vld [vmem:[#allocation2 + $0x258] sm:$0xff]
    %v2177 = vld [vmem:[#allocation2 + $0x260] sm:$0xff]
    %v2178 = vadd.f32 %v2101, %v1792
    %v2179 = vadd.f32 %v2102, %v1795
    %v2180 = vadd.f32 %v2103, %v1800
    %v2181 = vadd.f32 %v2104, %v1803
    %v2182 = vadd.f32 %v2105, %v1808
    %v2183 = vadd.f32 %v2106, %v1811
    %v2184 = vadd.f32 %v2107, %v1816
    %v2185 = vadd.f32 %v2108, %v1819
    %v2186 = vadd.f32 %v2109, %v1824
    %v2187 = vadd.f32 %v2110, %v1827
    %v2188 = vadd.f32 %v2111, %v1832
    %v2189 = vadd.f32 %v2112, %v1835
    %v2190 = vadd.f32 %v2113, %v1840
    %v2191 = vadd.f32 %v2114, %v1843
    %v2192 = vadd.f32 %v2115, %v1848
    %v2193 = vadd.f32 %v2116, %v1851
    %v2194 = vadd.f32 %v2117, %v1856
    %v2195 = vadd.f32 %v2118, %v1859
    %v2196 = vadd.f32 %v2119, %v1864
    %v2197 = vadd.f32 %v2120, %v1867
    %v2198 = vadd.f32 %v2121, %v1872
    %v2199 = vadd.f32 %v2122, %v1875
    %v2200 = vadd.f32 %v2123, %v1880
    %v2201 = vadd.f32 %v2124, %v1883
    %v2202 = vadd.f32 %v2125, %v1888
    %v2203 = vadd.f32 %v2126, %v1891
    %v2204 = vadd.f32 %v2127, %v1896
    %v2205 = vadd.f32 %v2128, %v1899
    %v2206 = vadd.f32 %v2129, %v1904
    %v2207 = vadd.f32 %v2130, %v1907
    %v2208 = vadd.f32 %v2131, %v1912
    %v2209 = vadd.f32 %v2132, %v1915
    %v2210 = vadd.f32 %v2133, %v1920
    %v2211 = vadd.f32 %v2134, %v1923
    %v2212 = vadd.f32 %v2135, %v1928
    %v2213 = vadd.f32 %v2136, %v1931
    %v2214 = vadd.f32 %v2137, %v1936
    %v2215 = vadd.f32 %v2138, %v1939
    %v2216 = vadd.f32 %v2139, %v1944
    %v2217 = vadd.f32 %v2140, %v1947
    %v2218 = vadd.f32 %v2141, %v1952
    %v2219 = vadd.f32 %v2142, %v1955
    %v2220 = vadd.f32 %v2143, %v1960
    %v2221 = vadd.f32 %v2144, %v1963
    %v2222 = vadd.f32 %v2145, %v1968
    %v2223 = vadd.f32 %v2146, %v1971
    %v2224 = vadd.f32 %v2147, %v1976
    %v2225 = vadd.f32 %v2148, %v1979
    %v2226 = vadd.f32 %v2149, %v1984
    %v2227 = vadd.f32 %v2150, %v1987
    %v2228 = vadd.f32 %v2151, %v1992
    %v2229 = vadd.f32 %v2152, %v1995
    %v2230 = vadd.f32 %v2153, %v2000
    %v2231 = vadd.f32 %v2154, %v2003
    %v2232 = vadd.f32 %v2155, %v2008
    %v2233 = vadd.f32 %v2156, %v2011
    %v2234 = vadd.f32 %v2157, %v2016
    %v2235 = vadd.f32 %v2158, %v2019
    %v2236 = vadd.f32 %v2159, %v2024
    %v2237 = vadd.f32 %v2160, %v2027
    %v2238 = vadd.f32 %v2161, %v2032
    %v2239 = vadd.f32 %v2162, %v2035
    %v2240 = vadd.f32 %v2163, %v2040
    %v2241 = vadd.f32 %v2164, %v2043
    %v2242 = vadd.f32 %v2165, %v2048
    %v2243 = vadd.f32 %v2166, %v2051
    %v2244 = vadd.f32 %v2167, %v2056
    %v2245 = vadd.f32 %v2168, %v2059
    %v2246 = vadd.f32 %v2169, %v2064
    %v2247 = vadd.f32 %v2170, %v2067
    %v2248 = vadd.f32 %v2171, %v2072
    %v2249 = vadd.f32 %v2172, %v2075
    %v2250 = vadd.f32 %v2173, %v2080
    %v2251 = vadd.f32 %v2174, %v2083
    %v2252 = vadd.f32 %v2175, %v2088
    %v2253 = vadd.f32 %v2176, %v2091
    %v2254 = vadd.f32 %v2177, %v2096
    %2255 = vst [vmem:[#allocation2] sm:$0xff] %v2178
    %2256 = vst [vmem:[#allocation2 + $0x8] sm:$0xff] %v2179
    %2257 = vst [vmem:[#allocation2 + $0x10] sm:$0xff] %v2180
    %2258 = vst [vmem:[#allocation2 + $0x18] sm:$0xff] %v2181
    %2259 = vst [vmem:[#allocation2 + $0x20] sm:$0xff] %v2182
    %2260 = vst [vmem:[#allocation2 + $0x28] sm:$0xff] %v2183
    %2261 = vst [vmem:[#allocation2 + $0x30] sm:$0xff] %v2184
    %2262 = vst [vmem:[#allocation2 + $0x38] sm:$0xff] %v2185
    %2263 = vst [vmem:[#allocation2 + $0x40] sm:$0xff] %v2186
    %2264 = vst [vmem:[#allocation2 + $0x48] sm:$0xff] %v2187
    %2265 = vst [vmem:[#allocation2 + $0x50] sm:$0xff] %v2188
    %2266 = vst [vmem:[#allocation2 + $0x58] sm:$0xff] %v2189
    %2267 = vst [vmem:[#allocation2 + $0x60] sm:$0xff] %v2190
    %2268 = vst [vmem:[#allocation2 + $0x68] sm:$0xff] %v2191
    %2269 = vst [vmem:[#allocation2 + $0x70] sm:$0xff] %v2192
    %2270 = vst [vmem:[#allocation2 + $0x78] sm:$0xff] %v2193
    %2271 = vst [vmem:[#allocation2 + $0x80] sm:$0xff] %v2194
    %2272 = vst [vmem:[#allocation2 + $0x88] sm:$0xff] %v2195
    %2273 = vst [vmem:[#allocation2 + $0x90] sm:$0xff] %v2196
    %2274 = vst [vmem:[#allocation2 + $0x98] sm:$0xff] %v2197
    %2275 = vst [vmem:[#allocation2 + $0xa0] sm:$0xff] %v2198
    %2276 = vst [vmem:[#allocation2 + $0xa8] sm:$0xff] %v2199
    %2277 = vst [vmem:[#allocation2 + $0xb0] sm:$0xff] %v2200
    %2278 = vst [vmem:[#allocation2 + $0xb8] sm:$0xff] %v2201
    %2279 = vst [vmem:[#allocation2 + $0xc0] sm:$0xff] %v2202
    %2280 = vst [vmem:[#allocation2 + $0xc8] sm:$0xff] %v2203
    %2281 = vst [vmem:[#allocation2 + $0xd0] sm:$0xff] %v2204
    %2282 = vst [vmem:[#allocation2 + $0xd8] sm:$0xff] %v2205
    %2283 = vst [vmem:[#allocation2 + $0xe0] sm:$0xff] %v2206
    %2284 = vst [vmem:[#allocation2 + $0xe8] sm:$0xff] %v2207
    %2285 = vst [vmem:[#allocation2 + $0xf0] sm:$0xff] %v2208
    %2286 = vst [vmem:[#allocation2 + $0xf8] sm:$0xff] %v2209
    %2287 = vst [vmem:[#allocation2 + $0x100] sm:$0xff] %v2210
    %2288 = vst [vmem:[#allocation2 + $0x108] sm:$0xff] %v2211
    %2289 = vst [vmem:[#allocation2 + $0x110] sm:$0xff] %v2212
    %2290 = vst [vmem:[#allocation2 + $0x118] sm:$0xff] %v2213
    %2291 = vst [vmem:[#allocation2 + $0x120] sm:$0xff] %v2214
    %2292 = vst [vmem:[#allocation2 + $0x128] sm:$0xff] %v2215
    %2293 = vst [vmem:[#allocation2 + $0x130] sm:$0xff] %v2216
    %2294 = vst [vmem:[#allocation2 + $0x138] sm:$0xff] %v2217
    %2295 = vst [vmem:[#allocation2 + $0x140] sm:$0xff] %v2218
    %2296 = vst [vmem:[#allocation2 + $0x148] sm:$0xff] %v2219
    %2297 = vst [vmem:[#allocation2 + $0x150] sm:$0xff] %v2220
    %2298 = vst [vmem:[#allocation2 + $0x158] sm:$0xff] %v2221
    %2299 = vst [vmem:[#allocation2 + $0x160] sm:$0xff] %v2222
    %2300 = vst [vmem:[#allocation2 + $0x168] sm:$0xff] %v2223
    %2301 = vst [vmem:[#allocation2 + $0x170] sm:$0xff] %v2224
    %2302 = vst [vmem:[#allocation2 + $0x178] sm:$0xff] %v2225
    %2303 = vst [vmem:[#allocation2 + $0x180] sm:$0xff] %v2226
    %2304 = vst [vmem:[#allocation2 + $0x188] sm:$0xff] %v2227
    %2305 = vst [vmem:[#allocation2 + $0x190] sm:$0xff] %v2228
    %2306 = vst [vmem:[#allocation2 + $0x198] sm:$0xff] %v2229
    %2307 = vst [vmem:[#allocation2 + $0x1a0] sm:$0xff] %v2230
    %2308 = vst [vmem:[#allocation2 + $0x1a8] sm:$0xff] %v2231
    %2309 = vst [vmem:[#allocation2 + $0x1b0] sm:$0xff] %v2232
    %2310 = vst [vmem:[#allocation2 + $0x1b8] sm:$0xff] %v2233
    %2311 = vst [vmem:[#allocation2 + $0x1c0] sm:$0xff] %v2234
    %2312 = vst [vmem:[#allocation2 + $0x1c8] sm:$0xff] %v2235
    %2313 = vst [vmem:[#allocation2 + $0x1d0] sm:$0xff] %v2236
    %2314 = vst [vmem:[#allocation2 + $0x1d8] sm:$0xff] %v2237
    %2315 = vst [vmem:[#allocation2 + $0x1e0] sm:$0xff] %v2238
    %2316 = vst [vmem:[#allocation2 + $0x1e8] sm:$0xff] %v2239
    %2317 = vst [vmem:[#allocation2 + $0x1f0] sm:$0xff] %v2240
    %2318 = vst [vmem:[#allocation2 + $0x1f8] sm:$0xff] %v2241
    %2319 = vst [vmem:[#allocation2 + $0x200] sm:$0xff] %v2242
    %2320 = vst [vmem:[#allocation2 + $0x208] sm:$0xff] %v2243
    %2321 = vst [vmem:[#allocation2 + $0x210] sm:$0xff] %v2244
    %2322 = vst [vmem:[#allocation2 + $0x218] sm:$0xff] %v2245
    %2323 = vst [vmem:[#allocation2 + $0x220] sm:$0xff] %v2246
    %2324 = vst [vmem:[#allocation2 + $0x228] sm:$0xff] %v2247
    %2325 = vst [vmem:[#allocation2 + $0x230] sm:$0xff] %v2248
    %2326 = vst [vmem:[#allocation2 + $0x238] sm:$0xff] %v2249
    %2327 = vst [vmem:[#allocation2 + $0x240] sm:$0xff] %v2250
    %2328 = vst [vmem:[#allocation2 + $0x248] sm:$0xff] %v2251
    %2329 = vst [vmem:[#allocation2 + $0x250] sm:$0xff] %v2252
    %2330 = vst [vmem:[#allocation2 + $0x258] sm:$0xff] %v2253
    %2331 = vst [vmem:[#allocation2 + $0x260] sm:$0xff] %v2254
    %v2332 = vld [vmem:[%s0 + $0x12] sm:$0xff]
    %v2333 = vld [vmem:[%s0 + $0x1a] sm:$0xff]
    %v2334 = vld [vmem:[%s0 + $0x22] sm:$0xff]
    %v2335 = vld [vmem:[%s0 + $0x2a] sm:$0xff]
    %v2336 = vld [vmem:[%s0 + $0x32] sm:$0xff]
    %v2337 = vld [vmem:[%s0 + $0x3a] sm:$0xff]
    %v2338 = vld [vmem:[%s0 + $0x42] sm:$0xff]
    %v2339 = vld [vmem:[%s0 + $0x4a] sm:$0xff]
    %v2340 = vld [vmem:[%s0 + $0x52] sm:$0xff]
    %v2341 = vld [vmem:[%s0 + $0x5a] sm:$0xff]
    %v2342 = vld [vmem:[%s0 + $0x62] sm:$0xff]
    %v2343 = vld [vmem:[%s0 + $0x6a] sm:$0xff]
    %v2344 = vld [vmem:[%s0 + $0x72] sm:$0xff]
    %v2345 = vld [vmem:[%s0 + $0x7a] sm:$0xff]
    %v2346 = vld [vmem:[%s0 + $0x82] sm:$0xff]
    %v2347 = vld [vmem:[%s0 + $0x8a] sm:$0xff]
    %v2348 = vld [vmem:[%s0 + $0x92] sm:$0xff]
    %v2349 = vld [vmem:[%s0 + $0x9a] sm:$0xff]
    %v2350 = vld [vmem:[%s0 + $0xa2] sm:$0xff]
    %v2351 = vld [vmem:[%s0 + $0xaa] sm:$0xff]
    %v2352 = vld [vmem:[%s0 + $0xb2] sm:$0xff]
    %v2353 = vld [vmem:[%s0 + $0xba] sm:$0xff]
    %v2354 = vld [vmem:[%s0 + $0xc2] sm:$0xff]
    %v2355 = vld [vmem:[%s0 + $0xca] sm:$0xff]
    %v2356 = vld [vmem:[%s0 + $0xd2] sm:$0xff]
    %v2357 = vld [vmem:[%s0 + $0xda] sm:$0xff]
    %v2358 = vld [vmem:[%s0 + $0xe2] sm:$0xff]
    %v2359 = vld [vmem:[%s0 + $0xea] sm:$0xff]
    %v2360 = vld [vmem:[%s0 + $0xf2] sm:$0xff]
    %v2361 = vld [vmem:[%s0 + $0xfa] sm:$0xff]
    %v2362 = vld [vmem:[%s0 + $0x102] sm:$0xff]
    %v2363 = vld [vmem:[%s0 + $0x10a] sm:$0xff]
    %v2364 = vld [vmem:[%s0 + $0x112] sm:$0xff]
    %v2365 = vld [vmem:[%s0 + $0x11a] sm:$0xff]
    %v2366 = vld [vmem:[%s0 + $0x122] sm:$0xff]
    %v2367 = vld [vmem:[%s0 + $0x12a] sm:$0xff]
    %v2368 = vld [vmem:[%s0 + $0x132] sm:$0xff]
    %v2369 = vld [vmem:[%s0 + $0x13a] sm:$0xff]
    %v2370 = vld [vmem:[%s0 + $0x142] sm:$0xff]
    %v2371 = vld [vmem:[%s0 + $0x14a] sm:$0xff]
    %v2372 = vld [vmem:[%s0 + $0x152] sm:$0xff]
    %v2373 = vld [vmem:[%s0 + $0x15a] sm:$0xff]
    %v2374 = vld [vmem:[%s0 + $0x162] sm:$0xff]
    %v2375 = vld [vmem:[%s0 + $0x16a] sm:$0xff]
    %v2376 = vld [vmem:[%s0 + $0x172] sm:$0xff]
    %v2377 = vld [vmem:[%s0 + $0x17a] sm:$0xff]
    %v2378 = vld [vmem:[%s0 + $0x182] sm:$0xff]
    %v2379 = vld [vmem:[%s0 + $0x18a] sm:$0xff]
    %v2380 = vld [vmem:[%s0 + $0x192] sm:$0xff]
    %v2381 = vld [vmem:[%s0 + $0x19a] sm:$0xff]
    %v2382 = vld [vmem:[%s0 + $0x1a2] sm:$0xff]
    %v2383 = vld [vmem:[%s0 + $0x1aa] sm:$0xff]
    %v2384 = vld [vmem:[%s0 + $0x1b2] sm:$0xff]
    %v2385 = vld [vmem:[%s0 + $0x1ba] sm:$0xff]
    %v2386 = vld [vmem:[%s0 + $0x1c2] sm:$0xff]
    %v2387 = vld [vmem:[%s0 + $0x1ca] sm:$0xff]
    %v2388 = vld [vmem:[%s0 + $0x1d2] sm:$0xff]
    %v2389 = vld [vmem:[%s0 + $0x1da] sm:$0xff]
    %v2390 = vld [vmem:[%s0 + $0x1e2] sm:$0xff]
    %v2391 = vld [vmem:[%s0 + $0x1ea] sm:$0xff]
    %v2392 = vld [vmem:[%s0 + $0x1f2] sm:$0xff]
    %v2393 = vld [vmem:[%s0 + $0x1fa] sm:$0xff]
    %v2394 = vld [vmem:[%s0 + $0x202] sm:$0xff]
    %v2395 = vld [vmem:[%s0 + $0x20a] sm:$0xff]
    %v2396 = vld [vmem:[%s0 + $0x212] sm:$0xff]
    %v2397 = vld [vmem:[%s0 + $0x21a] sm:$0xff]
    %v2398 = vld [vmem:[%s0 + $0x222] sm:$0xff]
    %v2399 = vld [vmem:[%s0 + $0x22a] sm:$0xff]
    %v2400 = vld [vmem:[%s0 + $0x232] sm:$0xff]
    %v2401 = vld [vmem:[%s0 + $0x23a] sm:$0xff]
    %v2402 = vld [vmem:[%s0 + $0x242] sm:$0xff]
    %v2403 = vld [vmem:[%s0 + $0x24a] sm:$0xff]
    %v2404 = vld [vmem:[%s0 + $0x252] sm:$0xff]
    %v2405 = vld [vmem:[%s0 + $0x25a] sm:$0xff]
    %v2406 = vld [vmem:[%s0 + $0x262] sm:$0xff]
    %v2407 = vld [vmem:[%s0 + $0x26a] sm:$0xff]
    %v2408 = vld [vmem:[%s0 + $0x272] sm:$0xff]
    %v2409 = vpack.c.bf16 %v2333, %v2332
    %v2410 = vpack.c.bf16 %v2335, %v2334
    %v2411 = vpack.c.bf16 %v2337, %v2336
    %v2412 = vpack.c.bf16 %v2339, %v2338
    %v2413 = vpack.c.bf16 %v2341, %v2340
    %v2414 = vpack.c.bf16 %v2343, %v2342
    %v2415 = vpack.c.bf16 %v2345, %v2344
    %v2416 = vpack.c.bf16 %v2347, %v2346
    %v2417 = vpack.c.bf16 %v2349, %v2348
    %v2418 = vpack.c.bf16 %v2351, %v2350
    %v2419 = vpack.c.bf16 %v2353, %v2352
    %v2420 = vpack.c.bf16 %v2355, %v2354
    %v2421 = vpack.c.bf16 %v2357, %v2356
    %v2422 = vpack.c.bf16 %v2359, %v2358
    %v2423 = vpack.c.bf16 %v2361, %v2360
    %v2424 = vpack.c.bf16 %v2363, %v2362
    %v2425 = vpack.c.bf16 %v2365, %v2364
    %v2426 = vpack.c.bf16 %v2367, %v2366
    %v2427 = vpack.c.bf16 %v2369, %v2368
    %v2428 = vpack.c.bf16 %v2371, %v2370
    %v2429 = vpack.c.bf16 %v2373, %v2372
    %v2430 = vpack.c.bf16 %v2375, %v2374
    %v2431 = vpack.c.bf16 %v2377, %v2376
    %v2432 = vpack.c.bf16 %v2379, %v2378
    %v2433 = vpack.c.bf16 %v2381, %v2380
    %v2434 = vpack.c.bf16 %v2383, %v2382
    %v2435 = vpack.c.bf16 %v2385, %v2384
    %v2436 = vpack.c.bf16 %v2387, %v2386
    %v2437 = vpack.c.bf16 %v2389, %v2388
    %v2438 = vpack.c.bf16 %v2391, %v2390
    %v2439 = vpack.c.bf16 %v2393, %v2392
    %v2440 = vpack.c.bf16 %v2395, %v2394
    %v2441 = vpack.c.bf16 %v2397, %v2396
    %v2442 = vpack.c.bf16 %v2399, %v2398
    %v2443 = vpack.c.bf16 %v2401, %v2400
    %v2444 = vpack.c.bf16 %v2403, %v2402
    %v2445 = vpack.c.bf16 %v2405, %v2404
    %v2446 = vpack.c.bf16 %v2407, %v2406
    %v2447 = vpack.c.bf16 %v2408, %v2408
    %s2448 = scalar_lea.vmem %s1, 24
    %v2449 = vld [vmem:[%s2448] sm:$0xf]
    %v2450 = vld [vmem:[%s2448 + $0x4] sm:$0x1]
    %v2453 = vunpack.c.l.b16 %v2449
    %v2454 = vunpack.c.l.b16 %v2450
    %v2455 = vpack.c.b16 %v2454, %v2453
    %v2457 = vsel %vm148, %v2409, 0
    %v2460 = vsel %vm148, %v2410, 0
    %v2463 = vsel %vm148, %v2411, 0
    %v2466 = vsel %vm148, %v2412, 0
    %v2469 = vsel %vm148, %v2413, 0
    %v2472 = vsel %vm148, %v2414, 0
    %v2475 = vsel %vm148, %v2415, 0
    %v2478 = vsel %vm148, %v2416, 0
    %v2481 = vsel %vm148, %v2417, 0
    %v2484 = vsel %vm148, %v2418, 0
    %v2487 = vsel %vm148, %v2419, 0
    %v2490 = vsel %vm148, %v2420, 0
    %v2493 = vsel %vm148, %v2421, 0
    %v2496 = vsel %vm148, %v2422, 0
    %v2499 = vsel %vm148, %v2423, 0
    %v2502 = vsel %vm148, %v2424, 0
    %v2505 = vsel %vm148, %v2425, 0
    %v2508 = vsel %vm148, %v2426, 0
    %v2511 = vsel %vm148, %v2427, 0
    %v2514 = vsel %vm148, %v2428, 0
    %v2517 = vsel %vm148, %v2429, 0
    %v2520 = vsel %vm148, %v2430, 0
    %v2523 = vsel %vm148, %v2431, 0
    %v2526 = vsel %vm148, %v2432, 0
    %v2529 = vsel %vm148, %v2433, 0
    %v2532 = vsel %vm148, %v2434, 0
    %v2535 = vsel %vm148, %v2435, 0
    %v2538 = vsel %vm148, %v2436, 0
    %v2541 = vsel %vm148, %v2437, 0
    %v2544 = vsel %vm148, %v2438, 0
    %v2547 = vsel %vm148, %v2439, 0
    %v2550 = vsel %vm148, %v2440, 0
    %v2553 = vsel %vm148, %v2441, 0
    %v2556 = vsel %vm148, %v2442, 0
    %v2559 = vsel %vm148, %v2443, 0
    %v2562 = vsel %vm148, %v2444, 0
    %v2565 = vsel %vm148, %v2445, 0
    %v2568 = vsel %vm148, %v2446, 0
    %v2571 = vsel %vm148, %v2447, 0
    %v2574 = vand.u32 %v2455, %v269
    %2576 = vmatprep.subr.bf16.mxu0 0
    %2577 = vmatpush1.bf16.msra.mxu0 %v2574
    %2578 = vmatprep.subr.bf16.mxu0 0
    %2579 = vmatpush1.bf16.msra.mxu0 0
    %2580 = vmatprep.subr.bf16.mxu0 0
    %2581 = vmatpush1.bf16.msra.mxu0 0
    %2582 = vmatprep.subr.bf16.mxu0 0
    %2583 = vmatpush1.bf16.msra.mxu0 0
    %2584 = vmatprep.subr.bf16.mxu0 0
    %2585 = vmatpush1.bf16.msra.mxu0 0
    %2586 = vmatprep.subr.bf16.mxu0 0
    %2587 = vmatpush1.bf16.msra.mxu0 0
    %2588 = vmatprep.subr.bf16.mxu0 0
    %2589 = vmatpush1.bf16.msra.mxu0 0
    %2590 = vmatprep.subr.bf16.mxu0 0
    %2591 = vmatpush1.bf16.msra.mxu0 0
    %2592 = vmatprep.subr.bf16.mxu0 0
    %2593 = vmatpush1.bf16.msra.mxu0 0
    %2594 = vmatprep.subr.bf16.mxu0 0
    %2595 = vmatpush1.bf16.msra.mxu0 0
    %2596 = vmatprep.subr.bf16.mxu0 0
    %2597 = vmatpush1.bf16.msra.mxu0 0
    %2598 = vmatprep.subr.bf16.mxu0 0
    %2599 = vmatpush1.bf16.msra.mxu0 0
    %2600 = vmatprep.subr.bf16.mxu0 0
    %2601 = vmatpush1.bf16.msra.mxu0 0
    %2602 = vmatprep.subr.bf16.mxu0 0
    %2603 = vmatpush1.bf16.msra.mxu0 0
    %2604 = vmatprep.subr.bf16.mxu0 0
    %2605 = vmatpush1.bf16.msra.mxu0 0
    %2606 = vmatprep.subr.bf16.mxu0 0
    %2607 = vmatpush1.bf16.msra.mxu0 0
    %2608 = vmatprep.mubr.bf16.mxu0 0
    %2609 = vmatmul.mubr.bf16.gmra.mrb[0].mxu0 %v2457
    %v2610 = vpop.f32.mrb[0].mxu0
    %v2611 = vadd.f32 0.0, %v2610
    %v2612 = vpop.f32.mrb[0].mxu0
    %v2613 = vpop.f32.mrb[0].mxu0
    %v2614 = vadd.f32 0.0, %v2613
    %v2615 = vpop.f32.mrb[0].mxu0
    %2616 = vmatprep.mubr.bf16.mxu0 0
    %2617 = vmatmul.mubr.bf16.gmra.mrb[0].mxu0 %v2460
    %v2618 = vpop.f32.mrb[0].mxu0
    %v2619 = vadd.f32 0.0, %v2618
    %v2620 = vpop.f32.mrb[0].mxu0
    %v2621 = vpop.f32.mrb[0].mxu0
    %v2622 = vadd.f32 0.0, %v2621
    %v2623 = vpop.f32.mrb[0].mxu0
    %2624 = vmatprep.mubr.bf16.mxu0 0
    %2625 = vmatmul.mubr.bf16.gmra.mrb[0].mxu0 %v2463
    %v2626 = vpop.f32.mrb[0].mxu0
    %v2627 = vadd.f32 0.0, %v2626
    %v2628 = vpop.f32.mrb[0].mxu0
    %v2629 = vpop.f32.mrb[0].mxu0
    %v2630 = vadd.f32 0.0, %v2629
    %v2631 = vpop.f32.mrb[0].mxu0
    %2632 = vmatprep.mubr.bf16.mxu0 0
    %2633 = vmatmul.mubr.bf16.gmra.mrb[0].mxu0 %v2466
    %v2634 = vpop.f32.mrb[0].mxu0
    %v2635 = vadd.f32 0.0, %v2634
    %v2636 = vpop.f32.mrb[0].mxu0
    %v2637 = vpop.f32.mrb[0].mxu0
    %v2638 = vadd.f32 0.0, %v2637
    %v2639 = vpop.f32.mrb[0].mxu0
    %2640 = vmatprep.mubr.bf16.mxu0 0
    %2641 = vmatmul.mubr.bf16.gmra.mrb[0].mxu0 %v2469
    %v2642 = vpop.f32.mrb[0].mxu0
    %v2643 = vadd.f32 0.0, %v2642
    %v2644 = vpop.f32.mrb[0].mxu0
    %v2645 = vpop.f32.mrb[0].mxu0
    %v2646 = vadd.f32 0.0, %v2645
    %v2647 = vpop.f32.mrb[0].mxu0
    %2648 = vmatprep.mubr.bf16.mxu0 0
    %2649 = vmatmul.mubr.bf16.gmra.mrb[0].mxu0 %v2472
    %v2650 = vpop.f32.mrb[0].mxu0
    %v2651 = vadd.f32 0.0, %v2650
    %v2652 = vpop.f32.mrb[0].mxu0
    %v2653 = vpop.f32.mrb[0].mxu0
    %v2654 = vadd.f32 0.0, %v2653
    %v2655 = vpop.f32.mrb[0].mxu0
    %2656 = vmatprep.mubr.bf16.mxu0 0
    %2657 = vmatmul.mubr.bf16.gmra.mrb[0].mxu0 %v2475
    %v2658 = vpop.f32.mrb[0].mxu0
    %v2659 = vadd.f32 0.0, %v2658
    %v2660 = vpop.f32.mrb[0].mxu0
    %v2661 = vpop.f32.mrb[0].mxu0
    %v2662 = vadd.f32 0.0, %v2661
    %v2663 = vpop.f32.mrb[0].mxu0
    %2664 = vmatprep.mubr.bf16.mxu0 0
    %2665 = vmatmul.mubr.bf16.gmra.mrb[0].mxu0 %v2478
    %v2666 = vpop.f32.mrb[0].mxu0
    %v2667 = vadd.f32 0.0, %v2666
    %v2668 = vpop.f32.mrb[0].mxu0
    %v2669 = vpop.f32.mrb[0].mxu0
    %v2670 = vadd.f32 0.0, %v2669
    %v2671 = vpop.f32.mrb[0].mxu0
    %2672 = vmatprep.mubr.bf16.mxu0 0
    %2673 = vmatmul.mubr.bf16.gmra.mrb[0].mxu0 %v2481
    %v2674 = vpop.f32.mrb[0].mxu0
    %v2675 = vadd.f32 0.0, %v2674
    %v2676 = vpop.f32.mrb[0].mxu0
    %v2677 = vpop.f32.mrb[0].mxu0
    %v2678 = vadd.f32 0.0, %v2677
    %v2679 = vpop.f32.mrb[0].mxu0
    %2680 = vmatprep.mubr.bf16.mxu0 0
    %2681 = vmatmul.mubr.bf16.gmra.mrb[0].mxu0 %v2484
    %v2682 = vpop.f32.mrb[0].mxu0
    %v2683 = vadd.f32 0.0, %v2682
    %v2684 = vpop.f32.mrb[0].mxu0
    %v2685 = vpop.f32.mrb[0].mxu0
    %v2686 = vadd.f32 0.0, %v2685
    %v2687 = vpop.f32.mrb[0].mxu0
    %2688 = vmatprep.mubr.bf16.mxu0 0
    %2689 = vmatmul.mubr.bf16.gmra.mrb[0].mxu0 %v2487
    %v2690 = vpop.f32.mrb[0].mxu0
    %v2691 = vadd.f32 0.0, %v2690
    %v2692 = vpop.f32.mrb[0].mxu0
    %v2693 = vpop.f32.mrb[0].mxu0
    %v2694 = vadd.f32 0.0, %v2693
    %v2695 = vpop.f32.mrb[0].mxu0
    %2696 = vmatprep.mubr.bf16.mxu0 0
    %2697 = vmatmul.mubr.bf16.gmra.mrb[0].mxu0 %v2490
    %v2698 = vpop.f32.mrb[0].mxu0
    %v2699 = vadd.f32 0.0, %v2698
    %v2700 = vpop.f32.mrb[0].mxu0
    %v2701 = vpop.f32.mrb[0].mxu0
    %v2702 = vadd.f32 0.0, %v2701
    %v2703 = vpop.f32.mrb[0].mxu0
    %2704 = vmatprep.mubr.bf16.mxu0 0
    %2705 = vmatmul.mubr.bf16.gmra.mrb[0].mxu0 %v2493
    %v2706 = vpop.f32.mrb[0].mxu0
    %v2707 = vadd.f32 0.0, %v2706
    %v2708 = vpop.f32.mrb[0].mxu0
    %v2709 = vpop.f32.mrb[0].mxu0
    %v2710 = vadd.f32 0.0, %v2709
    %v2711 = vpop.f32.mrb[0].mxu0
    %2712 = vmatprep.mubr.bf16.mxu0 0
    %2713 = vmatmul.mubr.bf16.gmra.mrb[0].mxu0 %v2496
    %v2714 = vpop.f32.mrb[0].mxu0
    %v2715 = vadd.f32 0.0, %v2714
    %v2716 = vpop.f32.mrb[0].mxu0
    %v2717 = vpop.f32.mrb[0].mxu0
    %v2718 = vadd.f32 0.0, %v2717
    %v2719 = vpop.f32.mrb[0].mxu0
    %2720 = vmatprep.mubr.bf16.mxu0 0
    %2721 = vmatmul.mubr.bf16.gmra.mrb[0].mxu0 %v2499
    %v2722 = vpop.f32.mrb[0].mxu0
    %v2723 = vadd.f32 0.0, %v2722
    %v2724 = vpop.f32.mrb[0].mxu0
    %v2725 = vpop.f32.mrb[0].mxu0
    %v2726 = vadd.f32 0.0, %v2725
    %v2727 = vpop.f32.mrb[0].mxu0
    %2728 = vmatprep.mubr.bf16.mxu0 0
    %2729 = vmatmul.mubr.bf16.gmra.mrb[0].mxu0 %v2502
    %v2730 = vpop.f32.mrb[0].mxu0
    %v2731 = vadd.f32 0.0, %v2730
    %v2732 = vpop.f32.mrb[0].mxu0
    %v2733 = vpop.f32.mrb[0].mxu0
    %v2734 = vadd.f32 0.0, %v2733
    %v2735 = vpop.f32.mrb[0].mxu0
    %2736 = vmatprep.mubr.bf16.mxu0 0
    %2737 = vmatmul.mubr.bf16.gmra.mrb[0].mxu0 %v2505
    %v2738 = vpop.f32.mrb[0].mxu0
    %v2739 = vadd.f32 0.0, %v2738
    %v2740 = vpop.f32.mrb[0].mxu0
    %v2741 = vpop.f32.mrb[0].mxu0
    %v2742 = vadd.f32 0.0, %v2741
    %v2743 = vpop.f32.mrb[0].mxu0
    %2744 = vmatprep.mubr.bf16.mxu0 0
    %2745 = vmatmul.mubr.bf16.gmra.mrb[0].mxu0 %v2508
    %v2746 = vpop.f32.mrb[0].mxu0
    %v2747 = vadd.f32 0.0, %v2746
    %v2748 = vpop.f32.mrb[0].mxu0
    %v2749 = vpop.f32.mrb[0].mxu0
    %v2750 = vadd.f32 0.0, %v2749
    %v2751 = vpop.f32.mrb[0].mxu0
    %2752 = vmatprep.mubr.bf16.mxu0 0
    %2753 = vmatmul.mubr.bf16.gmra.mrb[0].mxu0 %v2511
    %v2754 = vpop.f32.mrb[0].mxu0
    %v2755 = vadd.f32 0.0, %v2754
    %v2756 = vpop.f32.mrb[0].mxu0
    %v2757 = vpop.f32.mrb[0].mxu0
    %v2758 = vadd.f32 0.0, %v2757
    %v2759 = vpop.f32.mrb[0].mxu0
    %2760 = vmatprep.mubr.bf16.mxu0 0
    %2761 = vmatmul.mubr.bf16.gmra.mrb[0].mxu0 %v2514
    %v2762 = vpop.f32.mrb[0].mxu0
    %v2763 = vadd.f32 0.0, %v2762
    %v2764 = vpop.f32.mrb[0].mxu0
    %v2765 = vpop.f32.mrb[0].mxu0
    %v2766 = vadd.f32 0.0, %v2765
    %v2767 = vpop.f32.mrb[0].mxu0
    %2768 = vmatprep.mubr.bf16.mxu0 0
    %2769 = vmatmul.mubr.bf16.gmra.mrb[0].mxu0 %v2517
    %v2770 = vpop.f32.mrb[0].mxu0
    %v2771 = vadd.f32 0.0, %v2770
    %v2772 = vpop.f32.mrb[0].mxu0
    %v2773 = vpop.f32.mrb[0].mxu0
    %v2774 = vadd.f32 0.0, %v2773
    %v2775 = vpop.f32.mrb[0].mxu0
    %2776 = vmatprep.mubr.bf16.mxu0 0
    %2777 = vmatmul.mubr.bf16.gmra.mrb[0].mxu0 %v2520
    %v2778 = vpop.f32.mrb[0].mxu0
    %v2779 = vadd.f32 0.0, %v2778
    %v2780 = vpop.f32.mrb[0].mxu0
    %v2781 = vpop.f32.mrb[0].mxu0
    %v2782 = vadd.f32 0.0, %v2781
    %v2783 = vpop.f32.mrb[0].mxu0
    %2784 = vmatprep.mubr.bf16.mxu0 0
    %2785 = vmatmul.mubr.bf16.gmra.mrb[0].mxu0 %v2523
    %v2786 = vpop.f32.mrb[0].mxu0
    %v2787 = vadd.f32 0.0, %v2786
    %v2788 = vpop.f32.mrb[0].mxu0
    %v2789 = vpop.f32.mrb[0].mxu0
    %v2790 = vadd.f32 0.0, %v2789
    %v2791 = vpop.f32.mrb[0].mxu0
    %2792 = vmatprep.mubr.bf16.mxu0 0
    %2793 = vmatmul.mubr.bf16.gmra.mrb[0].mxu0 %v2526
    %v2794 = vpop.f32.mrb[0].mxu0
    %v2795 = vadd.f32 0.0, %v2794
    %v2796 = vpop.f32.mrb[0].mxu0
    %v2797 = vpop.f32.mrb[0].mxu0
    %v2798 = vadd.f32 0.0, %v2797
    %v2799 = vpop.f32.mrb[0].mxu0
    %2800 = vmatprep.mubr.bf16.mxu0 0
    %2801 = vmatmul.mubr.bf16.gmra.mrb[0].mxu0 %v2529
    %v2802 = vpop.f32.mrb[0].mxu0
    %v2803 = vadd.f32 0.0, %v2802
    %v2804 = vpop.f32.mrb[0].mxu0
    %v2805 = vpop.f32.mrb[0].mxu0
    %v2806 = vadd.f32 0.0, %v2805
    %v2807 = vpop.f32.mrb[0].mxu0
    %2808 = vmatprep.mubr.bf16.mxu0 0
    %2809 = vmatmul.mubr.bf16.gmra.mrb[0].mxu0 %v2532
    %v2810 = vpop.f32.mrb[0].mxu0
    %v2811 = vadd.f32 0.0, %v2810
    %v2812 = vpop.f32.mrb[0].mxu0
    %v2813 = vpop.f32.mrb[0].mxu0
    %v2814 = vadd.f32 0.0, %v2813
    %v2815 = vpop.f32.mrb[0].mxu0
    %2816 = vmatprep.mubr.bf16.mxu0 0
    %2817 = vmatmul.mubr.bf16.gmra.mrb[0].mxu0 %v2535
    %v2818 = vpop.f32.mrb[0].mxu0
    %v2819 = vadd.f32 0.0, %v2818
    %v2820 = vpop.f32.mrb[0].mxu0
    %v2821 = vpop.f32.mrb[0].mxu0
    %v2822 = vadd.f32 0.0, %v2821
    %v2823 = vpop.f32.mrb[0].mxu0
    %2824 = vmatprep.mubr.bf16.mxu0 0
    %2825 = vmatmul.mubr.bf16.gmra.mrb[0].mxu0 %v2538
    %v2826 = vpop.f32.mrb[0].mxu0
    %v2827 = vadd.f32 0.0, %v2826
    %v2828 = vpop.f32.mrb[0].mxu0
    %v2829 = vpop.f32.mrb[0].mxu0
    %v2830 = vadd.f32 0.0, %v2829
    %v2831 = vpop.f32.mrb[0].mxu0
    %2832 = vmatprep.mubr.bf16.mxu0 0
    %2833 = vmatmul.mubr.bf16.gmra.mrb[0].mxu0 %v2541
    %v2834 = vpop.f32.mrb[0].mxu0
    %v2835 = vadd.f32 0.0, %v2834
    %v2836 = vpop.f32.mrb[0].mxu0
    %v2837 = vpop.f32.mrb[0].mxu0
    %v2838 = vadd.f32 0.0, %v2837
    %v2839 = vpop.f32.mrb[0].mxu0
    %2840 = vmatprep.mubr.bf16.mxu0 0
    %2841 = vmatmul.mubr.bf16.gmra.mrb[0].mxu0 %v2544
    %v2842 = vpop.f32.mrb[0].mxu0
    %v2843 = vadd.f32 0.0, %v2842
    %v2844 = vpop.f32.mrb[0].mxu0
    %v2845 = vpop.f32.mrb[0].mxu0
    %v2846 = vadd.f32 0.0, %v2845
    %v2847 = vpop.f32.mrb[0].mxu0
    %2848 = vmatprep.mubr.bf16.mxu0 0
    %2849 = vmatmul.mubr.bf16.gmra.mrb[0].mxu0 %v2547
    %v2850 = vpop.f32.mrb[0].mxu0
    %v2851 = vadd.f32 0.0, %v2850
    %v2852 = vpop.f32.mrb[0].mxu0
    %v2853 = vpop.f32.mrb[0].mxu0
    %v2854 = vadd.f32 0.0, %v2853
    %v2855 = vpop.f32.mrb[0].mxu0
    %2856 = vmatprep.mubr.bf16.mxu0 0
    %2857 = vmatmul.mubr.bf16.gmra.mrb[0].mxu0 %v2550
    %v2858 = vpop.f32.mrb[0].mxu0
    %v2859 = vadd.f32 0.0, %v2858
    %v2860 = vpop.f32.mrb[0].mxu0
    %v2861 = vpop.f32.mrb[0].mxu0
    %v2862 = vadd.f32 0.0, %v2861
    %v2863 = vpop.f32.mrb[0].mxu0
    %2864 = vmatprep.mubr.bf16.mxu0 0
    %2865 = vmatmul.mubr.bf16.gmra.mrb[0].mxu0 %v2553
    %v2866 = vpop.f32.mrb[0].mxu0
    %v2867 = vadd.f32 0.0, %v2866
    %v2868 = vpop.f32.mrb[0].mxu0
    %v2869 = vpop.f32.mrb[0].mxu0
    %v2870 = vadd.f32 0.0, %v2869
    %v2871 = vpop.f32.mrb[0].mxu0
    %2872 = vmatprep.mubr.bf16.mxu0 0
    %2873 = vmatmul.mubr.bf16.gmra.mrb[0].mxu0 %v2556
    %v2874 = vpop.f32.mrb[0].mxu0
    %v2875 = vadd.f32 0.0, %v2874
    %v2876 = vpop.f32.mrb[0].mxu0
    %v2877 = vpop.f32.mrb[0].mxu0
    %v2878 = vadd.f32 0.0, %v2877
    %v2879 = vpop.f32.mrb[0].mxu0
    %2880 = vmatprep.mubr.bf16.mxu0 0
    %2881 = vmatmul.mubr.bf16.gmra.mrb[0].mxu0 %v2559
    %v2882 = vpop.f32.mrb[0].mxu0
    %v2883 = vadd.f32 0.0, %v2882
    %v2884 = vpop.f32.mrb[0].mxu0
    %v2885 = vpop.f32.mrb[0].mxu0
    %v2886 = vadd.f32 0.0, %v2885
    %v2887 = vpop.f32.mrb[0].mxu0
    %2888 = vmatprep.mubr.bf16.mxu0 0
    %2889 = vmatmul.mubr.bf16.gmra.mrb[0].mxu0 %v2562
    %v2890 = vpop.f32.mrb[0].mxu0
    %v2891 = vadd.f32 0.0, %v2890
    %v2892 = vpop.f32.mrb[0].mxu0
    %v2893 = vpop.f32.mrb[0].mxu0
    %v2894 = vadd.f32 0.0, %v2893
    %v2895 = vpop.f32.mrb[0].mxu0
    %2896 = vmatprep.mubr.bf16.mxu0 0
    %2897 = vmatmul.mubr.bf16.gmra.mrb[0].mxu0 %v2565
    %v2898 = vpop.f32.mrb[0].mxu0
    %v2899 = vadd.f32 0.0, %v2898
    %v2900 = vpop.f32.mrb[0].mxu0
    %v2901 = vpop.f32.mrb[0].mxu0
    %v2902 = vadd.f32 0.0, %v2901
    %v2903 = vpop.f32.mrb[0].mxu0
    %2904 = vmatprep.mubr.bf16.mxu0 0
    %2905 = vmatmul.mubr.bf16.gmra.mrb[0].mxu0 %v2568
    %v2906 = vpop.f32.mrb[0].mxu0
    %v2907 = vadd.f32 0.0, %v2906
    %v2908 = vpop.f32.mrb[0].mxu0
    %v2909 = vpop.f32.mrb[0].mxu0
    %v2910 = vadd.f32 0.0, %v2909
    %v2911 = vpop.f32.mrb[0].mxu0
    %2912 = vmatprep.mubr.bf16.mxu0 0
    %2913 = vmatmul.mubr.bf16.gmra.mrb[0].mxu0 %v2571
    %v2914 = vpop.f32.mrb[0].mxu0
    %v2915 = vadd.f32 0.0, %v2914
    %v2916 = vpop.f32.mrb[0].mxu0
    %v2917 = vpop.f32.mrb[0].mxu0
    %v2918 = vpop.f32.mrb[0].mxu0
    %2919 = vdwg.mxu0
    %v2920 = vld [vmem:[#allocation2] sm:$0xff]
    %v2921 = vld [vmem:[#allocation2 + $0x8] sm:$0xff]
    %v2922 = vld [vmem:[#allocation2 + $0x10] sm:$0xff]
    %v2923 = vld [vmem:[#allocation2 + $0x18] sm:$0xff]
    %v2924 = vld [vmem:[#allocation2 + $0x20] sm:$0xff]
    %v2925 = vld [vmem:[#allocation2 + $0x28] sm:$0xff]
    %v2926 = vld [vmem:[#allocation2 + $0x30] sm:$0xff]
    %v2927 = vld [vmem:[#allocation2 + $0x38] sm:$0xff]
    %v2928 = vld [vmem:[#allocation2 + $0x40] sm:$0xff]
    %v2929 = vld [vmem:[#allocation2 + $0x48] sm:$0xff]
    %v2930 = vld [vmem:[#allocation2 + $0x50] sm:$0xff]
    %v2931 = vld [vmem:[#allocation2 + $0x58] sm:$0xff]
    %v2932 = vld [vmem:[#allocation2 + $0x60] sm:$0xff]
    %v2933 = vld [vmem:[#allocation2 + $0x68] sm:$0xff]
    %v2934 = vld [vmem:[#allocation2 + $0x70] sm:$0xff]
    %v2935 = vld [vmem:[#allocation2 + $0x78] sm:$0xff]
    %v2936 = vld [vmem:[#allocation2 + $0x80] sm:$0xff]
    %v2937 = vld [vmem:[#allocation2 + $0x88] sm:$0xff]
    %v2938 = vld [vmem:[#allocation2 + $0x90] sm:$0xff]
    %v2939 = vld [vmem:[#allocation2 + $0x98] sm:$0xff]
    %v2940 = vld [vmem:[#allocation2 + $0xa0] sm:$0xff]
    %v2941 = vld [vmem:[#allocation2 + $0xa8] sm:$0xff]
    %v2942 = vld [vmem:[#allocation2 + $0xb0] sm:$0xff]
    %v2943 = vld [vmem:[#allocation2 + $0xb8] sm:$0xff]
    %v2944 = vld [vmem:[#allocation2 + $0xc0] sm:$0xff]
    %v2945 = vld [vmem:[#allocation2 + $0xc8] sm:$0xff]
    %v2946 = vld [vmem:[#allocation2 + $0xd0] sm:$0xff]
    %v2947 = vld [vmem:[#allocation2 + $0xd8] sm:$0xff]
    %v2948 = vld [vmem:[#allocation2 + $0xe0] sm:$0xff]
    %v2949 = vld [vmem:[#allocation2 + $0xe8] sm:$0xff]
    %v2950 = vld [vmem:[#allocation2 + $0xf0] sm:$0xff]
    %v2951 = vld [vmem:[#allocation2 + $0xf8] sm:$0xff]
    %v2952 = vld [vmem:[#allocation2 + $0x100] sm:$0xff]
    %v2953 = vld [vmem:[#allocation2 + $0x108] sm:$0xff]
    %v2954 = vld [vmem:[#allocation2 + $0x110] sm:$0xff]
    %v2955 = vld [vmem:[#allocation2 + $0x118] sm:$0xff]
    %v2956 = vld [vmem:[#allocation2 + $0x120] sm:$0xff]
    %v2957 = vld [vmem:[#allocation2 + $0x128] sm:$0xff]
    %v2958 = vld [vmem:[#allocation2 + $0x130] sm:$0xff]
    %v2959 = vld [vmem:[#allocation2 + $0x138] sm:$0xff]
    %v2960 = vld [vmem:[#allocation2 + $0x140] sm:$0xff]
    %v2961 = vld [vmem:[#allocation2 + $0x148] sm:$0xff]
    %v2962 = vld [vmem:[#allocation2 + $0x150] sm:$0xff]
    %v2963 = vld [vmem:[#allocation2 + $0x158] sm:$0xff]
    %v2964 = vld [vmem:[#allocation2 + $0x160] sm:$0xff]
    %v2965 = vld [vmem:[#allocation2 + $0x168] sm:$0xff]
    %v2966 = vld [vmem:[#allocation2 + $0x170] sm:$0xff]
    %v2967 = vld [vmem:[#allocation2 + $0x178] sm:$0xff]
    %v2968 = vld [vmem:[#allocation2 + $0x180] sm:$0xff]
    %v2969 = vld [vmem:[#allocation2 + $0x188] sm:$0xff]
    %v2970 = vld [vmem:[#allocation2 + $0x190] sm:$0xff]
    %v2971 = vld [vmem:[#allocation2 + $0x198] sm:$0xff]
    %v2972 = vld [vmem:[#allocation2 + $0x1a0] sm:$0xff]
    %v2973 = vld [vmem:[#allocation2 + $0x1a8] sm:$0xff]
    %v2974 = vld [vmem:[#allocation2 + $0x1b0] sm:$0xff]
    %v2975 = vld [vmem:[#allocation2 + $0x1b8] sm:$0xff]
    %v2976 = vld [vmem:[#allocation2 + $0x1c0] sm:$0xff]
    %v2977 = vld [vmem:[#allocation2 + $0x1c8] sm:$0xff]
    %v2978 = vld [vmem:[#allocation2 + $0x1d0] sm:$0xff]
    %v2979 = vld [vmem:[#allocation2 + $0x1d8] sm:$0xff]
    %v2980 = vld [vmem:[#allocation2 + $0x1e0] sm:$0xff]
    %v2981 = vld [vmem:[#allocation2 + $0x1e8] sm:$0xff]
    %v2982 = vld [vmem:[#allocation2 + $0x1f0] sm:$0xff]
    %v2983 = vld [vmem:[#allocation2 + $0x1f8] sm:$0xff]
    %v2984 = vld [vmem:[#allocation2 + $0x200] sm:$0xff]
    %v2985 = vld [vmem:[#allocation2 + $0x208] sm:$0xff]
    %v2986 = vld [vmem:[#allocation2 + $0x210] sm:$0xff]
    %v2987 = vld [vmem:[#allocation2 + $0x218] sm:$0xff]
    %v2988 = vld [vmem:[#allocation2 + $0x220] sm:$0xff]
    %v2989 = vld [vmem:[#allocation2 + $0x228] sm:$0xff]
    %v2990 = vld [vmem:[#allocation2 + $0x230] sm:$0xff]
    %v2991 = vld [vmem:[#allocation2 + $0x238] sm:$0xff]
    %v2992 = vld [vmem:[#allocation2 + $0x240] sm:$0xff]
    %v2993 = vld [vmem:[#allocation2 + $0x248] sm:$0xff]
    %v2994 = vld [vmem:[#allocation2 + $0x250] sm:$0xff]
    %v2995 = vld [vmem:[#allocation2 + $0x258] sm:$0xff]
    %v2996 = vld [vmem:[#allocation2 + $0x260] sm:$0xff]
    %v2997 = vadd.f32 %v2920, %v2611
    %v2998 = vadd.f32 %v2921, %v2614
    %v2999 = vadd.f32 %v2922, %v2619
    %v3000 = vadd.f32 %v2923, %v2622
    %v3001 = vadd.f32 %v2924, %v2627
    %v3002 = vadd.f32 %v2925, %v2630
    %v3003 = vadd.f32 %v2926, %v2635
    %v3004 = vadd.f32 %v2927, %v2638
    %v3005 = vadd.f32 %v2928, %v2643
    %v3006 = vadd.f32 %v2929, %v2646
    %v3007 = vadd.f32 %v2930, %v2651
    %v3008 = vadd.f32 %v2931, %v2654
    %v3009 = vadd.f32 %v2932, %v2659
    %v3010 = vadd.f32 %v2933, %v2662
    %v3011 = vadd.f32 %v2934, %v2667
    %v3012 = vadd.f32 %v2935, %v2670
    %v3013 = vadd.f32 %v2936, %v2675
    %v3014 = vadd.f32 %v2937, %v2678
    %v3015 = vadd.f32 %v2938, %v2683
    %v3016 = vadd.f32 %v2939, %v2686
    %v3017 = vadd.f32 %v2940, %v2691
    %v3018 = vadd.f32 %v2941, %v2694
    %v3019 = vadd.f32 %v2942, %v2699
    %v3020 = vadd.f32 %v2943, %v2702
    %v3021 = vadd.f32 %v2944, %v2707
    %v3022 = vadd.f32 %v2945, %v2710
    %v3023 = vadd.f32 %v2946, %v2715
    %v3024 = vadd.f32 %v2947, %v2718
    %v3025 = vadd.f32 %v2948, %v2723
    %v3026 = vadd.f32 %v2949, %v2726
    %v3027 = vadd.f32 %v2950, %v2731
    %v3028 = vadd.f32 %v2951, %v2734
    %v3029 = vadd.f32 %v2952, %v2739
    %v3030 = vadd.f32 %v2953, %v2742
    %v3031 = vadd.f32 %v2954, %v2747
    %v3032 = vadd.f32 %v2955, %v2750
    %v3033 = vadd.f32 %v2956, %v2755
    %v3034 = vadd.f32 %v2957, %v2758
    %v3035 = vadd.f32 %v2958, %v2763
    %v3036 = vadd.f32 %v2959, %v2766
    %v3037 = vadd.f32 %v2960, %v2771
    %v3038 = vadd.f32 %v2961, %v2774
    %v3039 = vadd.f32 %v2962, %v2779
    %v3040 = vadd.f32 %v2963, %v2782
    %v3041 = vadd.f32 %v2964, %v2787
    %v3042 = vadd.f32 %v2965, %v2790
    %v3043 = vadd.f32 %v2966, %v2795
    %v3044 = vadd.f32 %v2967, %v2798
    %v3045 = vadd.f32 %v2968, %v2803
    %v3046 = vadd.f32 %v2969, %v2806
    %v3047 = vadd.f32 %v2970, %v2811
    %v3048 = vadd.f32 %v2971, %v2814
    %v3049 = vadd.f32 %v2972, %v2819
    %v3050 = vadd.f32 %v2973, %v2822
    %v3051 = vadd.f32 %v2974, %v2827
    %v3052 = vadd.f32 %v2975, %v2830
    %v3053 = vadd.f32 %v2976, %v2835
    %v3054 = vadd.f32 %v2977, %v2838
    %v3055 = vadd.f32 %v2978, %v2843
    %v3056 = vadd.f32 %v2979, %v2846
    %v3057 = vadd.f32 %v2980, %v2851
    %v3058 = vadd.f32 %v2981, %v2854
    %v3059 = vadd.f32 %v2982, %v2859
    %v3060 = vadd.f32 %v2983, %v2862
    %v3061 = vadd.f32 %v2984, %v2867
    %v3062 = vadd.f32 %v2985, %v2870
    %v3063 = vadd.f32 %v2986, %v2875
    %v3064 = vadd.f32 %v2987, %v2878
    %v3065 = vadd.f32 %v2988, %v2883
    %v3066 = vadd.f32 %v2989, %v2886
    %v3067 = vadd.f32 %v2990, %v2891
    %v3068 = vadd.f32 %v2991, %v2894
    %v3069 = vadd.f32 %v2992, %v2899
    %v3070 = vadd.f32 %v2993, %v2902
    %v3071 = vadd.f32 %v2994, %v2907
    %v3072 = vadd.f32 %v2995, %v2910
    %v3073 = vadd.f32 %v2996, %v2915
    %3074 = vst [vmem:[#allocation2] sm:$0xff] %v2997
    %3075 = vst [vmem:[#allocation2 + $0x8] sm:$0xff] %v2998
    %3076 = vst [vmem:[#allocation2 + $0x10] sm:$0xff] %v2999
    %3077 = vst [vmem:[#allocation2 + $0x18] sm:$0xff] %v3000
    %3078 = vst [vmem:[#allocation2 + $0x20] sm:$0xff] %v3001
    %3079 = vst [vmem:[#allocation2 + $0x28] sm:$0xff] %v3002
    %3080 = vst [vmem:[#allocation2 + $0x30] sm:$0xff] %v3003
    %3081 = vst [vmem:[#allocation2 + $0x38] sm:$0xff] %v3004
    %3082 = vst [vmem:[#allocation2 + $0x40] sm:$0xff] %v3005
    %3083 = vst [vmem:[#allocation2 + $0x48] sm:$0xff] %v3006
    %3084 = vst [vmem:[#allocation2 + $0x50] sm:$0xff] %v3007
    %3085 = vst [vmem:[#allocation2 + $0x58] sm:$0xff] %v3008
    %3086 = vst [vmem:[#allocation2 + $0x60] sm:$0xff] %v3009
    %3087 = vst [vmem:[#allocation2 + $0x68] sm:$0xff] %v3010
    %3088 = vst [vmem:[#allocation2 + $0x70] sm:$0xff] %v3011
    %3089 = vst [vmem:[#allocation2 + $0x78] sm:$0xff] %v3012
    %3090 = vst [vmem:[#allocation2 + $0x80] sm:$0xff] %v3013
    %3091 = vst [vmem:[#allocation2 + $0x88] sm:$0xff] %v3014
    %3092 = vst [vmem:[#allocation2 + $0x90] sm:$0xff] %v3015
    %3093 = vst [vmem:[#allocation2 + $0x98] sm:$0xff] %v3016
    %3094 = vst [vmem:[#allocation2 + $0xa0] sm:$0xff] %v3017
    %3095 = vst [vmem:[#allocation2 + $0xa8] sm:$0xff] %v3018
    %3096 = vst [vmem:[#allocation2 + $0xb0] sm:$0xff] %v3019
    %3097 = vst [vmem:[#allocation2 + $0xb8] sm:$0xff] %v3020
    %3098 = vst [vmem:[#allocation2 + $0xc0] sm:$0xff] %v3021
    %3099 = vst [vmem:[#allocation2 + $0xc8] sm:$0xff] %v3022
    %3100 = vst [vmem:[#allocation2 + $0xd0] sm:$0xff] %v3023
    %3101 = vst [vmem:[#allocation2 + $0xd8] sm:$0xff] %v3024
    %3102 = vst [vmem:[#allocation2 + $0xe0] sm:$0xff] %v3025
    %3103 = vst [vmem:[#allocation2 + $0xe8] sm:$0xff] %v3026
    %3104 = vst [vmem:[#allocation2 + $0xf0] sm:$0xff] %v3027
    %3105 = vst [vmem:[#allocation2 + $0xf8] sm:$0xff] %v3028
    %3106 = vst [vmem:[#allocation2 + $0x100] sm:$0xff] %v3029
    %3107 = vst [vmem:[#allocation2 + $0x108] sm:$0xff] %v3030
    %3108 = vst [vmem:[#allocation2 + $0x110] sm:$0xff] %v3031
    %3109 = vst [vmem:[#allocation2 + $0x118] sm:$0xff] %v3032
    %3110 = vst [vmem:[#allocation2 + $0x120] sm:$0xff] %v3033
    %3111 = vst [vmem:[#allocation2 + $0x128] sm:$0xff] %v3034
    %3112 = vst [vmem:[#allocation2 + $0x130] sm:$0xff] %v3035
    %3113 = vst [vmem:[#allocation2 + $0x138] sm:$0xff] %v3036
    %3114 = vst [vmem:[#allocation2 + $0x140] sm:$0xff] %v3037
    %3115 = vst [vmem:[#allocation2 + $0x148] sm:$0xff] %v3038
    %3116 = vst [vmem:[#allocation2 + $0x150] sm:$0xff] %v3039
    %3117 = vst [vmem:[#allocation2 + $0x158] sm:$0xff] %v3040
    %3118 = vst [vmem:[#allocation2 + $0x160] sm:$0xff] %v3041
    %3119 = vst [vmem:[#allocation2 + $0x168] sm:$0xff] %v3042
    %3120 = vst [vmem:[#allocation2 + $0x170] sm:$0xff] %v3043
    %3121 = vst [vmem:[#allocation2 + $0x178] sm:$0xff] %v3044
    %3122 = vst [vmem:[#allocation2 + $0x180] sm:$0xff] %v3045
    %3123 = vst [vmem:[#allocation2 + $0x188] sm:$0xff] %v3046
    %3124 = vst [vmem:[#allocation2 + $0x190] sm:$0xff] %v3047
    %3125 = vst [vmem:[#allocation2 + $0x198] sm:$0xff] %v3048
    %3126 = vst [vmem:[#allocation2 + $0x1a0] sm:$0xff] %v3049
    %3127 = vst [vmem:[#allocation2 + $0x1a8] sm:$0xff] %v3050
    %3128 = vst [vmem:[#allocation2 + $0x1b0] sm:$0xff] %v3051
    %3129 = vst [vmem:[#allocation2 + $0x1b8] sm:$0xff] %v3052
    %3130 = vst [vmem:[#allocation2 + $0x1c0] sm:$0xff] %v3053
    %3131 = vst [vmem:[#allocation2 + $0x1c8] sm:$0xff] %v3054
    %3132 = vst [vmem:[#allocation2 + $0x1d0] sm:$0xff] %v3055
    %3133 = vst [vmem:[#allocation2 + $0x1d8] sm:$0xff] %v3056
    %3134 = vst [vmem:[#allocation2 + $0x1e0] sm:$0xff] %v3057
    %3135 = vst [vmem:[#allocation2 + $0x1e8] sm:$0xff] %v3058
    %3136 = vst [vmem:[#allocation2 + $0x1f0] sm:$0xff] %v3059
    %3137 = vst [vmem:[#allocation2 + $0x1f8] sm:$0xff] %v3060
    %3138 = vst [vmem:[#allocation2 + $0x200] sm:$0xff] %v3061
    %3139 = vst [vmem:[#allocation2 + $0x208] sm:$0xff] %v3062
    %3140 = vst [vmem:[#allocation2 + $0x210] sm:$0xff] %v3063
    %3141 = vst [vmem:[#allocation2 + $0x218] sm:$0xff] %v3064
    %3142 = vst [vmem:[#allocation2 + $0x220] sm:$0xff] %v3065
    %3143 = vst [vmem:[#allocation2 + $0x228] sm:$0xff] %v3066
    %3144 = vst [vmem:[#allocation2 + $0x230] sm:$0xff] %v3067
    %3145 = vst [vmem:[#allocation2 + $0x238] sm:$0xff] %v3068
    %3146 = vst [vmem:[#allocation2 + $0x240] sm:$0xff] %v3069
    %3147 = vst [vmem:[#allocation2 + $0x248] sm:$0xff] %v3070
    %3148 = vst [vmem:[#allocation2 + $0x250] sm:$0xff] %v3071
    %3149 = vst [vmem:[#allocation2 + $0x258] sm:$0xff] %v3072
    %3150 = vst [vmem:[#allocation2 + $0x260] sm:$0xff] %v3073
    %v3151 = vld [vmem:[%s0 + $0x13] sm:$0xff]
    %v3152 = vld [vmem:[%s0 + $0x1b] sm:$0xff]
    %v3153 = vld [vmem:[%s0 + $0x23] sm:$0xff]
    %v3154 = vld [vmem:[%s0 + $0x2b] sm:$0xff]
    %v3155 = vld [vmem:[%s0 + $0x33] sm:$0xff]
    %v3156 = vld [vmem:[%s0 + $0x3b] sm:$0xff]
    %v3157 = vld [vmem:[%s0 + $0x43] sm:$0xff]
    %v3158 = vld [vmem:[%s0 + $0x4b] sm:$0xff]
    %v3159 = vld [vmem:[%s0 + $0x53] sm:$0xff]
    %v3160 = vld [vmem:[%s0 + $0x5b] sm:$0xff]
    %v3161 = vld [vmem:[%s0 + $0x63] sm:$0xff]
    %v3162 = vld [vmem:[%s0 + $0x6b] sm:$0xff]
    %v3163 = vld [vmem:[%s0 + $0x73] sm:$0xff]
    %v3164 = vld [vmem:[%s0 + $0x7b] sm:$0xff]
    %v3165 = vld [vmem:[%s0 + $0x83] sm:$0xff]
    %v3166 = vld [vmem:[%s0 + $0x8b] sm:$0xff]
    %v3167 = vld [vmem:[%s0 + $0x93] sm:$0xff]
    %v3168 = vld [vmem:[%s0 + $0x9b] sm:$0xff]
    %v3169 = vld [vmem:[%s0 + $0xa3] sm:$0xff]
    %v3170 = vld [vmem:[%s0 + $0xab] sm:$0xff]
    %v3171 = vld [vmem:[%s0 + $0xb3] sm:$0xff]
    %v3172 = vld [vmem:[%s0 + $0xbb] sm:$0xff]
    %v3173 = vld [vmem:[%s0 + $0xc3] sm:$0xff]
    %v3174 = vld [vmem:[%s0 + $0xcb] sm:$0xff]
    %v3175 = vld [vmem:[%s0 + $0xd3] sm:$0xff]
    %v3176 = vld [vmem:[%s0 + $0xdb] sm:$0xff]
    %v3177 = vld [vmem:[%s0 + $0xe3] sm:$0xff]
    %v3178 = vld [vmem:[%s0 + $0xeb] sm:$0xff]
    %v3179 = vld [vmem:[%s0 + $0xf3] sm:$0xff]
    %v3180 = vld [vmem:[%s0 + $0xfb] sm:$0xff]
    %v3181 = vld [vmem:[%s0 + $0x103] sm:$0xff]
    %v3182 = vld [vmem:[%s0 + $0x10b] sm:$0xff]
    %v3183 = vld [vmem:[%s0 + $0x113] sm:$0xff]
    %v3184 = vld [vmem:[%s0 + $0x11b] sm:$0xff]
    %v3185 = vld [vmem:[%s0 + $0x123] sm:$0xff]
    %v3186 = vld [vmem:[%s0 + $0x12b] sm:$0xff]
    %v3187 = vld [vmem:[%s0 + $0x133] sm:$0xff]
    %v3188 = vld [vmem:[%s0 + $0x13b] sm:$0xff]
    %v3189 = vld [vmem:[%s0 + $0x143] sm:$0xff]
    %v3190 = vld [vmem:[%s0 + $0x14b] sm:$0xff]
    %v3191 = vld [vmem:[%s0 + $0x153] sm:$0xff]
    %v3192 = vld [vmem:[%s0 + $0x15b] sm:$0xff]
    %v3193 = vld [vmem:[%s0 + $0x163] sm:$0xff]
    %v3194 = vld [vmem:[%s0 + $0x16b] sm:$0xff]
    %v3195 = vld [vmem:[%s0 + $0x173] sm:$0xff]
    %v3196 = vld [vmem:[%s0 + $0x17b] sm:$0xff]
    %v3197 = vld [vmem:[%s0 + $0x183] sm:$0xff]
    %v3198 = vld [vmem:[%s0 + $0x18b] sm:$0xff]
    %v3199 = vld [vmem:[%s0 + $0x193] sm:$0xff]
    %v3200 = vld [vmem:[%s0 + $0x19b] sm:$0xff]
    %v3201 = vld [vmem:[%s0 + $0x1a3] sm:$0xff]
    %v3202 = vld [vmem:[%s0 + $0x1ab] sm:$0xff]
    %v3203 = vld [vmem:[%s0 + $0x1b3] sm:$0xff]
    %v3204 = vld [vmem:[%s0 + $0x1bb] sm:$0xff]
    %v3205 = vld [vmem:[%s0 + $0x1c3] sm:$0xff]
    %v3206 = vld [vmem:[%s0 + $0x1cb] sm:$0xff]
    %v3207 = vld [vmem:[%s0 + $0x1d3] sm:$0xff]
    %v3208 = vld [vmem:[%s0 + $0x1db] sm:$0xff]
    %v3209 = vld [vmem:[%s0 + $0x1e3] sm:$0xff]
    %v3210 = vld [vmem:[%s0 + $0x1eb] sm:$0xff]
    %v3211 = vld [vmem:[%s0 + $0x1f3] sm:$0xff]
    %v3212 = vld [vmem:[%s0 + $0x1fb] sm:$0xff]
    %v3213 = vld [vmem:[%s0 + $0x203] sm:$0xff]
    %v3214 = vld [vmem:[%s0 + $0x20b] sm:$0xff]
    %v3215 = vld [vmem:[%s0 + $0x213] sm:$0xff]
    %v3216 = vld [vmem:[%s0 + $0x21b] sm:$0xff]
    %v3217 = vld [vmem:[%s0 + $0x223] sm:$0xff]
    %v3218 = vld [vmem:[%s0 + $0x22b] sm:$0xff]
    %v3219 = vld [vmem:[%s0 + $0x233] sm:$0xff]
    %v3220 = vld [vmem:[%s0 + $0x23b] sm:$0xff]
    %v3221 = vld [vmem:[%s0 + $0x243] sm:$0xff]
    %v3222 = vld [vmem:[%s0 + $0x24b] sm:$0xff]
    %v3223 = vld [vmem:[%s0 + $0x253] sm:$0xff]
    %v3224 = vld [vmem:[%s0 + $0x25b] sm:$0xff]
    %v3225 = vld [vmem:[%s0 + $0x263] sm:$0xff]
    %v3226 = vld [vmem:[%s0 + $0x26b] sm:$0xff]
    %v3227 = vld [vmem:[%s0 + $0x273] sm:$0xff]
    %v3228 = vpack.c.bf16 %v3152, %v3151
    %v3229 = vpack.c.bf16 %v3154, %v3153
    %v3230 = vpack.c.bf16 %v3156, %v3155
    %v3231 = vpack.c.bf16 %v3158, %v3157
    %v3232 = vpack.c.bf16 %v3160, %v3159
    %v3233 = vpack.c.bf16 %v3162, %v3161
    %v3234 = vpack.c.bf16 %v3164, %v3163
    %v3235 = vpack.c.bf16 %v3166, %v3165
    %v3236 = vpack.c.bf16 %v3168, %v3167
    %v3237 = vpack.c.bf16 %v3170, %v3169
    %v3238 = vpack.c.bf16 %v3172, %v3171
    %v3239 = vpack.c.bf16 %v3174, %v3173
    %v3240 = vpack.c.bf16 %v3176, %v3175
    %v3241 = vpack.c.bf16 %v3178, %v3177
    %v3242 = vpack.c.bf16 %v3180, %v3179
    %v3243 = vpack.c.bf16 %v3182, %v3181
    %v3244 = vpack.c.bf16 %v3184, %v3183
    %v3245 = vpack.c.bf16 %v3186, %v3185
    %v3246 = vpack.c.bf16 %v3188, %v3187
    %v3247 = vpack.c.bf16 %v3190, %v3189
    %v3248 = vpack.c.bf16 %v3192, %v3191
    %v3249 = vpack.c.bf16 %v3194, %v3193
    %v3250 = vpack.c.bf16 %v3196, %v3195
    %v3251 = vpack.c.bf16 %v3198, %v3197
    %v3252 = vpack.c.bf16 %v3200, %v3199
    %v3253 = vpack.c.bf16 %v3202, %v3201
    %v3254 = vpack.c.bf16 %v3204, %v3203
    %v3255 = vpack.c.bf16 %v3206, %v3205
    %v3256 = vpack.c.bf16 %v3208, %v3207
    %v3257 = vpack.c.bf16 %v3210, %v3209
    %v3258 = vpack.c.bf16 %v3212, %v3211
    %v3259 = vpack.c.bf16 %v3214, %v3213
    %v3260 = vpack.c.bf16 %v3216, %v3215
    %v3261 = vpack.c.bf16 %v3218, %v3217
    %v3262 = vpack.c.bf16 %v3220, %v3219
    %v3263 = vpack.c.bf16 %v3222, %v3221
    %v3264 = vpack.c.bf16 %v3224, %v3223
    %v3265 = vpack.c.bf16 %v3226, %v3225
    %v3266 = vpack.c.bf16 %v3227, %v3227
    %s3267 = scalar_lea.vmem %s1, 32
    %v3268 = vld [vmem:[%s3267] sm:$0xf]
    %v3269 = vld [vmem:[%s3267 + $0x4] sm:$0x1]
    %v3272 = vunpack.c.l.b16 %v3268
    %v3273 = vunpack.c.l.b16 %v3269
    %v3274 = vpack.c.b16 %v3273, %v3272
    %v3276 = vsel %vm148, %v3228, 0
    %v3279 = vsel %vm148, %v3229, 0
    %v3282 = vsel %vm148, %v3230, 0
    %v3285 = vsel %vm148, %v3231, 0
    %v3288 = vsel %vm148, %v3232, 0
    %v3291 = vsel %vm148, %v3233, 0
    %v3294 = vsel %vm148, %v3234, 0
    %v3297 = vsel %vm148, %v3235, 0
    %v3300 = vsel %vm148, %v3236, 0
    %v3303 = vsel %vm148, %v3237, 0
    %v3306 = vsel %vm148, %v3238, 0
    %v3309 = vsel %vm148, %v3239, 0
    %v3312 = vsel %vm148, %v3240, 0
    %v3315 = vsel %vm148, %v3241, 0
    %v3318 = vsel %vm148, %v3242, 0
    %v3321 = vsel %vm148, %v3243, 0
    %v3324 = vsel %vm148, %v3244, 0
    %v3327 = vsel %vm148, %v3245, 0
    %v3330 = vsel %vm148, %v3246, 0
    %v3333 = vsel %vm148, %v3247, 0
    %v3336 = vsel %vm148, %v3248, 0
    %v3339 = vsel %vm148, %v3249, 0
    %v3342 = vsel %vm148, %v3250, 0
    %v3345 = vsel %vm148, %v3251, 0
    %v3348 = vsel %vm148, %v3252, 0
    %v3351 = vsel %vm148, %v3253, 0
    %v3354 = vsel %vm148, %v3254, 0
    %v3357 = vsel %vm148, %v3255, 0
    %v3360 = vsel %vm148, %v3256, 0
    %v3363 = vsel %vm148, %v3257, 0
    %v3366 = vsel %vm148, %v3258, 0
    %v3369 = vsel %vm148, %v3259, 0
    %v3372 = vsel %vm148, %v3260, 0
    %v3375 = vsel %vm148, %v3261, 0
    %v3378 = vsel %vm148, %v3262, 0
    %v3381 = vsel %vm148, %v3263, 0
    %v3384 = vsel %vm148, %v3264, 0
    %v3387 = vsel %vm148, %v3265, 0
    %v3390 = vsel %vm148, %v3266, 0
    %v3393 = vand.u32 %v3274, %v269
    %3395 = vmatprep.subr.bf16.mxu0 0
    %3396 = vmatpush1.bf16.msra.mxu0 %v3393
    %3397 = vmatprep.subr.bf16.mxu0 0
    %3398 = vmatpush1.bf16.msra.mxu0 0
    %3399 = vmatprep.subr.bf16.mxu0 0
    %3400 = vmatpush1.bf16.msra.mxu0 0
    %3401 = vmatprep.subr.bf16.mxu0 0
    %3402 = vmatpush1.bf16.msra.mxu0 0
    %3403 = vmatprep.subr.bf16.mxu0 0
    %3404 = vmatpush1.bf16.msra.mxu0 0
    %3405 = vmatprep.subr.bf16.mxu0 0
    %3406 = vmatpush1.bf16.msra.mxu0 0
    %3407 = vmatprep.subr.bf16.mxu0 0
    %3408 = vmatpush1.bf16.msra.mxu0 0
    %3409 = vmatprep.subr.bf16.mxu0 0
    %3410 = vmatpush1.bf16.msra.mxu0 0
    %3411 = vmatprep.subr.bf16.mxu0 0
    %3412 = vmatpush1.bf16.msra.mxu0 0
    %3413 = vmatprep.subr.bf16.mxu0 0
    %3414 = vmatpush1.bf16.msra.mxu0 0
    %3415 = vmatprep.subr.bf16.mxu0 0
    %3416 = vmatpush1.bf16.msra.mxu0 0
    %3417 = vmatprep.subr.bf16.mxu0 0
    %3418 = vmatpush1.bf16.msra.mxu0 0
    %3419 = vmatprep.subr.bf16.mxu0 0
    %3420 = vmatpush1.bf16.msra.mxu0 0
    %3421 = vmatprep.subr.bf16.mxu0 0
    %3422 = vmatpush1.bf16.msra.mxu0 0
    %3423 = vmatprep.subr.bf16.mxu0 0
    %3424 = vmatpush1.bf16.msra.mxu0 0
    %3425 = vmatprep.subr.bf16.mxu0 0
    %3426 = vmatpush1.bf16.msra.mxu0 0
    %3427 = vmatprep.mubr.bf16.mxu0 0
    %3428 = vmatmul.mubr.bf16.gmra.mrb[0].mxu0 %v3276
    %v3429 = vpop.f32.mrb[0].mxu0
    %v3430 = vadd.f32 0.0, %v3429
    %v3431 = vpop.f32.mrb[0].mxu0
    %v3432 = vpop.f32.mrb[0].mxu0
    %v3433 = vadd.f32 0.0, %v3432
    %v3434 = vpop.f32.mrb[0].mxu0
    %3435 = vmatprep.mubr.bf16.mxu0 0
    %3436 = vmatmul.mubr.bf16.gmra.mrb[0].mxu0 %v3279
    %v3437 = vpop.f32.mrb[0].mxu0
    %v3438 = vadd.f32 0.0, %v3437
    %v3439 = vpop.f32.mrb[0].mxu0
    %v3440 = vpop.f32.mrb[0].mxu0
    %v3441 = vadd.f32 0.0, %v3440
    %v3442 = vpop.f32.mrb[0].mxu0
    %3443 = vmatprep.mubr.bf16.mxu0 0
    %3444 = vmatmul.mubr.bf16.gmra.mrb[0].mxu0 %v3282
    %v3445 = vpop.f32.mrb[0].mxu0
    %v3446 = vadd.f32 0.0, %v3445
    %v3447 = vpop.f32.mrb[0].mxu0
    %v3448 = vpop.f32.mrb[0].mxu0
    %v3449 = vadd.f32 0.0, %v3448
    %v3450 = vpop.f32.mrb[0].mxu0
    %3451 = vmatprep.mubr.bf16.mxu0 0
    %3452 = vmatmul.mubr.bf16.gmra.mrb[0].mxu0 %v3285
    %v3453 = vpop.f32.mrb[0].mxu0
    %v3454 = vadd.f32 0.0, %v3453
    %v3455 = vpop.f32.mrb[0].mxu0
    %v3456 = vpop.f32.mrb[0].mxu0
    %v3457 = vadd.f32 0.0, %v3456
    %v3458 = vpop.f32.mrb[0].mxu0
    %3459 = vmatprep.mubr.bf16.mxu0 0
    %3460 = vmatmul.mubr.bf16.gmra.mrb[0].mxu0 %v3288
    %v3461 = vpop.f32.mrb[0].mxu0
    %v3462 = vadd.f32 0.0, %v3461
    %v3463 = vpop.f32.mrb[0].mxu0
    %v3464 = vpop.f32.mrb[0].mxu0
    %v3465 = vadd.f32 0.0, %v3464
    %v3466 = vpop.f32.mrb[0].mxu0
    %3467 = vmatprep.mubr.bf16.mxu0 0
    %3468 = vmatmul.mubr.bf16.gmra.mrb[0].mxu0 %v3291
    %v3469 = vpop.f32.mrb[0].mxu0
    %v3470 = vadd.f32 0.0, %v3469
    %v3471 = vpop.f32.mrb[0].mxu0
    %v3472 = vpop.f32.mrb[0].mxu0
    %v3473 = vadd.f32 0.0, %v3472
    %v3474 = vpop.f32.mrb[0].mxu0
    %3475 = vmatprep.mubr.bf16.mxu0 0
    %3476 = vmatmul.mubr.bf16.gmra.mrb[0].mxu0 %v3294
    %v3477 = vpop.f32.mrb[0].mxu0
    %v3478 = vadd.f32 0.0, %v3477
    %v3479 = vpop.f32.mrb[0].mxu0
    %v3480 = vpop.f32.mrb[0].mxu0
    %v3481 = vadd.f32 0.0, %v3480
    %v3482 = vpop.f32.mrb[0].mxu0
    %3483 = vmatprep.mubr.bf16.mxu0 0
    %3484 = vmatmul.mubr.bf16.gmra.mrb[0].mxu0 %v3297
    %v3485 = vpop.f32.mrb[0].mxu0
    %v3486 = vadd.f32 0.0, %v3485
    %v3487 = vpop.f32.mrb[0].mxu0
    %v3488 = vpop.f32.mrb[0].mxu0
    %v3489 = vadd.f32 0.0, %v3488
    %v3490 = vpop.f32.mrb[0].mxu0
    %3491 = vmatprep.mubr.bf16.mxu0 0
    %3492 = vmatmul.mubr.bf16.gmra.mrb[0].mxu0 %v3300
    %v3493 = vpop.f32.mrb[0].mxu0
    %v3494 = vadd.f32 0.0, %v3493
    %v3495 = vpop.f32.mrb[0].mxu0
    %v3496 = vpop.f32.mrb[0].mxu0
    %v3497 = vadd.f32 0.0, %v3496
    %v3498 = vpop.f32.mrb[0].mxu0
    %3499 = vmatprep.mubr.bf16.mxu0 0
    %3500 = vmatmul.mubr.bf16.gmra.mrb[0].mxu0 %v3303
    %v3501 = vpop.f32.mrb[0].mxu0
    %v3502 = vadd.f32 0.0, %v3501
    %v3503 = vpop.f32.mrb[0].mxu0
    %v3504 = vpop.f32.mrb[0].mxu0
    %v3505 = vadd.f32 0.0, %v3504
    %v3506 = vpop.f32.mrb[0].mxu0
    %3507 = vmatprep.mubr.bf16.mxu0 0
    %3508 = vmatmul.mubr.bf16.gmra.mrb[0].mxu0 %v3306
    %v3509 = vpop.f32.mrb[0].mxu0
    %v3510 = vadd.f32 0.0, %v3509
    %v3511 = vpop.f32.mrb[0].mxu0
    %v3512 = vpop.f32.mrb[0].mxu0
    %v3513 = vadd.f32 0.0, %v3512
    %v3514 = vpop.f32.mrb[0].mxu0
    %3515 = vmatprep.mubr.bf16.mxu0 0
    %3516 = vmatmul.mubr.bf16.gmra.mrb[0].mxu0 %v3309
    %v3517 = vpop.f32.mrb[0].mxu0
    %v3518 = vadd.f32 0.0, %v3517
    %v3519 = vpop.f32.mrb[0].mxu0
    %v3520 = vpop.f32.mrb[0].mxu0
    %v3521 = vadd.f32 0.0, %v3520
    %v3522 = vpop.f32.mrb[0].mxu0
    %3523 = vmatprep.mubr.bf16.mxu0 0
    %3524 = vmatmul.mubr.bf16.gmra.mrb[0].mxu0 %v3312
    %v3525 = vpop.f32.mrb[0].mxu0
    %v3526 = vadd.f32 0.0, %v3525
    %v3527 = vpop.f32.mrb[0].mxu0
    %v3528 = vpop.f32.mrb[0].mxu0
    %v3529 = vadd.f32 0.0, %v3528
    %v3530 = vpop.f32.mrb[0].mxu0
    %3531 = vmatprep.mubr.bf16.mxu0 0
    %3532 = vmatmul.mubr.bf16.gmra.mrb[0].mxu0 %v3315
    %v3533 = vpop.f32.mrb[0].mxu0
    %v3534 = vadd.f32 0.0, %v3533
    %v3535 = vpop.f32.mrb[0].mxu0
    %v3536 = vpop.f32.mrb[0].mxu0
    %v3537 = vadd.f32 0.0, %v3536
    %v3538 = vpop.f32.mrb[0].mxu0
    %3539 = vmatprep.mubr.bf16.mxu0 0
    %3540 = vmatmul.mubr.bf16.gmra.mrb[0].mxu0 %v3318
    %v3541 = vpop.f32.mrb[0].mxu0
    %v3542 = vadd.f32 0.0, %v3541
    %v3543 = vpop.f32.mrb[0].mxu0
    %v3544 = vpop.f32.mrb[0].mxu0
    %v3545 = vadd.f32 0.0, %v3544
    %v3546 = vpop.f32.mrb[0].mxu0
    %3547 = vmatprep.mubr.bf16.mxu0 0
    %3548 = vmatmul.mubr.bf16.gmra.mrb[0].mxu0 %v3321
    %v3549 = vpop.f32.mrb[0].mxu0
    %v3550 = vadd.f32 0.0, %v3549
    %v3551 = vpop.f32.mrb[0].mxu0
    %v3552 = vpop.f32.mrb[0].mxu0
    %v3553 = vadd.f32 0.0, %v3552
    %v3554 = vpop.f32.mrb[0].mxu0
    %3555 = vmatprep.mubr.bf16.mxu0 0
    %3556 = vmatmul.mubr.bf16.gmra.mrb[0].mxu0 %v3324
    %v3557 = vpop.f32.mrb[0].mxu0
    %v3558 = vadd.f32 0.0, %v3557
    %v3559 = vpop.f32.mrb[0].mxu0
    %v3560 = vpop.f32.mrb[0].mxu0
    %v3561 = vadd.f32 0.0, %v3560
    %v3562 = vpop.f32.mrb[0].mxu0
    %3563 = vmatprep.mubr.bf16.mxu0 0
    %3564 = vmatmul.mubr.bf16.gmra.mrb[0].mxu0 %v3327
    %v3565 = vpop.f32.mrb[0].mxu0
    %v3566 = vadd.f32 0.0, %v3565
    %v3567 = vpop.f32.mrb[0].mxu0
    %v3568 = vpop.f32.mrb[0].mxu0
    %v3569 = vadd.f32 0.0, %v3568
    %v3570 = vpop.f32.mrb[0].mxu0
    %3571 = vmatprep.mubr.bf16.mxu0 0
    %3572 = vmatmul.mubr.bf16.gmra.mrb[0].mxu0 %v3330
    %v3573 = vpop.f32.mrb[0].mxu0
    %v3574 = vadd.f32 0.0, %v3573
    %v3575 = vpop.f32.mrb[0].mxu0
    %v3576 = vpop.f32.mrb[0].mxu0
    %v3577 = vadd.f32 0.0, %v3576
    %v3578 = vpop.f32.mrb[0].mxu0
    %3579 = vmatprep.mubr.bf16.mxu0 0
    %3580 = vmatmul.mubr.bf16.gmra.mrb[0].mxu0 %v3333
    %v3581 = vpop.f32.mrb[0].mxu0
    %v3582 = vadd.f32 0.0, %v3581
    %v3583 = vpop.f32.mrb[0].mxu0
    %v3584 = vpop.f32.mrb[0].mxu0
    %v3585 = vadd.f32 0.0, %v3584
    %v3586 = vpop.f32.mrb[0].mxu0
    %3587 = vmatprep.mubr.bf16.mxu0 0
    %3588 = vmatmul.mubr.bf16.gmra.mrb[0].mxu0 %v3336
    %v3589 = vpop.f32.mrb[0].mxu0
    %v3590 = vadd.f32 0.0, %v3589
    %v3591 = vpop.f32.mrb[0].mxu0
    %v3592 = vpop.f32.mrb[0].mxu0
    %v3593 = vadd.f32 0.0, %v3592
    %v3594 = vpop.f32.mrb[0].mxu0
    %3595 = vmatprep.mubr.bf16.mxu0 0
    %3596 = vmatmul.mubr.bf16.gmra.mrb[0].mxu0 %v3339
    %v3597 = vpop.f32.mrb[0].mxu0
    %v3598 = vadd.f32 0.0, %v3597
    %v3599 = vpop.f32.mrb[0].mxu0
    %v3600 = vpop.f32.mrb[0].mxu0
    %v3601 = vadd.f32 0.0, %v3600
    %v3602 = vpop.f32.mrb[0].mxu0
    %3603 = vmatprep.mubr.bf16.mxu0 0
    %3604 = vmatmul.mubr.bf16.gmra.mrb[0].mxu0 %v3342
    %v3605 = vpop.f32.mrb[0].mxu0
    %v3606 = vadd.f32 0.0, %v3605
    %v3607 = vpop.f32.mrb[0].mxu0
    %v3608 = vpop.f32.mrb[0].mxu0
    %v3609 = vadd.f32 0.0, %v3608
    %v3610 = vpop.f32.mrb[0].mxu0
    %3611 = vmatprep.mubr.bf16.mxu0 0
    %3612 = vmatmul.mubr.bf16.gmra.mrb[0].mxu0 %v3345
    %v3613 = vpop.f32.mrb[0].mxu0
    %v3614 = vadd.f32 0.0, %v3613
    %v3615 = vpop.f32.mrb[0].mxu0
    %v3616 = vpop.f32.mrb[0].mxu0
    %v3617 = vadd.f32 0.0, %v3616
    %v3618 = vpop.f32.mrb[0].mxu0
    %3619 = vmatprep.mubr.bf16.mxu0 0
    %3620 = vmatmul.mubr.bf16.gmra.mrb[0].mxu0 %v3348
    %v3621 = vpop.f32.mrb[0].mxu0
    %v3622 = vadd.f32 0.0, %v3621
    %v3623 = vpop.f32.mrb[0].mxu0
    %v3624 = vpop.f32.mrb[0].mxu0
    %v3625 = vadd.f32 0.0, %v3624
    %v3626 = vpop.f32.mrb[0].mxu0
    %3627 = vmatprep.mubr.bf16.mxu0 0
    %3628 = vmatmul.mubr.bf16.gmra.mrb[0].mxu0 %v3351
    %v3629 = vpop.f32.mrb[0].mxu0
    %v3630 = vadd.f32 0.0, %v3629
    %v3631 = vpop.f32.mrb[0].mxu0
    %v3632 = vpop.f32.mrb[0].mxu0
    %v3633 = vadd.f32 0.0, %v3632
    %v3634 = vpop.f32.mrb[0].mxu0
    %3635 = vmatprep.mubr.bf16.mxu0 0
    %3636 = vmatmul.mubr.bf16.gmra.mrb[0].mxu0 %v3354
    %v3637 = vpop.f32.mrb[0].mxu0
    %v3638 = vadd.f32 0.0, %v3637
    %v3639 = vpop.f32.mrb[0].mxu0
    %v3640 = vpop.f32.mrb[0].mxu0
    %v3641 = vadd.f32 0.0, %v3640
    %v3642 = vpop.f32.mrb[0].mxu0
    %3643 = vmatprep.mubr.bf16.mxu0 0
    %3644 = vmatmul.mubr.bf16.gmra.mrb[0].mxu0 %v3357
    %v3645 = vpop.f32.mrb[0].mxu0
    %v3646 = vadd.f32 0.0, %v3645
    %v3647 = vpop.f32.mrb[0].mxu0
    %v3648 = vpop.f32.mrb[0].mxu0
    %v3649 = vadd.f32 0.0, %v3648
    %v3650 = vpop.f32.mrb[0].mxu0
    %3651 = vmatprep.mubr.bf16.mxu0 0
    %3652 = vmatmul.mubr.bf16.gmra.mrb[0].mxu0 %v3360
    %v3653 = vpop.f32.mrb[0].mxu0
    %v3654 = vadd.f32 0.0, %v3653
    %v3655 = vpop.f32.mrb[0].mxu0
    %v3656 = vpop.f32.mrb[0].mxu0
    %v3657 = vadd.f32 0.0, %v3656
    %v3658 = vpop.f32.mrb[0].mxu0
    %3659 = vmatprep.mubr.bf16.mxu0 0
    %3660 = vmatmul.mubr.bf16.gmra.mrb[0].mxu0 %v3363
    %v3661 = vpop.f32.mrb[0].mxu0
    %v3662 = vadd.f32 0.0, %v3661
    %v3663 = vpop.f32.mrb[0].mxu0
    %v3664 = vpop.f32.mrb[0].mxu0
    %v3665 = vadd.f32 0.0, %v3664
    %v3666 = vpop.f32.mrb[0].mxu0
    %3667 = vmatprep.mubr.bf16.mxu0 0
    %3668 = vmatmul.mubr.bf16.gmra.mrb[0].mxu0 %v3366
    %v3669 = vpop.f32.mrb[0].mxu0
    %v3670 = vadd.f32 0.0, %v3669
    %v3671 = vpop.f32.mrb[0].mxu0
    %v3672 = vpop.f32.mrb[0].mxu0
    %v3673 = vadd.f32 0.0, %v3672
    %v3674 = vpop.f32.mrb[0].mxu0
    %3675 = vmatprep.mubr.bf16.mxu0 0
    %3676 = vmatmul.mubr.bf16.gmra.mrb[0].mxu0 %v3369
    %v3677 = vpop.f32.mrb[0].mxu0
    %v3678 = vadd.f32 0.0, %v3677
    %v3679 = vpop.f32.mrb[0].mxu0
    %v3680 = vpop.f32.mrb[0].mxu0
    %v3681 = vadd.f32 0.0, %v3680
    %v3682 = vpop.f32.mrb[0].mxu0
    %3683 = vmatprep.mubr.bf16.mxu0 0
    %3684 = vmatmul.mubr.bf16.gmra.mrb[0].mxu0 %v3372
    %v3685 = vpop.f32.mrb[0].mxu0
    %v3686 = vadd.f32 0.0, %v3685
    %v3687 = vpop.f32.mrb[0].mxu0
    %v3688 = vpop.f32.mrb[0].mxu0
    %v3689 = vadd.f32 0.0, %v3688
    %v3690 = vpop.f32.mrb[0].mxu0
    %3691 = vmatprep.mubr.bf16.mxu0 0
    %3692 = vmatmul.mubr.bf16.gmra.mrb[0].mxu0 %v3375
    %v3693 = vpop.f32.mrb[0].mxu0
    %v3694 = vadd.f32 0.0, %v3693
    %v3695 = vpop.f32.mrb[0].mxu0
    %v3696 = vpop.f32.mrb[0].mxu0
    %v3697 = vadd.f32 0.0, %v3696
    %v3698 = vpop.f32.mrb[0].mxu0
    %3699 = vmatprep.mubr.bf16.mxu0 0
    %3700 = vmatmul.mubr.bf16.gmra.mrb[0].mxu0 %v3378
    %v3701 = vpop.f32.mrb[0].mxu0
    %v3702 = vadd.f32 0.0, %v3701
    %v3703 = vpop.f32.mrb[0].mxu0
    %v3704 = vpop.f32.mrb[0].mxu0
    %v3705 = vadd.f32 0.0, %v3704
    %v3706 = vpop.f32.mrb[0].mxu0
    %3707 = vmatprep.mubr.bf16.mxu0 0
    %3708 = vmatmul.mubr.bf16.gmra.mrb[0].mxu0 %v3381
    %v3709 = vpop.f32.mrb[0].mxu0
    %v3710 = vadd.f32 0.0, %v3709
    %v3711 = vpop.f32.mrb[0].mxu0
    %v3712 = vpop.f32.mrb[0].mxu0
    %v3713 = vadd.f32 0.0, %v3712
    %v3714 = vpop.f32.mrb[0].mxu0
    %3715 = vmatprep.mubr.bf16.mxu0 0
    %3716 = vmatmul.mubr.bf16.gmra.mrb[0].mxu0 %v3384
    %v3717 = vpop.f32.mrb[0].mxu0
    %v3718 = vadd.f32 0.0, %v3717
    %v3719 = vpop.f32.mrb[0].mxu0
    %v3720 = vpop.f32.mrb[0].mxu0
    %v3721 = vadd.f32 0.0, %v3720
    %v3722 = vpop.f32.mrb[0].mxu0
    %3723 = vmatprep.mubr.bf16.mxu0 0
    %3724 = vmatmul.mubr.bf16.gmra.mrb[0].mxu0 %v3387
    %v3725 = vpop.f32.mrb[0].mxu0
    %v3726 = vadd.f32 0.0, %v3725
    %v3727 = vpop.f32.mrb[0].mxu0
    %v3728 = vpop.f32.mrb[0].mxu0
    %v3729 = vadd.f32 0.0, %v3728
    %v3730 = vpop.f32.mrb[0].mxu0
    %3731 = vmatprep.mubr.bf16.mxu0 0
    %3732 = vmatmul.mubr.bf16.gmra.mrb[0].mxu0 %v3390
    %v3733 = vpop.f32.mrb[0].mxu0
    %v3734 = vadd.f32 0.0, %v3733
    %v3735 = vpop.f32.mrb[0].mxu0
    %v3736 = vpop.f32.mrb[0].mxu0
    %v3737 = vpop.f32.mrb[0].mxu0
    %3738 = vdwg.mxu0
    %v3739 = vld [vmem:[#allocation2] sm:$0xff]
    %v3740 = vld [vmem:[#allocation2 + $0x8] sm:$0xff]
    %v3741 = vld [vmem:[#allocation2 + $0x10] sm:$0xff]
    %v3742 = vld [vmem:[#allocation2 + $0x18] sm:$0xff]
    %v3743 = vld [vmem:[#allocation2 + $0x20] sm:$0xff]
    %v3744 = vld [vmem:[#allocation2 + $0x28] sm:$0xff]
    %v3745 = vld [vmem:[#allocation2 + $0x30] sm:$0xff]
    %v3746 = vld [vmem:[#allocation2 + $0x38] sm:$0xff]
    %v3747 = vld [vmem:[#allocation2 + $0x40] sm:$0xff]
    %v3748 = vld [vmem:[#allocation2 + $0x48] sm:$0xff]
    %v3749 = vld [vmem:[#allocation2 + $0x50] sm:$0xff]
    %v3750 = vld [vmem:[#allocation2 + $0x58] sm:$0xff]
    %v3751 = vld [vmem:[#allocation2 + $0x60] sm:$0xff]
    %v3752 = vld [vmem:[#allocation2 + $0x68] sm:$0xff]
    %v3753 = vld [vmem:[#allocation2 + $0x70] sm:$0xff]
    %v3754 = vld [vmem:[#allocation2 + $0x78] sm:$0xff]
    %v3755 = vld [vmem:[#allocation2 + $0x80] sm:$0xff]
    %v3756 = vld [vmem:[#allocation2 + $0x88] sm:$0xff]
    %v3757 = vld [vmem:[#allocation2 + $0x90] sm:$0xff]
    %v3758 = vld [vmem:[#allocation2 + $0x98] sm:$0xff]
    %v3759 = vld [vmem:[#allocation2 + $0xa0] sm:$0xff]
    %v3760 = vld [vmem:[#allocation2 + $0xa8] sm:$0xff]
    %v3761 = vld [vmem:[#allocation2 + $0xb0] sm:$0xff]
    %v3762 = vld [vmem:[#allocation2 + $0xb8] sm:$0xff]
    %v3763 = vld [vmem:[#allocation2 + $0xc0] sm:$0xff]
    %v3764 = vld [vmem:[#allocation2 + $0xc8] sm:$0xff]
    %v3765 = vld [vmem:[#allocation2 + $0xd0] sm:$0xff]
    %v3766 = vld [vmem:[#allocation2 + $0xd8] sm:$0xff]
    %v3767 = vld [vmem:[#allocation2 + $0xe0] sm:$0xff]
    %v3768 = vld [vmem:[#allocation2 + $0xe8] sm:$0xff]
    %v3769 = vld [vmem:[#allocation2 + $0xf0] sm:$0xff]
    %v3770 = vld [vmem:[#allocation2 + $0xf8] sm:$0xff]
    %v3771 = vld [vmem:[#allocation2 + $0x100] sm:$0xff]
    %v3772 = vld [vmem:[#allocation2 + $0x108] sm:$0xff]
    %v3773 = vld [vmem:[#allocation2 + $0x110] sm:$0xff]
    %v3774 = vld [vmem:[#allocation2 + $0x118] sm:$0xff]
    %v3775 = vld [vmem:[#allocation2 + $0x120] sm:$0xff]
    %v3776 = vld [vmem:[#allocation2 + $0x128] sm:$0xff]
    %v3777 = vld [vmem:[#allocation2 + $0x130] sm:$0xff]
    %v3778 = vld [vmem:[#allocation2 + $0x138] sm:$0xff]
    %v3779 = vld [vmem:[#allocation2 + $0x140] sm:$0xff]
    %v3780 = vld [vmem:[#allocation2 + $0x148] sm:$0xff]
    %v3781 = vld [vmem:[#allocation2 + $0x150] sm:$0xff]
    %v3782 = vld [vmem:[#allocation2 + $0x158] sm:$0xff]
    %v3783 = vld [vmem:[#allocation2 + $0x160] sm:$0xff]
    %v3784 = vld [vmem:[#allocation2 + $0x168] sm:$0xff]
    %v3785 = vld [vmem:[#allocation2 + $0x170] sm:$0xff]
    %v3786 = vld [vmem:[#allocation2 + $0x178] sm:$0xff]
    %v3787 = vld [vmem:[#allocation2 + $0x180] sm:$0xff]
    %v3788 = vld [vmem:[#allocation2 + $0x188] sm:$0xff]
    %v3789 = vld [vmem:[#allocation2 + $0x190] sm:$0xff]
    %v3790 = vld [vmem:[#allocation2 + $0x198] sm:$0xff]
    %v3791 = vld [vmem:[#allocation2 + $0x1a0] sm:$0xff]
    %v3792 = vld [vmem:[#allocation2 + $0x1a8] sm:$0xff]
    %v3793 = vld [vmem:[#allocation2 + $0x1b0] sm:$0xff]
    %v3794 = vld [vmem:[#allocation2 + $0x1b8] sm:$0xff]
    %v3795 = vld [vmem:[#allocation2 + $0x1c0] sm:$0xff]
    %v3796 = vld [vmem:[#allocation2 + $0x1c8] sm:$0xff]
    %v3797 = vld [vmem:[#allocation2 + $0x1d0] sm:$0xff]
    %v3798 = vld [vmem:[#allocation2 + $0x1d8] sm:$0xff]
    %v3799 = vld [vmem:[#allocation2 + $0x1e0] sm:$0xff]
    %v3800 = vld [vmem:[#allocation2 + $0x1e8] sm:$0xff]
    %v3801 = vld [vmem:[#allocation2 + $0x1f0] sm:$0xff]
    %v3802 = vld [vmem:[#allocation2 + $0x1f8] sm:$0xff]
    %v3803 = vld [vmem:[#allocation2 + $0x200] sm:$0xff]
    %v3804 = vld [vmem:[#allocation2 + $0x208] sm:$0xff]
    %v3805 = vld [vmem:[#allocation2 + $0x210] sm:$0xff]
    %v3806 = vld [vmem:[#allocation2 + $0x218] sm:$0xff]
    %v3807 = vld [vmem:[#allocation2 + $0x220] sm:$0xff]
    %v3808 = vld [vmem:[#allocation2 + $0x228] sm:$0xff]
    %v3809 = vld [vmem:[#allocation2 + $0x230] sm:$0xff]
    %v3810 = vld [vmem:[#allocation2 + $0x238] sm:$0xff]
    %v3811 = vld [vmem:[#allocation2 + $0x240] sm:$0xff]
    %v3812 = vld [vmem:[#allocation2 + $0x248] sm:$0xff]
    %v3813 = vld [vmem:[#allocation2 + $0x250] sm:$0xff]
    %v3814 = vld [vmem:[#allocation2 + $0x258] sm:$0xff]
    %v3815 = vld [vmem:[#allocation2 + $0x260] sm:$0xff]
    %v3816 = vadd.f32 %v3739, %v3430
    %v3817 = vadd.f32 %v3740, %v3433
    %v3818 = vadd.f32 %v3741, %v3438
    %v3819 = vadd.f32 %v3742, %v3441
    %v3820 = vadd.f32 %v3743, %v3446
    %v3821 = vadd.f32 %v3744, %v3449
    %v3822 = vadd.f32 %v3745, %v3454
    %v3823 = vadd.f32 %v3746, %v3457
    %v3824 = vadd.f32 %v3747, %v3462
    %v3825 = vadd.f32 %v3748, %v3465
    %v3826 = vadd.f32 %v3749, %v3470
    %v3827 = vadd.f32 %v3750, %v3473
    %v3828 = vadd.f32 %v3751, %v3478
    %v3829 = vadd.f32 %v3752, %v3481
    %v3830 = vadd.f32 %v3753, %v3486
    %v3831 = vadd.f32 %v3754, %v3489
    %v3832 = vadd.f32 %v3755, %v3494
    %v3833 = vadd.f32 %v3756, %v3497
    %v3834 = vadd.f32 %v3757, %v3502
    %v3835 = vadd.f32 %v3758, %v3505
    %v3836 = vadd.f32 %v3759, %v3510
    %v3837 = vadd.f32 %v3760, %v3513
    %v3838 = vadd.f32 %v3761, %v3518
    %v3839 = vadd.f32 %v3762, %v3521
    %v3840 = vadd.f32 %v3763, %v3526
    %v3841 = vadd.f32 %v3764, %v3529
    %v3842 = vadd.f32 %v3765, %v3534
    %v3843 = vadd.f32 %v3766, %v3537
    %v3844 = vadd.f32 %v3767, %v3542
    %v3845 = vadd.f32 %v3768, %v3545
    %v3846 = vadd.f32 %v3769, %v3550
    %v3847 = vadd.f32 %v3770, %v3553
    %v3848 = vadd.f32 %v3771, %v3558
    %v3849 = vadd.f32 %v3772, %v3561
    %v3850 = vadd.f32 %v3773, %v3566
    %v3851 = vadd.f32 %v3774, %v3569
    %v3852 = vadd.f32 %v3775, %v3574
    %v3853 = vadd.f32 %v3776, %v3577
    %v3854 = vadd.f32 %v3777, %v3582
    %v3855 = vadd.f32 %v3778, %v3585
    %v3856 = vadd.f32 %v3779, %v3590
    %v3857 = vadd.f32 %v3780, %v3593
    %v3858 = vadd.f32 %v3781, %v3598
    %v3859 = vadd.f32 %v3782, %v3601
    %v3860 = vadd.f32 %v3783, %v3606
    %v3861 = vadd.f32 %v3784, %v3609
    %v3862 = vadd.f32 %v3785, %v3614
    %v3863 = vadd.f32 %v3786, %v3617
    %v3864 = vadd.f32 %v3787, %v3622
    %v3865 = vadd.f32 %v3788, %v3625
    %v3866 = vadd.f32 %v3789, %v3630
    %v3867 = vadd.f32 %v3790, %v3633
    %v3868 = vadd.f32 %v3791, %v3638
    %v3869 = vadd.f32 %v3792, %v3641
    %v3870 = vadd.f32 %v3793, %v3646
    %v3871 = vadd.f32 %v3794, %v3649
    %v3872 = vadd.f32 %v3795, %v3654
    %v3873 = vadd.f32 %v3796, %v3657
    %v3874 = vadd.f32 %v3797, %v3662
    %v3875 = vadd.f32 %v3798, %v3665
    %v3876 = vadd.f32 %v3799, %v3670
    %v3877 = vadd.f32 %v3800, %v3673
    %v3878 = vadd.f32 %v3801, %v3678
    %v3879 = vadd.f32 %v3802, %v3681
    %v3880 = vadd.f32 %v3803, %v3686
    %v3881 = vadd.f32 %v3804, %v3689
    %v3882 = vadd.f32 %v3805, %v3694
    %v3883 = vadd.f32 %v3806, %v3697
    %v3884 = vadd.f32 %v3807, %v3702
    %v3885 = vadd.f32 %v3808, %v3705
    %v3886 = vadd.f32 %v3809, %v3710
    %v3887 = vadd.f32 %v3810, %v3713
    %v3888 = vadd.f32 %v3811, %v3718
    %v3889 = vadd.f32 %v3812, %v3721
    %v3890 = vadd.f32 %v3813, %v3726
    %v3891 = vadd.f32 %v3814, %v3729
    %v3892 = vadd.f32 %v3815, %v3734
    %3893 = vst [vmem:[#allocation2] sm:$0xff] %v3816
    %3894 = vst [vmem:[#allocation2 + $0x8] sm:$0xff] %v3817
    %3895 = vst [vmem:[#allocation2 + $0x10] sm:$0xff] %v3818
    %3896 = vst [vmem:[#allocation2 + $0x18] sm:$0xff] %v3819
    %3897 = vst [vmem:[#allocation2 + $0x20] sm:$0xff] %v3820
    %3898 = vst [vmem:[#allocation2 + $0x28] sm:$0xff] %v3821
    %3899 = vst [vmem:[#allocation2 + $0x30] sm:$0xff] %v3822
    %3900 = vst [vmem:[#allocation2 + $0x38] sm:$0xff] %v3823
    %3901 = vst [vmem:[#allocation2 + $0x40] sm:$0xff] %v3824
    %3902 = vst [vmem:[#allocation2 + $0x48] sm:$0xff] %v3825
    %3903 = vst [vmem:[#allocation2 + $0x50] sm:$0xff] %v3826
    %3904 = vst [vmem:[#allocation2 + $0x58] sm:$0xff] %v3827
    %3905 = vst [vmem:[#allocation2 + $0x60] sm:$0xff] %v3828
    %3906 = vst [vmem:[#allocation2 + $0x68] sm:$0xff] %v3829
    %3907 = vst [vmem:[#allocation2 + $0x70] sm:$0xff] %v3830
    %3908 = vst [vmem:[#allocation2 + $0x78] sm:$0xff] %v3831
    %3909 = vst [vmem:[#allocation2 + $0x80] sm:$0xff] %v3832
    %3910 = vst [vmem:[#allocation2 + $0x88] sm:$0xff] %v3833
    %3911 = vst [vmem:[#allocation2 + $0x90] sm:$0xff] %v3834
    %3912 = vst [vmem:[#allocation2 + $0x98] sm:$0xff] %v3835
    %3913 = vst [vmem:[#allocation2 + $0xa0] sm:$0xff] %v3836
    %3914 = vst [vmem:[#allocation2 + $0xa8] sm:$0xff] %v3837
    %3915 = vst [vmem:[#allocation2 + $0xb0] sm:$0xff] %v3838
    %3916 = vst [vmem:[#allocation2 + $0xb8] sm:$0xff] %v3839
    %3917 = vst [vmem:[#allocation2 + $0xc0] sm:$0xff] %v3840
    %3918 = vst [vmem:[#allocation2 + $0xc8] sm:$0xff] %v3841
    %3919 = vst [vmem:[#allocation2 + $0xd0] sm:$0xff] %v3842
    %3920 = vst [vmem:[#allocation2 + $0xd8] sm:$0xff] %v3843
    %3921 = vst [vmem:[#allocation2 + $0xe0] sm:$0xff] %v3844
    %3922 = vst [vmem:[#allocation2 + $0xe8] sm:$0xff] %v3845
    %3923 = vst [vmem:[#allocation2 + $0xf0] sm:$0xff] %v3846
    %3924 = vst [vmem:[#allocation2 + $0xf8] sm:$0xff] %v3847
    %3925 = vst [vmem:[#allocation2 + $0x100] sm:$0xff] %v3848
    %3926 = vst [vmem:[#allocation2 + $0x108] sm:$0xff] %v3849
    %3927 = vst [vmem:[#allocation2 + $0x110] sm:$0xff] %v3850
    %3928 = vst [vmem:[#allocation2 + $0x118] sm:$0xff] %v3851
    %3929 = vst [vmem:[#allocation2 + $0x120] sm:$0xff] %v3852
    %3930 = vst [vmem:[#allocation2 + $0x128] sm:$0xff] %v3853
    %3931 = vst [vmem:[#allocation2 + $0x130] sm:$0xff] %v3854
    %3932 = vst [vmem:[#allocation2 + $0x138] sm:$0xff] %v3855
    %3933 = vst [vmem:[#allocation2 + $0x140] sm:$0xff] %v3856
    %3934 = vst [vmem:[#allocation2 + $0x148] sm:$0xff] %v3857
    %3935 = vst [vmem:[#allocation2 + $0x150] sm:$0xff] %v3858
    %3936 = vst [vmem:[#allocation2 + $0x158] sm:$0xff] %v3859
    %3937 = vst [vmem:[#allocation2 + $0x160] sm:$0xff] %v3860
    %3938 = vst [vmem:[#allocation2 + $0x168] sm:$0xff] %v3861
    %3939 = vst [vmem:[#allocation2 + $0x170] sm:$0xff] %v3862
    %3940 = vst [vmem:[#allocation2 + $0x178] sm:$0xff] %v3863
    %3941 = vst [vmem:[#allocation2 + $0x180] sm:$0xff] %v3864
    %3942 = vst [vmem:[#allocation2 + $0x188] sm:$0xff] %v3865
    %3943 = vst [vmem:[#allocation2 + $0x190] sm:$0xff] %v3866
    %3944 = vst [vmem:[#allocation2 + $0x198] sm:$0xff] %v3867
    %3945 = vst [vmem:[#allocation2 + $0x1a0] sm:$0xff] %v3868
    %3946 = vst [vmem:[#allocation2 + $0x1a8] sm:$0xff] %v3869
    %3947 = vst [vmem:[#allocation2 + $0x1b0] sm:$0xff] %v3870
    %3948 = vst [vmem:[#allocation2 + $0x1b8] sm:$0xff] %v3871
    %3949 = vst [vmem:[#allocation2 + $0x1c0] sm:$0xff] %v3872
    %3950 = vst [vmem:[#allocation2 + $0x1c8] sm:$0xff] %v3873
    %3951 = vst [vmem:[#allocation2 + $0x1d0] sm:$0xff] %v3874
    %3952 = vst [vmem:[#allocation2 + $0x1d8] sm:$0xff] %v3875
    %3953 = vst [vmem:[#allocation2 + $0x1e0] sm:$0xff] %v3876
    %3954 = vst [vmem:[#allocation2 + $0x1e8] sm:$0xff] %v3877
    %3955 = vst [vmem:[#allocation2 + $0x1f0] sm:$0xff] %v3878
    %3956 = vst [vmem:[#allocation2 + $0x1f8] sm:$0xff] %v3879
    %3957 = vst [vmem:[#allocation2 + $0x200] sm:$0xff] %v3880
    %3958 = vst [vmem:[#allocation2 + $0x208] sm:$0xff] %v3881
    %3959 = vst [vmem:[#allocation2 + $0x210] sm:$0xff] %v3882
    %3960 = vst [vmem:[#allocation2 + $0x218] sm:$0xff] %v3883
    %3961 = vst [vmem:[#allocation2 + $0x220] sm:$0xff] %v3884
    %3962 = vst [vmem:[#allocation2 + $0x228] sm:$0xff] %v3885
    %3963 = vst [vmem:[#allocation2 + $0x230] sm:$0xff] %v3886
    %3964 = vst [vmem:[#allocation2 + $0x238] sm:$0xff] %v3887
    %3965 = vst [vmem:[#allocation2 + $0x240] sm:$0xff] %v3888
    %3966 = vst [vmem:[#allocation2 + $0x248] sm:$0xff] %v3889
    %3967 = vst [vmem:[#allocation2 + $0x250] sm:$0xff] %v3890
    %3968 = vst [vmem:[#allocation2 + $0x258] sm:$0xff] %v3891
    %3969 = vst [vmem:[#allocation2 + $0x260] sm:$0xff] %v3892
    %v3970 = vld [vmem:[%s0 + $0x14] sm:$0xff]
    %v3971 = vld [vmem:[%s0 + $0x1c] sm:$0xff]
    %v3972 = vld [vmem:[%s0 + $0x24] sm:$0xff]
    %v3973 = vld [vmem:[%s0 + $0x2c] sm:$0xff]
    %v3974 = vld [vmem:[%s0 + $0x34] sm:$0xff]
    %v3975 = vld [vmem:[%s0 + $0x3c] sm:$0xff]
    %v3976 = vld [vmem:[%s0 + $0x44] sm:$0xff]
    %v3977 = vld [vmem:[%s0 + $0x4c] sm:$0xff]
    %v3978 = vld [vmem:[%s0 + $0x54] sm:$0xff]
    %v3979 = vld [vmem:[%s0 + $0x5c] sm:$0xff]
    %v3980 = vld [vmem:[%s0 + $0x64] sm:$0xff]
    %v3981 = vld [vmem:[%s0 + $0x6c] sm:$0xff]
    %v3982 = vld [vmem:[%s0 + $0x74] sm:$0xff]
    %v3983 = vld [vmem:[%s0 + $0x7c] sm:$0xff]
    %v3984 = vld [vmem:[%s0 + $0x84] sm:$0xff]
    %v3985 = vld [vmem:[%s0 + $0x8c] sm:$0xff]
    %v3986 = vld [vmem:[%s0 + $0x94] sm:$0xff]
    %v3987 = vld [vmem:[%s0 + $0x9c] sm:$0xff]
    %v3988 = vld [vmem:[%s0 + $0xa4] sm:$0xff]
    %v3989 = vld [vmem:[%s0 + $0xac] sm:$0xff]
    %v3990 = vld [vmem:[%s0 + $0xb4] sm:$0xff]
    %v3991 = vld [vmem:[%s0 + $0xbc] sm:$0xff]
    %v3992 = vld [vmem:[%s0 + $0xc4] sm:$0xff]
    %v3993 = vld [vmem:[%s0 + $0xcc] sm:$0xff]
    %v3994 = vld [vmem:[%s0 + $0xd4] sm:$0xff]
    %v3995 = vld [vmem:[%s0 + $0xdc] sm:$0xff]
    %v3996 = vld [vmem:[%s0 + $0xe4] sm:$0xff]
    %v3997 = vld [vmem:[%s0 + $0xec] sm:$0xff]
    %v3998 = vld [vmem:[%s0 + $0xf4] sm:$0xff]
    %v3999 = vld [vmem:[%s0 + $0xfc] sm:$0xff]
    %v4000 = vld [vmem:[%s0 + $0x104] sm:$0xff]
    %v4001 = vld [vmem:[%s0 + $0x10c] sm:$0xff]
    %v4002 = vld [vmem:[%s0 + $0x114] sm:$0xff]
    %v4003 = vld [vmem:[%s0 + $0x11c] sm:$0xff]
    %v4004 = vld [vmem:[%s0 + $0x124] sm:$0xff]
    %v4005 = vld [vmem:[%s0 + $0x12c] sm:$0xff]
    %v4006 = vld [vmem:[%s0 + $0x134] sm:$0xff]
    %v4007 = vld [vmem:[%s0 + $0x13c] sm:$0xff]
    %v4008 = vld [vmem:[%s0 + $0x144] sm:$0xff]
    %v4009 = vld [vmem:[%s0 + $0x14c] sm:$0xff]
    %v4010 = vld [vmem:[%s0 + $0x154] sm:$0xff]
    %v4011 = vld [vmem:[%s0 + $0x15c] sm:$0xff]
    %v4012 = vld [vmem:[%s0 + $0x164] sm:$0xff]
    %v4013 = vld [vmem:[%s0 + $0x16c] sm:$0xff]
    %v4014 = vld [vmem:[%s0 + $0x174] sm:$0xff]
    %v4015 = vld [vmem:[%s0 + $0x17c] sm:$0xff]
    %v4016 = vld [vmem:[%s0 + $0x184] sm:$0xff]
    %v4017 = vld [vmem:[%s0 + $0x18c] sm:$0xff]
    %v4018 = vld [vmem:[%s0 + $0x194] sm:$0xff]
    %v4019 = vld [vmem:[%s0 + $0x19c] sm:$0xff]
    %v4020 = vld [vmem:[%s0 + $0x1a4] sm:$0xff]
    %v4021 = vld [vmem:[%s0 + $0x1ac] sm:$0xff]
    %v4022 = vld [vmem:[%s0 + $0x1b4] sm:$0xff]
    %v4023 = vld [vmem:[%s0 + $0x1bc] sm:$0xff]
    %v4024 = vld [vmem:[%s0 + $0x1c4] sm:$0xff]
    %v4025 = vld [vmem:[%s0 + $0x1cc] sm:$0xff]
    %v4026 = vld [vmem:[%s0 + $0x1d4] sm:$0xff]
    %v4027 = vld [vmem:[%s0 + $0x1dc] sm:$0xff]
    %v4028 = vld [vmem:[%s0 + $0x1e4] sm:$0xff]
    %v4029 = vld [vmem:[%s0 + $0x1ec] sm:$0xff]
    %v4030 = vld [vmem:[%s0 + $0x1f4] sm:$0xff]
    %v4031 = vld [vmem:[%s0 + $0x1fc] sm:$0xff]
    %v4032 = vld [vmem:[%s0 + $0x204] sm:$0xff]
    %v4033 = vld [vmem:[%s0 + $0x20c] sm:$0xff]
    %v4034 = vld [vmem:[%s0 + $0x214] sm:$0xff]
    %v4035 = vld [vmem:[%s0 + $0x21c] sm:$0xff]
    %v4036 = vld [vmem:[%s0 + $0x224] sm:$0xff]
    %v4037 = vld [vmem:[%s0 + $0x22c] sm:$0xff]
    %v4038 = vld [vmem:[%s0 + $0x234] sm:$0xff]
    %v4039 = vld [vmem:[%s0 + $0x23c] sm:$0xff]
    %v4040 = vld [vmem:[%s0 + $0x244] sm:$0xff]
    %v4041 = vld [vmem:[%s0 + $0x24c] sm:$0xff]
    %v4042 = vld [vmem:[%s0 + $0x254] sm:$0xff]
    %v4043 = vld [vmem:[%s0 + $0x25c] sm:$0xff]
    %v4044 = vld [vmem:[%s0 + $0x264] sm:$0xff]
    %v4045 = vld [vmem:[%s0 + $0x26c] sm:$0xff]
    %v4046 = vld [vmem:[%s0 + $0x274] sm:$0xff]
    %v4047 = vpack.c.bf16 %v3971, %v3970
    %v4048 = vpack.c.bf16 %v3973, %v3972
    %v4049 = vpack.c.bf16 %v3975, %v3974
    %v4050 = vpack.c.bf16 %v3977, %v3976
    %v4051 = vpack.c.bf16 %v3979, %v3978
    %v4052 = vpack.c.bf16 %v3981, %v3980
    %v4053 = vpack.c.bf16 %v3983, %v3982
    %v4054 = vpack.c.bf16 %v3985, %v3984
    %v4055 = vpack.c.bf16 %v3987, %v3986
    %v4056 = vpack.c.bf16 %v3989, %v3988
    %v4057 = vpack.c.bf16 %v3991, %v3990
    %v4058 = vpack.c.bf16 %v3993, %v3992
    %v4059 = vpack.c.bf16 %v3995, %v3994
    %v4060 = vpack.c.bf16 %v3997, %v3996
    %v4061 = vpack.c.bf16 %v3999, %v3998
    %v4062 = vpack.c.bf16 %v4001, %v4000
    %v4063 = vpack.c.bf16 %v4003, %v4002
    %v4064 = vpack.c.bf16 %v4005, %v4004
    %v4065 = vpack.c.bf16 %v4007, %v4006
    %v4066 = vpack.c.bf16 %v4009, %v4008
    %v4067 = vpack.c.bf16 %v4011, %v4010
    %v4068 = vpack.c.bf16 %v4013, %v4012
    %v4069 = vpack.c.bf16 %v4015, %v4014
    %v4070 = vpack.c.bf16 %v4017, %v4016
    %v4071 = vpack.c.bf16 %v4019, %v4018
    %v4072 = vpack.c.bf16 %v4021, %v4020
    %v4073 = vpack.c.bf16 %v4023, %v4022
    %v4074 = vpack.c.bf16 %v4025, %v4024
    %v4075 = vpack.c.bf16 %v4027, %v4026
    %v4076 = vpack.c.bf16 %v4029, %v4028
    %v4077 = vpack.c.bf16 %v4031, %v4030
    %v4078 = vpack.c.bf16 %v4033, %v4032
    %v4079 = vpack.c.bf16 %v4035, %v4034
    %v4080 = vpack.c.bf16 %v4037, %v4036
    %v4081 = vpack.c.bf16 %v4039, %v4038
    %v4082 = vpack.c.bf16 %v4041, %v4040
    %v4083 = vpack.c.bf16 %v4043, %v4042
    %v4084 = vpack.c.bf16 %v4045, %v4044
    %v4085 = vpack.c.bf16 %v4046, %v4046
    %s4086 = scalar_lea.vmem %s1, 40
    %v4087 = vld [vmem:[%s4086] sm:$0xf]
    %v4088 = vld [vmem:[%s4086 + $0x4] sm:$0x1]
    %v4091 = vunpack.c.l.b16 %v4087
    %v4092 = vunpack.c.l.b16 %v4088
    %v4093 = vpack.c.b16 %v4092, %v4091
    %v4095 = vsel %vm148, %v4047, 0
    %v4098 = vsel %vm148, %v4048, 0
    %v4101 = vsel %vm148, %v4049, 0
    %v4104 = vsel %vm148, %v4050, 0
    %v4107 = vsel %vm148, %v4051, 0
    %v4110 = vsel %vm148, %v4052, 0
    %v4113 = vsel %vm148, %v4053, 0
    %v4116 = vsel %vm148, %v4054, 0
    %v4119 = vsel %vm148, %v4055, 0
    %v4122 = vsel %vm148, %v4056, 0
    %v4125 = vsel %vm148, %v4057, 0
    %v4128 = vsel %vm148, %v4058, 0
    %v4131 = vsel %vm148, %v4059, 0
    %v4134 = vsel %vm148, %v4060, 0
    %v4137 = vsel %vm148, %v4061, 0
    %v4140 = vsel %vm148, %v4062, 0
    %v4143 = vsel %vm148, %v4063, 0
    %v4146 = vsel %vm148, %v4064, 0
    %v4149 = vsel %vm148, %v4065, 0
    %v4152 = vsel %vm148, %v4066, 0
    %v4155 = vsel %vm148, %v4067, 0
    %v4158 = vsel %vm148, %v4068, 0
    %v4161 = vsel %vm148, %v4069, 0
    %v4164 = vsel %vm148, %v4070, 0
    %v4167 = vsel %vm148, %v4071, 0
    %v4170 = vsel %vm148, %v4072, 0
    %v4173 = vsel %vm148, %v4073, 0
    %v4176 = vsel %vm148, %v4074, 0
    %v4179 = vsel %vm148, %v4075, 0
    %v4182 = vsel %vm148, %v4076, 0
    %v4185 = vsel %vm148, %v4077, 0
    %v4188 = vsel %vm148, %v4078, 0
    %v4191 = vsel %vm148, %v4079, 0
    %v4194 = vsel %vm148, %v4080, 0
    %v4197 = vsel %vm148, %v4081, 0
    %v4200 = vsel %vm148, %v4082, 0
    %v4203 = vsel %vm148, %v4083, 0
    %v4206 = vsel %vm148, %v4084, 0
    %v4209 = vsel %vm148, %v4085, 0
    %v4212 = vand.u32 %v4093, %v269
    %4214 = vmatprep.subr.bf16.mxu0 0
    %4215 = vmatpush1.bf16.msra.mxu0 %v4212
    %4216 = vmatprep.subr.bf16.mxu0 0
    %4217 = vmatpush1.bf16.msra.mxu0 0
    %4218 = vmatprep.subr.bf16.mxu0 0
    %4219 = vmatpush1.bf16.msra.mxu0 0
    %4220 = vmatprep.subr.bf16.mxu0 0
    %4221 = vmatpush1.bf16.msra.mxu0 0
    %4222 = vmatprep.subr.bf16.mxu0 0
    %4223 = vmatpush1.bf16.msra.mxu0 0
    %4224 = vmatprep.subr.bf16.mxu0 0
    %4225 = vmatpush1.bf16.msra.mxu0 0
    %4226 = vmatprep.subr.bf16.mxu0 0
    %4227 = vmatpush1.bf16.msra.mxu0 0
    %4228 = vmatprep.subr.bf16.mxu0 0
    %4229 = vmatpush1.bf16.msra.mxu0 0
    %4230 = vmatprep.subr.bf16.mxu0 0
    %4231 = vmatpush1.bf16.msra.mxu0 0
    %4232 = vmatprep.subr.bf16.mxu0 0
    %4233 = vmatpush1.bf16.msra.mxu0 0
    %4234 = vmatprep.subr.bf16.mxu0 0
    %4235 = vmatpush1.bf16.msra.mxu0 0
    %4236 = vmatprep.subr.bf16.mxu0 0
    %4237 = vmatpush1.bf16.msra.mxu0 0
    %4238 = vmatprep.subr.bf16.mxu0 0
    %4239 = vmatpush1.bf16.msra.mxu0 0
    %4240 = vmatprep.subr.bf16.mxu0 0
    %4241 = vmatpush1.bf16.msra.mxu0 0
    %4242 = vmatprep.subr.bf16.mxu0 0
    %4243 = vmatpush1.bf16.msra.mxu0 0
    %4244 = vmatprep.subr.bf16.mxu0 0
    %4245 = vmatpush1.bf16.msra.mxu0 0
    %4246 = vmatprep.mubr.bf16.mxu0 0
    %4247 = vmatmul.mubr.bf16.gmra.mrb[0].mxu0 %v4095
    %v4248 = vpop.f32.mrb[0].mxu0
    %v4249 = vadd.f32 0.0, %v4248
    %v4250 = vpop.f32.mrb[0].mxu0
    %v4251 = vpop.f32.mrb[0].mxu0
    %v4252 = vadd.f32 0.0, %v4251
    %v4253 = vpop.f32.mrb[0].mxu0
    %4254 = vmatprep.mubr.bf16.mxu0 0
    %4255 = vmatmul.mubr.bf16.gmra.mrb[0].mxu0 %v4098
    %v4256 = vpop.f32.mrb[0].mxu0
    %v4257 = vadd.f32 0.0, %v4256
    %v4258 = vpop.f32.mrb[0].mxu0
    %v4259 = vpop.f32.mrb[0].mxu0
    %v4260 = vadd.f32 0.0, %v4259
    %v4261 = vpop.f32.mrb[0].mxu0
    %4262 = vmatprep.mubr.bf16.mxu0 0
    %4263 = vmatmul.mubr.bf16.gmra.mrb[0].mxu0 %v4101
    %v4264 = vpop.f32.mrb[0].mxu0
    %v4265 = vadd.f32 0.0, %v4264
    %v4266 = vpop.f32.mrb[0].mxu0
    %v4267 = vpop.f32.mrb[0].mxu0
    %v4268 = vadd.f32 0.0, %v4267
    %v4269 = vpop.f32.mrb[0].mxu0
    %4270 = vmatprep.mubr.bf16.mxu0 0
    %4271 = vmatmul.mubr.bf16.gmra.mrb[0].mxu0 %v4104
    %v4272 = vpop.f32.mrb[0].mxu0
    %v4273 = vadd.f32 0.0, %v4272
    %v4274 = vpop.f32.mrb[0].mxu0
    %v4275 = vpop.f32.mrb[0].mxu0
    %v4276 = vadd.f32 0.0, %v4275
    %v4277 = vpop.f32.mrb[0].mxu0
    %4278 = vmatprep.mubr.bf16.mxu0 0
    %4279 = vmatmul.mubr.bf16.gmra.mrb[0].mxu0 %v4107
    %v4280 = vpop.f32.mrb[0].mxu0
    %v4281 = vadd.f32 0.0, %v4280
    %v4282 = vpop.f32.mrb[0].mxu0
    %v4283 = vpop.f32.mrb[0].mxu0
    %v4284 = vadd.f32 0.0, %v4283
    %v4285 = vpop.f32.mrb[0].mxu0
    %4286 = vmatprep.mubr.bf16.mxu0 0
    %4287 = vmatmul.mubr.bf16.gmra.mrb[0].mxu0 %v4110
    %v4288 = vpop.f32.mrb[0].mxu0
    %v4289 = vadd.f32 0.0, %v4288
    %v4290 = vpop.f32.mrb[0].mxu0
    %v4291 = vpop.f32.mrb[0].mxu0
    %v4292 = vadd.f32 0.0, %v4291
    %v4293 = vpop.f32.mrb[0].mxu0
    %4294 = vmatprep.mubr.bf16.mxu0 0
    %4295 = vmatmul.mubr.bf16.gmra.mrb[0].mxu0 %v4113
    %v4296 = vpop.f32.mrb[0].mxu0
    %v4297 = vadd.f32 0.0, %v4296
    %v4298 = vpop.f32.mrb[0].mxu0
    %v4299 = vpop.f32.mrb[0].mxu0
    %v4300 = vadd.f32 0.0, %v4299
    %v4301 = vpop.f32.mrb[0].mxu0
    %4302 = vmatprep.mubr.bf16.mxu0 0
    %4303 = vmatmul.mubr.bf16.gmra.mrb[0].mxu0 %v4116
    %v4304 = vpop.f32.mrb[0].mxu0
    %v4305 = vadd.f32 0.0, %v4304
    %v4306 = vpop.f32.mrb[0].mxu0
    %v4307 = vpop.f32.mrb[0].mxu0
    %v4308 = vadd.f32 0.0, %v4307
    %v4309 = vpop.f32.mrb[0].mxu0
    %4310 = vmatprep.mubr.bf16.mxu0 0
    %4311 = vmatmul.mubr.bf16.gmra.mrb[0].mxu0 %v4119
    %v4312 = vpop.f32.mrb[0].mxu0
    %v4313 = vadd.f32 0.0, %v4312
    %v4314 = vpop.f32.mrb[0].mxu0
    %v4315 = vpop.f32.mrb[0].mxu0
    %v4316 = vadd.f32 0.0, %v4315
    %v4317 = vpop.f32.mrb[0].mxu0
    %4318 = vmatprep.mubr.bf16.mxu0 0
    %4319 = vmatmul.mubr.bf16.gmra.mrb[0].mxu0 %v4122
    %v4320 = vpop.f32.mrb[0].mxu0
    %v4321 = vadd.f32 0.0, %v4320
    %v4322 = vpop.f32.mrb[0].mxu0
    %v4323 = vpop.f32.mrb[0].mxu0
    %v4324 = vadd.f32 0.0, %v4323
    %v4325 = vpop.f32.mrb[0].mxu0
    %4326 = vmatprep.mubr.bf16.mxu0 0
    %4327 = vmatmul.mubr.bf16.gmra.mrb[0].mxu0 %v4125
    %v4328 = vpop.f32.mrb[0].mxu0
    %v4329 = vadd.f32 0.0, %v4328
    %v4330 = vpop.f32.mrb[0].mxu0
    %v4331 = vpop.f32.mrb[0].mxu0
    %v4332 = vadd.f32 0.0, %v4331
    %v4333 = vpop.f32.mrb[0].mxu0
    %4334 = vmatprep.mubr.bf16.mxu0 0
    %4335 = vmatmul.mubr.bf16.gmra.mrb[0].mxu0 %v4128
    %v4336 = vpop.f32.mrb[0].mxu0
    %v4337 = vadd.f32 0.0, %v4336
    %v4338 = vpop.f32.mrb[0].mxu0
    %v4339 = vpop.f32.mrb[0].mxu0
    %v4340 = vadd.f32 0.0, %v4339
    %v4341 = vpop.f32.mrb[0].mxu0
    %4342 = vmatprep.mubr.bf16.mxu0 0
    %4343 = vmatmul.mubr.bf16.gmra.mrb[0].mxu0 %v4131
    %v4344 = vpop.f32.mrb[0].mxu0
    %v4345 = vadd.f32 0.0, %v4344
    %v4346 = vpop.f32.mrb[0].mxu0
    %v4347 = vpop.f32.mrb[0].mxu0
    %v4348 = vadd.f32 0.0, %v4347
    %v4349 = vpop.f32.mrb[0].mxu0
    %4350 = vmatprep.mubr.bf16.mxu0 0
    %4351 = vmatmul.mubr.bf16.gmra.mrb[0].mxu0 %v4134
    %v4352 = vpop.f32.mrb[0].mxu0
    %v4353 = vadd.f32 0.0, %v4352
    %v4354 = vpop.f32.mrb[0].mxu0
    %v4355 = vpop.f32.mrb[0].mxu0
    %v4356 = vadd.f32 0.0, %v4355
    %v4357 = vpop.f32.mrb[0].mxu0
    %4358 = vmatprep.mubr.bf16.mxu0 0
    %4359 = vmatmul.mubr.bf16.gmra.mrb[0].mxu0 %v4137
    %v4360 = vpop.f32.mrb[0].mxu0
    %v4361 = vadd.f32 0.0, %v4360
    %v4362 = vpop.f32.mrb[0].mxu0
    %v4363 = vpop.f32.mrb[0].mxu0
    %v4364 = vadd.f32 0.0, %v4363
    %v4365 = vpop.f32.mrb[0].mxu0
    %4366 = vmatprep.mubr.bf16.mxu0 0
    %4367 = vmatmul.mubr.bf16.gmra.mrb[0].mxu0 %v4140
    %v4368 = vpop.f32.mrb[0].mxu0
    %v4369 = vadd.f32 0.0, %v4368
    %v4370 = vpop.f32.mrb[0].mxu0
    %v4371 = vpop.f32.mrb[0].mxu0
    %v4372 = vadd.f32 0.0, %v4371
    %v4373 = vpop.f32.mrb[0].mxu0
    %4374 = vmatprep.mubr.bf16.mxu0 0
    %4375 = vmatmul.mubr.bf16.gmra.mrb[0].mxu0 %v4143
    %v4376 = vpop.f32.mrb[0].mxu0
    %v4377 = vadd.f32 0.0, %v4376
    %v4378 = vpop.f32.mrb[0].mxu0
    %v4379 = vpop.f32.mrb[0].mxu0
    %v4380 = vadd.f32 0.0, %v4379
    %v4381 = vpop.f32.mrb[0].mxu0
    %4382 = vmatprep.mubr.bf16.mxu0 0
    %4383 = vmatmul.mubr.bf16.gmra.mrb[0].mxu0 %v4146
    %v4384 = vpop.f32.mrb[0].mxu0
    %v4385 = vadd.f32 0.0, %v4384
    %v4386 = vpop.f32.mrb[0].mxu0
    %v4387 = vpop.f32.mrb[0].mxu0
    %v4388 = vadd.f32 0.0, %v4387
    %v4389 = vpop.f32.mrb[0].mxu0
    %4390 = vmatprep.mubr.bf16.mxu0 0
    %4391 = vmatmul.mubr.bf16.gmra.mrb[0].mxu0 %v4149
    %v4392 = vpop.f32.mrb[0].mxu0
    %v4393 = vadd.f32 0.0, %v4392
    %v4394 = vpop.f32.mrb[0].mxu0
    %v4395 = vpop.f32.mrb[0].mxu0
    %v4396 = vadd.f32 0.0, %v4395
    %v4397 = vpop.f32.mrb[0].mxu0
    %4398 = vmatprep.mubr.bf16.mxu0 0
    %4399 = vmatmul.mubr.bf16.gmra.mrb[0].mxu0 %v4152
    %v4400 = vpop.f32.mrb[0].mxu0
    %v4401 = vadd.f32 0.0, %v4400
    %v4402 = vpop.f32.mrb[0].mxu0
    %v4403 = vpop.f32.mrb[0].mxu0
    %v4404 = vadd.f32 0.0, %v4403
    %v4405 = vpop.f32.mrb[0].mxu0
    %4406 = vmatprep.mubr.bf16.mxu0 0
    %4407 = vmatmul.mubr.bf16.gmra.mrb[0].mxu0 %v4155
    %v4408 = vpop.f32.mrb[0].mxu0
    %v4409 = vadd.f32 0.0, %v4408
    %v4410 = vpop.f32.mrb[0].mxu0
    %v4411 = vpop.f32.mrb[0].mxu0
    %v4412 = vadd.f32 0.0, %v4411
    %v4413 = vpop.f32.mrb[0].mxu0
    %4414 = vmatprep.mubr.bf16.mxu0 0
    %4415 = vmatmul.mubr.bf16.gmra.mrb[0].mxu0 %v4158
    %v4416 = vpop.f32.mrb[0].mxu0
    %v4417 = vadd.f32 0.0, %v4416
    %v4418 = vpop.f32.mrb[0].mxu0
    %v4419 = vpop.f32.mrb[0].mxu0
    %v4420 = vadd.f32 0.0, %v4419
    %v4421 = vpop.f32.mrb[0].mxu0
    %4422 = vmatprep.mubr.bf16.mxu0 0
    %4423 = vmatmul.mubr.bf16.gmra.mrb[0].mxu0 %v4161
    %v4424 = vpop.f32.mrb[0].mxu0
    %v4425 = vadd.f32 0.0, %v4424
    %v4426 = vpop.f32.mrb[0].mxu0
    %v4427 = vpop.f32.mrb[0].mxu0
    %v4428 = vadd.f32 0.0, %v4427
    %v4429 = vpop.f32.mrb[0].mxu0
    %4430 = vmatprep.mubr.bf16.mxu0 0
    %4431 = vmatmul.mubr.bf16.gmra.mrb[0].mxu0 %v4164
    %v4432 = vpop.f32.mrb[0].mxu0
    %v4433 = vadd.f32 0.0, %v4432
    %v4434 = vpop.f32.mrb[0].mxu0
    %v4435 = vpop.f32.mrb[0].mxu0
    %v4436 = vadd.f32 0.0, %v4435
    %v4437 = vpop.f32.mrb[0].mxu0
    %4438 = vmatprep.mubr.bf16.mxu0 0
    %4439 = vmatmul.mubr.bf16.gmra.mrb[0].mxu0 %v4167
    %v4440 = vpop.f32.mrb[0].mxu0
    %v4441 = vadd.f32 0.0, %v4440
    %v4442 = vpop.f32.mrb[0].mxu0
    %v4443 = vpop.f32.mrb[0].mxu0
    %v4444 = vadd.f32 0.0, %v4443
    %v4445 = vpop.f32.mrb[0].mxu0
    %4446 = vmatprep.mubr.bf16.mxu0 0
    %4447 = vmatmul.mubr.bf16.gmra.mrb[0].mxu0 %v4170
    %v4448 = vpop.f32.mrb[0].mxu0
    %v4449 = vadd.f32 0.0, %v4448
    %v4450 = vpop.f32.mrb[0].mxu0
    %v4451 = vpop.f32.mrb[0].mxu0
    %v4452 = vadd.f32 0.0, %v4451
    %v4453 = vpop.f32.mrb[0].mxu0
    %4454 = vmatprep.mubr.bf16.mxu0 0
    %4455 = vmatmul.mubr.bf16.gmra.mrb[0].mxu0 %v4173
    %v4456 = vpop.f32.mrb[0].mxu0
    %v4457 = vadd.f32 0.0, %v4456
    %v4458 = vpop.f32.mrb[0].mxu0
    %v4459 = vpop.f32.mrb[0].mxu0
    %v4460 = vadd.f32 0.0, %v4459
    %v4461 = vpop.f32.mrb[0].mxu0
    %4462 = vmatprep.mubr.bf16.mxu0 0
    %4463 = vmatmul.mubr.bf16.gmra.mrb[0].mxu0 %v4176
    %v4464 = vpop.f32.mrb[0].mxu0
    %v4465 = vadd.f32 0.0, %v4464
    %v4466 = vpop.f32.mrb[0].mxu0
    %v4467 = vpop.f32.mrb[0].mxu0
    %v4468 = vadd.f32 0.0, %v4467
    %v4469 = vpop.f32.mrb[0].mxu0
    %4470 = vmatprep.mubr.bf16.mxu0 0
    %4471 = vmatmul.mubr.bf16.gmra.mrb[0].mxu0 %v4179
    %v4472 = vpop.f32.mrb[0].mxu0
    %v4473 = vadd.f32 0.0, %v4472
    %v4474 = vpop.f32.mrb[0].mxu0
    %v4475 = vpop.f32.mrb[0].mxu0
    %v4476 = vadd.f32 0.0, %v4475
    %v4477 = vpop.f32.mrb[0].mxu0
    %4478 = vmatprep.mubr.bf16.mxu0 0
    %4479 = vmatmul.mubr.bf16.gmra.mrb[0].mxu0 %v4182
    %v4480 = vpop.f32.mrb[0].mxu0
    %v4481 = vadd.f32 0.0, %v4480
    %v4482 = vpop.f32.mrb[0].mxu0
    %v4483 = vpop.f32.mrb[0].mxu0
    %v4484 = vadd.f32 0.0, %v4483
    %v4485 = vpop.f32.mrb[0].mxu0
    %4486 = vmatprep.mubr.bf16.mxu0 0
    %4487 = vmatmul.mubr.bf16.gmra.mrb[0].mxu0 %v4185
    %v4488 = vpop.f32.mrb[0].mxu0
    %v4489 = vadd.f32 0.0, %v4488
    %v4490 = vpop.f32.mrb[0].mxu0
    %v4491 = vpop.f32.mrb[0].mxu0
    %v4492 = vadd.f32 0.0, %v4491
    %v4493 = vpop.f32.mrb[0].mxu0
    %4494 = vmatprep.mubr.bf16.mxu0 0
    %4495 = vmatmul.mubr.bf16.gmra.mrb[0].mxu0 %v4188
    %v4496 = vpop.f32.mrb[0].mxu0
    %v4497 = vadd.f32 0.0, %v4496
    %v4498 = vpop.f32.mrb[0].mxu0
    %v4499 = vpop.f32.mrb[0].mxu0
    %v4500 = vadd.f32 0.0, %v4499
    %v4501 = vpop.f32.mrb[0].mxu0
    %4502 = vmatprep.mubr.bf16.mxu0 0
    %4503 = vmatmul.mubr.bf16.gmra.mrb[0].mxu0 %v4191
    %v4504 = vpop.f32.mrb[0].mxu0
    %v4505 = vadd.f32 0.0, %v4504
    %v4506 = vpop.f32.mrb[0].mxu0
    %v4507 = vpop.f32.mrb[0].mxu0
    %v4508 = vadd.f32 0.0, %v4507
    %v4509 = vpop.f32.mrb[0].mxu0
    %4510 = vmatprep.mubr.bf16.mxu0 0
    %4511 = vmatmul.mubr.bf16.gmra.mrb[0].mxu0 %v4194
    %v4512 = vpop.f32.mrb[0].mxu0
    %v4513 = vadd.f32 0.0, %v4512
    %v4514 = vpop.f32.mrb[0].mxu0
    %v4515 = vpop.f32.mrb[0].mxu0
    %v4516 = vadd.f32 0.0, %v4515
    %v4517 = vpop.f32.mrb[0].mxu0
    %4518 = vmatprep.mubr.bf16.mxu0 0
    %4519 = vmatmul.mubr.bf16.gmra.mrb[0].mxu0 %v4197
    %v4520 = vpop.f32.mrb[0].mxu0
    %v4521 = vadd.f32 0.0, %v4520
    %v4522 = vpop.f32.mrb[0].mxu0
    %v4523 = vpop.f32.mrb[0].mxu0
    %v4524 = vadd.f32 0.0, %v4523
    %v4525 = vpop.f32.mrb[0].mxu0
    %4526 = vmatprep.mubr.bf16.mxu0 0
    %4527 = vmatmul.mubr.bf16.gmra.mrb[0].mxu0 %v4200
    %v4528 = vpop.f32.mrb[0].mxu0
    %v4529 = vadd.f32 0.0, %v4528
    %v4530 = vpop.f32.mrb[0].mxu0
    %v4531 = vpop.f32.mrb[0].mxu0
    %v4532 = vadd.f32 0.0, %v4531
    %v4533 = vpop.f32.mrb[0].mxu0
    %4534 = vmatprep.mubr.bf16.mxu0 0
    %4535 = vmatmul.mubr.bf16.gmra.mrb[0].mxu0 %v4203
    %v4536 = vpop.f32.mrb[0].mxu0
    %v4537 = vadd.f32 0.0, %v4536
    %v4538 = vpop.f32.mrb[0].mxu0
    %v4539 = vpop.f32.mrb[0].mxu0
    %v4540 = vadd.f32 0.0, %v4539
    %v4541 = vpop.f32.mrb[0].mxu0
    %4542 = vmatprep.mubr.bf16.mxu0 0
    %4543 = vmatmul.mubr.bf16.gmra.mrb[0].mxu0 %v4206
    %v4544 = vpop.f32.mrb[0].mxu0
    %v4545 = vadd.f32 0.0, %v4544
    %v4546 = vpop.f32.mrb[0].mxu0
    %v4547 = vpop.f32.mrb[0].mxu0
    %v4548 = vadd.f32 0.0, %v4547
    %v4549 = vpop.f32.mrb[0].mxu0
    %4550 = vmatprep.mubr.bf16.mxu0 0
    %4551 = vmatmul.mubr.bf16.gmra.mrb[0].mxu0 %v4209
    %v4552 = vpop.f32.mrb[0].mxu0
    %v4553 = vadd.f32 0.0, %v4552
    %v4554 = vpop.f32.mrb[0].mxu0
    %v4555 = vpop.f32.mrb[0].mxu0
    %v4556 = vpop.f32.mrb[0].mxu0
    %4557 = vdwg.mxu0
    %v4558 = vld [vmem:[#allocation2] sm:$0xff]
    %v4559 = vld [vmem:[#allocation2 + $0x8] sm:$0xff]
    %v4560 = vld [vmem:[#allocation2 + $0x10] sm:$0xff]
    %v4561 = vld [vmem:[#allocation2 + $0x18] sm:$0xff]
    %v4562 = vld [vmem:[#allocation2 + $0x20] sm:$0xff]
    %v4563 = vld [vmem:[#allocation2 + $0x28] sm:$0xff]
    %v4564 = vld [vmem:[#allocation2 + $0x30] sm:$0xff]
    %v4565 = vld [vmem:[#allocation2 + $0x38] sm:$0xff]
    %v4566 = vld [vmem:[#allocation2 + $0x40] sm:$0xff]
    %v4567 = vld [vmem:[#allocation2 + $0x48] sm:$0xff]
    %v4568 = vld [vmem:[#allocation2 + $0x50] sm:$0xff]
    %v4569 = vld [vmem:[#allocation2 + $0x58] sm:$0xff]
    %v4570 = vld [vmem:[#allocation2 + $0x60] sm:$0xff]
    %v4571 = vld [vmem:[#allocation2 + $0x68] sm:$0xff]
    %v4572 = vld [vmem:[#allocation2 + $0x70] sm:$0xff]
    %v4573 = vld [vmem:[#allocation2 + $0x78] sm:$0xff]
    %v4574 = vld [vmem:[#allocation2 + $0x80] sm:$0xff]
    %v4575 = vld [vmem:[#allocation2 + $0x88] sm:$0xff]
    %v4576 = vld [vmem:[#allocation2 + $0x90] sm:$0xff]
    %v4577 = vld [vmem:[#allocation2 + $0x98] sm:$0xff]
    %v4578 = vld [vmem:[#allocation2 + $0xa0] sm:$0xff]
    %v4579 = vld [vmem:[#allocation2 + $0xa8] sm:$0xff]
    %v4580 = vld [vmem:[#allocation2 + $0xb0] sm:$0xff]
    %v4581 = vld [vmem:[#allocation2 + $0xb8] sm:$0xff]
    %v4582 = vld [vmem:[#allocation2 + $0xc0] sm:$0xff]
    %v4583 = vld [vmem:[#allocation2 + $0xc8] sm:$0xff]
    %v4584 = vld [vmem:[#allocation2 + $0xd0] sm:$0xff]
    %v4585 = vld [vmem:[#allocation2 + $0xd8] sm:$0xff]
    %v4586 = vld [vmem:[#allocation2 + $0xe0] sm:$0xff]
    %v4587 = vld [vmem:[#allocation2 + $0xe8] sm:$0xff]
    %v4588 = vld [vmem:[#allocation2 + $0xf0] sm:$0xff]
    %v4589 = vld [vmem:[#allocation2 + $0xf8] sm:$0xff]
    %v4590 = vld [vmem:[#allocation2 + $0x100] sm:$0xff]
    %v4591 = vld [vmem:[#allocation2 + $0x108] sm:$0xff]
    %v4592 = vld [vmem:[#allocation2 + $0x110] sm:$0xff]
    %v4593 = vld [vmem:[#allocation2 + $0x118] sm:$0xff]
    %v4594 = vld [vmem:[#allocation2 + $0x120] sm:$0xff]
    %v4595 = vld [vmem:[#allocation2 + $0x128] sm:$0xff]
    %v4596 = vld [vmem:[#allocation2 + $0x130] sm:$0xff]
    %v4597 = vld [vmem:[#allocation2 + $0x138] sm:$0xff]
    %v4598 = vld [vmem:[#allocation2 + $0x140] sm:$0xff]
    %v4599 = vld [vmem:[#allocation2 + $0x148] sm:$0xff]
    %v4600 = vld [vmem:[#allocation2 + $0x150] sm:$0xff]
    %v4601 = vld [vmem:[#allocation2 + $0x158] sm:$0xff]
    %v4602 = vld [vmem:[#allocation2 + $0x160] sm:$0xff]
    %v4603 = vld [vmem:[#allocation2 + $0x168] sm:$0xff]
    %v4604 = vld [vmem:[#allocation2 + $0x170] sm:$0xff]
    %v4605 = vld [vmem:[#allocation2 + $0x178] sm:$0xff]
    %v4606 = vld [vmem:[#allocation2 + $0x180] sm:$0xff]
    %v4607 = vld [vmem:[#allocation2 + $0x188] sm:$0xff]
    %v4608 = vld [vmem:[#allocation2 + $0x190] sm:$0xff]
    %v4609 = vld [vmem:[#allocation2 + $0x198] sm:$0xff]
    %v4610 = vld [vmem:[#allocation2 + $0x1a0] sm:$0xff]
    %v4611 = vld [vmem:[#allocation2 + $0x1a8] sm:$0xff]
    %v4612 = vld [vmem:[#allocation2 + $0x1b0] sm:$0xff]
    %v4613 = vld [vmem:[#allocation2 + $0x1b8] sm:$0xff]
    %v4614 = vld [vmem:[#allocation2 + $0x1c0] sm:$0xff]
    %v4615 = vld [vmem:[#allocation2 + $0x1c8] sm:$0xff]
    %v4616 = vld [vmem:[#allocation2 + $0x1d0] sm:$0xff]
    %v4617 = vld [vmem:[#allocation2 + $0x1d8] sm:$0xff]
    %v4618 = vld [vmem:[#allocation2 + $0x1e0] sm:$0xff]
    %v4619 = vld [vmem:[#allocation2 + $0x1e8] sm:$0xff]
    %v4620 = vld [vmem:[#allocation2 + $0x1f0] sm:$0xff]
    %v4621 = vld [vmem:[#allocation2 + $0x1f8] sm:$0xff]
    %v4622 = vld [vmem:[#allocation2 + $0x200] sm:$0xff]
    %v4623 = vld [vmem:[#allocation2 + $0x208] sm:$0xff]
    %v4624 = vld [vmem:[#allocation2 + $0x210] sm:$0xff]
    %v4625 = vld [vmem:[#allocation2 + $0x218] sm:$0xff]
    %v4626 = vld [vmem:[#allocation2 + $0x220] sm:$0xff]
    %v4627 = vld [vmem:[#allocation2 + $0x228] sm:$0xff]
    %v4628 = vld [vmem:[#allocation2 + $0x230] sm:$0xff]
    %v4629 = vld [vmem:[#allocation2 + $0x238] sm:$0xff]
    %v4630 = vld [vmem:[#allocation2 + $0x240] sm:$0xff]
    %v4631 = vld [vmem:[#allocation2 + $0x248] sm:$0xff]
    %v4632 = vld [vmem:[#allocation2 + $0x250] sm:$0xff]
    %v4633 = vld [vmem:[#allocation2 + $0x258] sm:$0xff]
    %v4634 = vld [vmem:[#allocation2 + $0x260] sm:$0xff]
    %v4635 = vadd.f32 %v4558, %v4249
    %v4636 = vadd.f32 %v4559, %v4252
    %v4637 = vadd.f32 %v4560, %v4257
    %v4638 = vadd.f32 %v4561, %v4260
    %v4639 = vadd.f32 %v4562, %v4265
    %v4640 = vadd.f32 %v4563, %v4268
    %v4641 = vadd.f32 %v4564, %v4273
    %v4642 = vadd.f32 %v4565, %v4276
    %v4643 = vadd.f32 %v4566, %v4281
    %v4644 = vadd.f32 %v4567, %v4284
    %v4645 = vadd.f32 %v4568, %v4289
    %v4646 = vadd.f32 %v4569, %v4292
    %v4647 = vadd.f32 %v4570, %v4297
    %v4648 = vadd.f32 %v4571, %v4300
    %v4649 = vadd.f32 %v4572, %v4305
    %v4650 = vadd.f32 %v4573, %v4308
    %v4651 = vadd.f32 %v4574, %v4313
    %v4652 = vadd.f32 %v4575, %v4316
    %v4653 = vadd.f32 %v4576, %v4321
    %v4654 = vadd.f32 %v4577, %v4324
    %v4655 = vadd.f32 %v4578, %v4329
    %v4656 = vadd.f32 %v4579, %v4332
    %v4657 = vadd.f32 %v4580, %v4337
    %v4658 = vadd.f32 %v4581, %v4340
    %v4659 = vadd.f32 %v4582, %v4345
    %v4660 = vadd.f32 %v4583, %v4348
    %v4661 = vadd.f32 %v4584, %v4353
    %v4662 = vadd.f32 %v4585, %v4356
    %v4663 = vadd.f32 %v4586, %v4361
    %v4664 = vadd.f32 %v4587, %v4364
    %v4665 = vadd.f32 %v4588, %v4369
    %v4666 = vadd.f32 %v4589, %v4372
    %v4667 = vadd.f32 %v4590, %v4377
    %v4668 = vadd.f32 %v4591, %v4380
    %v4669 = vadd.f32 %v4592, %v4385
    %v4670 = vadd.f32 %v4593, %v4388
    %v4671 = vadd.f32 %v4594, %v4393
    %v4672 = vadd.f32 %v4595, %v4396
    %v4673 = vadd.f32 %v4596, %v4401
    %v4674 = vadd.f32 %v4597, %v4404
    %v4675 = vadd.f32 %v4598, %v4409
    %v4676 = vadd.f32 %v4599, %v4412
    %v4677 = vadd.f32 %v4600, %v4417
    %v4678 = vadd.f32 %v4601, %v4420
    %v4679 = vadd.f32 %v4602, %v4425
    %v4680 = vadd.f32 %v4603, %v4428
    %v4681 = vadd.f32 %v4604, %v4433
    %v4682 = vadd.f32 %v4605, %v4436
    %v4683 = vadd.f32 %v4606, %v4441
    %v4684 = vadd.f32 %v4607, %v4444
    %v4685 = vadd.f32 %v4608, %v4449
    %v4686 = vadd.f32 %v4609, %v4452
    %v4687 = vadd.f32 %v4610, %v4457
    %v4688 = vadd.f32 %v4611, %v4460
    %v4689 = vadd.f32 %v4612, %v4465
    %v4690 = vadd.f32 %v4613, %v4468
    %v4691 = vadd.f32 %v4614, %v4473
    %v4692 = vadd.f32 %v4615, %v4476
    %v4693 = vadd.f32 %v4616, %v4481
    %v4694 = vadd.f32 %v4617, %v4484
    %v4695 = vadd.f32 %v4618, %v4489
    %v4696 = vadd.f32 %v4619, %v4492
    %v4697 = vadd.f32 %v4620, %v4497
    %v4698 = vadd.f32 %v4621, %v4500
    %v4699 = vadd.f32 %v4622, %v4505
    %v4700 = vadd.f32 %v4623, %v4508
    %v4701 = vadd.f32 %v4624, %v4513
    %v4702 = vadd.f32 %v4625, %v4516
    %v4703 = vadd.f32 %v4626, %v4521
    %v4704 = vadd.f32 %v4627, %v4524
    %v4705 = vadd.f32 %v4628, %v4529
    %v4706 = vadd.f32 %v4629, %v4532
    %v4707 = vadd.f32 %v4630, %v4537
    %v4708 = vadd.f32 %v4631, %v4540
    %v4709 = vadd.f32 %v4632, %v4545
    %v4710 = vadd.f32 %v4633, %v4548
    %v4711 = vadd.f32 %v4634, %v4553
    %4712 = vst [vmem:[#allocation2] sm:$0xff] %v4635
    %4713 = vst [vmem:[#allocation2 + $0x8] sm:$0xff] %v4636
    %4714 = vst [vmem:[#allocation2 + $0x10] sm:$0xff] %v4637
    %4715 = vst [vmem:[#allocation2 + $0x18] sm:$0xff] %v4638
    %4716 = vst [vmem:[#allocation2 + $0x20] sm:$0xff] %v4639
    %4717 = vst [vmem:[#allocation2 + $0x28] sm:$0xff] %v4640
    %4718 = vst [vmem:[#allocation2 + $0x30] sm:$0xff] %v4641
    %4719 = vst [vmem:[#allocation2 + $0x38] sm:$0xff] %v4642
    %4720 = vst [vmem:[#allocation2 + $0x40] sm:$0xff] %v4643
    %4721 = vst [vmem:[#allocation2 + $0x48] sm:$0xff] %v4644
    %4722 = vst [vmem:[#allocation2 + $0x50] sm:$0xff] %v4645
    %4723 = vst [vmem:[#allocation2 + $0x58] sm:$0xff] %v4646
    %4724 = vst [vmem:[#allocation2 + $0x60] sm:$0xff] %v4647
    %4725 = vst [vmem:[#allocation2 + $0x68] sm:$0xff] %v4648
    %4726 = vst [vmem:[#allocation2 + $0x70] sm:$0xff] %v4649
    %4727 = vst [vmem:[#allocation2 + $0x78] sm:$0xff] %v4650
    %4728 = vst [vmem:[#allocation2 + $0x80] sm:$0xff] %v4651
    %4729 = vst [vmem:[#allocation2 + $0x88] sm:$0xff] %v4652
    %4730 = vst [vmem:[#allocation2 + $0x90] sm:$0xff] %v4653
    %4731 = vst [vmem:[#allocation2 + $0x98] sm:$0xff] %v4654
    %4732 = vst [vmem:[#allocation2 + $0xa0] sm:$0xff] %v4655
    %4733 = vst [vmem:[#allocation2 + $0xa8] sm:$0xff] %v4656
    %4734 = vst [vmem:[#allocation2 + $0xb0] sm:$0xff] %v4657
    %4735 = vst [vmem:[#allocation2 + $0xb8] sm:$0xff] %v4658
    %4736 = vst [vmem:[#allocation2 + $0xc0] sm:$0xff] %v4659
    %4737 = vst [vmem:[#allocation2 + $0xc8] sm:$0xff] %v4660
    %4738 = vst [vmem:[#allocation2 + $0xd0] sm:$0xff] %v4661
    %4739 = vst [vmem:[#allocation2 + $0xd8] sm:$0xff] %v4662
    %4740 = vst [vmem:[#allocation2 + $0xe0] sm:$0xff] %v4663
    %4741 = vst [vmem:[#allocation2 + $0xe8] sm:$0xff] %v4664
    %4742 = vst [vmem:[#allocation2 + $0xf0] sm:$0xff] %v4665
    %4743 = vst [vmem:[#allocation2 + $0xf8] sm:$0xff] %v4666
    %4744 = vst [vmem:[#allocation2 + $0x100] sm:$0xff] %v4667
    %4745 = vst [vmem:[#allocation2 + $0x108] sm:$0xff] %v4668
    %4746 = vst [vmem:[#allocation2 + $0x110] sm:$0xff] %v4669
    %4747 = vst [vmem:[#allocation2 + $0x118] sm:$0xff] %v4670
    %4748 = vst [vmem:[#allocation2 + $0x120] sm:$0xff] %v4671
    %4749 = vst [vmem:[#allocation2 + $0x128] sm:$0xff] %v4672
    %4750 = vst [vmem:[#allocation2 + $0x130] sm:$0xff] %v4673
    %4751 = vst [vmem:[#allocation2 + $0x138] sm:$0xff] %v4674
    %4752 = vst [vmem:[#allocation2 + $0x140] sm:$0xff] %v4675
    %4753 = vst [vmem:[#allocation2 + $0x148] sm:$0xff] %v4676
    %4754 = vst [vmem:[#allocation2 + $0x150] sm:$0xff] %v4677
    %4755 = vst [vmem:[#allocation2 + $0x158] sm:$0xff] %v4678
    %4756 = vst [vmem:[#allocation2 + $0x160] sm:$0xff] %v4679
    %4757 = vst [vmem:[#allocation2 + $0x168] sm:$0xff] %v4680
    %4758 = vst [vmem:[#allocation2 + $0x170] sm:$0xff] %v4681
    %4759 = vst [vmem:[#allocation2 + $0x178] sm:$0xff] %v4682
    %4760 = vst [vmem:[#allocation2 + $0x180] sm:$0xff] %v4683
    %4761 = vst [vmem:[#allocation2 + $0x188] sm:$0xff] %v4684
    %4762 = vst [vmem:[#allocation2 + $0x190] sm:$0xff] %v4685
    %4763 = vst [vmem:[#allocation2 + $0x198] sm:$0xff] %v4686
    %4764 = vst [vmem:[#allocation2 + $0x1a0] sm:$0xff] %v4687
    %4765 = vst [vmem:[#allocation2 + $0x1a8] sm:$0xff] %v4688
    %4766 = vst [vmem:[#allocation2 + $0x1b0] sm:$0xff] %v4689
    %4767 = vst [vmem:[#allocation2 + $0x1b8] sm:$0xff] %v4690
    %4768 = vst [vmem:[#allocation2 + $0x1c0] sm:$0xff] %v4691
    %4769 = vst [vmem:[#allocation2 + $0x1c8] sm:$0xff] %v4692
    %4770 = vst [vmem:[#allocation2 + $0x1d0] sm:$0xff] %v4693
    %4771 = vst [vmem:[#allocation2 + $0x1d8] sm:$0xff] %v4694
    %4772 = vst [vmem:[#allocation2 + $0x1e0] sm:$0xff] %v4695
    %4773 = vst [vmem:[#allocation2 + $0x1e8] sm:$0xff] %v4696
    %4774 = vst [vmem:[#allocation2 + $0x1f0] sm:$0xff] %v4697
    %4775 = vst [vmem:[#allocation2 + $0x1f8] sm:$0xff] %v4698
    %4776 = vst [vmem:[#allocation2 + $0x200] sm:$0xff] %v4699
    %4777 = vst [vmem:[#allocation2 + $0x208] sm:$0xff] %v4700
    %4778 = vst [vmem:[#allocation2 + $0x210] sm:$0xff] %v4701
    %4779 = vst [vmem:[#allocation2 + $0x218] sm:$0xff] %v4702
    %4780 = vst [vmem:[#allocation2 + $0x220] sm:$0xff] %v4703
    %4781 = vst [vmem:[#allocation2 + $0x228] sm:$0xff] %v4704
    %4782 = vst [vmem:[#allocation2 + $0x230] sm:$0xff] %v4705
    %4783 = vst [vmem:[#allocation2 + $0x238] sm:$0xff] %v4706
    %4784 = vst [vmem:[#allocation2 + $0x240] sm:$0xff] %v4707
    %4785 = vst [vmem:[#allocation2 + $0x248] sm:$0xff] %v4708
    %4786 = vst [vmem:[#allocation2 + $0x250] sm:$0xff] %v4709
    %4787 = vst [vmem:[#allocation2 + $0x258] sm:$0xff] %v4710
    %4788 = vst [vmem:[#allocation2 + $0x260] sm:$0xff] %v4711
    %v4789 = vld [vmem:[%s0 + $0x24] sm:$0xff]
    %v4790 = vld [vmem:[%s0 + $0x2c] sm:$0xff]
    %v4791 = vld [vmem:[%s0 + $0x34] sm:$0xff]
    %v4792 = vld [vmem:[%s0 + $0x3c] sm:$0xff]
    %v4793 = vld [vmem:[%s0 + $0x44] sm:$0xff]
    %v4794 = vld [vmem:[%s0 + $0x4c] sm:$0xff]
    %v4795 = vld [vmem:[%s0 + $0x54] sm:$0xff]
    %v4796 = vld [vmem:[%s0 + $0x5c] sm:$0xff]
    %v4797 = vld [vmem:[%s0 + $0x64] sm:$0xff]
    %v4798 = vld [vmem:[%s0 + $0x6c] sm:$0xff]
    %v4799 = vld [vmem:[%s0 + $0x74] sm:$0xff]
    %v4800 = vld [vmem:[%s0 + $0x7c] sm:$0xff]
    %v4801 = vld [vmem:[%s0 + $0x84] sm:$0xff]
    %v4802 = vld [vmem:[%s0 + $0x8c] sm:$0xff]
    %v4803 = vld [vmem:[%s0 + $0x94] sm:$0xff]
    %v4804 = vld [vmem:[%s0 + $0x9c] sm:$0xff]
    %v4805 = vld [vmem:[%s0 + $0xa4] sm:$0xff]
    %v4806 = vld [vmem:[%s0 + $0xac] sm:$0xff]
    %v4807 = vld [vmem:[%s0 + $0xb4] sm:$0xff]
    %v4808 = vld [vmem:[%s0 + $0xbc] sm:$0xff]
    %v4809 = vld [vmem:[%s0 + $0xc4] sm:$0xff]
    %v4810 = vld [vmem:[%s0 + $0xcc] sm:$0xff]
    %v4811 = vld [vmem:[%s0 + $0xd4] sm:$0xff]
    %v4812 = vld [vmem:[%s0 + $0xdc] sm:$0xff]
    %v4813 = vld [vmem:[%s0 + $0xe4] sm:$0xff]
    %v4814 = vld [vmem:[%s0 + $0xec] sm:$0xff]
    %v4815 = vld [vmem:[%s0 + $0xf4] sm:$0xff]
    %v4816 = vld [vmem:[%s0 + $0xfc] sm:$0xff]
    %v4817 = vld [vmem:[%s0 + $0x104] sm:$0xff]
    %v4818 = vld [vmem:[%s0 + $0x10c] sm:$0xff]
    %v4819 = vld [vmem:[%s0 + $0x114] sm:$0xff]
    %v4820 = vld [vmem:[%s0 + $0x11c] sm:$0xff]
    %v4821 = vld [vmem:[%s0 + $0x124] sm:$0xff]
    %v4822 = vld [vmem:[%s0 + $0x12c] sm:$0xff]
    %v4823 = vld [vmem:[%s0 + $0x134] sm:$0xff]
    %v4824 = vld [vmem:[%s0 + $0x13c] sm:$0xff]
    %v4825 = vld [vmem:[%s0 + $0x144] sm:$0xff]
    %v4826 = vld [vmem:[%s0 + $0x14c] sm:$0xff]
    %v4827 = vld [vmem:[%s0 + $0x154] sm:$0xff]
    %v4828 = vld [vmem:[%s0 + $0x15c] sm:$0xff]
    %v4829 = vld [vmem:[%s0 + $0x164] sm:$0xff]
    %v4830 = vld [vmem:[%s0 + $0x16c] sm:$0xff]
    %v4831 = vld [vmem:[%s0 + $0x174] sm:$0xff]
    %v4832 = vld [vmem:[%s0 + $0x17c] sm:$0xff]
    %v4833 = vld [vmem:[%s0 + $0x184] sm:$0xff]
    %v4834 = vld [vmem:[%s0 + $0x18c] sm:$0xff]
    %v4835 = vld [vmem:[%s0 + $0x194] sm:$0xff]
    %v4836 = vld [vmem:[%s0 + $0x19c] sm:$0xff]
    %v4837 = vld [vmem:[%s0 + $0x1a4] sm:$0xff]
    %v4838 = vld [vmem:[%s0 + $0x1ac] sm:$0xff]
    %v4839 = vld [vmem:[%s0 + $0x1b4] sm:$0xff]
    %v4840 = vld [vmem:[%s0 + $0x1bc] sm:$0xff]
    %v4841 = vld [vmem:[%s0 + $0x1c4] sm:$0xff]
    %v4842 = vld [vmem:[%s0 + $0x1cc] sm:$0xff]
    %v4843 = vld [vmem:[%s0 + $0x1d4] sm:$0xff]
    %v4844 = vld [vmem:[%s0 + $0x1dc] sm:$0xff]
    %v4845 = vld [vmem:[%s0 + $0x1e4] sm:$0xff]
    %v4846 = vld [vmem:[%s0 + $0x1ec] sm:$0xff]
    %v4847 = vld [vmem:[%s0 + $0x1f4] sm:$0xff]
    %v4848 = vld [vmem:[%s0 + $0x1fc] sm:$0xff]
    %v4849 = vld [vmem:[%s0 + $0x204] sm:$0xff]
    %v4850 = vld [vmem:[%s0 + $0x20c] sm:$0xff]
    %v4851 = vld [vmem:[%s0 + $0x214] sm:$0xff]
    %v4852 = vld [vmem:[%s0 + $0x21c] sm:$0xff]
    %v4853 = vld [vmem:[%s0 + $0x224] sm:$0xff]
    %v4854 = vld [vmem:[%s0 + $0x22c] sm:$0xff]
    %v4855 = vld [vmem:[%s0 + $0x234] sm:$0xff]
    %v4856 = vld [vmem:[%s0 + $0x23c] sm:$0xff]
    %v4857 = vld [vmem:[%s0 + $0x244] sm:$0xff]
    %v4858 = vld [vmem:[%s0 + $0x24c] sm:$0xff]
    %v4859 = vld [vmem:[%s0 + $0x254] sm:$0xff]
    %v4860 = vld [vmem:[%s0 + $0x25c] sm:$0xff]
    %v4861 = vld [vmem:[%s0 + $0x264] sm:$0xff]
    %v4862 = vld [vmem:[%s0 + $0x26c] sm:$0xff]
    %v4863 = vld [vmem:[%s0 + $0x274] sm:$0xff]
    %v4864 = vld [vmem:[%s0 + $0x27c] sm:$0xff]
    %v4865 = vld [vmem:[%s0 + $0x284] sm:$0xff]
    %v4866 = vpack.c.bf16 %v4790, %v4789
    %v4867 = vpack.c.bf16 %v4792, %v4791
    %v4868 = vpack.c.bf16 %v4794, %v4793
    %v4869 = vpack.c.bf16 %v4796, %v4795
    %v4870 = vpack.c.bf16 %v4798, %v4797
    %v4871 = vpack.c.bf16 %v4800, %v4799
    %v4872 = vpack.c.bf16 %v4802, %v4801
    %v4873 = vpack.c.bf16 %v4804, %v4803
    %v4874 = vpack.c.bf16 %v4806, %v4805
    %v4875 = vpack.c.bf16 %v4808, %v4807
    %v4876 = vpack.c.bf16 %v4810, %v4809
    %v4877 = vpack.c.bf16 %v4812, %v4811
    %v4878 = vpack.c.bf16 %v4814, %v4813
    %v4879 = vpack.c.bf16 %v4816, %v4815
    %v4880 = vpack.c.bf16 %v4818, %v4817
    %v4881 = vpack.c.bf16 %v4820, %v4819
    %v4882 = vpack.c.bf16 %v4822, %v4821
    %v4883 = vpack.c.bf16 %v4824, %v4823
    %v4884 = vpack.c.bf16 %v4826, %v4825
    %v4885 = vpack.c.bf16 %v4828, %v4827
    %v4886 = vpack.c.bf16 %v4830, %v4829
    %v4887 = vpack.c.bf16 %v4832, %v4831
    %v4888 = vpack.c.bf16 %v4834, %v4833
    %v4889 = vpack.c.bf16 %v4836, %v4835
    %v4890 = vpack.c.bf16 %v4838, %v4837
    %v4891 = vpack.c.bf16 %v4840, %v4839
    %v4892 = vpack.c.bf16 %v4842, %v4841
    %v4893 = vpack.c.bf16 %v4844, %v4843
    %v4894 = vpack.c.bf16 %v4846, %v4845
    %v4895 = vpack.c.bf16 %v4848, %v4847
    %v4896 = vpack.c.bf16 %v4850, %v4849
    %v4897 = vpack.c.bf16 %v4852, %v4851
    %v4898 = vpack.c.bf16 %v4854, %v4853
    %v4899 = vpack.c.bf16 %v4856, %v4855
    %v4900 = vpack.c.bf16 %v4858, %v4857
    %v4901 = vpack.c.bf16 %v4860, %v4859
    %v4902 = vpack.c.bf16 %v4862, %v4861
    %v4903 = vpack.c.bf16 %v4864, %v4863
    %v4904 = vpack.c.bf16 %v4865, %v4865
    %s4905 = scalar_lea.vmem %s1, 48
    %v4906 = vld [vmem:[%s4905] sm:$0xf]
    %v4907 = vld [vmem:[%s4905 + $0x4] sm:$0x1]
    %v4910 = vunpack.c.l.b16 %v4906
    %v4911 = vunpack.c.l.b16 %v4907
    %v4912 = vpack.c.b16 %v4911, %v4910
    %v4914 = vsel %vm148, %v4866, 0
    %v4917 = vsel %vm148, %v4867, 0
    %v4920 = vsel %vm148, %v4868, 0
    %v4923 = vsel %vm148, %v4869, 0
    %v4926 = vsel %vm148, %v4870, 0
    %v4929 = vsel %vm148, %v4871, 0
    %v4932 = vsel %vm148, %v4872, 0
    %v4935 = vsel %vm148, %v4873, 0
    %v4938 = vsel %vm148, %v4874, 0
    %v4941 = vsel %vm148, %v4875, 0
    %v4944 = vsel %vm148, %v4876, 0
    %v4947 = vsel %vm148, %v4877, 0
    %v4950 = vsel %vm148, %v4878, 0
    %v4953 = vsel %vm148, %v4879, 0
    %v4956 = vsel %vm148, %v4880, 0
    %v4959 = vsel %vm148, %v4881, 0
    %v4962 = vsel %vm148, %v4882, 0
    %v4965 = vsel %vm148, %v4883, 0
    %v4968 = vsel %vm148, %v4884, 0
    %v4971 = vsel %vm148, %v4885, 0
    %v4974 = vsel %vm148, %v4886, 0
    %v4977 = vsel %vm148, %v4887, 0
    %v4980 = vsel %vm148, %v4888, 0
    %v4983 = vsel %vm148, %v4889, 0
    %v4986 = vsel %vm148, %v4890, 0
    %v4989 = vsel %vm148, %v4891, 0
    %v4992 = vsel %vm148, %v4892, 0
    %v4995 = vsel %vm148, %v4893, 0
    %v4998 = vsel %vm148, %v4894, 0
    %v5001 = vsel %vm148, %v4895, 0
    %v5004 = vsel %vm148, %v4896, 0
    %v5007 = vsel %vm148, %v4897, 0
    %v5010 = vsel %vm148, %v4898, 0
    %v5013 = vsel %vm148, %v4899, 0
    %v5016 = vsel %vm148, %v4900, 0
    %v5019 = vsel %vm148, %v4901, 0
    %v5022 = vsel %vm148, %v4902, 0
    %v5025 = vsel %vm148, %v4903, 0
    %v5028 = vsel %vm148, %v4904, 0
    %v5031 = vand.u32 %v4912, %v269
    %5033 = vmatprep.subr.bf16.mxu0 0
    %5034 = vmatpush1.bf16.msra.mxu0 %v5031
    %5035 = vmatprep.subr.bf16.mxu0 0
    %5036 = vmatpush1.bf16.msra.mxu0 0
    %5037 = vmatprep.subr.bf16.mxu0 0
    %5038 = vmatpush1.bf16.msra.mxu0 0
    %5039 = vmatprep.subr.bf16.mxu0 0
    %5040 = vmatpush1.bf16.msra.mxu0 0
    %5041 = vmatprep.subr.bf16.mxu0 0
    %5042 = vmatpush1.bf16.msra.mxu0 0
    %5043 = vmatprep.subr.bf16.mxu0 0
    %5044 = vmatpush1.bf16.msra.mxu0 0
    %5045 = vmatprep.subr.bf16.mxu0 0
    %5046 = vmatpush1.bf16.msra.mxu0 0
    %5047 = vmatprep.subr.bf16.mxu0 0
    %5048 = vmatpush1.bf16.msra.mxu0 0
    %5049 = vmatprep.subr.bf16.mxu0 0
    %5050 = vmatpush1.bf16.msra.mxu0 0
    %5051 = vmatprep.subr.bf16.mxu0 0
    %5052 = vmatpush1.bf16.msra.mxu0 0
    %5053 = vmatprep.subr.bf16.mxu0 0
    %5054 = vmatpush1.bf16.msra.mxu0 0
    %5055 = vmatprep.subr.bf16.mxu0 0
    %5056 = vmatpush1.bf16.msra.mxu0 0
    %5057 = vmatprep.subr.bf16.mxu0 0
    %5058 = vmatpush1.bf16.msra.mxu0 0
    %5059 = vmatprep.subr.bf16.mxu0 0
    %5060 = vmatpush1.bf16.msra.mxu0 0
    %5061 = vmatprep.subr.bf16.mxu0 0
    %5062 = vmatpush1.bf16.msra.mxu0 0
    %5063 = vmatprep.subr.bf16.mxu0 0
    %5064 = vmatpush1.bf16.msra.mxu0 0
    %5065 = vmatprep.mubr.bf16.mxu0 0
    %5066 = vmatmul.mubr.bf16.gmra.mrb[0].mxu0 %v4914
    %v5067 = vpop.f32.mrb[0].mxu0
    %v5068 = vadd.f32 0.0, %v5067
    %v5069 = vpop.f32.mrb[0].mxu0
    %v5070 = vpop.f32.mrb[0].mxu0
    %v5071 = vadd.f32 0.0, %v5070
    %v5072 = vpop.f32.mrb[0].mxu0
    %5073 = vmatprep.mubr.bf16.mxu0 0
    %5074 = vmatmul.mubr.bf16.gmra.mrb[0].mxu0 %v4917
    %v5075 = vpop.f32.mrb[0].mxu0
    %v5076 = vadd.f32 0.0, %v5075
    %v5077 = vpop.f32.mrb[0].mxu0
    %v5078 = vpop.f32.mrb[0].mxu0
    %v5079 = vadd.f32 0.0, %v5078
    %v5080 = vpop.f32.mrb[0].mxu0
    %5081 = vmatprep.mubr.bf16.mxu0 0
    %5082 = vmatmul.mubr.bf16.gmra.mrb[0].mxu0 %v4920
    %v5083 = vpop.f32.mrb[0].mxu0
    %v5084 = vadd.f32 0.0, %v5083
    %v5085 = vpop.f32.mrb[0].mxu0
    %v5086 = vpop.f32.mrb[0].mxu0
    %v5087 = vadd.f32 0.0, %v5086
    %v5088 = vpop.f32.mrb[0].mxu0
    %5089 = vmatprep.mubr.bf16.mxu0 0
    %5090 = vmatmul.mubr.bf16.gmra.mrb[0].mxu0 %v4923
    %v5091 = vpop.f32.mrb[0].mxu0
    %v5092 = vadd.f32 0.0, %v5091
    %v5093 = vpop.f32.mrb[0].mxu0
    %v5094 = vpop.f32.mrb[0].mxu0
    %v5095 = vadd.f32 0.0, %v5094
    %v5096 = vpop.f32.mrb[0].mxu0
    %5097 = vmatprep.mubr.bf16.mxu0 0
    %5098 = vmatmul.mubr.bf16.gmra.mrb[0].mxu0 %v4926
    %v5099 = vpop.f32.mrb[0].mxu0
    %v5100 = vadd.f32 0.0, %v5099
    %v5101 = vpop.f32.mrb[0].mxu0
    %v5102 = vpop.f32.mrb[0].mxu0
    %v5103 = vadd.f32 0.0, %v5102
    %v5104 = vpop.f32.mrb[0].mxu0
    %5105 = vmatprep.mubr.bf16.mxu0 0
    %5106 = vmatmul.mubr.bf16.gmra.mrb[0].mxu0 %v4929
    %v5107 = vpop.f32.mrb[0].mxu0
    %v5108 = vadd.f32 0.0, %v5107
    %v5109 = vpop.f32.mrb[0].mxu0
    %v5110 = vpop.f32.mrb[0].mxu0
    %v5111 = vadd.f32 0.0, %v5110
    %v5112 = vpop.f32.mrb[0].mxu0
    %5113 = vmatprep.mubr.bf16.mxu0 0
    %5114 = vmatmul.mubr.bf16.gmra.mrb[0].mxu0 %v4932
    %v5115 = vpop.f32.mrb[0].mxu0
    %v5116 = vadd.f32 0.0, %v5115
    %v5117 = vpop.f32.mrb[0].mxu0
    %v5118 = vpop.f32.mrb[0].mxu0
    %v5119 = vadd.f32 0.0, %v5118
    %v5120 = vpop.f32.mrb[0].mxu0
    %5121 = vmatprep.mubr.bf16.mxu0 0
    %5122 = vmatmul.mubr.bf16.gmra.mrb[0].mxu0 %v4935
    %v5123 = vpop.f32.mrb[0].mxu0
    %v5124 = vadd.f32 0.0, %v5123
    %v5125 = vpop.f32.mrb[0].mxu0
    %v5126 = vpop.f32.mrb[0].mxu0
    %v5127 = vadd.f32 0.0, %v5126
    %v5128 = vpop.f32.mrb[0].mxu0
    %5129 = vmatprep.mubr.bf16.mxu0 0
    %5130 = vmatmul.mubr.bf16.gmra.mrb[0].mxu0 %v4938
    %v5131 = vpop.f32.mrb[0].mxu0
    %v5132 = vadd.f32 0.0, %v5131
    %v5133 = vpop.f32.mrb[0].mxu0
    %v5134 = vpop.f32.mrb[0].mxu0
    %v5135 = vadd.f32 0.0, %v5134
    %v5136 = vpop.f32.mrb[0].mxu0
    %5137 = vmatprep.mubr.bf16.mxu0 0
    %5138 = vmatmul.mubr.bf16.gmra.mrb[0].mxu0 %v4941
    %v5139 = vpop.f32.mrb[0].mxu0
    %v5140 = vadd.f32 0.0, %v5139
    %v5141 = vpop.f32.mrb[0].mxu0
    %v5142 = vpop.f32.mrb[0].mxu0
    %v5143 = vadd.f32 0.0, %v5142
    %v5144 = vpop.f32.mrb[0].mxu0
    %5145 = vmatprep.mubr.bf16.mxu0 0
    %5146 = vmatmul.mubr.bf16.gmra.mrb[0].mxu0 %v4944
    %v5147 = vpop.f32.mrb[0].mxu0
    %v5148 = vadd.f32 0.0, %v5147
    %v5149 = vpop.f32.mrb[0].mxu0
    %v5150 = vpop.f32.mrb[0].mxu0
    %v5151 = vadd.f32 0.0, %v5150
    %v5152 = vpop.f32.mrb[0].mxu0
    %5153 = vmatprep.mubr.bf16.mxu0 0
    %5154 = vmatmul.mubr.bf16.gmra.mrb[0].mxu0 %v4947
    %v5155 = vpop.f32.mrb[0].mxu0
    %v5156 = vadd.f32 0.0, %v5155
    %v5157 = vpop.f32.mrb[0].mxu0
    %v5158 = vpop.f32.mrb[0].mxu0
    %v5159 = vadd.f32 0.0, %v5158
    %v5160 = vpop.f32.mrb[0].mxu0
    %5161 = vmatprep.mubr.bf16.mxu0 0
    %5162 = vmatmul.mubr.bf16.gmra.mrb[0].mxu0 %v4950
    %v5163 = vpop.f32.mrb[0].mxu0
    %v5164 = vadd.f32 0.0, %v5163
    %v5165 = vpop.f32.mrb[0].mxu0
    %v5166 = vpop.f32.mrb[0].mxu0
    %v5167 = vadd.f32 0.0, %v5166
    %v5168 = vpop.f32.mrb[0].mxu0
    %5169 = vmatprep.mubr.bf16.mxu0 0
    %5170 = vmatmul.mubr.bf16.gmra.mrb[0].mxu0 %v4953
    %v5171 = vpop.f32.mrb[0].mxu0
    %v5172 = vadd.f32 0.0, %v5171
    %v5173 = vpop.f32.mrb[0].mxu0
    %v5174 = vpop.f32.mrb[0].mxu0
    %v5175 = vadd.f32 0.0, %v5174
    %v5176 = vpop.f32.mrb[0].mxu0
    %5177 = vmatprep.mubr.bf16.mxu0 0
    %5178 = vmatmul.mubr.bf16.gmra.mrb[0].mxu0 %v4956
    %v5179 = vpop.f32.mrb[0].mxu0
    %v5180 = vadd.f32 0.0, %v5179
    %v5181 = vpop.f32.mrb[0].mxu0
    %v5182 = vpop.f32.mrb[0].mxu0
    %v5183 = vadd.f32 0.0, %v5182
    %v5184 = vpop.f32.mrb[0].mxu0
    %5185 = vmatprep.mubr.bf16.mxu0 0
    %5186 = vmatmul.mubr.bf16.gmra.mrb[0].mxu0 %v4959
    %v5187 = vpop.f32.mrb[0].mxu0
    %v5188 = vadd.f32 0.0, %v5187
    %v5189 = vpop.f32.mrb[0].mxu0
    %v5190 = vpop.f32.mrb[0].mxu0
    %v5191 = vadd.f32 0.0, %v5190
    %v5192 = vpop.f32.mrb[0].mxu0
    %5193 = vmatprep.mubr.bf16.mxu0 0
    %5194 = vmatmul.mubr.bf16.gmra.mrb[0].mxu0 %v4962
    %v5195 = vpop.f32.mrb[0].mxu0
    %v5196 = vadd.f32 0.0, %v5195
    %v5197 = vpop.f32.mrb[0].mxu0
    %v5198 = vpop.f32.mrb[0].mxu0
    %v5199 = vadd.f32 0.0, %v5198
    %v5200 = vpop.f32.mrb[0].mxu0
    %5201 = vmatprep.mubr.bf16.mxu0 0
    %5202 = vmatmul.mubr.bf16.gmra.mrb[0].mxu0 %v4965
    %v5203 = vpop.f32.mrb[0].mxu0
    %v5204 = vadd.f32 0.0, %v5203
    %v5205 = vpop.f32.mrb[0].mxu0
    %v5206 = vpop.f32.mrb[0].mxu0
    %v5207 = vadd.f32 0.0, %v5206
    %v5208 = vpop.f32.mrb[0].mxu0
    %5209 = vmatprep.mubr.bf16.mxu0 0
    %5210 = vmatmul.mubr.bf16.gmra.mrb[0].mxu0 %v4968
    %v5211 = vpop.f32.mrb[0].mxu0
    %v5212 = vadd.f32 0.0, %v5211
    %v5213 = vpop.f32.mrb[0].mxu0
    %v5214 = vpop.f32.mrb[0].mxu0
    %v5215 = vadd.f32 0.0, %v5214
    %v5216 = vpop.f32.mrb[0].mxu0
    %5217 = vmatprep.mubr.bf16.mxu0 0
    %5218 = vmatmul.mubr.bf16.gmra.mrb[0].mxu0 %v4971
    %v5219 = vpop.f32.mrb[0].mxu0
    %v5220 = vadd.f32 0.0, %v5219
    %v5221 = vpop.f32.mrb[0].mxu0
    %v5222 = vpop.f32.mrb[0].mxu0
    %v5223 = vadd.f32 0.0, %v5222
    %v5224 = vpop.f32.mrb[0].mxu0
    %5225 = vmatprep.mubr.bf16.mxu0 0
    %5226 = vmatmul.mubr.bf16.gmra.mrb[0].mxu0 %v4974
    %v5227 = vpop.f32.mrb[0].mxu0
    %v5228 = vadd.f32 0.0, %v5227
    %v5229 = vpop.f32.mrb[0].mxu0
    %v5230 = vpop.f32.mrb[0].mxu0
    %v5231 = vadd.f32 0.0, %v5230
    %v5232 = vpop.f32.mrb[0].mxu0
    %5233 = vmatprep.mubr.bf16.mxu0 0
    %5234 = vmatmul.mubr.bf16.gmra.mrb[0].mxu0 %v4977
    %v5235 = vpop.f32.mrb[0].mxu0
    %v5236 = vadd.f32 0.0, %v5235
    %v5237 = vpop.f32.mrb[0].mxu0
    %v5238 = vpop.f32.mrb[0].mxu0
    %v5239 = vadd.f32 0.0, %v5238
    %v5240 = vpop.f32.mrb[0].mxu0
    %5241 = vmatprep.mubr.bf16.mxu0 0
    %5242 = vmatmul.mubr.bf16.gmra.mrb[0].mxu0 %v4980
    %v5243 = vpop.f32.mrb[0].mxu0
    %v5244 = vadd.f32 0.0, %v5243
    %v5245 = vpop.f32.mrb[0].mxu0
    %v5246 = vpop.f32.mrb[0].mxu0
    %v5247 = vadd.f32 0.0, %v5246
    %v5248 = vpop.f32.mrb[0].mxu0
    %5249 = vmatprep.mubr.bf16.mxu0 0
    %5250 = vmatmul.mubr.bf16.gmra.mrb[0].mxu0 %v4983
    %v5251 = vpop.f32.mrb[0].mxu0
    %v5252 = vadd.f32 0.0, %v5251
    %v5253 = vpop.f32.mrb[0].mxu0
    %v5254 = vpop.f32.mrb[0].mxu0
    %v5255 = vadd.f32 0.0, %v5254
    %v5256 = vpop.f32.mrb[0].mxu0
    %5257 = vmatprep.mubr.bf16.mxu0 0
    %5258 = vmatmul.mubr.bf16.gmra.mrb[0].mxu0 %v4986
    %v5259 = vpop.f32.mrb[0].mxu0
    %v5260 = vadd.f32 0.0, %v5259
    %v5261 = vpop.f32.mrb[0].mxu0
    %v5262 = vpop.f32.mrb[0].mxu0
    %v5263 = vadd.f32 0.0, %v5262
    %v5264 = vpop.f32.mrb[0].mxu0
    %5265 = vmatprep.mubr.bf16.mxu0 0
    %5266 = vmatmul.mubr.bf16.gmra.mrb[0].mxu0 %v4989
    %v5267 = vpop.f32.mrb[0].mxu0
    %v5268 = vadd.f32 0.0, %v5267
    %v5269 = vpop.f32.mrb[0].mxu0
    %v5270 = vpop.f32.mrb[0].mxu0
    %v5271 = vadd.f32 0.0, %v5270
    %v5272 = vpop.f32.mrb[0].mxu0
    %5273 = vmatprep.mubr.bf16.mxu0 0
    %5274 = vmatmul.mubr.bf16.gmra.mrb[0].mxu0 %v4992
    %v5275 = vpop.f32.mrb[0].mxu0
    %v5276 = vadd.f32 0.0, %v5275
    %v5277 = vpop.f32.mrb[0].mxu0
    %v5278 = vpop.f32.mrb[0].mxu0
    %v5279 = vadd.f32 0.0, %v5278
    %v5280 = vpop.f32.mrb[0].mxu0
    %5281 = vmatprep.mubr.bf16.mxu0 0
    %5282 = vmatmul.mubr.bf16.gmra.mrb[0].mxu0 %v4995
    %v5283 = vpop.f32.mrb[0].mxu0
    %v5284 = vadd.f32 0.0, %v5283
    %v5285 = vpop.f32.mrb[0].mxu0
    %v5286 = vpop.f32.mrb[0].mxu0
    %v5287 = vadd.f32 0.0, %v5286
    %v5288 = vpop.f32.mrb[0].mxu0
    %5289 = vmatprep.mubr.bf16.mxu0 0
    %5290 = vmatmul.mubr.bf16.gmra.mrb[0].mxu0 %v4998
    %v5291 = vpop.f32.mrb[0].mxu0
    %v5292 = vadd.f32 0.0, %v5291
    %v5293 = vpop.f32.mrb[0].mxu0
    %v5294 = vpop.f32.mrb[0].mxu0
    %v5295 = vadd.f32 0.0, %v5294
    %v5296 = vpop.f32.mrb[0].mxu0
    %5297 = vmatprep.mubr.bf16.mxu0 0
    %5298 = vmatmul.mubr.bf16.gmra.mrb[0].mxu0 %v5001
    %v5299 = vpop.f32.mrb[0].mxu0
    %v5300 = vadd.f32 0.0, %v5299
    %v5301 = vpop.f32.mrb[0].mxu0
    %v5302 = vpop.f32.mrb[0].mxu0
    %v5303 = vadd.f32 0.0, %v5302
    %v5304 = vpop.f32.mrb[0].mxu0
    %5305 = vmatprep.mubr.bf16.mxu0 0
    %5306 = vmatmul.mubr.bf16.gmra.mrb[0].mxu0 %v5004
    %v5307 = vpop.f32.mrb[0].mxu0
    %v5308 = vadd.f32 0.0, %v5307
    %v5309 = vpop.f32.mrb[0].mxu0
    %v5310 = vpop.f32.mrb[0].mxu0
    %v5311 = vadd.f32 0.0, %v5310
    %v5312 = vpop.f32.mrb[0].mxu0
    %5313 = vmatprep.mubr.bf16.mxu0 0
    %5314 = vmatmul.mubr.bf16.gmra.mrb[0].mxu0 %v5007
    %v5315 = vpop.f32.mrb[0].mxu0
    %v5316 = vadd.f32 0.0, %v5315
    %v5317 = vpop.f32.mrb[0].mxu0
    %v5318 = vpop.f32.mrb[0].mxu0
    %v5319 = vadd.f32 0.0, %v5318
    %v5320 = vpop.f32.mrb[0].mxu0
    %5321 = vmatprep.mubr.bf16.mxu0 0
    %5322 = vmatmul.mubr.bf16.gmra.mrb[0].mxu0 %v5010
    %v5323 = vpop.f32.mrb[0].mxu0
    %v5324 = vadd.f32 0.0, %v5323
    %v5325 = vpop.f32.mrb[0].mxu0
    %v5326 = vpop.f32.mrb[0].mxu0
    %v5327 = vadd.f32 0.0, %v5326
    %v5328 = vpop.f32.mrb[0].mxu0
    %5329 = vmatprep.mubr.bf16.mxu0 0
    %5330 = vmatmul.mubr.bf16.gmra.mrb[0].mxu0 %v5013
    %v5331 = vpop.f32.mrb[0].mxu0
    %v5332 = vadd.f32 0.0, %v5331
    %v5333 = vpop.f32.mrb[0].mxu0
    %v5334 = vpop.f32.mrb[0].mxu0
    %v5335 = vadd.f32 0.0, %v5334
    %v5336 = vpop.f32.mrb[0].mxu0
    %5337 = vmatprep.mubr.bf16.mxu0 0
    %5338 = vmatmul.mubr.bf16.gmra.mrb[0].mxu0 %v5016
    %v5339 = vpop.f32.mrb[0].mxu0
    %v5340 = vadd.f32 0.0, %v5339
    %v5341 = vpop.f32.mrb[0].mxu0
    %v5342 = vpop.f32.mrb[0].mxu0
    %v5343 = vadd.f32 0.0, %v5342
    %v5344 = vpop.f32.mrb[0].mxu0
    %5345 = vmatprep.mubr.bf16.mxu0 0
    %5346 = vmatmul.mubr.bf16.gmra.mrb[0].mxu0 %v5019
    %v5347 = vpop.f32.mrb[0].mxu0
    %v5348 = vadd.f32 0.0, %v5347
    %v5349 = vpop.f32.mrb[0].mxu0
    %v5350 = vpop.f32.mrb[0].mxu0
    %v5351 = vadd.f32 0.0, %v5350
    %v5352 = vpop.f32.mrb[0].mxu0
    %5353 = vmatprep.mubr.bf16.mxu0 0
    %5354 = vmatmul.mubr.bf16.gmra.mrb[0].mxu0 %v5022
    %v5355 = vpop.f32.mrb[0].mxu0
    %v5356 = vadd.f32 0.0, %v5355
    %v5357 = vpop.f32.mrb[0].mxu0
    %v5358 = vpop.f32.mrb[0].mxu0
    %v5359 = vadd.f32 0.0, %v5358
    %v5360 = vpop.f32.mrb[0].mxu0
    %5361 = vmatprep.mubr.bf16.mxu0 0
    %5362 = vmatmul.mubr.bf16.gmra.mrb[0].mxu0 %v5025
    %v5363 = vpop.f32.mrb[0].mxu0
    %v5364 = vadd.f32 0.0, %v5363
    %v5365 = vpop.f32.mrb[0].mxu0
    %v5366 = vpop.f32.mrb[0].mxu0
    %v5367 = vadd.f32 0.0, %v5366
    %v5368 = vpop.f32.mrb[0].mxu0
    %5369 = vmatprep.mubr.bf16.mxu0 0
    %5370 = vmatmul.mubr.bf16.gmra.mrb[0].mxu0 %v5028
    %v5371 = vpop.f32.mrb[0].mxu0
    %v5372 = vadd.f32 0.0, %v5371
    %v5373 = vpop.f32.mrb[0].mxu0
    %v5374 = vpop.f32.mrb[0].mxu0
    %v5375 = vpop.f32.mrb[0].mxu0
    %5376 = vdwg.mxu0
    %v5377 = vld [vmem:[#allocation2] sm:$0xff]
    %v5378 = vld [vmem:[#allocation2 + $0x8] sm:$0xff]
    %v5379 = vld [vmem:[#allocation2 + $0x10] sm:$0xff]
    %v5380 = vld [vmem:[#allocation2 + $0x18] sm:$0xff]
    %v5381 = vld [vmem:[#allocation2 + $0x20] sm:$0xff]
    %v5382 = vld [vmem:[#allocation2 + $0x28] sm:$0xff]
    %v5383 = vld [vmem:[#allocation2 + $0x30] sm:$0xff]
    %v5384 = vld [vmem:[#allocation2 + $0x38] sm:$0xff]
    %v5385 = vld [vmem:[#allocation2 + $0x40] sm:$0xff]
    %v5386 = vld [vmem:[#allocation2 + $0x48] sm:$0xff]
    %v5387 = vld [vmem:[#allocation2 + $0x50] sm:$0xff]
    %v5388 = vld [vmem:[#allocation2 + $0x58] sm:$0xff]
    %v5389 = vld [vmem:[#allocation2 + $0x60] sm:$0xff]
    %v5390 = vld [vmem:[#allocation2 + $0x68] sm:$0xff]
    %v5391 = vld [vmem:[#allocation2 + $0x70] sm:$0xff]
    %v5392 = vld [vmem:[#allocation2 + $0x78] sm:$0xff]
    %v5393 = vld [vmem:[#allocation2 + $0x80] sm:$0xff]
    %v5394 = vld [vmem:[#allocation2 + $0x88] sm:$0xff]
    %v5395 = vld [vmem:[#allocation2 + $0x90] sm:$0xff]
    %v5396 = vld [vmem:[#allocation2 + $0x98] sm:$0xff]
    %v5397 = vld [vmem:[#allocation2 + $0xa0] sm:$0xff]
    %v5398 = vld [vmem:[#allocation2 + $0xa8] sm:$0xff]
    %v5399 = vld [vmem:[#allocation2 + $0xb0] sm:$0xff]
    %v5400 = vld [vmem:[#allocation2 + $0xb8] sm:$0xff]
    %v5401 = vld [vmem:[#allocation2 + $0xc0] sm:$0xff]
    %v5402 = vld [vmem:[#allocation2 + $0xc8] sm:$0xff]
    %v5403 = vld [vmem:[#allocation2 + $0xd0] sm:$0xff]
    %v5404 = vld [vmem:[#allocation2 + $0xd8] sm:$0xff]
    %v5405 = vld [vmem:[#allocation2 + $0xe0] sm:$0xff]
    %v5406 = vld [vmem:[#allocation2 + $0xe8] sm:$0xff]
    %v5407 = vld [vmem:[#allocation2 + $0xf0] sm:$0xff]
    %v5408 = vld [vmem:[#allocation2 + $0xf8] sm:$0xff]
    %v5409 = vld [vmem:[#allocation2 + $0x100] sm:$0xff]
    %v5410 = vld [vmem:[#allocation2 + $0x108] sm:$0xff]
    %v5411 = vld [vmem:[#allocation2 + $0x110] sm:$0xff]
    %v5412 = vld [vmem:[#allocation2 + $0x118] sm:$0xff]
    %v5413 = vld [vmem:[#allocation2 + $0x120] sm:$0xff]
    %v5414 = vld [vmem:[#allocation2 + $0x128] sm:$0xff]
    %v5415 = vld [vmem:[#allocation2 + $0x130] sm:$0xff]
    %v5416 = vld [vmem:[#allocation2 + $0x138] sm:$0xff]
    %v5417 = vld [vmem:[#allocation2 + $0x140] sm:$0xff]
    %v5418 = vld [vmem:[#allocation2 + $0x148] sm:$0xff]
    %v5419 = vld [vmem:[#allocation2 + $0x150] sm:$0xff]
    %v5420 = vld [vmem:[#allocation2 + $0x158] sm:$0xff]
    %v5421 = vld [vmem:[#allocation2 + $0x160] sm:$0xff]
    %v5422 = vld [vmem:[#allocation2 + $0x168] sm:$0xff]
    %v5423 = vld [vmem:[#allocation2 + $0x170] sm:$0xff]
    %v5424 = vld [vmem:[#allocation2 + $0x178] sm:$0xff]
    %v5425 = vld [vmem:[#allocation2 + $0x180] sm:$0xff]
    %v5426 = vld [vmem:[#allocation2 + $0x188] sm:$0xff]
    %v5427 = vld [vmem:[#allocation2 + $0x190] sm:$0xff]
    %v5428 = vld [vmem:[#allocation2 + $0x198] sm:$0xff]
    %v5429 = vld [vmem:[#allocation2 + $0x1a0] sm:$0xff]
    %v5430 = vld [vmem:[#allocation2 + $0x1a8] sm:$0xff]
    %v5431 = vld [vmem:[#allocation2 + $0x1b0] sm:$0xff]
    %v5432 = vld [vmem:[#allocation2 + $0x1b8] sm:$0xff]
    %v5433 = vld [vmem:[#allocation2 + $0x1c0] sm:$0xff]
    %v5434 = vld [vmem:[#allocation2 + $0x1c8] sm:$0xff]
    %v5435 = vld [vmem:[#allocation2 + $0x1d0] sm:$0xff]
    %v5436 = vld [vmem:[#allocation2 + $0x1d8] sm:$0xff]
    %v5437 = vld [vmem:[#allocation2 + $0x1e0] sm:$0xff]
    %v5438 = vld [vmem:[#allocation2 + $0x1e8] sm:$0xff]
    %v5439 = vld [vmem:[#allocation2 + $0x1f0] sm:$0xff]
    %v5440 = vld [vmem:[#allocation2 + $0x1f8] sm:$0xff]
    %v5441 = vld [vmem:[#allocation2 + $0x200] sm:$0xff]
    %v5442 = vld [vmem:[#allocation2 + $0x208] sm:$0xff]
    %v5443 = vld [vmem:[#allocation2 + $0x210] sm:$0xff]
    %v5444 = vld [vmem:[#allocation2 + $0x218] sm:$0xff]
    %v5445 = vld [vmem:[#allocation2 + $0x220] sm:$0xff]
    %v5446 = vld [vmem:[#allocation2 + $0x228] sm:$0xff]
    %v5447 = vld [vmem:[#allocation2 + $0x230] sm:$0xff]
    %v5448 = vld [vmem:[#allocation2 + $0x238] sm:$0xff]
    %v5449 = vld [vmem:[#allocation2 + $0x240] sm:$0xff]
    %v5450 = vld [vmem:[#allocation2 + $0x248] sm:$0xff]
    %v5451 = vld [vmem:[#allocation2 + $0x250] sm:$0xff]
    %v5452 = vld [vmem:[#allocation2 + $0x258] sm:$0xff]
    %v5453 = vld [vmem:[#allocation2 + $0x260] sm:$0xff]
    %v5454 = vadd.f32 %v5377, %v5068
    %v5455 = vadd.f32 %v5378, %v5071
    %v5456 = vadd.f32 %v5379, %v5076
    %v5457 = vadd.f32 %v5380, %v5079
    %v5458 = vadd.f32 %v5381, %v5084
    %v5459 = vadd.f32 %v5382, %v5087
    %v5460 = vadd.f32 %v5383, %v5092
    %v5461 = vadd.f32 %v5384, %v5095
    %v5462 = vadd.f32 %v5385, %v5100
    %v5463 = vadd.f32 %v5386, %v5103
    %v5464 = vadd.f32 %v5387, %v5108
    %v5465 = vadd.f32 %v5388, %v5111
    %v5466 = vadd.f32 %v5389, %v5116
    %v5467 = vadd.f32 %v5390, %v5119
    %v5468 = vadd.f32 %v5391, %v5124
    %v5469 = vadd.f32 %v5392, %v5127
    %v5470 = vadd.f32 %v5393, %v5132
    %v5471 = vadd.f32 %v5394, %v5135
    %v5472 = vadd.f32 %v5395, %v5140
    %v5473 = vadd.f32 %v5396, %v5143
    %v5474 = vadd.f32 %v5397, %v5148
    %v5475 = vadd.f32 %v5398, %v5151
    %v5476 = vadd.f32 %v5399, %v5156
    %v5477 = vadd.f32 %v5400, %v5159
    %v5478 = vadd.f32 %v5401, %v5164
    %v5479 = vadd.f32 %v5402, %v5167
    %v5480 = vadd.f32 %v5403, %v5172
    %v5481 = vadd.f32 %v5404, %v5175
    %v5482 = vadd.f32 %v5405, %v5180
    %v5483 = vadd.f32 %v5406, %v5183
    %v5484 = vadd.f32 %v5407, %v5188
    %v5485 = vadd.f32 %v5408, %v5191
    %v5486 = vadd.f32 %v5409, %v5196
    %v5487 = vadd.f32 %v5410, %v5199
    %v5488 = vadd.f32 %v5411, %v5204
    %v5489 = vadd.f32 %v5412, %v5207
    %v5490 = vadd.f32 %v5413, %v5212
    %v5491 = vadd.f32 %v5414, %v5215
    %v5492 = vadd.f32 %v5415, %v5220
    %v5493 = vadd.f32 %v5416, %v5223
    %v5494 = vadd.f32 %v5417, %v5228
    %v5495 = vadd.f32 %v5418, %v5231
    %v5496 = vadd.f32 %v5419, %v5236
    %v5497 = vadd.f32 %v5420, %v5239
    %v5498 = vadd.f32 %v5421, %v5244
    %v5499 = vadd.f32 %v5422, %v5247
    %v5500 = vadd.f32 %v5423, %v5252
    %v5501 = vadd.f32 %v5424, %v5255
    %v5502 = vadd.f32 %v5425, %v5260
    %v5503 = vadd.f32 %v5426, %v5263
    %v5504 = vadd.f32 %v5427, %v5268
    %v5505 = vadd.f32 %v5428, %v5271
    %v5506 = vadd.f32 %v5429, %v5276
    %v5507 = vadd.f32 %v5430, %v5279
    %v5508 = vadd.f32 %v5431, %v5284
    %v5509 = vadd.f32 %v5432, %v5287
    %v5510 = vadd.f32 %v5433, %v5292
    %v5511 = vadd.f32 %v5434, %v5295
    %v5512 = vadd.f32 %v5435, %v5300
    %v5513 = vadd.f32 %v5436, %v5303
    %v5514 = vadd.f32 %v5437, %v5308
    %v5515 = vadd.f32 %v5438, %v5311
    %v5516 = vadd.f32 %v5439, %v5316
    %v5517 = vadd.f32 %v5440, %v5319
    %v5518 = vadd.f32 %v5441, %v5324
    %v5519 = vadd.f32 %v5442, %v5327
    %v5520 = vadd.f32 %v5443, %v5332
    %v5521 = vadd.f32 %v5444, %v5335
    %v5522 = vadd.f32 %v5445, %v5340
    %v5523 = vadd.f32 %v5446, %v5343
    %v5524 = vadd.f32 %v5447, %v5348
    %v5525 = vadd.f32 %v5448, %v5351
    %v5526 = vadd.f32 %v5449, %v5356
    %v5527 = vadd.f32 %v5450, %v5359
    %v5528 = vadd.f32 %v5451, %v5364
    %v5529 = vadd.f32 %v5452, %v5367
    %v5530 = vadd.f32 %v5453, %v5372
    %5531 = vst [vmem:[#allocation2] sm:$0xff] %v5454
    %5532 = vst [vmem:[#allocation2 + $0x8] sm:$0xff] %v5455
    %5533 = vst [vmem:[#allocation2 + $0x10] sm:$0xff] %v5456
    %5534 = vst [vmem:[#allocation2 + $0x18] sm:$0xff] %v5457
    %5535 = vst [vmem:[#allocation2 + $0x20] sm:$0xff] %v5458
    %5536 = vst [vmem:[#allocation2 + $0x28] sm:$0xff] %v5459
    %5537 = vst [vmem:[#allocation2 + $0x30] sm:$0xff] %v5460
    %5538 = vst [vmem:[#allocation2 + $0x38] sm:$0xff] %v5461
    %5539 = vst [vmem:[#allocation2 + $0x40] sm:$0xff] %v5462
    %5540 = vst [vmem:[#allocation2 + $0x48] sm:$0xff] %v5463
    %5541 = vst [vmem:[#allocation2 + $0x50] sm:$0xff] %v5464
    %5542 = vst [vmem:[#allocation2 + $0x58] sm:$0xff] %v5465
    %5543 = vst [vmem:[#allocation2 + $0x60] sm:$0xff] %v5466
    %5544 = vst [vmem:[#allocation2 + $0x68] sm:$0xff] %v5467
    %5545 = vst [vmem:[#allocation2 + $0x70] sm:$0xff] %v5468
    %5546 = vst [vmem:[#allocation2 + $0x78] sm:$0xff] %v5469
    %5547 = vst [vmem:[#allocation2 + $0x80] sm:$0xff] %v5470
    %5548 = vst [vmem:[#allocation2 + $0x88] sm:$0xff] %v5471
    %5549 = vst [vmem:[#allocation2 + $0x90] sm:$0xff] %v5472
    %5550 = vst [vmem:[#allocation2 + $0x98] sm:$0xff] %v5473
    %5551 = vst [vmem:[#allocation2 + $0xa0] sm:$0xff] %v5474
    %5552 = vst [vmem:[#allocation2 + $0xa8] sm:$0xff] %v5475
    %5553 = vst [vmem:[#allocation2 + $0xb0] sm:$0xff] %v5476
    %5554 = vst [vmem:[#allocation2 + $0xb8] sm:$0xff] %v5477
    %5555 = vst [vmem:[#allocation2 + $0xc0] sm:$0xff] %v5478
    %5556 = vst [vmem:[#allocation2 + $0xc8] sm:$0xff] %v5479
    %5557 = vst [vmem:[#allocation2 + $0xd0] sm:$0xff] %v5480
    %5558 = vst [vmem:[#allocation2 + $0xd8] sm:$0xff] %v5481
    %5559 = vst [vmem:[#allocation2 + $0xe0] sm:$0xff] %v5482
    %5560 = vst [vmem:[#allocation2 + $0xe8] sm:$0xff] %v5483
    %5561 = vst [vmem:[#allocation2 + $0xf0] sm:$0xff] %v5484
    %5562 = vst [vmem:[#allocation2 + $0xf8] sm:$0xff] %v5485
    %5563 = vst [vmem:[#allocation2 + $0x100] sm:$0xff] %v5486
    %5564 = vst [vmem:[#allocation2 + $0x108] sm:$0xff] %v5487
    %5565 = vst [vmem:[#allocation2 + $0x110] sm:$0xff] %v5488
    %5566 = vst [vmem:[#allocation2 + $0x118] sm:$0xff] %v5489
    %5567 = vst [vmem:[#allocation2 + $0x120] sm:$0xff] %v5490
    %5568 = vst [vmem:[#allocation2 + $0x128] sm:$0xff] %v5491
    %5569 = vst [vmem:[#allocation2 + $0x130] sm:$0xff] %v5492
    %5570 = vst [vmem:[#allocation2 + $0x138] sm:$0xff] %v5493
    %5571 = vst [vmem:[#allocation2 + $0x140] sm:$0xff] %v5494
    %5572 = vst [vmem:[#allocation2 + $0x148] sm:$0xff] %v5495
    %5573 = vst [vmem:[#allocation2 + $0x150] sm:$0xff] %v5496
    %5574 = vst [vmem:[#allocation2 + $0x158] sm:$0xff] %v5497
    %5575 = vst [vmem:[#allocation2 + $0x160] sm:$0xff] %v5498
    %5576 = vst [vmem:[#allocation2 + $0x168] sm:$0xff] %v5499
    %5577 = vst [vmem:[#allocation2 + $0x170] sm:$0xff] %v5500
    %5578 = vst [vmem:[#allocation2 + $0x178] sm:$0xff] %v5501
    %5579 = vst [vmem:[#allocation2 + $0x180] sm:$0xff] %v5502
    %5580 = vst [vmem:[#allocation2 + $0x188] sm:$0xff] %v5503
    %5581 = vst [vmem:[#allocation2 + $0x190] sm:$0xff] %v5504
    %5582 = vst [vmem:[#allocation2 + $0x198] sm:$0xff] %v5505
    %5583 = vst [vmem:[#allocation2 + $0x1a0] sm:$0xff] %v5506
    %5584 = vst [vmem:[#allocation2 + $0x1a8] sm:$0xff] %v5507
    %5585 = vst [vmem:[#allocation2 + $0x1b0] sm:$0xff] %v5508
    %5586 = vst [vmem:[#allocation2 + $0x1b8] sm:$0xff] %v5509
    %5587 = vst [vmem:[#allocation2 + $0x1c0] sm:$0xff] %v5510
    %5588 = vst [vmem:[#allocation2 + $0x1c8] sm:$0xff] %v5511
    %5589 = vst [vmem:[#allocation2 + $0x1d0] sm:$0xff] %v5512
    %5590 = vst [vmem:[#allocation2 + $0x1d8] sm:$0xff] %v5513
    %5591 = vst [vmem:[#allocation2 + $0x1e0] sm:$0xff] %v5514
    %5592 = vst [vmem:[#allocation2 + $0x1e8] sm:$0xff] %v5515
    %5593 = vst [vmem:[#allocation2 + $0x1f0] sm:$0xff] %v5516
    %5594 = vst [vmem:[#allocation2 + $0x1f8] sm:$0xff] %v5517
    %5595 = vst [vmem:[#allocation2 + $0x200] sm:$0xff] %v5518
    %5596 = vst [vmem:[#allocation2 + $0x208] sm:$0xff] %v5519
    %5597 = vst [vmem:[#allocation2 + $0x210] sm:$0xff] %v5520
    %5598 = vst [vmem:[#allocation2 + $0x218] sm:$0xff] %v5521
    %5599 = vst [vmem:[#allocation2 + $0x220] sm:$0xff] %v5522
    %5600 = vst [vmem:[#allocation2 + $0x228] sm:$0xff] %v5523
    %5601 = vst [vmem:[#allocation2 + $0x230] sm:$0xff] %v5524
    %5602 = vst [vmem:[#allocation2 + $0x238] sm:$0xff] %v5525
    %5603 = vst [vmem:[#allocation2 + $0x240] sm:$0xff] %v5526
    %5604 = vst [vmem:[#allocation2 + $0x248] sm:$0xff] %v5527
    %5605 = vst [vmem:[#allocation2 + $0x250] sm:$0xff] %v5528
    %5606 = vst [vmem:[#allocation2 + $0x258] sm:$0xff] %v5529
    %5607 = vst [vmem:[#allocation2 + $0x260] sm:$0xff] %v5530
    %v5608 = vld [vmem:[%s0 + $0x25] sm:$0xff]
    %v5609 = vld [vmem:[%s0 + $0x2d] sm:$0xff]
    %v5610 = vld [vmem:[%s0 + $0x35] sm:$0xff]
    %v5611 = vld [vmem:[%s0 + $0x3d] sm:$0xff]
    %v5612 = vld [vmem:[%s0 + $0x45] sm:$0xff]
    %v5613 = vld [vmem:[%s0 + $0x4d] sm:$0xff]
    %v5614 = vld [vmem:[%s0 + $0x55] sm:$0xff]
    %v5615 = vld [vmem:[%s0 + $0x5d] sm:$0xff]
    %v5616 = vld [vmem:[%s0 + $0x65] sm:$0xff]
    %v5617 = vld [vmem:[%s0 + $0x6d] sm:$0xff]
    %v5618 = vld [vmem:[%s0 + $0x75] sm:$0xff]
    %v5619 = vld [vmem:[%s0 + $0x7d] sm:$0xff]
    %v5620 = vld [vmem:[%s0 + $0x85] sm:$0xff]
    %v5621 = vld [vmem:[%s0 + $0x8d] sm:$0xff]
    %v5622 = vld [vmem:[%s0 + $0x95] sm:$0xff]
    %v5623 = vld [vmem:[%s0 + $0x9d] sm:$0xff]
    %v5624 = vld [vmem:[%s0 + $0xa5] sm:$0xff]
    %v5625 = vld [vmem:[%s0 + $0xad] sm:$0xff]
    %v5626 = vld [vmem:[%s0 + $0xb5] sm:$0xff]
    %v5627 = vld [vmem:[%s0 + $0xbd] sm:$0xff]
    %v5628 = vld [vmem:[%s0 + $0xc5] sm:$0xff]
    %v5629 = vld [vmem:[%s0 + $0xcd] sm:$0xff]
    %v5630 = vld [vmem:[%s0 + $0xd5] sm:$0xff]
    %v5631 = vld [vmem:[%s0 + $0xdd] sm:$0xff]
    %v5632 = vld [vmem:[%s0 + $0xe5] sm:$0xff]
    %v5633 = vld [vmem:[%s0 + $0xed] sm:$0xff]
    %v5634 = vld [vmem:[%s0 + $0xf5] sm:$0xff]
    %v5635 = vld [vmem:[%s0 + $0xfd] sm:$0xff]
    %v5636 = vld [vmem:[%s0 + $0x105] sm:$0xff]
    %v5637 = vld [vmem:[%s0 + $0x10d] sm:$0xff]
    %v5638 = vld [vmem:[%s0 + $0x115] sm:$0xff]
    %v5639 = vld [vmem:[%s0 + $0x11d] sm:$0xff]
    %v5640 = vld [vmem:[%s0 + $0x125] sm:$0xff]
    %v5641 = vld [vmem:[%s0 + $0x12d] sm:$0xff]
    %v5642 = vld [vmem:[%s0 + $0x135] sm:$0xff]
    %v5643 = vld [vmem:[%s0 + $0x13d] sm:$0xff]
    %v5644 = vld [vmem:[%s0 + $0x145] sm:$0xff]
    %v5645 = vld [vmem:[%s0 + $0x14d] sm:$0xff]
    %v5646 = vld [vmem:[%s0 + $0x155] sm:$0xff]
    %v5647 = vld [vmem:[%s0 + $0x15d] sm:$0xff]
    %v5648 = vld [vmem:[%s0 + $0x165] sm:$0xff]
    %v5649 = vld [vmem:[%s0 + $0x16d] sm:$0xff]
    %v5650 = vld [vmem:[%s0 + $0x175] sm:$0xff]
    %v5651 = vld [vmem:[%s0 + $0x17d] sm:$0xff]
    %v5652 = vld [vmem:[%s0 + $0x185] sm:$0xff]
    %v5653 = vld [vmem:[%s0 + $0x18d] sm:$0xff]
    %v5654 = vld [vmem:[%s0 + $0x195] sm:$0xff]
    %v5655 = vld [vmem:[%s0 + $0x19d] sm:$0xff]
    %v5656 = vld [vmem:[%s0 + $0x1a5] sm:$0xff]
    %v5657 = vld [vmem:[%s0 + $0x1ad] sm:$0xff]
    %v5658 = vld [vmem:[%s0 + $0x1b5] sm:$0xff]
    %v5659 = vld [vmem:[%s0 + $0x1bd] sm:$0xff]
    %v5660 = vld [vmem:[%s0 + $0x1c5] sm:$0xff]
    %v5661 = vld [vmem:[%s0 + $0x1cd] sm:$0xff]
    %v5662 = vld [vmem:[%s0 + $0x1d5] sm:$0xff]
    %v5663 = vld [vmem:[%s0 + $0x1dd] sm:$0xff]
    %v5664 = vld [vmem:[%s0 + $0x1e5] sm:$0xff]
    %v5665 = vld [vmem:[%s0 + $0x1ed] sm:$0xff]
    %v5666 = vld [vmem:[%s0 + $0x1f5] sm:$0xff]
    %v5667 = vld [vmem:[%s0 + $0x1fd] sm:$0xff]
    %v5668 = vld [vmem:[%s0 + $0x205] sm:$0xff]
    %v5669 = vld [vmem:[%s0 + $0x20d] sm:$0xff]
    %v5670 = vld [vmem:[%s0 + $0x215] sm:$0xff]
    %v5671 = vld [vmem:[%s0 + $0x21d] sm:$0xff]
    %v5672 = vld [vmem:[%s0 + $0x225] sm:$0xff]
    %v5673 = vld [vmem:[%s0 + $0x22d] sm:$0xff]
    %v5674 = vld [vmem:[%s0 + $0x235] sm:$0xff]
    %v5675 = vld [vmem:[%s0 + $0x23d] sm:$0xff]
    %v5676 = vld [vmem:[%s0 + $0x245] sm:$0xff]
    %v5677 = vld [vmem:[%s0 + $0x24d] sm:$0xff]
    %v5678 = vld [vmem:[%s0 + $0x255] sm:$0xff]
    %v5679 = vld [vmem:[%s0 + $0x25d] sm:$0xff]
    %v5680 = vld [vmem:[%s0 + $0x265] sm:$0xff]
    %v5681 = vld [vmem:[%s0 + $0x26d] sm:$0xff]
    %v5682 = vld [vmem:[%s0 + $0x275] sm:$0xff]
    %v5683 = vld [vmem:[%s0 + $0x27d] sm:$0xff]
    %v5684 = vld [vmem:[%s0 + $0x285] sm:$0xff]
    %v5685 = vpack.c.bf16 %v5609, %v5608
    %v5686 = vpack.c.bf16 %v5611, %v5610
    %v5687 = vpack.c.bf16 %v5613, %v5612
    %v5688 = vpack.c.bf16 %v5615, %v5614
    %v5689 = vpack.c.bf16 %v5617, %v5616
    %v5690 = vpack.c.bf16 %v5619, %v5618
    %v5691 = vpack.c.bf16 %v5621, %v5620
    %v5692 = vpack.c.bf16 %v5623, %v5622
    %v5693 = vpack.c.bf16 %v5625, %v5624
    %v5694 = vpack.c.bf16 %v5627, %v5626
    %v5695 = vpack.c.bf16 %v5629, %v5628
    %v5696 = vpack.c.bf16 %v5631, %v5630
    %v5697 = vpack.c.bf16 %v5633, %v5632
    %v5698 = vpack.c.bf16 %v5635, %v5634
    %v5699 = vpack.c.bf16 %v5637, %v5636
    %v5700 = vpack.c.bf16 %v5639, %v5638
    %v5701 = vpack.c.bf16 %v5641, %v5640
    %v5702 = vpack.c.bf16 %v5643, %v5642
    %v5703 = vpack.c.bf16 %v5645, %v5644
    %v5704 = vpack.c.bf16 %v5647, %v5646
    %v5705 = vpack.c.bf16 %v5649, %v5648
    %v5706 = vpack.c.bf16 %v5651, %v5650
    %v5707 = vpack.c.bf16 %v5653, %v5652
    %v5708 = vpack.c.bf16 %v5655, %v5654
    %v5709 = vpack.c.bf16 %v5657, %v5656
    %v5710 = vpack.c.bf16 %v5659, %v5658
    %v5711 = vpack.c.bf16 %v5661, %v5660
    %v5712 = vpack.c.bf16 %v5663, %v5662
    %v5713 = vpack.c.bf16 %v5665, %v5664
    %v5714 = vpack.c.bf16 %v5667, %v5666
    %v5715 = vpack.c.bf16 %v5669, %v5668
    %v5716 = vpack.c.bf16 %v5671, %v5670
    %v5717 = vpack.c.bf16 %v5673, %v5672
    %v5718 = vpack.c.bf16 %v5675, %v5674
    %v5719 = vpack.c.bf16 %v5677, %v5676
    %v5720 = vpack.c.bf16 %v5679, %v5678
    %v5721 = vpack.c.bf16 %v5681, %v5680
    %v5722 = vpack.c.bf16 %v5683, %v5682
    %v5723 = vpack.c.bf16 %v5684, %v5684
    %s5724 = scalar_lea.vmem %s1, 56
    %v5725 = vld [vmem:[%s5724] sm:$0xf]
    %v5726 = vld [vmem:[%s5724 + $0x4] sm:$0x1]
    %v5729 = vunpack.c.l.b16 %v5725
    %v5730 = vunpack.c.l.b16 %v5726
    %v5731 = vpack.c.b16 %v5730, %v5729
    %v5733 = vsel %vm148, %v5685, 0
    %v5736 = vsel %vm148, %v5686, 0
    %v5739 = vsel %vm148, %v5687, 0
    %v5742 = vsel %vm148, %v5688, 0
    %v5745 = vsel %vm148, %v5689, 0
    %v5748 = vsel %vm148, %v5690, 0
    %v5751 = vsel %vm148, %v5691, 0
    %v5754 = vsel %vm148, %v5692, 0
    %v5757 = vsel %vm148, %v5693, 0
    %v5760 = vsel %vm148, %v5694, 0
    %v5763 = vsel %vm148, %v5695, 0
    %v5766 = vsel %vm148, %v5696, 0
    %v5769 = vsel %vm148, %v5697, 0
    %v5772 = vsel %vm148, %v5698, 0
    %v5775 = vsel %vm148, %v5699, 0
    %v5778 = vsel %vm148, %v5700, 0
    %v5781 = vsel %vm148, %v5701, 0
    %v5784 = vsel %vm148, %v5702, 0
    %v5787 = vsel %vm148, %v5703, 0
    %v5790 = vsel %vm148, %v5704, 0
    %v5793 = vsel %vm148, %v5705, 0
    %v5796 = vsel %vm148, %v5706, 0
    %v5799 = vsel %vm148, %v5707, 0
    %v5802 = vsel %vm148, %v5708, 0
    %v5805 = vsel %vm148, %v5709, 0
    %v5808 = vsel %vm148, %v5710, 0
    %v5811 = vsel %vm148, %v5711, 0
    %v5814 = vsel %vm148, %v5712, 0
    %v5817 = vsel %vm148, %v5713, 0
    %v5820 = vsel %vm148, %v5714, 0
    %v5823 = vsel %vm148, %v5715, 0
    %v5826 = vsel %vm148, %v5716, 0
    %v5829 = vsel %vm148, %v5717, 0
    %v5832 = vsel %vm148, %v5718, 0
    %v5835 = vsel %vm148, %v5719, 0
    %v5838 = vsel %vm148, %v5720, 0
    %v5841 = vsel %vm148, %v5721, 0
    %v5844 = vsel %vm148, %v5722, 0
    %v5847 = vsel %vm148, %v5723, 0
    %v5850 = vand.u32 %v5731, %v269
    %5852 = vmatprep.subr.bf16.mxu0 0
    %5853 = vmatpush1.bf16.msra.mxu0 %v5850
    %5854 = vmatprep.subr.bf16.mxu0 0
    %5855 = vmatpush1.bf16.msra.mxu0 0
    %5856 = vmatprep.subr.bf16.mxu0 0
    %5857 = vmatpush1.bf16.msra.mxu0 0
    %5858 = vmatprep.subr.bf16.mxu0 0
    %5859 = vmatpush1.bf16.msra.mxu0 0
    %5860 = vmatprep.subr.bf16.mxu0 0
    %5861 = vmatpush1.bf16.msra.mxu0 0
    %5862 = vmatprep.subr.bf16.mxu0 0
    %5863 = vmatpush1.bf16.msra.mxu0 0
    %5864 = vmatprep.subr.bf16.mxu0 0
    %5865 = vmatpush1.bf16.msra.mxu0 0
    %5866 = vmatprep.subr.bf16.mxu0 0
    %5867 = vmatpush1.bf16.msra.mxu0 0
    %5868 = vmatprep.subr.bf16.mxu0 0
    %5869 = vmatpush1.bf16.msra.mxu0 0
    %5870 = vmatprep.subr.bf16.mxu0 0
    %5871 = vmatpush1.bf16.msra.mxu0 0
    %5872 = vmatprep.subr.bf16.mxu0 0
    %5873 = vmatpush1.bf16.msra.mxu0 0
    %5874 = vmatprep.subr.bf16.mxu0 0
    %5875 = vmatpush1.bf16.msra.mxu0 0
    %5876 = vmatprep.subr.bf16.mxu0 0
    %5877 = vmatpush1.bf16.msra.mxu0 0
    %5878 = vmatprep.subr.bf16.mxu0 0
    %5879 = vmatpush1.bf16.msra.mxu0 0
    %5880 = vmatprep.subr.bf16.mxu0 0
    %5881 = vmatpush1.bf16.msra.mxu0 0
    %5882 = vmatprep.subr.bf16.mxu0 0
    %5883 = vmatpush1.bf16.msra.mxu0 0
    %5884 = vmatprep.mubr.bf16.mxu0 0
    %5885 = vmatmul.mubr.bf16.gmra.mrb[0].mxu0 %v5733
    %v5886 = vpop.f32.mrb[0].mxu0
    %v5887 = vadd.f32 0.0, %v5886
    %v5888 = vpop.f32.mrb[0].mxu0
    %v5889 = vpop.f32.mrb[0].mxu0
    %v5890 = vadd.f32 0.0, %v5889
    %v5891 = vpop.f32.mrb[0].mxu0
    %5892 = vmatprep.mubr.bf16.mxu0 0
    %5893 = vmatmul.mubr.bf16.gmra.mrb[0].mxu0 %v5736
    %v5894 = vpop.f32.mrb[0].mxu0
    %v5895 = vadd.f32 0.0, %v5894
    %v5896 = vpop.f32.mrb[0].mxu0
    %v5897 = vpop.f32.mrb[0].mxu0
    %v5898 = vadd.f32 0.0, %v5897
    %v5899 = vpop.f32.mrb[0].mxu0
    %5900 = vmatprep.mubr.bf16.mxu0 0
    %5901 = vmatmul.mubr.bf16.gmra.mrb[0].mxu0 %v5739
    %v5902 = vpop.f32.mrb[0].mxu0
    %v5903 = vadd.f32 0.0, %v5902
    %v5904 = vpop.f32.mrb[0].mxu0
    %v5905 = vpop.f32.mrb[0].mxu0
    %v5906 = vadd.f32 0.0, %v5905
    %v5907 = vpop.f32.mrb[0].mxu0
    %5908 = vmatprep.mubr.bf16.mxu0 0
    %5909 = vmatmul.mubr.bf16.gmra.mrb[0].mxu0 %v5742
    %v5910 = vpop.f32.mrb[0].mxu0
    %v5911 = vadd.f32 0.0, %v5910
    %v5912 = vpop.f32.mrb[0].mxu0
    %v5913 = vpop.f32.mrb[0].mxu0
    %v5914 = vadd.f32 0.0, %v5913
    %v5915 = vpop.f32.mrb[0].mxu0
    %5916 = vmatprep.mubr.bf16.mxu0 0
    %5917 = vmatmul.mubr.bf16.gmra.mrb[0].mxu0 %v5745
    %v5918 = vpop.f32.mrb[0].mxu0
    %v5919 = vadd.f32 0.0, %v5918
    %v5920 = vpop.f32.mrb[0].mxu0
    %v5921 = vpop.f32.mrb[0].mxu0
    %v5922 = vadd.f32 0.0, %v5921
    %v5923 = vpop.f32.mrb[0].mxu0
    %5924 = vmatprep.mubr.bf16.mxu0 0
    %5925 = vmatmul.mubr.bf16.gmra.mrb[0].mxu0 %v5748
    %v5926 = vpop.f32.mrb[0].mxu0
    %v5927 = vadd.f32 0.0, %v5926
    %v5928 = vpop.f32.mrb[0].mxu0
    %v5929 = vpop.f32.mrb[0].mxu0
    %v5930 = vadd.f32 0.0, %v5929
    %v5931 = vpop.f32.mrb[0].mxu0
    %5932 = vmatprep.mubr.bf16.mxu0 0
    %5933 = vmatmul.mubr.bf16.gmra.mrb[0].mxu0 %v5751
    %v5934 = vpop.f32.mrb[0].mxu0
    %v5935 = vadd.f32 0.0, %v5934
    %v5936 = vpop.f32.mrb[0].mxu0
    %v5937 = vpop.f32.mrb[0].mxu0
    %v5938 = vadd.f32 0.0, %v5937
    %v5939 = vpop.f32.mrb[0].mxu0
    %5940 = vmatprep.mubr.bf16.mxu0 0
    %5941 = vmatmul.mubr.bf16.gmra.mrb[0].mxu0 %v5754
    %v5942 = vpop.f32.mrb[0].mxu0
    %v5943 = vadd.f32 0.0, %v5942
    %v5944 = vpop.f32.mrb[0].mxu0
    %v5945 = vpop.f32.mrb[0].mxu0
    %v5946 = vadd.f32 0.0, %v5945
    %v5947 = vpop.f32.mrb[0].mxu0
    %5948 = vmatprep.mubr.bf16.mxu0 0
    %5949 = vmatmul.mubr.bf16.gmra.mrb[0].mxu0 %v5757
    %v5950 = vpop.f32.mrb[0].mxu0
    %v5951 = vadd.f32 0.0, %v5950
    %v5952 = vpop.f32.mrb[0].mxu0
    %v5953 = vpop.f32.mrb[0].mxu0
    %v5954 = vadd.f32 0.0, %v5953
    %v5955 = vpop.f32.mrb[0].mxu0
    %5956 = vmatprep.mubr.bf16.mxu0 0
    %5957 = vmatmul.mubr.bf16.gmra.mrb[0].mxu0 %v5760
    %v5958 = vpop.f32.mrb[0].mxu0
    %v5959 = vadd.f32 0.0, %v5958
    %v5960 = vpop.f32.mrb[0].mxu0
    %v5961 = vpop.f32.mrb[0].mxu0
    %v5962 = vadd.f32 0.0, %v5961
    %v5963 = vpop.f32.mrb[0].mxu0
    %5964 = vmatprep.mubr.bf16.mxu0 0
    %5965 = vmatmul.mubr.bf16.gmra.mrb[0].mxu0 %v5763
    %v5966 = vpop.f32.mrb[0].mxu0
    %v5967 = vadd.f32 0.0, %v5966
    %v5968 = vpop.f32.mrb[0].mxu0
    %v5969 = vpop.f32.mrb[0].mxu0
    %v5970 = vadd.f32 0.0, %v5969
    %v5971 = vpop.f32.mrb[0].mxu0
    %5972 = vmatprep.mubr.bf16.mxu0 0
    %5973 = vmatmul.mubr.bf16.gmra.mrb[0].mxu0 %v5766
    %v5974 = vpop.f32.mrb[0].mxu0
    %v5975 = vadd.f32 0.0, %v5974
    %v5976 = vpop.f32.mrb[0].mxu0
    %v5977 = vpop.f32.mrb[0].mxu0
    %v5978 = vadd.f32 0.0, %v5977
    %v5979 = vpop.f32.mrb[0].mxu0
    %5980 = vmatprep.mubr.bf16.mxu0 0
    %5981 = vmatmul.mubr.bf16.gmra.mrb[0].mxu0 %v5769
    %v5982 = vpop.f32.mrb[0].mxu0
    %v5983 = vadd.f32 0.0, %v5982
    %v5984 = vpop.f32.mrb[0].mxu0
    %v5985 = vpop.f32.mrb[0].mxu0
    %v5986 = vadd.f32 0.0, %v5985
    %v5987 = vpop.f32.mrb[0].mxu0
    %5988 = vmatprep.mubr.bf16.mxu0 0
    %5989 = vmatmul.mubr.bf16.gmra.mrb[0].mxu0 %v5772
    %v5990 = vpop.f32.mrb[0].mxu0
    %v5991 = vadd.f32 0.0, %v5990
    %v5992 = vpop.f32.mrb[0].mxu0
    %v5993 = vpop.f32.mrb[0].mxu0
    %v5994 = vadd.f32 0.0, %v5993
    %v5995 = vpop.f32.mrb[0].mxu0
    %5996 = vmatprep.mubr.bf16.mxu0 0
    %5997 = vmatmul.mubr.bf16.gmra.mrb[0].mxu0 %v5775
    %v5998 = vpop.f32.mrb[0].mxu0
    %v5999 = vadd.f32 0.0, %v5998
    %v6000 = vpop.f32.mrb[0].mxu0
    %v6001 = vpop.f32.mrb[0].mxu0
    %v6002 = vadd.f32 0.0, %v6001
    %v6003 = vpop.f32.mrb[0].mxu0
    %6004 = vmatprep.mubr.bf16.mxu0 0
    %6005 = vmatmul.mubr.bf16.gmra.mrb[0].mxu0 %v5778
    %v6006 = vpop.f32.mrb[0].mxu0
    %v6007 = vadd.f32 0.0, %v6006
    %v6008 = vpop.f32.mrb[0].mxu0
    %v6009 = vpop.f32.mrb[0].mxu0
    %v6010 = vadd.f32 0.0, %v6009
    %v6011 = vpop.f32.mrb[0].mxu0
    %6012 = vmatprep.mubr.bf16.mxu0 0
    %6013 = vmatmul.mubr.bf16.gmra.mrb[0].mxu0 %v5781
    %v6014 = vpop.f32.mrb[0].mxu0
    %v6015 = vadd.f32 0.0, %v6014
    %v6016 = vpop.f32.mrb[0].mxu0
    %v6017 = vpop.f32.mrb[0].mxu0
    %v6018 = vadd.f32 0.0, %v6017
    %v6019 = vpop.f32.mrb[0].mxu0
    %6020 = vmatprep.mubr.bf16.mxu0 0
    %6021 = vmatmul.mubr.bf16.gmra.mrb[0].mxu0 %v5784
    %v6022 = vpop.f32.mrb[0].mxu0
    %v6023 = vadd.f32 0.0, %v6022
    %v6024 = vpop.f32.mrb[0].mxu0
    %v6025 = vpop.f32.mrb[0].mxu0
    %v6026 = vadd.f32 0.0, %v6025
    %v6027 = vpop.f32.mrb[0].mxu0
    %6028 = vmatprep.mubr.bf16.mxu0 0
    %6029 = vmatmul.mubr.bf16.gmra.mrb[0].mxu0 %v5787
    %v6030 = vpop.f32.mrb[0].mxu0
    %v6031 = vadd.f32 0.0, %v6030
    %v6032 = vpop.f32.mrb[0].mxu0
    %v6033 = vpop.f32.mrb[0].mxu0
    %v6034 = vadd.f32 0.0, %v6033
    %v6035 = vpop.f32.mrb[0].mxu0
    %6036 = vmatprep.mubr.bf16.mxu0 0
    %6037 = vmatmul.mubr.bf16.gmra.mrb[0].mxu0 %v5790
    %v6038 = vpop.f32.mrb[0].mxu0
    %v6039 = vadd.f32 0.0, %v6038
    %v6040 = vpop.f32.mrb[0].mxu0
    %v6041 = vpop.f32.mrb[0].mxu0
    %v6042 = vadd.f32 0.0, %v6041
    %v6043 = vpop.f32.mrb[0].mxu0
    %6044 = vmatprep.mubr.bf16.mxu0 0
    %6045 = vmatmul.mubr.bf16.gmra.mrb[0].mxu0 %v5793
    %v6046 = vpop.f32.mrb[0].mxu0
    %v6047 = vadd.f32 0.0, %v6046
    %v6048 = vpop.f32.mrb[0].mxu0
    %v6049 = vpop.f32.mrb[0].mxu0
    %v6050 = vadd.f32 0.0, %v6049
    %v6051 = vpop.f32.mrb[0].mxu0
    %6052 = vmatprep.mubr.bf16.mxu0 0
    %6053 = vmatmul.mubr.bf16.gmra.mrb[0].mxu0 %v5796
    %v6054 = vpop.f32.mrb[0].mxu0
    %v6055 = vadd.f32 0.0, %v6054
    %v6056 = vpop.f32.mrb[0].mxu0
    %v6057 = vpop.f32.mrb[0].mxu0
    %v6058 = vadd.f32 0.0, %v6057
    %v6059 = vpop.f32.mrb[0].mxu0
    %6060 = vmatprep.mubr.bf16.mxu0 0
    %6061 = vmatmul.mubr.bf16.gmra.mrb[0].mxu0 %v5799
    %v6062 = vpop.f32.mrb[0].mxu0
    %v6063 = vadd.f32 0.0, %v6062
    %v6064 = vpop.f32.mrb[0].mxu0
    %v6065 = vpop.f32.mrb[0].mxu0
    %v6066 = vadd.f32 0.0, %v6065
    %v6067 = vpop.f32.mrb[0].mxu0
    %6068 = vmatprep.mubr.bf16.mxu0 0
    %6069 = vmatmul.mubr.bf16.gmra.mrb[0].mxu0 %v5802
    %v6070 = vpop.f32.mrb[0].mxu0
    %v6071 = vadd.f32 0.0, %v6070
    %v6072 = vpop.f32.mrb[0].mxu0
    %v6073 = vpop.f32.mrb[0].mxu0
    %v6074 = vadd.f32 0.0, %v6073
    %v6075 = vpop.f32.mrb[0].mxu0
    %6076 = vmatprep.mubr.bf16.mxu0 0
    %6077 = vmatmul.mubr.bf16.gmra.mrb[0].mxu0 %v5805
    %v6078 = vpop.f32.mrb[0].mxu0
    %v6079 = vadd.f32 0.0, %v6078
    %v6080 = vpop.f32.mrb[0].mxu0
    %v6081 = vpop.f32.mrb[0].mxu0
    %v6082 = vadd.f32 0.0, %v6081
    %v6083 = vpop.f32.mrb[0].mxu0
    %6084 = vmatprep.mubr.bf16.mxu0 0
    %6085 = vmatmul.mubr.bf16.gmra.mrb[0].mxu0 %v5808
    %v6086 = vpop.f32.mrb[0].mxu0
    %v6087 = vadd.f32 0.0, %v6086
    %v6088 = vpop.f32.mrb[0].mxu0
    %v6089 = vpop.f32.mrb[0].mxu0
    %v6090 = vadd.f32 0.0, %v6089
    %v6091 = vpop.f32.mrb[0].mxu0
    %6092 = vmatprep.mubr.bf16.mxu0 0
    %6093 = vmatmul.mubr.bf16.gmra.mrb[0].mxu0 %v5811
    %v6094 = vpop.f32.mrb[0].mxu0
    %v6095 = vadd.f32 0.0, %v6094
    %v6096 = vpop.f32.mrb[0].mxu0
    %v6097 = vpop.f32.mrb[0].mxu0
    %v6098 = vadd.f32 0.0, %v6097
    %v6099 = vpop.f32.mrb[0].mxu0
    %6100 = vmatprep.mubr.bf16.mxu0 0
    %6101 = vmatmul.mubr.bf16.gmra.mrb[0].mxu0 %v5814
    %v6102 = vpop.f32.mrb[0].mxu0
    %v6103 = vadd.f32 0.0, %v6102
    %v6104 = vpop.f32.mrb[0].mxu0
    %v6105 = vpop.f32.mrb[0].mxu0
    %v6106 = vadd.f32 0.0, %v6105
    %v6107 = vpop.f32.mrb[0].mxu0
    %6108 = vmatprep.mubr.bf16.mxu0 0
    %6109 = vmatmul.mubr.bf16.gmra.mrb[0].mxu0 %v5817
    %v6110 = vpop.f32.mrb[0].mxu0
    %v6111 = vadd.f32 0.0, %v6110
    %v6112 = vpop.f32.mrb[0].mxu0
    %v6113 = vpop.f32.mrb[0].mxu0
    %v6114 = vadd.f32 0.0, %v6113
    %v6115 = vpop.f32.mrb[0].mxu0
    %6116 = vmatprep.mubr.bf16.mxu0 0
    %6117 = vmatmul.mubr.bf16.gmra.mrb[0].mxu0 %v5820
    %v6118 = vpop.f32.mrb[0].mxu0
    %v6119 = vadd.f32 0.0, %v6118
    %v6120 = vpop.f32.mrb[0].mxu0
    %v6121 = vpop.f32.mrb[0].mxu0
    %v6122 = vadd.f32 0.0, %v6121
    %v6123 = vpop.f32.mrb[0].mxu0
    %6124 = vmatprep.mubr.bf16.mxu0 0
    %6125 = vmatmul.mubr.bf16.gmra.mrb[0].mxu0 %v5823
    %v6126 = vpop.f32.mrb[0].mxu0
    %v6127 = vadd.f32 0.0, %v6126
    %v6128 = vpop.f32.mrb[0].mxu0
    %v6129 = vpop.f32.mrb[0].mxu0
    %v6130 = vadd.f32 0.0, %v6129
    %v6131 = vpop.f32.mrb[0].mxu0
    %6132 = vmatprep.mubr.bf16.mxu0 0
    %6133 = vmatmul.mubr.bf16.gmra.mrb[0].mxu0 %v5826
    %v6134 = vpop.f32.mrb[0].mxu0
    %v6135 = vadd.f32 0.0, %v6134
    %v6136 = vpop.f32.mrb[0].mxu0
    %v6137 = vpop.f32.mrb[0].mxu0
    %v6138 = vadd.f32 0.0, %v6137
    %v6139 = vpop.f32.mrb[0].mxu0
    %6140 = vmatprep.mubr.bf16.mxu0 0
    %6141 = vmatmul.mubr.bf16.gmra.mrb[0].mxu0 %v5829
    %v6142 = vpop.f32.mrb[0].mxu0
    %v6143 = vadd.f32 0.0, %v6142
    %v6144 = vpop.f32.mrb[0].mxu0
    %v6145 = vpop.f32.mrb[0].mxu0
    %v6146 = vadd.f32 0.0, %v6145
    %v6147 = vpop.f32.mrb[0].mxu0
    %6148 = vmatprep.mubr.bf16.mxu0 0
    %6149 = vmatmul.mubr.bf16.gmra.mrb[0].mxu0 %v5832
    %v6150 = vpop.f32.mrb[0].mxu0
    %v6151 = vadd.f32 0.0, %v6150
    %v6152 = vpop.f32.mrb[0].mxu0
    %v6153 = vpop.f32.mrb[0].mxu0
    %v6154 = vadd.f32 0.0, %v6153
    %v6155 = vpop.f32.mrb[0].mxu0
    %6156 = vmatprep.mubr.bf16.mxu0 0
    %6157 = vmatmul.mubr.bf16.gmra.mrb[0].mxu0 %v5835
    %v6158 = vpop.f32.mrb[0].mxu0
    %v6159 = vadd.f32 0.0, %v6158
    %v6160 = vpop.f32.mrb[0].mxu0
    %v6161 = vpop.f32.mrb[0].mxu0
    %v6162 = vadd.f32 0.0, %v6161
    %v6163 = vpop.f32.mrb[0].mxu0
    %6164 = vmatprep.mubr.bf16.mxu0 0
    %6165 = vmatmul.mubr.bf16.gmra.mrb[0].mxu0 %v5838
    %v6166 = vpop.f32.mrb[0].mxu0
    %v6167 = vadd.f32 0.0, %v6166
    %v6168 = vpop.f32.mrb[0].mxu0
    %v6169 = vpop.f32.mrb[0].mxu0
    %v6170 = vadd.f32 0.0, %v6169
    %v6171 = vpop.f32.mrb[0].mxu0
    %6172 = vmatprep.mubr.bf16.mxu0 0
    %6173 = vmatmul.mubr.bf16.gmra.mrb[0].mxu0 %v5841
    %v6174 = vpop.f32.mrb[0].mxu0
    %v6175 = vadd.f32 0.0, %v6174
    %v6176 = vpop.f32.mrb[0].mxu0
    %v6177 = vpop.f32.mrb[0].mxu0
    %v6178 = vadd.f32 0.0, %v6177
    %v6179 = vpop.f32.mrb[0].mxu0
    %6180 = vmatprep.mubr.bf16.mxu0 0
    %6181 = vmatmul.mubr.bf16.gmra.mrb[0].mxu0 %v5844
    %v6182 = vpop.f32.mrb[0].mxu0
    %v6183 = vadd.f32 0.0, %v6182
    %v6184 = vpop.f32.mrb[0].mxu0
    %v6185 = vpop.f32.mrb[0].mxu0
    %v6186 = vadd.f32 0.0, %v6185
    %v6187 = vpop.f32.mrb[0].mxu0
    %6188 = vmatprep.mubr.bf16.mxu0 0
    %6189 = vmatmul.mubr.bf16.gmra.mrb[0].mxu0 %v5847
    %v6190 = vpop.f32.mrb[0].mxu0
    %v6191 = vadd.f32 0.0, %v6190
    %v6192 = vpop.f32.mrb[0].mxu0
    %v6193 = vpop.f32.mrb[0].mxu0
    %v6194 = vpop.f32.mrb[0].mxu0
    %6195 = vdwg.mxu0
    %v6196 = vld [vmem:[#allocation2] sm:$0xff]
    %v6197 = vld [vmem:[#allocation2 + $0x8] sm:$0xff]
    %v6198 = vld [vmem:[#allocation2 + $0x10] sm:$0xff]
    %v6199 = vld [vmem:[#allocation2 + $0x18] sm:$0xff]
    %v6200 = vld [vmem:[#allocation2 + $0x20] sm:$0xff]
    %v6201 = vld [vmem:[#allocation2 + $0x28] sm:$0xff]
    %v6202 = vld [vmem:[#allocation2 + $0x30] sm:$0xff]
    %v6203 = vld [vmem:[#allocation2 + $0x38] sm:$0xff]
    %v6204 = vld [vmem:[#allocation2 + $0x40] sm:$0xff]
    %v6205 = vld [vmem:[#allocation2 + $0x48] sm:$0xff]
    %v6206 = vld [vmem:[#allocation2 + $0x50] sm:$0xff]
    %v6207 = vld [vmem:[#allocation2 + $0x58] sm:$0xff]
    %v6208 = vld [vmem:[#allocation2 + $0x60] sm:$0xff]
    %v6209 = vld [vmem:[#allocation2 + $0x68] sm:$0xff]
    %v6210 = vld [vmem:[#allocation2 + $0x70] sm:$0xff]
    %v6211 = vld [vmem:[#allocation2 + $0x78] sm:$0xff]
    %v6212 = vld [vmem:[#allocation2 + $0x80] sm:$0xff]
    %v6213 = vld [vmem:[#allocation2 + $0x88] sm:$0xff]
    %v6214 = vld [vmem:[#allocation2 + $0x90] sm:$0xff]
    %v6215 = vld [vmem:[#allocation2 + $0x98] sm:$0xff]
    %v6216 = vld [vmem:[#allocation2 + $0xa0] sm:$0xff]
    %v6217 = vld [vmem:[#allocation2 + $0xa8] sm:$0xff]
    %v6218 = vld [vmem:[#allocation2 + $0xb0] sm:$0xff]
    %v6219 = vld [vmem:[#allocation2 + $0xb8] sm:$0xff]
    %v6220 = vld [vmem:[#allocation2 + $0xc0] sm:$0xff]
    %v6221 = vld [vmem:[#allocation2 + $0xc8] sm:$0xff]
    %v6222 = vld [vmem:[#allocation2 + $0xd0] sm:$0xff]
    %v6223 = vld [vmem:[#allocation2 + $0xd8] sm:$0xff]
    %v6224 = vld [vmem:[#allocation2 + $0xe0] sm:$0xff]
    %v6225 = vld [vmem:[#allocation2 + $0xe8] sm:$0xff]
    %v6226 = vld [vmem:[#allocation2 + $0xf0] sm:$0xff]
    %v6227 = vld [vmem:[#allocation2 + $0xf8] sm:$0xff]
    %v6228 = vld [vmem:[#allocation2 + $0x100] sm:$0xff]
    %v6229 = vld [vmem:[#allocation2 + $0x108] sm:$0xff]
    %v6230 = vld [vmem:[#allocation2 + $0x110] sm:$0xff]
    %v6231 = vld [vmem:[#allocation2 + $0x118] sm:$0xff]
    %v6232 = vld [vmem:[#allocation2 + $0x120] sm:$0xff]
    %v6233 = vld [vmem:[#allocation2 + $0x128] sm:$0xff]
    %v6234 = vld [vmem:[#allocation2 + $0x130] sm:$0xff]
    %v6235 = vld [vmem:[#allocation2 + $0x138] sm:$0xff]
    %v6236 = vld [vmem:[#allocation2 + $0x140] sm:$0xff]
    %v6237 = vld [vmem:[#allocation2 + $0x148] sm:$0xff]
    %v6238 = vld [vmem:[#allocation2 + $0x150] sm:$0xff]
    %v6239 = vld [vmem:[#allocation2 + $0x158] sm:$0xff]
    %v6240 = vld [vmem:[#allocation2 + $0x160] sm:$0xff]
    %v6241 = vld [vmem:[#allocation2 + $0x168] sm:$0xff]
    %v6242 = vld [vmem:[#allocation2 + $0x170] sm:$0xff]
    %v6243 = vld [vmem:[#allocation2 + $0x178] sm:$0xff]
    %v6244 = vld [vmem:[#allocation2 + $0x180] sm:$0xff]
    %v6245 = vld [vmem:[#allocation2 + $0x188] sm:$0xff]
    %v6246 = vld [vmem:[#allocation2 + $0x190] sm:$0xff]
    %v6247 = vld [vmem:[#allocation2 + $0x198] sm:$0xff]
    %v6248 = vld [vmem:[#allocation2 + $0x1a0] sm:$0xff]
    %v6249 = vld [vmem:[#allocation2 + $0x1a8] sm:$0xff]
    %v6250 = vld [vmem:[#allocation2 + $0x1b0] sm:$0xff]
    %v6251 = vld [vmem:[#allocation2 + $0x1b8] sm:$0xff]
    %v6252 = vld [vmem:[#allocation2 + $0x1c0] sm:$0xff]
    %v6253 = vld [vmem:[#allocation2 + $0x1c8] sm:$0xff]
    %v6254 = vld [vmem:[#allocation2 + $0x1d0] sm:$0xff]
    %v6255 = vld [vmem:[#allocation2 + $0x1d8] sm:$0xff]
    %v6256 = vld [vmem:[#allocation2 + $0x1e0] sm:$0xff]
    %v6257 = vld [vmem:[#allocation2 + $0x1e8] sm:$0xff]
    %v6258 = vld [vmem:[#allocation2 + $0x1f0] sm:$0xff]
    %v6259 = vld [vmem:[#allocation2 + $0x1f8] sm:$0xff]
    %v6260 = vld [vmem:[#allocation2 + $0x200] sm:$0xff]
    %v6261 = vld [vmem:[#allocation2 + $0x208] sm:$0xff]
    %v6262 = vld [vmem:[#allocation2 + $0x210] sm:$0xff]
    %v6263 = vld [vmem:[#allocation2 + $0x218] sm:$0xff]
    %v6264 = vld [vmem:[#allocation2 + $0x220] sm:$0xff]
    %v6265 = vld [vmem:[#allocation2 + $0x228] sm:$0xff]
    %v6266 = vld [vmem:[#allocation2 + $0x230] sm:$0xff]
    %v6267 = vld [vmem:[#allocation2 + $0x238] sm:$0xff]
    %v6268 = vld [vmem:[#allocation2 + $0x240] sm:$0xff]
    %v6269 = vld [vmem:[#allocation2 + $0x248] sm:$0xff]
    %v6270 = vld [vmem:[#allocation2 + $0x250] sm:$0xff]
    %v6271 = vld [vmem:[#allocation2 + $0x258] sm:$0xff]
    %v6272 = vld [vmem:[#allocation2 + $0x260] sm:$0xff]
    %v6273 = vadd.f32 %v6196, %v5887
    %v6274 = vadd.f32 %v6197, %v5890
    %v6275 = vadd.f32 %v6198, %v5895
    %v6276 = vadd.f32 %v6199, %v5898
    %v6277 = vadd.f32 %v6200, %v5903
    %v6278 = vadd.f32 %v6201, %v5906
    %v6279 = vadd.f32 %v6202, %v5911
    %v6280 = vadd.f32 %v6203, %v5914
    %v6281 = vadd.f32 %v6204, %v5919
    %v6282 = vadd.f32 %v6205, %v5922
    %v6283 = vadd.f32 %v6206, %v5927
    %v6284 = vadd.f32 %v6207, %v5930
    %v6285 = vadd.f32 %v6208, %v5935
    %v6286 = vadd.f32 %v6209, %v5938
    %v6287 = vadd.f32 %v6210, %v5943
    %v6288 = vadd.f32 %v6211, %v5946
    %v6289 = vadd.f32 %v6212, %v5951
    %v6290 = vadd.f32 %v6213, %v5954
    %v6291 = vadd.f32 %v6214, %v5959
    %v6292 = vadd.f32 %v6215, %v5962
    %v6293 = vadd.f32 %v6216, %v5967
    %v6294 = vadd.f32 %v6217, %v5970
    %v6295 = vadd.f32 %v6218, %v5975
    %v6296 = vadd.f32 %v6219, %v5978
    %v6297 = vadd.f32 %v6220, %v5983
    %v6298 = vadd.f32 %v6221, %v5986
    %v6299 = vadd.f32 %v6222, %v5991
    %v6300 = vadd.f32 %v6223, %v5994
    %v6301 = vadd.f32 %v6224, %v5999
    %v6302 = vadd.f32 %v6225, %v6002
    %v6303 = vadd.f32 %v6226, %v6007
    %v6304 = vadd.f32 %v6227, %v6010
    %v6305 = vadd.f32 %v6228, %v6015
    %v6306 = vadd.f32 %v6229, %v6018
    %v6307 = vadd.f32 %v6230, %v6023
    %v6308 = vadd.f32 %v6231, %v6026
    %v6309 = vadd.f32 %v6232, %v6031
    %v6310 = vadd.f32 %v6233, %v6034
    %v6311 = vadd.f32 %v6234, %v6039
    %v6312 = vadd.f32 %v6235, %v6042
    %v6313 = vadd.f32 %v6236, %v6047
    %v6314 = vadd.f32 %v6237, %v6050
    %v6315 = vadd.f32 %v6238, %v6055
    %v6316 = vadd.f32 %v6239, %v6058
    %v6317 = vadd.f32 %v6240, %v6063
    %v6318 = vadd.f32 %v6241, %v6066
    %v6319 = vadd.f32 %v6242, %v6071
    %v6320 = vadd.f32 %v6243, %v6074
    %v6321 = vadd.f32 %v6244, %v6079
    %v6322 = vadd.f32 %v6245, %v6082
    %v6323 = vadd.f32 %v6246, %v6087
    %v6324 = vadd.f32 %v6247, %v6090
    %v6325 = vadd.f32 %v6248, %v6095
    %v6326 = vadd.f32 %v6249, %v6098
    %v6327 = vadd.f32 %v6250, %v6103
    %v6328 = vadd.f32 %v6251, %v6106
    %v6329 = vadd.f32 %v6252, %v6111
    %v6330 = vadd.f32 %v6253, %v6114
    %v6331 = vadd.f32 %v6254, %v6119
    %v6332 = vadd.f32 %v6255, %v6122
    %v6333 = vadd.f32 %v6256, %v6127
    %v6334 = vadd.f32 %v6257, %v6130
    %v6335 = vadd.f32 %v6258, %v6135
    %v6336 = vadd.f32 %v6259, %v6138
    %v6337 = vadd.f32 %v6260, %v6143
    %v6338 = vadd.f32 %v6261, %v6146
    %v6339 = vadd.f32 %v6262, %v6151
    %v6340 = vadd.f32 %v6263, %v6154
    %v6341 = vadd.f32 %v6264, %v6159
    %v6342 = vadd.f32 %v6265, %v6162
    %v6343 = vadd.f32 %v6266, %v6167
    %v6344 = vadd.f32 %v6267, %v6170
    %v6345 = vadd.f32 %v6268, %v6175
    %v6346 = vadd.f32 %v6269, %v6178
    %v6347 = vadd.f32 %v6270, %v6183
    %v6348 = vadd.f32 %v6271, %v6186
    %v6349 = vadd.f32 %v6272, %v6191
    %6350 = vst [vmem:[#allocation2] sm:$0xff] %v6273
    %6351 = vst [vmem:[#allocation2 + $0x8] sm:$0xff] %v6274
    %6352 = vst [vmem:[#allocation2 + $0x10] sm:$0xff] %v6275
    %6353 = vst [vmem:[#allocation2 + $0x18] sm:$0xff] %v6276
    %6354 = vst [vmem:[#allocation2 + $0x20] sm:$0xff] %v6277
    %6355 = vst [vmem:[#allocation2 + $0x28] sm:$0xff] %v6278
    %6356 = vst [vmem:[#allocation2 + $0x30] sm:$0xff] %v6279
    %6357 = vst [vmem:[#allocation2 + $0x38] sm:$0xff] %v6280
    %6358 = vst [vmem:[#allocation2 + $0x40] sm:$0xff] %v6281
    %6359 = vst [vmem:[#allocation2 + $0x48] sm:$0xff] %v6282
    %6360 = vst [vmem:[#allocation2 + $0x50] sm:$0xff] %v6283
    %6361 = vst [vmem:[#allocation2 + $0x58] sm:$0xff] %v6284
    %6362 = vst [vmem:[#allocation2 + $0x60] sm:$0xff] %v6285
    %6363 = vst [vmem:[#allocation2 + $0x68] sm:$0xff] %v6286
    %6364 = vst [vmem:[#allocation2 + $0x70] sm:$0xff] %v6287
    %6365 = vst [vmem:[#allocation2 + $0x78] sm:$0xff] %v6288
    %6366 = vst [vmem:[#allocation2 + $0x80] sm:$0xff] %v6289
    %6367 = vst [vmem:[#allocation2 + $0x88] sm:$0xff] %v6290
    %6368 = vst [vmem:[#allocation2 + $0x90] sm:$0xff] %v6291
    %6369 = vst [vmem:[#allocation2 + $0x98] sm:$0xff] %v6292
    %6370 = vst [vmem:[#allocation2 + $0xa0] sm:$0xff] %v6293
    %6371 = vst [vmem:[#allocation2 + $0xa8] sm:$0xff] %v6294
    %6372 = vst [vmem:[#allocation2 + $0xb0] sm:$0xff] %v6295
    %6373 = vst [vmem:[#allocation2 + $0xb8] sm:$0xff] %v6296
    %6374 = vst [vmem:[#allocation2 + $0xc0] sm:$0xff] %v6297
    %6375 = vst [vmem:[#allocation2 + $0xc8] sm:$0xff] %v6298
    %6376 = vst [vmem:[#allocation2 + $0xd0] sm:$0xff] %v6299
    %6377 = vst [vmem:[#allocation2 + $0xd8] sm:$0xff] %v6300
    %6378 = vst [vmem:[#allocation2 + $0xe0] sm:$0xff] %v6301
    %6379 = vst [vmem:[#allocation2 + $0xe8] sm:$0xff] %v6302
    %6380 = vst [vmem:[#allocation2 + $0xf0] sm:$0xff] %v6303
    %6381 = vst [vmem:[#allocation2 + $0xf8] sm:$0xff] %v6304
    %6382 = vst [vmem:[#allocation2 + $0x100] sm:$0xff] %v6305
    %6383 = vst [vmem:[#allocation2 + $0x108] sm:$0xff] %v6306
    %6384 = vst [vmem:[#allocation2 + $0x110] sm:$0xff] %v6307
    %6385 = vst [vmem:[#allocation2 + $0x118] sm:$0xff] %v6308
    %6386 = vst [vmem:[#allocation2 + $0x120] sm:$0xff] %v6309
    %6387 = vst [vmem:[#allocation2 + $0x128] sm:$0xff] %v6310
    %6388 = vst [vmem:[#allocation2 + $0x130] sm:$0xff] %v6311
    %6389 = vst [vmem:[#allocation2 + $0x138] sm:$0xff] %v6312
    %6390 = vst [vmem:[#allocation2 + $0x140] sm:$0xff] %v6313
    %6391 = vst [vmem:[#allocation2 + $0x148] sm:$0xff] %v6314
    %6392 = vst [vmem:[#allocation2 + $0x150] sm:$0xff] %v6315
    %6393 = vst [vmem:[#allocation2 + $0x158] sm:$0xff] %v6316
    %6394 = vst [vmem:[#allocation2 + $0x160] sm:$0xff] %v6317
    %6395 = vst [vmem:[#allocation2 + $0x168] sm:$0xff] %v6318
    %6396 = vst [vmem:[#allocation2 + $0x170] sm:$0xff] %v6319
    %6397 = vst [vmem:[#allocation2 + $0x178] sm:$0xff] %v6320
    %6398 = vst [vmem:[#allocation2 + $0x180] sm:$0xff] %v6321
    %6399 = vst [vmem:[#allocation2 + $0x188] sm:$0xff] %v6322
    %6400 = vst [vmem:[#allocation2 + $0x190] sm:$0xff] %v6323
    %6401 = vst [vmem:[#allocation2 + $0x198] sm:$0xff] %v6324
    %6402 = vst [vmem:[#allocation2 + $0x1a0] sm:$0xff] %v6325
    %6403 = vst [vmem:[#allocation2 + $0x1a8] sm:$0xff] %v6326
    %6404 = vst [vmem:[#allocation2 + $0x1b0] sm:$0xff] %v6327
    %6405 = vst [vmem:[#allocation2 + $0x1b8] sm:$0xff] %v6328
    %6406 = vst [vmem:[#allocation2 + $0x1c0] sm:$0xff] %v6329
    %6407 = vst [vmem:[#allocation2 + $0x1c8] sm:$0xff] %v6330
    %6408 = vst [vmem:[#allocation2 + $0x1d0] sm:$0xff] %v6331
    %6409 = vst [vmem:[#allocation2 + $0x1d8] sm:$0xff] %v6332
    %6410 = vst [vmem:[#allocation2 + $0x1e0] sm:$0xff] %v6333
    %6411 = vst [vmem:[#allocation2 + $0x1e8] sm:$0xff] %v6334
    %6412 = vst [vmem:[#allocation2 + $0x1f0] sm:$0xff] %v6335
    %6413 = vst [vmem:[#allocation2 + $0x1f8] sm:$0xff] %v6336
    %6414 = vst [vmem:[#allocation2 + $0x200] sm:$0xff] %v6337
    %6415 = vst [vmem:[#allocation2 + $0x208] sm:$0xff] %v6338
    %6416 = vst [vmem:[#allocation2 + $0x210] sm:$0xff] %v6339
    %6417 = vst [vmem:[#allocation2 + $0x218] sm:$0xff] %v6340
    %6418 = vst [vmem:[#allocation2 + $0x220] sm:$0xff] %v6341
    %6419 = vst [vmem:[#allocation2 + $0x228] sm:$0xff] %v6342
    %6420 = vst [vmem:[#allocation2 + $0x230] sm:$0xff] %v6343
    %6421 = vst [vmem:[#allocation2 + $0x238] sm:$0xff] %v6344
    %6422 = vst [vmem:[#allocation2 + $0x240] sm:$0xff] %v6345
    %6423 = vst [vmem:[#allocation2 + $0x248] sm:$0xff] %v6346
    %6424 = vst [vmem:[#allocation2 + $0x250] sm:$0xff] %v6347
    %6425 = vst [vmem:[#allocation2 + $0x258] sm:$0xff] %v6348
    %6426 = vst [vmem:[#allocation2 + $0x260] sm:$0xff] %v6349
    %v6427 = vld [vmem:[%s0 + $0x26] sm:$0xff]
    %v6428 = vld [vmem:[%s0 + $0x2e] sm:$0xff]
    %v6429 = vld [vmem:[%s0 + $0x36] sm:$0xff]
    %v6430 = vld [vmem:[%s0 + $0x3e] sm:$0xff]
    %v6431 = vld [vmem:[%s0 + $0x46] sm:$0xff]
    %v6432 = vld [vmem:[%s0 + $0x4e] sm:$0xff]
    %v6433 = vld [vmem:[%s0 + $0x56] sm:$0xff]
    %v6434 = vld [vmem:[%s0 + $0x5e] sm:$0xff]
    %v6435 = vld [vmem:[%s0 + $0x66] sm:$0xff]
    %v6436 = vld [vmem:[%s0 + $0x6e] sm:$0xff]
    %v6437 = vld [vmem:[%s0 + $0x76] sm:$0xff]
    %v6438 = vld [vmem:[%s0 + $0x7e] sm:$0xff]
    %v6439 = vld [vmem:[%s0 + $0x86] sm:$0xff]
    %v6440 = vld [vmem:[%s0 + $0x8e] sm:$0xff]
    %v6441 = vld [vmem:[%s0 + $0x96] sm:$0xff]
    %v6442 = vld [vmem:[%s0 + $0x9e] sm:$0xff]
    %v6443 = vld [vmem:[%s0 + $0xa6] sm:$0xff]
    %v6444 = vld [vmem:[%s0 + $0xae] sm:$0xff]
    %v6445 = vld [vmem:[%s0 + $0xb6] sm:$0xff]
    %v6446 = vld [vmem:[%s0 + $0xbe] sm:$0xff]
    %v6447 = vld [vmem:[%s0 + $0xc6] sm:$0xff]
    %v6448 = vld [vmem:[%s0 + $0xce] sm:$0xff]
    %v6449 = vld [vmem:[%s0 + $0xd6] sm:$0xff]
    %v6450 = vld [vmem:[%s0 + $0xde] sm:$0xff]
    %v6451 = vld [vmem:[%s0 + $0xe6] sm:$0xff]
    %v6452 = vld [vmem:[%s0 + $0xee] sm:$0xff]
    %v6453 = vld [vmem:[%s0 + $0xf6] sm:$0xff]
    %v6454 = vld [vmem:[%s0 + $0xfe] sm:$0xff]
    %v6455 = vld [vmem:[%s0 + $0x106] sm:$0xff]
    %v6456 = vld [vmem:[%s0 + $0x10e] sm:$0xff]
    %v6457 = vld [vmem:[%s0 + $0x116] sm:$0xff]
    %v6458 = vld [vmem:[%s0 + $0x11e] sm:$0xff]
    %v6459 = vld [vmem:[%s0 + $0x126] sm:$0xff]
    %v6460 = vld [vmem:[%s0 + $0x12e] sm:$0xff]
    %v6461 = vld [vmem:[%s0 + $0x136] sm:$0xff]
    %v6462 = vld [vmem:[%s0 + $0x13e] sm:$0xff]
    %v6463 = vld [vmem:[%s0 + $0x146] sm:$0xff]
    %v6464 = vld [vmem:[%s0 + $0x14e] sm:$0xff]
    %v6465 = vld [vmem:[%s0 + $0x156] sm:$0xff]
    %v6466 = vld [vmem:[%s0 + $0x15e] sm:$0xff]
    %v6467 = vld [vmem:[%s0 + $0x166] sm:$0xff]
    %v6468 = vld [vmem:[%s0 + $0x16e] sm:$0xff]
    %v6469 = vld [vmem:[%s0 + $0x176] sm:$0xff]
    %v6470 = vld [vmem:[%s0 + $0x17e] sm:$0xff]
    %v6471 = vld [vmem:[%s0 + $0x186] sm:$0xff]
    %v6472 = vld [vmem:[%s0 + $0x18e] sm:$0xff]
    %v6473 = vld [vmem:[%s0 + $0x196] sm:$0xff]
    %v6474 = vld [vmem:[%s0 + $0x19e] sm:$0xff]
    %v6475 = vld [vmem:[%s0 + $0x1a6] sm:$0xff]
    %v6476 = vld [vmem:[%s0 + $0x1ae] sm:$0xff]
    %v6477 = vld [vmem:[%s0 + $0x1b6] sm:$0xff]
    %v6478 = vld [vmem:[%s0 + $0x1be] sm:$0xff]
    %v6479 = vld [vmem:[%s0 + $0x1c6] sm:$0xff]
    %v6480 = vld [vmem:[%s0 + $0x1ce] sm:$0xff]
    %v6481 = vld [vmem:[%s0 + $0x1d6] sm:$0xff]
    %v6482 = vld [vmem:[%s0 + $0x1de] sm:$0xff]
    %v6483 = vld [vmem:[%s0 + $0x1e6] sm:$0xff]
    %v6484 = vld [vmem:[%s0 + $0x1ee] sm:$0xff]
    %v6485 = vld [vmem:[%s0 + $0x1f6] sm:$0xff]
    %v6486 = vld [vmem:[%s0 + $0x1fe] sm:$0xff]
    %v6487 = vld [vmem:[%s0 + $0x206] sm:$0xff]
    %v6488 = vld [vmem:[%s0 + $0x20e] sm:$0xff]
    %v6489 = vld [vmem:[%s0 + $0x216] sm:$0xff]
    %v6490 = vld [vmem:[%s0 + $0x21e] sm:$0xff]
    %v6491 = vld [vmem:[%s0 + $0x226] sm:$0xff]
    %v6492 = vld [vmem:[%s0 + $0x22e] sm:$0xff]
    %v6493 = vld [vmem:[%s0 + $0x236] sm:$0xff]
    %v6494 = vld [vmem:[%s0 + $0x23e] sm:$0xff]
    %v6495 = vld [vmem:[%s0 + $0x246] sm:$0xff]
    %v6496 = vld [vmem:[%s0 + $0x24e] sm:$0xff]
    %v6497 = vld [vmem:[%s0 + $0x256] sm:$0xff]
    %v6498 = vld [vmem:[%s0 + $0x25e] sm:$0xff]
    %v6499 = vld [vmem:[%s0 + $0x266] sm:$0xff]
    %v6500 = vld [vmem:[%s0 + $0x26e] sm:$0xff]
    %v6501 = vld [vmem:[%s0 + $0x276] sm:$0xff]
    %v6502 = vld [vmem:[%s0 + $0x27e] sm:$0xff]
    %v6503 = vld [vmem:[%s0 + $0x286] sm:$0xff]
    %v6504 = vpack.c.bf16 %v6428, %v6427
    %v6505 = vpack.c.bf16 %v6430, %v6429
    %v6506 = vpack.c.bf16 %v6432, %v6431
    %v6507 = vpack.c.bf16 %v6434, %v6433
    %v6508 = vpack.c.bf16 %v6436, %v6435
    %v6509 = vpack.c.bf16 %v6438, %v6437
    %v6510 = vpack.c.bf16 %v6440, %v6439
    %v6511 = vpack.c.bf16 %v6442, %v6441
    %v6512 = vpack.c.bf16 %v6444, %v6443
    %v6513 = vpack.c.bf16 %v6446, %v6445
    %v6514 = vpack.c.bf16 %v6448, %v6447
    %v6515 = vpack.c.bf16 %v6450, %v6449
    %v6516 = vpack.c.bf16 %v6452, %v6451
    %v6517 = vpack.c.bf16 %v6454, %v6453
    %v6518 = vpack.c.bf16 %v6456, %v6455
    %v6519 = vpack.c.bf16 %v6458, %v6457
    %v6520 = vpack.c.bf16 %v6460, %v6459
    %v6521 = vpack.c.bf16 %v6462, %v6461
    %v6522 = vpack.c.bf16 %v6464, %v6463
    %v6523 = vpack.c.bf16 %v6466, %v6465
    %v6524 = vpack.c.bf16 %v6468, %v6467
    %v6525 = vpack.c.bf16 %v6470, %v6469
    %v6526 = vpack.c.bf16 %v6472, %v6471
    %v6527 = vpack.c.bf16 %v6474, %v6473
    %v6528 = vpack.c.bf16 %v6476, %v6475
    %v6529 = vpack.c.bf16 %v6478, %v6477
    %v6530 = vpack.c.bf16 %v6480, %v6479
    %v6531 = vpack.c.bf16 %v6482, %v6481
    %v6532 = vpack.c.bf16 %v6484, %v6483
    %v6533 = vpack.c.bf16 %v6486, %v6485
    %v6534 = vpack.c.bf16 %v6488, %v6487
    %v6535 = vpack.c.bf16 %v6490, %v6489
    %v6536 = vpack.c.bf16 %v6492, %v6491
    %v6537 = vpack.c.bf16 %v6494, %v6493
    %v6538 = vpack.c.bf16 %v6496, %v6495
    %v6539 = vpack.c.bf16 %v6498, %v6497
    %v6540 = vpack.c.bf16 %v6500, %v6499
    %v6541 = vpack.c.bf16 %v6502, %v6501
    %v6542 = vpack.c.bf16 %v6503, %v6503
    %s6543 = scalar_lea.vmem %s1, 64
    %v6544 = vld [vmem:[%s6543] sm:$0xf]
    %v6545 = vld [vmem:[%s6543 + $0x4] sm:$0x1]
    %v6548 = vunpack.c.l.b16 %v6544
    %v6549 = vunpack.c.l.b16 %v6545
    %v6550 = vpack.c.b16 %v6549, %v6548
    %v6552 = vsel %vm148, %v6504, 0
    %v6555 = vsel %vm148, %v6505, 0
    %v6558 = vsel %vm148, %v6506, 0
    %v6561 = vsel %vm148, %v6507, 0
    %v6564 = vsel %vm148, %v6508, 0
    %v6567 = vsel %vm148, %v6509, 0
    %v6570 = vsel %vm148, %v6510, 0
    %v6573 = vsel %vm148, %v6511, 0
    %v6576 = vsel %vm148, %v6512, 0
    %v6579 = vsel %vm148, %v6513, 0
    %v6582 = vsel %vm148, %v6514, 0
    %v6585 = vsel %vm148, %v6515, 0
    %v6588 = vsel %vm148, %v6516, 0
    %v6591 = vsel %vm148, %v6517, 0
    %v6594 = vsel %vm148, %v6518, 0
    %v6597 = vsel %vm148, %v6519, 0
    %v6600 = vsel %vm148, %v6520, 0
    %v6603 = vsel %vm148, %v6521, 0
    %v6606 = vsel %vm148, %v6522, 0
    %v6609 = vsel %vm148, %v6523, 0
    %v6612 = vsel %vm148, %v6524, 0
    %v6615 = vsel %vm148, %v6525, 0
    %v6618 = vsel %vm148, %v6526, 0
    %v6621 = vsel %vm148, %v6527, 0
    %v6624 = vsel %vm148, %v6528, 0
    %v6627 = vsel %vm148, %v6529, 0
    %v6630 = vsel %vm148, %v6530, 0
    %v6633 = vsel %vm148, %v6531, 0
    %v6636 = vsel %vm148, %v6532, 0
    %v6639 = vsel %vm148, %v6533, 0
    %v6642 = vsel %vm148, %v6534, 0
    %v6645 = vsel %vm148, %v6535, 0
    %v6648 = vsel %vm148, %v6536, 0
    %v6651 = vsel %vm148, %v6537, 0
    %v6654 = vsel %vm148, %v6538, 0
    %v6657 = vsel %vm148, %v6539, 0
    %v6660 = vsel %vm148, %v6540, 0
    %v6663 = vsel %vm148, %v6541, 0
    %v6666 = vsel %vm148, %v6542, 0
    %v6669 = vand.u32 %v6550, %v269
    %6671 = vmatprep.subr.bf16.mxu0 0
    %6672 = vmatpush1.bf16.msra.mxu0 %v6669
    %6673 = vmatprep.subr.bf16.mxu0 0
    %6674 = vmatpush1.bf16.msra.mxu0 0
    %6675 = vmatprep.subr.bf16.mxu0 0
    %6676 = vmatpush1.bf16.msra.mxu0 0
    %6677 = vmatprep.subr.bf16.mxu0 0
    %6678 = vmatpush1.bf16.msra.mxu0 0
    %6679 = vmatprep.subr.bf16.mxu0 0
    %6680 = vmatpush1.bf16.msra.mxu0 0
    %6681 = vmatprep.subr.bf16.mxu0 0
    %6682 = vmatpush1.bf16.msra.mxu0 0
    %6683 = vmatprep.subr.bf16.mxu0 0
    %6684 = vmatpush1.bf16.msra.mxu0 0
    %6685 = vmatprep.subr.bf16.mxu0 0
    %6686 = vmatpush1.bf16.msra.mxu0 0
    %6687 = vmatprep.subr.bf16.mxu0 0
    %6688 = vmatpush1.bf16.msra.mxu0 0
    %6689 = vmatprep.subr.bf16.mxu0 0
    %6690 = vmatpush1.bf16.msra.mxu0 0
    %6691 = vmatprep.subr.bf16.mxu0 0
    %6692 = vmatpush1.bf16.msra.mxu0 0
    %6693 = vmatprep.subr.bf16.mxu0 0
    %6694 = vmatpush1.bf16.msra.mxu0 0
    %6695 = vmatprep.subr.bf16.mxu0 0
    %6696 = vmatpush1.bf16.msra.mxu0 0
    %6697 = vmatprep.subr.bf16.mxu0 0
    %6698 = vmatpush1.bf16.msra.mxu0 0
    %6699 = vmatprep.subr.bf16.mxu0 0
    %6700 = vmatpush1.bf16.msra.mxu0 0
    %6701 = vmatprep.subr.bf16.mxu0 0
    %6702 = vmatpush1.bf16.msra.mxu0 0
    %6703 = vmatprep.mubr.bf16.mxu0 0
    %6704 = vmatmul.mubr.bf16.gmra.mrb[0].mxu0 %v6552
    %v6705 = vpop.f32.mrb[0].mxu0
    %v6706 = vadd.f32 0.0, %v6705
    %v6707 = vpop.f32.mrb[0].mxu0
    %v6708 = vpop.f32.mrb[0].mxu0
    %v6709 = vadd.f32 0.0, %v6708
    %v6710 = vpop.f32.mrb[0].mxu0
    %6711 = vmatprep.mubr.bf16.mxu0 0
    %6712 = vmatmul.mubr.bf16.gmra.mrb[0].mxu0 %v6555
    %v6713 = vpop.f32.mrb[0].mxu0
    %v6714 = vadd.f32 0.0, %v6713
    %v6715 = vpop.f32.mrb[0].mxu0
    %v6716 = vpop.f32.mrb[0].mxu0
    %v6717 = vadd.f32 0.0, %v6716
    %v6718 = vpop.f32.mrb[0].mxu0
    %6719 = vmatprep.mubr.bf16.mxu0 0
    %6720 = vmatmul.mubr.bf16.gmra.mrb[0].mxu0 %v6558
    %v6721 = vpop.f32.mrb[0].mxu0
    %v6722 = vadd.f32 0.0, %v6721
    %v6723 = vpop.f32.mrb[0].mxu0
    %v6724 = vpop.f32.mrb[0].mxu0
    %v6725 = vadd.f32 0.0, %v6724
    %v6726 = vpop.f32.mrb[0].mxu0
    %6727 = vmatprep.mubr.bf16.mxu0 0
    %6728 = vmatmul.mubr.bf16.gmra.mrb[0].mxu0 %v6561
    %v6729 = vpop.f32.mrb[0].mxu0
    %v6730 = vadd.f32 0.0, %v6729
    %v6731 = vpop.f32.mrb[0].mxu0
    %v6732 = vpop.f32.mrb[0].mxu0
    %v6733 = vadd.f32 0.0, %v6732
    %v6734 = vpop.f32.mrb[0].mxu0
    %6735 = vmatprep.mubr.bf16.mxu0 0
    %6736 = vmatmul.mubr.bf16.gmra.mrb[0].mxu0 %v6564
    %v6737 = vpop.f32.mrb[0].mxu0
    %v6738 = vadd.f32 0.0, %v6737
    %v6739 = vpop.f32.mrb[0].mxu0
    %v6740 = vpop.f32.mrb[0].mxu0
    %v6741 = vadd.f32 0.0, %v6740
    %v6742 = vpop.f32.mrb[0].mxu0
    %6743 = vmatprep.mubr.bf16.mxu0 0
    %6744 = vmatmul.mubr.bf16.gmra.mrb[0].mxu0 %v6567
    %v6745 = vpop.f32.mrb[0].mxu0
    %v6746 = vadd.f32 0.0, %v6745
    %v6747 = vpop.f32.mrb[0].mxu0
    %v6748 = vpop.f32.mrb[0].mxu0
    %v6749 = vadd.f32 0.0, %v6748
    %v6750 = vpop.f32.mrb[0].mxu0
    %6751 = vmatprep.mubr.bf16.mxu0 0
    %6752 = vmatmul.mubr.bf16.gmra.mrb[0].mxu0 %v6570
    %v6753 = vpop.f32.mrb[0].mxu0
    %v6754 = vadd.f32 0.0, %v6753
    %v6755 = vpop.f32.mrb[0].mxu0
    %v6756 = vpop.f32.mrb[0].mxu0
    %v6757 = vadd.f32 0.0, %v6756
    %v6758 = vpop.f32.mrb[0].mxu0
    %6759 = vmatprep.mubr.bf16.mxu0 0
    %6760 = vmatmul.mubr.bf16.gmra.mrb[0].mxu0 %v6573
    %v6761 = vpop.f32.mrb[0].mxu0
    %v6762 = vadd.f32 0.0, %v6761
    %v6763 = vpop.f32.mrb[0].mxu0
    %v6764 = vpop.f32.mrb[0].mxu0
    %v6765 = vadd.f32 0.0, %v6764
    %v6766 = vpop.f32.mrb[0].mxu0
    %6767 = vmatprep.mubr.bf16.mxu0 0
    %6768 = vmatmul.mubr.bf16.gmra.mrb[0].mxu0 %v6576
    %v6769 = vpop.f32.mrb[0].mxu0
    %v6770 = vadd.f32 0.0, %v6769
    %v6771 = vpop.f32.mrb[0].mxu0
    %v6772 = vpop.f32.mrb[0].mxu0
    %v6773 = vadd.f32 0.0, %v6772
    %v6774 = vpop.f32.mrb[0].mxu0
    %6775 = vmatprep.mubr.bf16.mxu0 0
    %6776 = vmatmul.mubr.bf16.gmra.mrb[0].mxu0 %v6579
    %v6777 = vpop.f32.mrb[0].mxu0
    %v6778 = vadd.f32 0.0, %v6777
    %v6779 = vpop.f32.mrb[0].mxu0
    %v6780 = vpop.f32.mrb[0].mxu0
    %v6781 = vadd.f32 0.0, %v6780
    %v6782 = vpop.f32.mrb[0].mxu0
    %6783 = vmatprep.mubr.bf16.mxu0 0
    %6784 = vmatmul.mubr.bf16.gmra.mrb[0].mxu0 %v6582
    %v6785 = vpop.f32.mrb[0].mxu0
    %v6786 = vadd.f32 0.0, %v6785
    %v6787 = vpop.f32.mrb[0].mxu0
    %v6788 = vpop.f32.mrb[0].mxu0
    %v6789 = vadd.f32 0.0, %v6788
    %v6790 = vpop.f32.mrb[0].mxu0
    %6791 = vmatprep.mubr.bf16.mxu0 0
    %6792 = vmatmul.mubr.bf16.gmra.mrb[0].mxu0 %v6585
    %v6793 = vpop.f32.mrb[0].mxu0
    %v6794 = vadd.f32 0.0, %v6793
    %v6795 = vpop.f32.mrb[0].mxu0
    %v6796 = vpop.f32.mrb[0].mxu0
    %v6797 = vadd.f32 0.0, %v6796
    %v6798 = vpop.f32.mrb[0].mxu0
    %6799 = vmatprep.mubr.bf16.mxu0 0
    %6800 = vmatmul.mubr.bf16.gmra.mrb[0].mxu0 %v6588
    %v6801 = vpop.f32.mrb[0].mxu0
    %v6802 = vadd.f32 0.0, %v6801
    %v6803 = vpop.f32.mrb[0].mxu0
    %v6804 = vpop.f32.mrb[0].mxu0
    %v6805 = vadd.f32 0.0, %v6804
    %v6806 = vpop.f32.mrb[0].mxu0
    %6807 = vmatprep.mubr.bf16.mxu0 0
    %6808 = vmatmul.mubr.bf16.gmra.mrb[0].mxu0 %v6591
    %v6809 = vpop.f32.mrb[0].mxu0
    %v6810 = vadd.f32 0.0, %v6809
    %v6811 = vpop.f32.mrb[0].mxu0
    %v6812 = vpop.f32.mrb[0].mxu0
    %v6813 = vadd.f32 0.0, %v6812
    %v6814 = vpop.f32.mrb[0].mxu0
    %6815 = vmatprep.mubr.bf16.mxu0 0
    %6816 = vmatmul.mubr.bf16.gmra.mrb[0].mxu0 %v6594
    %v6817 = vpop.f32.mrb[0].mxu0
    %v6818 = vadd.f32 0.0, %v6817
    %v6819 = vpop.f32.mrb[0].mxu0
    %v6820 = vpop.f32.mrb[0].mxu0
    %v6821 = vadd.f32 0.0, %v6820
    %v6822 = vpop.f32.mrb[0].mxu0
    %6823 = vmatprep.mubr.bf16.mxu0 0
    %6824 = vmatmul.mubr.bf16.gmra.mrb[0].mxu0 %v6597
    %v6825 = vpop.f32.mrb[0].mxu0
    %v6826 = vadd.f32 0.0, %v6825
    %v6827 = vpop.f32.mrb[0].mxu0
    %v6828 = vpop.f32.mrb[0].mxu0
    %v6829 = vadd.f32 0.0, %v6828
    %v6830 = vpop.f32.mrb[0].mxu0
    %6831 = vmatprep.mubr.bf16.mxu0 0
    %6832 = vmatmul.mubr.bf16.gmra.mrb[0].mxu0 %v6600
    %v6833 = vpop.f32.mrb[0].mxu0
    %v6834 = vadd.f32 0.0, %v6833
    %v6835 = vpop.f32.mrb[0].mxu0
    %v6836 = vpop.f32.mrb[0].mxu0
    %v6837 = vadd.f32 0.0, %v6836
    %v6838 = vpop.f32.mrb[0].mxu0
    %6839 = vmatprep.mubr.bf16.mxu0 0
    %6840 = vmatmul.mubr.bf16.gmra.mrb[0].mxu0 %v6603
    %v6841 = vpop.f32.mrb[0].mxu0
    %v6842 = vadd.f32 0.0, %v6841
    %v6843 = vpop.f32.mrb[0].mxu0
    %v6844 = vpop.f32.mrb[0].mxu0
    %v6845 = vadd.f32 0.0, %v6844
    %v6846 = vpop.f32.mrb[0].mxu0
    %6847 = vmatprep.mubr.bf16.mxu0 0
    %6848 = vmatmul.mubr.bf16.gmra.mrb[0].mxu0 %v6606
    %v6849 = vpop.f32.mrb[0].mxu0
    %v6850 = vadd.f32 0.0, %v6849
    %v6851 = vpop.f32.mrb[0].mxu0
    %v6852 = vpop.f32.mrb[0].mxu0
    %v6853 = vadd.f32 0.0, %v6852
    %v6854 = vpop.f32.mrb[0].mxu0
    %6855 = vmatprep.mubr.bf16.mxu0 0
    %6856 = vmatmul.mubr.bf16.gmra.mrb[0].mxu0 %v6609
    %v6857 = vpop.f32.mrb[0].mxu0
    %v6858 = vadd.f32 0.0, %v6857
    %v6859 = vpop.f32.mrb[0].mxu0
    %v6860 = vpop.f32.mrb[0].mxu0
    %v6861 = vadd.f32 0.0, %v6860
    %v6862 = vpop.f32.mrb[0].mxu0
    %6863 = vmatprep.mubr.bf16.mxu0 0
    %6864 = vmatmul.mubr.bf16.gmra.mrb[0].mxu0 %v6612
    %v6865 = vpop.f32.mrb[0].mxu0
    %v6866 = vadd.f32 0.0, %v6865
    %v6867 = vpop.f32.mrb[0].mxu0
    %v6868 = vpop.f32.mrb[0].mxu0
    %v6869 = vadd.f32 0.0, %v6868
    %v6870 = vpop.f32.mrb[0].mxu0
    %6871 = vmatprep.mubr.bf16.mxu0 0
    %6872 = vmatmul.mubr.bf16.gmra.mrb[0].mxu0 %v6615
    %v6873 = vpop.f32.mrb[0].mxu0
    %v6874 = vadd.f32 0.0, %v6873
    %v6875 = vpop.f32.mrb[0].mxu0
    %v6876 = vpop.f32.mrb[0].mxu0
    %v6877 = vadd.f32 0.0, %v6876
    %v6878 = vpop.f32.mrb[0].mxu0
    %6879 = vmatprep.mubr.bf16.mxu0 0
    %6880 = vmatmul.mubr.bf16.gmra.mrb[0].mxu0 %v6618
    %v6881 = vpop.f32.mrb[0].mxu0
    %v6882 = vadd.f32 0.0, %v6881
    %v6883 = vpop.f32.mrb[0].mxu0
    %v6884 = vpop.f32.mrb[0].mxu0
    %v6885 = vadd.f32 0.0, %v6884
    %v6886 = vpop.f32.mrb[0].mxu0
    %6887 = vmatprep.mubr.bf16.mxu0 0
    %6888 = vmatmul.mubr.bf16.gmra.mrb[0].mxu0 %v6621
    %v6889 = vpop.f32.mrb[0].mxu0
    %v6890 = vadd.f32 0.0, %v6889
    %v6891 = vpop.f32.mrb[0].mxu0
    %v6892 = vpop.f32.mrb[0].mxu0
    %v6893 = vadd.f32 0.0, %v6892
    %v6894 = vpop.f32.mrb[0].mxu0
    %6895 = vmatprep.mubr.bf16.mxu0 0
    %6896 = vmatmul.mubr.bf16.gmra.mrb[0].mxu0 %v6624
    %v6897 = vpop.f32.mrb[0].mxu0
    %v6898 = vadd.f32 0.0, %v6897
    %v6899 = vpop.f32.mrb[0].mxu0
    %v6900 = vpop.f32.mrb[0].mxu0
    %v6901 = vadd.f32 0.0, %v6900
    %v6902 = vpop.f32.mrb[0].mxu0
    %6903 = vmatprep.mubr.bf16.mxu0 0
    %6904 = vmatmul.mubr.bf16.gmra.mrb[0].mxu0 %v6627
    %v6905 = vpop.f32.mrb[0].mxu0
    %v6906 = vadd.f32 0.0, %v6905
    %v6907 = vpop.f32.mrb[0].mxu0
    %v6908 = vpop.f32.mrb[0].mxu0
    %v6909 = vadd.f32 0.0, %v6908
    %v6910 = vpop.f32.mrb[0].mxu0
    %6911 = vmatprep.mubr.bf16.mxu0 0
    %6912 = vmatmul.mubr.bf16.gmra.mrb[0].mxu0 %v6630
    %v6913 = vpop.f32.mrb[0].mxu0
    %v6914 = vadd.f32 0.0, %v6913
    %v6915 = vpop.f32.mrb[0].mxu0
    %v6916 = vpop.f32.mrb[0].mxu0
    %v6917 = vadd.f32 0.0, %v6916
    %v6918 = vpop.f32.mrb[0].mxu0
    %6919 = vmatprep.mubr.bf16.mxu0 0
    %6920 = vmatmul.mubr.bf16.gmra.mrb[0].mxu0 %v6633
    %v6921 = vpop.f32.mrb[0].mxu0
    %v6922 = vadd.f32 0.0, %v6921
    %v6923 = vpop.f32.mrb[0].mxu0
    %v6924 = vpop.f32.mrb[0].mxu0
    %v6925 = vadd.f32 0.0, %v6924
    %v6926 = vpop.f32.mrb[0].mxu0
    %6927 = vmatprep.mubr.bf16.mxu0 0
    %6928 = vmatmul.mubr.bf16.gmra.mrb[0].mxu0 %v6636
    %v6929 = vpop.f32.mrb[0].mxu0
    %v6930 = vadd.f32 0.0, %v6929
    %v6931 = vpop.f32.mrb[0].mxu0
    %v6932 = vpop.f32.mrb[0].mxu0
    %v6933 = vadd.f32 0.0, %v6932
    %v6934 = vpop.f32.mrb[0].mxu0
    %6935 = vmatprep.mubr.bf16.mxu0 0
    %6936 = vmatmul.mubr.bf16.gmra.mrb[0].mxu0 %v6639
    %v6937 = vpop.f32.mrb[0].mxu0
    %v6938 = vadd.f32 0.0, %v6937
    %v6939 = vpop.f32.mrb[0].mxu0
    %v6940 = vpop.f32.mrb[0].mxu0
    %v6941 = vadd.f32 0.0, %v6940
    %v6942 = vpop.f32.mrb[0].mxu0
    %6943 = vmatprep.mubr.bf16.mxu0 0
    %6944 = vmatmul.mubr.bf16.gmra.mrb[0].mxu0 %v6642
    %v6945 = vpop.f32.mrb[0].mxu0
    %v6946 = vadd.f32 0.0, %v6945
    %v6947 = vpop.f32.mrb[0].mxu0
    %v6948 = vpop.f32.mrb[0].mxu0
    %v6949 = vadd.f32 0.0, %v6948
    %v6950 = vpop.f32.mrb[0].mxu0
    %6951 = vmatprep.mubr.bf16.mxu0 0
    %6952 = vmatmul.mubr.bf16.gmra.mrb[0].mxu0 %v6645
    %v6953 = vpop.f32.mrb[0].mxu0
    %v6954 = vadd.f32 0.0, %v6953
    %v6955 = vpop.f32.mrb[0].mxu0
    %v6956 = vpop.f32.mrb[0].mxu0
    %v6957 = vadd.f32 0.0, %v6956
    %v6958 = vpop.f32.mrb[0].mxu0
    %6959 = vmatprep.mubr.bf16.mxu0 0
    %6960 = vmatmul.mubr.bf16.gmra.mrb[0].mxu0 %v6648
    %v6961 = vpop.f32.mrb[0].mxu0
    %v6962 = vadd.f32 0.0, %v6961
    %v6963 = vpop.f32.mrb[0].mxu0
    %v6964 = vpop.f32.mrb[0].mxu0
    %v6965 = vadd.f32 0.0, %v6964
    %v6966 = vpop.f32.mrb[0].mxu0
    %6967 = vmatprep.mubr.bf16.mxu0 0
    %6968 = vmatmul.mubr.bf16.gmra.mrb[0].mxu0 %v6651
    %v6969 = vpop.f32.mrb[0].mxu0
    %v6970 = vadd.f32 0.0, %v6969
    %v6971 = vpop.f32.mrb[0].mxu0
    %v6972 = vpop.f32.mrb[0].mxu0
    %v6973 = vadd.f32 0.0, %v6972
    %v6974 = vpop.f32.mrb[0].mxu0
    %6975 = vmatprep.mubr.bf16.mxu0 0
    %6976 = vmatmul.mubr.bf16.gmra.mrb[0].mxu0 %v6654
    %v6977 = vpop.f32.mrb[0].mxu0
    %v6978 = vadd.f32 0.0, %v6977
    %v6979 = vpop.f32.mrb[0].mxu0
    %v6980 = vpop.f32.mrb[0].mxu0
    %v6981 = vadd.f32 0.0, %v6980
    %v6982 = vpop.f32.mrb[0].mxu0
    %6983 = vmatprep.mubr.bf16.mxu0 0
    %6984 = vmatmul.mubr.bf16.gmra.mrb[0].mxu0 %v6657
    %v6985 = vpop.f32.mrb[0].mxu0
    %v6986 = vadd.f32 0.0, %v6985
    %v6987 = vpop.f32.mrb[0].mxu0
    %v6988 = vpop.f32.mrb[0].mxu0
    %v6989 = vadd.f32 0.0, %v6988
    %v6990 = vpop.f32.mrb[0].mxu0
    %6991 = vmatprep.mubr.bf16.mxu0 0
    %6992 = vmatmul.mubr.bf16.gmra.mrb[0].mxu0 %v6660
    %v6993 = vpop.f32.mrb[0].mxu0
    %v6994 = vadd.f32 0.0, %v6993
    %v6995 = vpop.f32.mrb[0].mxu0
    %v6996 = vpop.f32.mrb[0].mxu0
    %v6997 = vadd.f32 0.0, %v6996
    %v6998 = vpop.f32.mrb[0].mxu0
    %6999 = vmatprep.mubr.bf16.mxu0 0
    %7000 = vmatmul.mubr.bf16.gmra.mrb[0].mxu0 %v6663
    %v7001 = vpop.f32.mrb[0].mxu0
    %v7002 = vadd.f32 0.0, %v7001
    %v7003 = vpop.f32.mrb[0].mxu0
    %v7004 = vpop.f32.mrb[0].mxu0
    %v7005 = vadd.f32 0.0, %v7004
    %v7006 = vpop.f32.mrb[0].mxu0
    %7007 = vmatprep.mubr.bf16.mxu0 0
    %7008 = vmatmul.mubr.bf16.gmra.mrb[0].mxu0 %v6666
    %v7009 = vpop.f32.mrb[0].mxu0
    %v7010 = vadd.f32 0.0, %v7009
    %v7011 = vpop.f32.mrb[0].mxu0
    %v7012 = vpop.f32.mrb[0].mxu0
    %v7013 = vpop.f32.mrb[0].mxu0
    %7014 = vdwg.mxu0
    %v7015 = vld [vmem:[#allocation2] sm:$0xff]
    %v7016 = vld [vmem:[#allocation2 + $0x8] sm:$0xff]
    %v7017 = vld [vmem:[#allocation2 + $0x10] sm:$0xff]
    %v7018 = vld [vmem:[#allocation2 + $0x18] sm:$0xff]
    %v7019 = vld [vmem:[#allocation2 + $0x20] sm:$0xff]
    %v7020 = vld [vmem:[#allocation2 + $0x28] sm:$0xff]
    %v7021 = vld [vmem:[#allocation2 + $0x30] sm:$0xff]
    %v7022 = vld [vmem:[#allocation2 + $0x38] sm:$0xff]
    %v7023 = vld [vmem:[#allocation2 + $0x40] sm:$0xff]
    %v7024 = vld [vmem:[#allocation2 + $0x48] sm:$0xff]
    %v7025 = vld [vmem:[#allocation2 + $0x50] sm:$0xff]
    %v7026 = vld [vmem:[#allocation2 + $0x58] sm:$0xff]
    %v7027 = vld [vmem:[#allocation2 + $0x60] sm:$0xff]
    %v7028 = vld [vmem:[#allocation2 + $0x68] sm:$0xff]
    %v7029 = vld [vmem:[#allocation2 + $0x70] sm:$0xff]
    %v7030 = vld [vmem:[#allocation2 + $0x78] sm:$0xff]
    %v7031 = vld [vmem:[#allocation2 + $0x80] sm:$0xff]
    %v7032 = vld [vmem:[#allocation2 + $0x88] sm:$0xff]
    %v7033 = vld [vmem:[#allocation2 + $0x90] sm:$0xff]
    %v7034 = vld [vmem:[#allocation2 + $0x98] sm:$0xff]
    %v7035 = vld [vmem:[#allocation2 + $0xa0] sm:$0xff]
    %v7036 = vld [vmem:[#allocation2 + $0xa8] sm:$0xff]
    %v7037 = vld [vmem:[#allocation2 + $0xb0] sm:$0xff]
    %v7038 = vld [vmem:[#allocation2 + $0xb8] sm:$0xff]
    %v7039 = vld [vmem:[#allocation2 + $0xc0] sm:$0xff]
    %v7040 = vld [vmem:[#allocation2 + $0xc8] sm:$0xff]
    %v7041 = vld [vmem:[#allocation2 + $0xd0] sm:$0xff]
    %v7042 = vld [vmem:[#allocation2 + $0xd8] sm:$0xff]
    %v7043 = vld [vmem:[#allocation2 + $0xe0] sm:$0xff]
    %v7044 = vld [vmem:[#allocation2 + $0xe8] sm:$0xff]
    %v7045 = vld [vmem:[#allocation2 + $0xf0] sm:$0xff]
    %v7046 = vld [vmem:[#allocation2 + $0xf8] sm:$0xff]
    %v7047 = vld [vmem:[#allocation2 + $0x100] sm:$0xff]
    %v7048 = vld [vmem:[#allocation2 + $0x108] sm:$0xff]
    %v7049 = vld [vmem:[#allocation2 + $0x110] sm:$0xff]
    %v7050 = vld [vmem:[#allocation2 + $0x118] sm:$0xff]
    %v7051 = vld [vmem:[#allocation2 + $0x120] sm:$0xff]
    %v7052 = vld [vmem:[#allocation2 + $0x128] sm:$0xff]
    %v7053 = vld [vmem:[#allocation2 + $0x130] sm:$0xff]
    %v7054 = vld [vmem:[#allocation2 + $0x138] sm:$0xff]
    %v7055 = vld [vmem:[#allocation2 + $0x140] sm:$0xff]
    %v7056 = vld [vmem:[#allocation2 + $0x148] sm:$0xff]
    %v7057 = vld [vmem:[#allocation2 + $0x150] sm:$0xff]
    %v7058 = vld [vmem:[#allocation2 + $0x158] sm:$0xff]
    %v7059 = vld [vmem:[#allocation2 + $0x160] sm:$0xff]
    %v7060 = vld [vmem:[#allocation2 + $0x168] sm:$0xff]
    %v7061 = vld [vmem:[#allocation2 + $0x170] sm:$0xff]
    %v7062 = vld [vmem:[#allocation2 + $0x178] sm:$0xff]
    %v7063 = vld [vmem:[#allocation2 + $0x180] sm:$0xff]
    %v7064 = vld [vmem:[#allocation2 + $0x188] sm:$0xff]
    %v7065 = vld [vmem:[#allocation2 + $0x190] sm:$0xff]
    %v7066 = vld [vmem:[#allocation2 + $0x198] sm:$0xff]
    %v7067 = vld [vmem:[#allocation2 + $0x1a0] sm:$0xff]
    %v7068 = vld [vmem:[#allocation2 + $0x1a8] sm:$0xff]
    %v7069 = vld [vmem:[#allocation2 + $0x1b0] sm:$0xff]
    %v7070 = vld [vmem:[#allocation2 + $0x1b8] sm:$0xff]
    %v7071 = vld [vmem:[#allocation2 + $0x1c0] sm:$0xff]
    %v7072 = vld [vmem:[#allocation2 + $0x1c8] sm:$0xff]
    %v7073 = vld [vmem:[#allocation2 + $0x1d0] sm:$0xff]
    %v7074 = vld [vmem:[#allocation2 + $0x1d8] sm:$0xff]
    %v7075 = vld [vmem:[#allocation2 + $0x1e0] sm:$0xff]
    %v7076 = vld [vmem:[#allocation2 + $0x1e8] sm:$0xff]
    %v7077 = vld [vmem:[#allocation2 + $0x1f0] sm:$0xff]
    %v7078 = vld [vmem:[#allocation2 + $0x1f8] sm:$0xff]
    %v7079 = vld [vmem:[#allocation2 + $0x200] sm:$0xff]
    %v7080 = vld [vmem:[#allocation2 + $0x208] sm:$0xff]
    %v7081 = vld [vmem:[#allocation2 + $0x210] sm:$0xff]
    %v7082 = vld [vmem:[#allocation2 + $0x218] sm:$0xff]
    %v7083 = vld [vmem:[#allocation2 + $0x220] sm:$0xff]
    %v7084 = vld [vmem:[#allocation2 + $0x228] sm:$0xff]
    %v7085 = vld [vmem:[#allocation2 + $0x230] sm:$0xff]
    %v7086 = vld [vmem:[#allocation2 + $0x238] sm:$0xff]
    %v7087 = vld [vmem:[#allocation2 + $0x240] sm:$0xff]
    %v7088 = vld [vmem:[#allocation2 + $0x248] sm:$0xff]
    %v7089 = vld [vmem:[#allocation2 + $0x250] sm:$0xff]
    %v7090 = vld [vmem:[#allocation2 + $0x258] sm:$0xff]
    %v7091 = vld [vmem:[#allocation2 + $0x260] sm:$0xff]
    %v7092 = vadd.f32 %v7015, %v6706
    %v7093 = vadd.f32 %v7016, %v6709
    %v7094 = vadd.f32 %v7017, %v6714
    %v7095 = vadd.f32 %v7018, %v6717
    %v7096 = vadd.f32 %v7019, %v6722
    %v7097 = vadd.f32 %v7020, %v6725
    %v7098 = vadd.f32 %v7021, %v6730
    %v7099 = vadd.f32 %v7022, %v6733
    %v7100 = vadd.f32 %v7023, %v6738
    %v7101 = vadd.f32 %v7024, %v6741
    %v7102 = vadd.f32 %v7025, %v6746
    %v7103 = vadd.f32 %v7026, %v6749
    %v7104 = vadd.f32 %v7027, %v6754
    %v7105 = vadd.f32 %v7028, %v6757
    %v7106 = vadd.f32 %v7029, %v6762
    %v7107 = vadd.f32 %v7030, %v6765
    %v7108 = vadd.f32 %v7031, %v6770
    %v7109 = vadd.f32 %v7032, %v6773
    %v7110 = vadd.f32 %v7033, %v6778
    %v7111 = vadd.f32 %v7034, %v6781
    %v7112 = vadd.f32 %v7035, %v6786
    %v7113 = vadd.f32 %v7036, %v6789
    %v7114 = vadd.f32 %v7037, %v6794
    %v7115 = vadd.f32 %v7038, %v6797
    %v7116 = vadd.f32 %v7039, %v6802
    %v7117 = vadd.f32 %v7040, %v6805
    %v7118 = vadd.f32 %v7041, %v6810
    %v7119 = vadd.f32 %v7042, %v6813
    %v7120 = vadd.f32 %v7043, %v6818
    %v7121 = vadd.f32 %v7044, %v6821
    %v7122 = vadd.f32 %v7045, %v6826
    %v7123 = vadd.f32 %v7046, %v6829
    %v7124 = vadd.f32 %v7047, %v6834
    %v7125 = vadd.f32 %v7048, %v6837
    %v7126 = vadd.f32 %v7049, %v6842
    %v7127 = vadd.f32 %v7050, %v6845
    %v7128 = vadd.f32 %v7051, %v6850
    %v7129 = vadd.f32 %v7052, %v6853
    %v7130 = vadd.f32 %v7053, %v6858
    %v7131 = vadd.f32 %v7054, %v6861
    %v7132 = vadd.f32 %v7055, %v6866
    %v7133 = vadd.f32 %v7056, %v6869
    %v7134 = vadd.f32 %v7057, %v6874
    %v7135 = vadd.f32 %v7058, %v6877
    %v7136 = vadd.f32 %v7059, %v6882
    %v7137 = vadd.f32 %v7060, %v6885
    %v7138 = vadd.f32 %v7061, %v6890
    %v7139 = vadd.f32 %v7062, %v6893
    %v7140 = vadd.f32 %v7063, %v6898
    %v7141 = vadd.f32 %v7064, %v6901
    %v7142 = vadd.f32 %v7065, %v6906
    %v7143 = vadd.f32 %v7066, %v6909
    %v7144 = vadd.f32 %v7067, %v6914
    %v7145 = vadd.f32 %v7068, %v6917
    %v7146 = vadd.f32 %v7069, %v6922
    %v7147 = vadd.f32 %v7070, %v6925
    %v7148 = vadd.f32 %v7071, %v6930
    %v7149 = vadd.f32 %v7072, %v6933
    %v7150 = vadd.f32 %v7073, %v6938
    %v7151 = vadd.f32 %v7074, %v6941
    %v7152 = vadd.f32 %v7075, %v6946
    %v7153 = vadd.f32 %v7076, %v6949
    %v7154 = vadd.f32 %v7077, %v6954
    %v7155 = vadd.f32 %v7078, %v6957
    %v7156 = vadd.f32 %v7079, %v6962
    %v7157 = vadd.f32 %v7080, %v6965
    %v7158 = vadd.f32 %v7081, %v6970
    %v7159 = vadd.f32 %v7082, %v6973
    %v7160 = vadd.f32 %v7083, %v6978
    %v7161 = vadd.f32 %v7084, %v6981
    %v7162 = vadd.f32 %v7085, %v6986
    %v7163 = vadd.f32 %v7086, %v6989
    %v7164 = vadd.f32 %v7087, %v6994
    %v7165 = vadd.f32 %v7088, %v6997
    %v7166 = vadd.f32 %v7089, %v7002
    %v7167 = vadd.f32 %v7090, %v7005
    %v7168 = vadd.f32 %v7091, %v7010
    %7169 = vst [vmem:[#allocation2] sm:$0xff] %v7092
    %7170 = vst [vmem:[#allocation2 + $0x8] sm:$0xff] %v7093
    %7171 = vst [vmem:[#allocation2 + $0x10] sm:$0xff] %v7094
    %7172 = vst [vmem:[#allocation2 + $0x18] sm:$0xff] %v7095
    %7173 = vst [vmem:[#allocation2 + $0x20] sm:$0xff] %v7096
    %7174 = vst [vmem:[#allocation2 + $0x28] sm:$0xff] %v7097
    %7175 = vst [vmem:[#allocation2 + $0x30] sm:$0xff] %v7098
    %7176 = vst [vmem:[#allocation2 + $0x38] sm:$0xff] %v7099
    %7177 = vst [vmem:[#allocation2 + $0x40] sm:$0xff] %v7100
    %7178 = vst [vmem:[#allocation2 + $0x48] sm:$0xff] %v7101
    %7179 = vst [vmem:[#allocation2 + $0x50] sm:$0xff] %v7102
    %7180 = vst [vmem:[#allocation2 + $0x58] sm:$0xff] %v7103
    %7181 = vst [vmem:[#allocation2 + $0x60] sm:$0xff] %v7104
    %7182 = vst [vmem:[#allocation2 + $0x68] sm:$0xff] %v7105
    %7183 = vst [vmem:[#allocation2 + $0x70] sm:$0xff] %v7106
    %7184 = vst [vmem:[#allocation2 + $0x78] sm:$0xff] %v7107
    %7185 = vst [vmem:[#allocation2 + $0x80] sm:$0xff] %v7108
    %7186 = vst [vmem:[#allocation2 + $0x88] sm:$0xff] %v7109
    %7187 = vst [vmem:[#allocation2 + $0x90] sm:$0xff] %v7110
    %7188 = vst [vmem:[#allocation2 + $0x98] sm:$0xff] %v7111
    %7189 = vst [vmem:[#allocation2 + $0xa0] sm:$0xff] %v7112
    %7190 = vst [vmem:[#allocation2 + $0xa8] sm:$0xff] %v7113
    %7191 = vst [vmem:[#allocation2 + $0xb0] sm:$0xff] %v7114
    %7192 = vst [vmem:[#allocation2 + $0xb8] sm:$0xff] %v7115
    %7193 = vst [vmem:[#allocation2 + $0xc0] sm:$0xff] %v7116
    %7194 = vst [vmem:[#allocation2 + $0xc8] sm:$0xff] %v7117
    %7195 = vst [vmem:[#allocation2 + $0xd0] sm:$0xff] %v7118
    %7196 = vst [vmem:[#allocation2 + $0xd8] sm:$0xff] %v7119
    %7197 = vst [vmem:[#allocation2 + $0xe0] sm:$0xff] %v7120
    %7198 = vst [vmem:[#allocation2 + $0xe8] sm:$0xff] %v7121
    %7199 = vst [vmem:[#allocation2 + $0xf0] sm:$0xff] %v7122
    %7200 = vst [vmem:[#allocation2 + $0xf8] sm:$0xff] %v7123
    %7201 = vst [vmem:[#allocation2 + $0x100] sm:$0xff] %v7124
    %7202 = vst [vmem:[#allocation2 + $0x108] sm:$0xff] %v7125
    %7203 = vst [vmem:[#allocation2 + $0x110] sm:$0xff] %v7126
    %7204 = vst [vmem:[#allocation2 + $0x118] sm:$0xff] %v7127
    %7205 = vst [vmem:[#allocation2 + $0x120] sm:$0xff] %v7128
    %7206 = vst [vmem:[#allocation2 + $0x128] sm:$0xff] %v7129
    %7207 = vst [vmem:[#allocation2 + $0x130] sm:$0xff] %v7130
    %7208 = vst [vmem:[#allocation2 + $0x138] sm:$0xff] %v7131
    %7209 = vst [vmem:[#allocation2 + $0x140] sm:$0xff] %v7132
    %7210 = vst [vmem:[#allocation2 + $0x148] sm:$0xff] %v7133
    %7211 = vst [vmem:[#allocation2 + $0x150] sm:$0xff] %v7134
    %7212 = vst [vmem:[#allocation2 + $0x158] sm:$0xff] %v7135
    %7213 = vst [vmem:[#allocation2 + $0x160] sm:$0xff] %v7136
    %7214 = vst [vmem:[#allocation2 + $0x168] sm:$0xff] %v7137
    %7215 = vst [vmem:[#allocation2 + $0x170] sm:$0xff] %v7138
    %7216 = vst [vmem:[#allocation2 + $0x178] sm:$0xff] %v7139
    %7217 = vst [vmem:[#allocation2 + $0x180] sm:$0xff] %v7140
    %7218 = vst [vmem:[#allocation2 + $0x188] sm:$0xff] %v7141
    %7219 = vst [vmem:[#allocation2 + $0x190] sm:$0xff] %v7142
    %7220 = vst [vmem:[#allocation2 + $0x198] sm:$0xff] %v7143
    %7221 = vst [vmem:[#allocation2 + $0x1a0] sm:$0xff] %v7144
    %7222 = vst [vmem:[#allocation2 + $0x1a8] sm:$0xff] %v7145
    %7223 = vst [vmem:[#allocation2 + $0x1b0] sm:$0xff] %v7146
    %7224 = vst [vmem:[#allocation2 + $0x1b8] sm:$0xff] %v7147
    %7225 = vst [vmem:[#allocation2 + $0x1c0] sm:$0xff] %v7148
    %7226 = vst [vmem:[#allocation2 + $0x1c8] sm:$0xff] %v7149
    %7227 = vst [vmem:[#allocation2 + $0x1d0] sm:$0xff] %v7150
    %7228 = vst [vmem:[#allocation2 + $0x1d8] sm:$0xff] %v7151
    %7229 = vst [vmem:[#allocation2 + $0x1e0] sm:$0xff] %v7152
    %7230 = vst [vmem:[#allocation2 + $0x1e8] sm:$0xff] %v7153
    %7231 = vst [vmem:[#allocation2 + $0x1f0] sm:$0xff] %v7154
    %7232 = vst [vmem:[#allocation2 + $0x1f8] sm:$0xff] %v7155
    %7233 = vst [vmem:[#allocation2 + $0x200] sm:$0xff] %v7156
    %7234 = vst [vmem:[#allocation2 + $0x208] sm:$0xff] %v7157
    %7235 = vst [vmem:[#allocation2 + $0x210] sm:$0xff] %v7158
    %7236 = vst [vmem:[#allocation2 + $0x218] sm:$0xff] %v7159
    %7237 = vst [vmem:[#allocation2 + $0x220] sm:$0xff] %v7160
    %7238 = vst [vmem:[#allocation2 + $0x228] sm:$0xff] %v7161
    %7239 = vst [vmem:[#allocation2 + $0x230] sm:$0xff] %v7162
    %7240 = vst [vmem:[#allocation2 + $0x238] sm:$0xff] %v7163
    %7241 = vst [vmem:[#allocation2 + $0x240] sm:$0xff] %v7164
    %7242 = vst [vmem:[#allocation2 + $0x248] sm:$0xff] %v7165
    %7243 = vst [vmem:[#allocation2 + $0x250] sm:$0xff] %v7166
    %7244 = vst [vmem:[#allocation2 + $0x258] sm:$0xff] %v7167
    %7245 = vst [vmem:[#allocation2 + $0x260] sm:$0xff] %v7168
    %v7246 = vld [vmem:[#allocation2] sm:$0xff]
    %v7247 = vld [vmem:[#allocation2 + $0x8] sm:$0xff]
    %v7248 = vld [vmem:[#allocation2 + $0x10] sm:$0xff]
    %v7249 = vld [vmem:[#allocation2 + $0x18] sm:$0xff]
    %v7250 = vld [vmem:[#allocation2 + $0x20] sm:$0xff]
    %v7251 = vld [vmem:[#allocation2 + $0x28] sm:$0xff]
    %v7252 = vld [vmem:[#allocation2 + $0x30] sm:$0xff]
    %v7253 = vld [vmem:[#allocation2 + $0x38] sm:$0xff]
    %v7254 = vld [vmem:[#allocation2 + $0x40] sm:$0xff]
    %v7255 = vld [vmem:[#allocation2 + $0x48] sm:$0xff]
    %v7256 = vld [vmem:[#allocation2 + $0x50] sm:$0xff]
    %v7257 = vld [vmem:[#allocation2 + $0x58] sm:$0xff]
    %v7258 = vld [vmem:[#allocation2 + $0x60] sm:$0xff]
    %v7259 = vld [vmem:[#allocation2 + $0x68] sm:$0xff]
    %v7260 = vld [vmem:[#allocation2 + $0x70] sm:$0xff]
    %v7261 = vld [vmem:[#allocation2 + $0x78] sm:$0xff]
    %v7262 = vld [vmem:[#allocation2 + $0x80] sm:$0xff]
    %v7263 = vld [vmem:[#allocation2 + $0x88] sm:$0xff]
    %v7264 = vld [vmem:[#allocation2 + $0x90] sm:$0xff]
    %v7265 = vld [vmem:[#allocation2 + $0x98] sm:$0xff]
    %v7266 = vld [vmem:[#allocation2 + $0xa0] sm:$0xff]
    %v7267 = vld [vmem:[#allocation2 + $0xa8] sm:$0xff]
    %v7268 = vld [vmem:[#allocation2 + $0xb0] sm:$0xff]
    %v7269 = vld [vmem:[#allocation2 + $0xb8] sm:$0xff]
    %v7270 = vld [vmem:[#allocation2 + $0xc0] sm:$0xff]
    %v7271 = vld [vmem:[#allocation2 + $0xc8] sm:$0xff]
    %v7272 = vld [vmem:[#allocation2 + $0xd0] sm:$0xff]
    %v7273 = vld [vmem:[#allocation2 + $0xd8] sm:$0xff]
    %v7274 = vld [vmem:[#allocation2 + $0xe0] sm:$0xff]
    %v7275 = vld [vmem:[#allocation2 + $0xe8] sm:$0xff]
    %v7276 = vld [vmem:[#allocation2 + $0xf0] sm:$0xff]
    %v7277 = vld [vmem:[#allocation2 + $0xf8] sm:$0xff]
    %v7278 = vld [vmem:[#allocation2 + $0x100] sm:$0xff]
    %v7279 = vld [vmem:[#allocation2 + $0x108] sm:$0xff]
    %v7280 = vld [vmem:[#allocation2 + $0x110] sm:$0xff]
    %v7281 = vld [vmem:[#allocation2 + $0x118] sm:$0xff]
    %v7282 = vld [vmem:[#allocation2 + $0x120] sm:$0xff]
    %v7283 = vld [vmem:[#allocation2 + $0x128] sm:$0xff]
    %v7284 = vld [vmem:[#allocation2 + $0x130] sm:$0xff]
    %v7285 = vld [vmem:[#allocation2 + $0x138] sm:$0xff]
    %v7286 = vld [vmem:[#allocation2 + $0x140] sm:$0xff]
    %v7287 = vld [vmem:[#allocation2 + $0x148] sm:$0xff]
    %v7288 = vld [vmem:[#allocation2 + $0x150] sm:$0xff]
    %v7289 = vld [vmem:[#allocation2 + $0x158] sm:$0xff]
    %v7290 = vld [vmem:[#allocation2 + $0x160] sm:$0xff]
    %v7291 = vld [vmem:[#allocation2 + $0x168] sm:$0xff]
    %v7292 = vld [vmem:[#allocation2 + $0x170] sm:$0xff]
    %v7293 = vld [vmem:[#allocation2 + $0x178] sm:$0xff]
    %v7294 = vld [vmem:[#allocation2 + $0x180] sm:$0xff]
    %v7295 = vld [vmem:[#allocation2 + $0x188] sm:$0xff]
    %v7296 = vld [vmem:[#allocation2 + $0x190] sm:$0xff]
    %v7297 = vld [vmem:[#allocation2 + $0x198] sm:$0xff]
    %v7298 = vld [vmem:[#allocation2 + $0x1a0] sm:$0xff]
    %v7299 = vld [vmem:[#allocation2 + $0x1a8] sm:$0xff]
    %v7300 = vld [vmem:[#allocation2 + $0x1b0] sm:$0xff]
    %v7301 = vld [vmem:[#allocation2 + $0x1b8] sm:$0xff]
    %v7302 = vld [vmem:[#allocation2 + $0x1c0] sm:$0xff]
    %v7303 = vld [vmem:[#allocation2 + $0x1c8] sm:$0xff]
    %v7304 = vld [vmem:[#allocation2 + $0x1d0] sm:$0xff]
    %v7305 = vld [vmem:[#allocation2 + $0x1d8] sm:$0xff]
    %v7306 = vld [vmem:[#allocation2 + $0x1e0] sm:$0xff]
    %v7307 = vld [vmem:[#allocation2 + $0x1e8] sm:$0xff]
    %v7308 = vld [vmem:[#allocation2 + $0x1f0] sm:$0xff]
    %v7309 = vld [vmem:[#allocation2 + $0x1f8] sm:$0xff]
    %v7310 = vld [vmem:[#allocation2 + $0x200] sm:$0xff]
    %v7311 = vld [vmem:[#allocation2 + $0x208] sm:$0xff]
    %v7312 = vld [vmem:[#allocation2 + $0x210] sm:$0xff]
    %v7313 = vld [vmem:[#allocation2 + $0x218] sm:$0xff]
    %v7314 = vld [vmem:[#allocation2 + $0x220] sm:$0xff]
    %v7315 = vld [vmem:[#allocation2 + $0x228] sm:$0xff]
    %v7316 = vld [vmem:[#allocation2 + $0x230] sm:$0xff]
    %v7317 = vld [vmem:[#allocation2 + $0x238] sm:$0xff]
    %v7318 = vld [vmem:[#allocation2 + $0x240] sm:$0xff]
    %v7319 = vld [vmem:[#allocation2 + $0x248] sm:$0xff]
    %v7320 = vld [vmem:[#allocation2 + $0x250] sm:$0xff]
    %v7321 = vld [vmem:[#allocation2 + $0x258] sm:$0xff]
    %v7322 = vld [vmem:[#allocation2 + $0x260] sm:$0xff]
    %v7323 = vld [vmem:[%s2] sm:$0x1]
    %v7325 = vlaneseq
    %v7326 = vshrl.u32 %v7325, 7
    %v7327 = vsub.s32 0, %v7326
    %v7328 = vrot.slane %v7323, %v7327
    %v7330 = vadd.f32 %v7246, %v7328
    %v7331 = vadd.f32 %v7247, %v7328
    %v7332 = vadd.f32 %v7248, %v7328
    %v7333 = vadd.f32 %v7249, %v7328
    %v7334 = vadd.f32 %v7250, %v7328
    %v7335 = vadd.f32 %v7251, %v7328
    %v7336 = vadd.f32 %v7252, %v7328
    %v7337 = vadd.f32 %v7253, %v7328
    %v7338 = vadd.f32 %v7254, %v7328
    %v7339 = vadd.f32 %v7255, %v7328
    %v7340 = vadd.f32 %v7256, %v7328
    %v7341 = vadd.f32 %v7257, %v7328
    %v7342 = vadd.f32 %v7258, %v7328
    %v7343 = vadd.f32 %v7259, %v7328
    %v7344 = vadd.f32 %v7260, %v7328
    %v7345 = vadd.f32 %v7261, %v7328
    %v7346 = vadd.f32 %v7262, %v7328
    %v7347 = vadd.f32 %v7263, %v7328
    %v7348 = vadd.f32 %v7264, %v7328
    %v7349 = vadd.f32 %v7265, %v7328
    %v7350 = vadd.f32 %v7266, %v7328
    %v7351 = vadd.f32 %v7267, %v7328
    %v7352 = vadd.f32 %v7268, %v7328
    %v7353 = vadd.f32 %v7269, %v7328
    %v7354 = vadd.f32 %v7270, %v7328
    %v7355 = vadd.f32 %v7271, %v7328
    %v7356 = vadd.f32 %v7272, %v7328
    %v7357 = vadd.f32 %v7273, %v7328
    %v7358 = vadd.f32 %v7274, %v7328
    %v7359 = vadd.f32 %v7275, %v7328
    %v7360 = vadd.f32 %v7276, %v7328
    %v7361 = vadd.f32 %v7277, %v7328
    %v7362 = vadd.f32 %v7278, %v7328
    %v7363 = vadd.f32 %v7279, %v7328
    %v7364 = vadd.f32 %v7280, %v7328
    %v7365 = vadd.f32 %v7281, %v7328
    %v7366 = vadd.f32 %v7282, %v7328
    %v7367 = vadd.f32 %v7283, %v7328
    %v7368 = vadd.f32 %v7284, %v7328
    %v7369 = vadd.f32 %v7285, %v7328
    %v7370 = vadd.f32 %v7286, %v7328
    %v7371 = vadd.f32 %v7287, %v7328
    %v7372 = vadd.f32 %v7288, %v7328
    %v7373 = vadd.f32 %v7289, %v7328
    %v7374 = vadd.f32 %v7290, %v7328
    %v7375 = vadd.f32 %v7291, %v7328
    %v7376 = vadd.f32 %v7292, %v7328
    %v7377 = vadd.f32 %v7293, %v7328
    %v7378 = vadd.f32 %v7294, %v7328
    %v7379 = vadd.f32 %v7295, %v7328
    %v7380 = vadd.f32 %v7296, %v7328
    %v7381 = vadd.f32 %v7297, %v7328
    %v7382 = vadd.f32 %v7298, %v7328
    %v7383 = vadd.f32 %v7299, %v7328
    %v7384 = vadd.f32 %v7300, %v7328
    %v7385 = vadd.f32 %v7301, %v7328
    %v7386 = vadd.f32 %v7302, %v7328
    %v7387 = vadd.f32 %v7303, %v7328
    %v7388 = vadd.f32 %v7304, %v7328
    %v7389 = vadd.f32 %v7305, %v7328
    %v7390 = vadd.f32 %v7306, %v7328
    %v7391 = vadd.f32 %v7307, %v7328
    %v7392 = vadd.f32 %v7308, %v7328
    %v7393 = vadd.f32 %v7309, %v7328
    %v7394 = vadd.f32 %v7310, %v7328
    %v7395 = vadd.f32 %v7311, %v7328
    %v7396 = vadd.f32 %v7312, %v7328
    %v7397 = vadd.f32 %v7313, %v7328
    %v7398 = vadd.f32 %v7314, %v7328
    %v7399 = vadd.f32 %v7315, %v7328
    %v7400 = vadd.f32 %v7316, %v7328
    %v7401 = vadd.f32 %v7317, %v7328
    %v7402 = vadd.f32 %v7318, %v7328
    %v7403 = vadd.f32 %v7319, %v7328
    %v7404 = vadd.f32 %v7320, %v7328
    %v7405 = vadd.f32 %v7321, %v7328
    %v7406 = vadd.f32 %v7322, %v7328
    %v7407 = vmax.f32 %v7330, 0.0
    %v7408 = vmax.f32 %v7331, 0.0
    %v7409 = vmax.f32 %v7332, 0.0
    %v7410 = vmax.f32 %v7333, 0.0
    %v7411 = vmax.f32 %v7334, 0.0
    %v7412 = vmax.f32 %v7335, 0.0
    %v7413 = vmax.f32 %v7336, 0.0
    %v7414 = vmax.f32 %v7337, 0.0
    %v7415 = vmax.f32 %v7338, 0.0
    %v7416 = vmax.f32 %v7339, 0.0
    %v7417 = vmax.f32 %v7340, 0.0
    %v7418 = vmax.f32 %v7341, 0.0
    %v7419 = vmax.f32 %v7342, 0.0
    %v7420 = vmax.f32 %v7343, 0.0
    %v7421 = vmax.f32 %v7344, 0.0
    %v7422 = vmax.f32 %v7345, 0.0
    %v7423 = vmax.f32 %v7346, 0.0
    %v7424 = vmax.f32 %v7347, 0.0
    %v7425 = vmax.f32 %v7348, 0.0
    %v7426 = vmax.f32 %v7349, 0.0
    %v7427 = vmax.f32 %v7350, 0.0
    %v7428 = vmax.f32 %v7351, 0.0
    %v7429 = vmax.f32 %v7352, 0.0
    %v7430 = vmax.f32 %v7353, 0.0
    %v7431 = vmax.f32 %v7354, 0.0
    %v7432 = vmax.f32 %v7355, 0.0
    %v7433 = vmax.f32 %v7356, 0.0
    %v7434 = vmax.f32 %v7357, 0.0
    %v7435 = vmax.f32 %v7358, 0.0
    %v7436 = vmax.f32 %v7359, 0.0
    %v7437 = vmax.f32 %v7360, 0.0
    %v7438 = vmax.f32 %v7361, 0.0
    %v7439 = vmax.f32 %v7362, 0.0
    %v7440 = vmax.f32 %v7363, 0.0
    %v7441 = vmax.f32 %v7364, 0.0
    %v7442 = vmax.f32 %v7365, 0.0
    %v7443 = vmax.f32 %v7366, 0.0
    %v7444 = vmax.f32 %v7367, 0.0
    %v7445 = vmax.f32 %v7368, 0.0
    %v7446 = vmax.f32 %v7369, 0.0
    %v7447 = vmax.f32 %v7370, 0.0
    %v7448 = vmax.f32 %v7371, 0.0
    %v7449 = vmax.f32 %v7372, 0.0
    %v7450 = vmax.f32 %v7373, 0.0
    %v7451 = vmax.f32 %v7374, 0.0
    %v7452 = vmax.f32 %v7375, 0.0
    %v7453 = vmax.f32 %v7376, 0.0
    %v7454 = vmax.f32 %v7377, 0.0
    %v7455 = vmax.f32 %v7378, 0.0
    %v7456 = vmax.f32 %v7379, 0.0
    %v7457 = vmax.f32 %v7380, 0.0
    %v7458 = vmax.f32 %v7381, 0.0
    %v7459 = vmax.f32 %v7382, 0.0
    %v7460 = vmax.f32 %v7383, 0.0
    %v7461 = vmax.f32 %v7384, 0.0
    %v7462 = vmax.f32 %v7385, 0.0
    %v7463 = vmax.f32 %v7386, 0.0
    %v7464 = vmax.f32 %v7387, 0.0
    %v7465 = vmax.f32 %v7388, 0.0
    %v7466 = vmax.f32 %v7389, 0.0
    %v7467 = vmax.f32 %v7390, 0.0
    %v7468 = vmax.f32 %v7391, 0.0
    %v7469 = vmax.f32 %v7392, 0.0
    %v7470 = vmax.f32 %v7393, 0.0
    %v7471 = vmax.f32 %v7394, 0.0
    %v7472 = vmax.f32 %v7395, 0.0
    %v7473 = vmax.f32 %v7396, 0.0
    %v7474 = vmax.f32 %v7397, 0.0
    %v7475 = vmax.f32 %v7398, 0.0
    %v7476 = vmax.f32 %v7399, 0.0
    %v7477 = vmax.f32 %v7400, 0.0
    %v7478 = vmax.f32 %v7401, 0.0
    %v7479 = vmax.f32 %v7402, 0.0
    %v7480 = vmax.f32 %v7403, 0.0
    %v7481 = vmax.f32 %v7404, 0.0
    %v7482 = vmax.f32 %v7405, 0.0
    %v7483 = vmax.f32 %v7406, 0.0
    %v7484 = vld [vmem:[%s3] sm:$0xff]
    %v7485 = vld [vmem:[%s3 + $0x8] sm:$0x3]
    %v7488 = vcombine.high %v7484, %v7484
    %v7490 = vunpack.c.l.s4 1983009808
    %v7491 = vunpack.c.0.s8 %v7490
    %v7492 = vlaneseq
    %v7493 = vshrl.u32 %v7492, 7
    %v7494 = vsub.s32 %v7491, %v7493
    %v7495 = vrot.slane %v7484, %v7494
    %v7497 = vunpack.c.l.s4 1983009808
    %v7498 = vunpack.c.0.s8 %v7497
    %v7499 = vlaneseq
    %v7500 = vshrl.u32 %v7499, 7
    %v7501 = vsub.s32 %v7498, %v7500
    %v7502 = vrot.slane %v7488, %v7501
    %v7503 = vcombine.high %v7495, %v7495
    %v7504 = vcombine.high %v7502, %v7502
    %v7506 = vunpack.c.l.s4 1983009808
    %v7507 = vunpack.c.0.s8 %v7506
    %v7508 = vlaneseq
    %v7509 = vshrl.u32 %v7508, 7
    %v7510 = vsub.s32 %v7507, %v7509
    %v7511 = vrot.slane %v7485, %v7510
    %vm7516 = vcmask 850944
    %v7517 = vsel %vm7516, %v7511, 0
    %7519 = vmatprep.subr.mxu0 0.0
    %7520 = vmatpush1.msra.mxu0 %v7407
    %7521 = vmatprep.subr.mxu0 0.0
    %7522 = vmatpush1.msra.mxu0 %v7408
    %7523 = vmatprep.subr.mxu0 0.0
    %7524 = vmatpush1.msra.mxu0 %v7409
    %7525 = vmatprep.subr.mxu0 0.0
    %7526 = vmatpush1.msra.mxu0 %v7410
    %7527 = vmatprep.subr.mxu0 0.0
    %7528 = vmatpush1.msra.mxu0 %v7411
    %7529 = vmatprep.subr.mxu0 0.0
    %7530 = vmatpush1.msra.mxu0 %v7412
    %7531 = vmatprep.subr.mxu0 0.0
    %7532 = vmatpush1.msra.mxu0 %v7413
    %7533 = vmatprep.subr.mxu0 0.0
    %7534 = vmatpush1.msra.mxu0 %v7414
    %7535 = vmatprep.subr.mxu0 0.0
    %7536 = vmatpush1.msra.mxu0 %v7415
    %7537 = vmatprep.subr.mxu0 0.0
    %7538 = vmatpush1.msra.mxu0 %v7416
    %7539 = vmatprep.subr.mxu0 0.0
    %7540 = vmatpush1.msra.mxu0 %v7417
    %7541 = vmatprep.subr.mxu0 0.0
    %7542 = vmatpush1.msra.mxu0 %v7418
    %7543 = vmatprep.subr.mxu0 0.0
    %7544 = vmatpush1.msra.mxu0 %v7419
    %7545 = vmatprep.subr.mxu0 0.0
    %7546 = vmatpush1.msra.mxu0 %v7420
    %7547 = vmatprep.subr.mxu0 0.0
    %7548 = vmatpush1.msra.mxu0 %v7421
    %7549 = vmatprep.subr.mxu0 0.0
    %7550 = vmatpush1.msra.mxu0 %v7422
    %7551 = vmatprep.subr.mxu0 0.0
    %7552 = vmatpush1.msra.mxu0 %v7423
    %7553 = vmatprep.subr.mxu0 0.0
    %7554 = vmatpush1.msra.mxu0 %v7424
    %7555 = vmatprep.subr.mxu0 0.0
    %7556 = vmatpush1.msra.mxu0 %v7425
    %7557 = vmatprep.subr.mxu0 0.0
    %7558 = vmatpush1.msra.mxu0 %v7426
    %7559 = vmatprep.subr.mxu0 0.0
    %7560 = vmatpush1.msra.mxu0 %v7427
    %7561 = vmatprep.subr.mxu0 0.0
    %7562 = vmatpush1.msra.mxu0 %v7428
    %7563 = vmatprep.subr.mxu0 0.0
    %7564 = vmatpush1.msra.mxu0 %v7429
    %7565 = vmatprep.subr.mxu0 0.0
    %7566 = vmatpush1.msra.mxu0 %v7430
    %7567 = vmatprep.subr.mxu0 0.0
    %7568 = vmatpush1.msra.mxu0 %v7431
    %7569 = vmatprep.subr.mxu0 0.0
    %7570 = vmatpush1.msra.mxu0 %v7432
    %7571 = vmatprep.subr.mxu0 0.0
    %7572 = vmatpush1.msra.mxu0 %v7433
    %7573 = vmatprep.subr.mxu0 0.0
    %7574 = vmatpush1.msra.mxu0 %v7434
    %7575 = vmatprep.subr.mxu0 0.0
    %7576 = vmatpush1.msra.mxu0 %v7435
    %7577 = vmatprep.subr.mxu0 0.0
    %7578 = vmatpush1.msra.mxu0 %v7436
    %7579 = vmatprep.subr.mxu0 0.0
    %7580 = vmatpush1.msra.mxu0 %v7437
    %7581 = vmatprep.subr.mxu0 0.0
    %7582 = vmatpush1.msra.mxu0 %v7438
    %7583 = vmatprep.mubr.f32.mxu0 %v7503
    %7584 = vmatmul.mubr.f32.gmra.mrb[0].mxu0 %v7495
    %v7585 = vpop.f32.mrb[0].mxu0
    %v7586 = vadd.f32 0.0, %v7585
    %v7587 = vpop.f32.mrb[0].mxu0
    %7588 = vdwg.mxu0
    %7589 = vmatprep.subr.mxu0 0.0
    %7590 = vmatpush1.msra.mxu0 %v7439
    %7591 = vmatprep.subr.mxu0 0.0
    %7592 = vmatpush1.msra.mxu0 %v7440
    %7593 = vmatprep.subr.mxu0 0.0
    %7594 = vmatpush1.msra.mxu0 %v7441
    %7595 = vmatprep.subr.mxu0 0.0
    %7596 = vmatpush1.msra.mxu0 %v7442
    %7597 = vmatprep.subr.mxu0 0.0
    %7598 = vmatpush1.msra.mxu0 %v7443
    %7599 = vmatprep.subr.mxu0 0.0
    %7600 = vmatpush1.msra.mxu0 %v7444
    %7601 = vmatprep.subr.mxu0 0.0
    %7602 = vmatpush1.msra.mxu0 %v7445
    %7603 = vmatprep.subr.mxu0 0.0
    %7604 = vmatpush1.msra.mxu0 %v7446
    %7605 = vmatprep.subr.mxu0 0.0
    %7606 = vmatpush1.msra.mxu0 %v7447
    %7607 = vmatprep.subr.mxu0 0.0
    %7608 = vmatpush1.msra.mxu0 %v7448
    %7609 = vmatprep.subr.mxu0 0.0
    %7610 = vmatpush1.msra.mxu0 %v7449
    %7611 = vmatprep.subr.mxu0 0.0
    %7612 = vmatpush1.msra.mxu0 %v7450
    %7613 = vmatprep.subr.mxu0 0.0
    %7614 = vmatpush1.msra.mxu0 %v7451
    %7615 = vmatprep.subr.mxu0 0.0
    %7616 = vmatpush1.msra.mxu0 %v7452
    %7617 = vmatprep.subr.mxu0 0.0
    %7618 = vmatpush1.msra.mxu0 %v7453
    %7619 = vmatprep.subr.mxu0 0.0
    %7620 = vmatpush1.msra.mxu0 %v7454
    %7621 = vmatprep.subr.mxu0 0.0
    %7622 = vmatpush1.msra.mxu0 %v7455
    %7623 = vmatprep.subr.mxu0 0.0
    %7624 = vmatpush1.msra.mxu0 %v7456
    %7625 = vmatprep.subr.mxu0 0.0
    %7626 = vmatpush1.msra.mxu0 %v7457
    %7627 = vmatprep.subr.mxu0 0.0
    %7628 = vmatpush1.msra.mxu0 %v7458
    %7629 = vmatprep.subr.mxu0 0.0
    %7630 = vmatpush1.msra.mxu0 %v7459
    %7631 = vmatprep.subr.mxu0 0.0
    %7632 = vmatpush1.msra.mxu0 %v7460
    %7633 = vmatprep.subr.mxu0 0.0
    %7634 = vmatpush1.msra.mxu0 %v7461
    %7635 = vmatprep.subr.mxu0 0.0
    %7636 = vmatpush1.msra.mxu0 %v7462
    %7637 = vmatprep.subr.mxu0 0.0
    %7638 = vmatpush1.msra.mxu0 %v7463
    %7639 = vmatprep.subr.mxu0 0.0
    %7640 = vmatpush1.msra.mxu0 %v7464
    %7641 = vmatprep.subr.mxu0 0.0
    %7642 = vmatpush1.msra.mxu0 %v7465
    %7643 = vmatprep.subr.mxu0 0.0
    %7644 = vmatpush1.msra.mxu0 %v7466
    %7645 = vmatprep.subr.mxu0 0.0
    %7646 = vmatpush1.msra.mxu0 %v7467
    %7647 = vmatprep.subr.mxu0 0.0
    %7648 = vmatpush1.msra.mxu0 %v7468
    %7649 = vmatprep.subr.mxu0 0.0
    %7650 = vmatpush1.msra.mxu0 %v7469
    %7651 = vmatprep.subr.mxu0 0.0
    %7652 = vmatpush1.msra.mxu0 %v7470
    %7653 = vmatprep.mubr.f32.mxu0 %v7504
    %7654 = vmatmul.mubr.f32.gmra.mrb[0].mxu0 %v7502
    %v7655 = vpop.f32.mrb[0].mxu0
    %v7656 = vadd.f32 %v7586, %v7655
    %v7657 = vpop.f32.mrb[0].mxu0
    %7658 = vdwg.mxu0
    %7659 = vmatprep.subr.mxu0 0.0
    %7660 = vmatpush1.msra.mxu0 %v7471
    %7661 = vmatprep.subr.mxu0 0.0
    %7662 = vmatpush1.msra.mxu0 %v7472
    %7663 = vmatprep.subr.mxu0 0.0
    %7664 = vmatpush1.msra.mxu0 %v7473
    %7665 = vmatprep.subr.mxu0 0.0
    %7666 = vmatpush1.msra.mxu0 %v7474
    %7667 = vmatprep.subr.mxu0 0.0
    %7668 = vmatpush1.msra.mxu0 %v7475
    %7669 = vmatprep.subr.mxu0 0.0
    %7670 = vmatpush1.msra.mxu0 %v7476
    %7671 = vmatprep.subr.mxu0 0.0
    %7672 = vmatpush1.msra.mxu0 %v7477
    %7673 = vmatprep.subr.mxu0 0.0
    %7674 = vmatpush1.msra.mxu0 %v7478
    %7675 = vmatprep.subr.mxu0 0.0
    %7676 = vmatpush1.msra.mxu0 %v7479
    %7677 = vmatprep.subr.mxu0 0.0
    %7678 = vmatpush1.msra.mxu0 %v7480
    %7679 = vmatprep.subr.mxu0 0.0
    %7680 = vmatpush1.msra.mxu0 %v7481
    %7681 = vmatprep.subr.mxu0 0.0
    %7682 = vmatpush1.msra.mxu0 %v7482
    %7683 = vmatprep.subr.mxu0 0.0
    %7684 = vmatpush1.msra.mxu0 %v7483
    %7685 = vmatprep.subr.mxu0 0.0
    %7686 = vmatpush1.msra.mxu0 0.0
    %7687 = vmatprep.subr.mxu0 0.0
    %7688 = vmatpush1.msra.mxu0 0.0
    %7689 = vmatprep.subr.mxu0 0.0
    %7690 = vmatpush1.msra.mxu0 0.0
    %7691 = vmatprep.subr.mxu0 0.0
    %7692 = vmatpush1.msra.mxu0 0.0
    %7693 = vmatprep.subr.mxu0 0.0
    %7694 = vmatpush1.msra.mxu0 0.0
    %7695 = vmatprep.subr.mxu0 0.0
    %7696 = vmatpush1.msra.mxu0 0.0
    %7697 = vmatprep.subr.mxu0 0.0
    %7698 = vmatpush1.msra.mxu0 0.0
    %7699 = vmatprep.subr.mxu0 0.0
    %7700 = vmatpush1.msra.mxu0 0.0
    %7701 = vmatprep.subr.mxu0 0.0
    %7702 = vmatpush1.msra.mxu0 0.0
    %7703 = vmatprep.subr.mxu0 0.0
    %7704 = vmatpush1.msra.mxu0 0.0
    %7705 = vmatprep.subr.mxu0 0.0
    %7706 = vmatpush1.msra.mxu0 0.0
    %7707 = vmatprep.subr.mxu0 0.0
    %7708 = vmatpush1.msra.mxu0 0.0
    %7709 = vmatprep.subr.mxu0 0.0
    %7710 = vmatpush1.msra.mxu0 0.0
    %7711 = vmatprep.subr.mxu0 0.0
    %7712 = vmatpush1.msra.mxu0 0.0
    %7713 = vmatprep.subr.mxu0 0.0
    %7714 = vmatpush1.msra.mxu0 0.0
    %7715 = vmatprep.subr.mxu0 0.0
    %7716 = vmatpush1.msra.mxu0 0.0
    %7717 = vmatprep.subr.mxu0 0.0
    %7718 = vmatpush1.msra.mxu0 0.0
    %7719 = vmatprep.subr.mxu0 0.0
    %7720 = vmatpush1.msra.mxu0 0.0
    %7721 = vmatprep.subr.mxu0 0.0
    %7722 = vmatpush1.msra.mxu0 0.0
    %7723 = vmatprep.mubr.f32.mxu0 0.0
    %7724 = vmatmul.mubr.f32.gmra.mrb[0].mxu0 %v7517
    %v7725 = vpop.f32.mrb[0].mxu0
    %v7726 = vadd.f32 %v7656, %v7725
    %v7727 = vpop.f32.mrb[0].mxu0
    %7728 = vdwg.mxu0
    %v7729 = vld [vmem:[%s4] sm:$0xff]
    %v7730 = vld [vmem:[%s4 + $0x8] sm:$0xff]
    %v7731 = vld [vmem:[%s4 + $0x10] sm:$0xff]
    %v7732 = vld [vmem:[%s4 + $0x18] sm:$0xff]
    %v7733 = vld [vmem:[%s4 + $0x20] sm:$0xff]
    %v7734 = vld [vmem:[%s4 + $0x28] sm:$0xff]
    %v7735 = vld [vmem:[%s4 + $0x30] sm:$0xff]
    %v7736 = vld [vmem:[%s4 + $0x38] sm:$0xff]
    %v7737 = vld [vmem:[%s4 + $0x40] sm:$0xff]
    %v7738 = vld [vmem:[%s4 + $0x48] sm:$0xff]
    %v7739 = vld [vmem:[%s4 + $0x50] sm:$0xff]
    %v7740 = vld [vmem:[%s4 + $0x58] sm:$0xff]
    %v7741 = vld [vmem:[%s4 + $0x60] sm:$0xff]
    %v7742 = vld [vmem:[%s4 + $0x68] sm:$0xff]
    %v7743 = vld [vmem:[%s4 + $0x70] sm:$0xff]
    %v7744 = vld [vmem:[%s4 + $0x78] sm:$0xff]
    %v7745 = vld [vmem:[%s5] sm:$0x1]
    %v7747 = vlaneseq
    %v7748 = vshrl.u32 %v7747, 7
    %v7749 = vsub.s32 0, %v7748
    %v7750 = vrot.slane %v7745, %v7749
    %7752 = vmatprep.subr.mxu0 0.0
    %7753 = vmatpush1.msra.mxu0 %v7729
    %7754 = vmatprep.subr.mxu0 0.0
    %7755 = vmatpush1.msra.mxu0 %v7730
    %7756 = vmatprep.subr.mxu0 0.0
    %7757 = vmatpush1.msra.mxu0 %v7731
    %7758 = vmatprep.subr.mxu0 0.0
    %7759 = vmatpush1.msra.mxu0 %v7732
    %7760 = vmatprep.subr.mxu0 0.0
    %7761 = vmatpush1.msra.mxu0 %v7733
    %7762 = vmatprep.subr.mxu0 0.0
    %7763 = vmatpush1.msra.mxu0 %v7734
    %7764 = vmatprep.subr.mxu0 0.0
    %7765 = vmatpush1.msra.mxu0 %v7735
    %7766 = vmatprep.subr.mxu0 0.0
    %7767 = vmatpush1.msra.mxu0 %v7736
    %7768 = vmatprep.subr.mxu0 0.0
    %7769 = vmatpush1.msra.mxu0 %v7737
    %7770 = vmatprep.subr.mxu0 0.0
    %7771 = vmatpush1.msra.mxu0 %v7738
    %7772 = vmatprep.subr.mxu0 0.0
    %7773 = vmatpush1.msra.mxu0 %v7739
    %7774 = vmatprep.subr.mxu0 0.0
    %7775 = vmatpush1.msra.mxu0 %v7740
    %7776 = vmatprep.subr.mxu0 0.0
    %7777 = vmatpush1.msra.mxu0 %v7741
    %7778 = vmatprep.subr.mxu0 0.0
    %7779 = vmatpush1.msra.mxu0 %v7742
    %7780 = vmatprep.subr.mxu0 0.0
    %7781 = vmatpush1.msra.mxu0 %v7743
    %7782 = vmatprep.subr.mxu0 0.0
    %7783 = vmatpush1.msra.mxu0 %v7744
    %7784 = vmatprep.subr.mxu0 0.0
    %7785 = vmatpush1.msra.mxu0 0.0
    %7786 = vmatprep.subr.mxu0 0.0
    %7787 = vmatpush1.msra.mxu0 0.0
    %7788 = vmatprep.subr.mxu0 0.0
    %7789 = vmatpush1.msra.mxu0 0.0
    %7790 = vmatprep.subr.mxu0 0.0
    %7791 = vmatpush1.msra.mxu0 0.0
    %7792 = vmatprep.subr.mxu0 0.0
    %7793 = vmatpush1.msra.mxu0 0.0
    %7794 = vmatprep.subr.mxu0 0.0
    %7795 = vmatpush1.msra.mxu0 0.0
    %7796 = vmatprep.subr.mxu0 0.0
    %7797 = vmatpush1.msra.mxu0 0.0
    %7798 = vmatprep.subr.mxu0 0.0
    %7799 = vmatpush1.msra.mxu0 0.0
    %7800 = vmatprep.subr.mxu0 0.0
    %7801 = vmatpush1.msra.mxu0 0.0
    %7802 = vmatprep.subr.mxu0 0.0
    %7803 = vmatpush1.msra.mxu0 0.0
    %7804 = vmatprep.subr.mxu0 0.0
    %7805 = vmatpush1.msra.mxu0 0.0
    %7806 = vmatprep.subr.mxu0 0.0
    %7807 = vmatpush1.msra.mxu0 0.0
    %7808 = vmatprep.subr.mxu0 0.0
    %7809 = vmatpush1.msra.mxu0 0.0
    %7810 = vmatprep.subr.mxu0 0.0
    %7811 = vmatpush1.msra.mxu0 0.0
    %7812 = vmatprep.subr.mxu0 0.0
    %7813 = vmatpush1.msra.mxu0 0.0
    %7814 = vmatprep.subr.mxu0 0.0
    %7815 = vmatpush1.msra.mxu0 0.0
    %7816 = vmatprep.mubr.f32.mxu0 0.0
    %7817 = vmatmul.mubr.f32.gmra.mrb[0].mxu0 %v7726
    %v7818 = vpop.f32.mrb[0].mxu0
    %v7819 = vadd.f32 %v7750, %v7818
    %v7820 = vpop.f32.mrb[0].mxu0
    %7821 = vdwg.mxu0
    %7822 = vst [vmem:[#allocation3] sm:$0x3] %v7819
    // Predicated region
    $region26: #{tpu_custom_call.1} parent=1 // pred_check
      _
    $region27: #{tpu_custom_call.1} parent=1 // pred_check_branch
      %7824 = sbr.rel (0) target = $region29
    $region28: #{tpu_custom_call.1} parent=1 // pred_region
      %s7826 = ssub.s32 32, 32
      %7827 = vsyncadd [#allocation4], %s7826
      %s7829 = sshll.u32 [#allocation3], 4
      %s7830 = int_to_ptr.vmem [resolvable:$true] %s7829
      %7832 = dma.vmem_to_hbm [thread:$0]  %s7830, 32, %s6, [#allocation4]
    $region29: #{tpu_custom_call.1} parent=1 // pred_fallthru
      _
    // Predicated region
    $region30: #{tpu_custom_call.1} parent=1 // pred_check
      _
    $region31: #{tpu_custom_call.1} parent=1 // pred_check_branch
      %7834 = sbr.rel (0) target = $region33
    $region32: #{tpu_custom_call.1} parent=1 // pred_region
      %7835 = dma.done [#allocation4], 32
    $region33: #{tpu_custom_call.1} parent=1 // pred_fallthru
      _
    %7836 = vsyncpa [#allocation4], 1

</llo_original>
